<compile_context>
chip_gen: v6e
topology: v6e:2x2x1
jax: 0.10.0
libtpu: 0.0.40
codegen_flags: <defaults>
</compile_context>

<pallas_src>
import jax
import jax.numpy as jnp
from jax import lax
from jax.experimental import pallas as pl
from jax.experimental.pallas import tpu as pltpu


def _silu(x):
    # SiLU with sigmoid expressed via tanh: one EUP transcendental, no divide, fp32 math.
    return x * (0.5 * jnp.tanh(0.5 * x) + 0.5)


def _round_up(n, m):
    return (n + m - 1) // m * m


def _pad_axis(a, axis, size):
    pad = size - a.shape[axis]
    if pad == 0:
        return a
    cfg = [(0, 0)] * a.ndim
    cfg[axis] = (0, pad)
    return jnp.pad(a, cfg)


def _pad_last(a, size):
    return _pad_axis(a, a.ndim - 1, size)


def _pick_batch_tile(N, H, Wp):
    # Small images are grid-step-overhead dominated (~0.35us/step); block several batch images
    # per step so the MXU M dimension is at least ~1024 rows when possible.
    target_rows = 1024
    best = 1
    for cand in range(1, N + 1):
        if N % cand == 0 and cand * H * Wp <= max(target_rows, H * Wp):
            best = cand
    return best


def _vmem_limit_bytes():
    # Generation-aware VMEM budget: v7x has 64 MiB/TensorCore, v5e/v6e have 128 MiB.
    try:
        cap = int(pltpu.get_tpu_info().vmem_capacity_bytes)
        return int(max(32 * 1024 * 1024, min(cap - 8 * 1024 * 1024, 100 * 1024 * 1024)))
    except Exception:
        return 56 * 1024 * 1024  # safe on every generation (fits v7x's 64 MiB)


def _make_fused_kernel(Bt, H, W, Wp, Cin_p, Cmid_p, Cout_p, use_res):
    """Fused ResnetBlock kernel for static tile/batch/channel sizes."""
    M = Bt * H * Wp

    def scatter(p_ref, v, c):
        # v: (Bt, H, Wp, c). Writes the interior rows of p_ref with the three column-shifted
        # copies concatenated on the LANE axis. The zero edge columns are built in-register so
        # the store is one full-width, sublane-aligned write (no masked column-offset stores).
        zc = jnp.zeros((Bt, H, 1, c), v.dtype)
        left = jnp.concatenate([zc, v[:, :, :Wp - 1, :]], axis=2)    # value at col a is v[a-1]
        right = jnp.concatenate([v[:, :, 1:, :], zc], axis=2)        # value at col a is v[a+1]
        p_ref[:, 1:H + 1, :, 0:3 * c] = jnp.concatenate([left, v, right], axis=-1)

    def conv3x3(p_ref, w_ref, bias, cin):
        # p_ref interior+halo rows hold the 3 dx-shifted copies (lane blocks of width cin);
        # w_ref: (3, 3*cin, cout). Each dy tap is a free row-offset slice feeding one K=3*cin
        # MXU matmul -> 3 matmuls total instead of 9.
        k = 3 * cin
        acc = None
        for dy in range(3):
            slab = p_ref[:, dy:dy + H, :, 0:k].reshape(M, k)
            part = jnp.dot(slab, w_ref[dy], preferred_element_type=jnp.float32)
            acc = part if acc is None else acc + part
        return acc + bias

    def kernel(*refs):
        if use_res:
            (x_ref, w1_ref, b1_ref, w2_ref, b2_ref, wr_ref, br_ref,
             o_ref, p_ref) = refs
        else:
            (x_ref, w1_ref, b1_ref, w2_ref, b2_ref, o_ref, p_ref) = refs
            wr_ref = br_ref = None

        # Only the two halo ROWS need zeroing each step (scratch persists across the "parallel"
        # batch axis, so a program_id==0-only init would be wrong on megacore parts); the
        # interior rows and the shifted edge columns are fully rewritten by scatter().
        zrow = jnp.zeros((Bt, 1, Wp, p_ref.shape[-1]), p_ref.dtype)
        p_ref[:, 0:1] = zrow
        p_ref[:, H + 1:H + 2] = zrow

        xv = x_ref[...]                                   # (Bt, H, Wp, Cin_p) bf16
        scatter(p_ref, xv, Cin_p)

        # Conv1 + SiLU; h1 never leaves VMEM.
        h1 = _silu(conv3x3(p_ref, w1_ref, b1_ref[...], Cin_p))      # (M, Cmid_p) f32
        h1 = h1.reshape(Bt, H, Wp, Cmid_p)
        if Wp != W:
            # Padded W columns of h1 are not zero (bias + SiLU); zero them so conv2's last
            # valid column does not pick them up through the +1 tap.
            col = lax.broadcasted_iota(jnp.int32, (Bt, H, Wp, Cmid_p), 2)
            h1 = jnp.where(col < W, h1, 0.0)

        # Residual from x BEFORE the plane buffer is reused for h1.
        if use_res:
            res = jnp.dot(xv.reshape(M, Cin_p), wr_ref[...],
                          preferred_element_type=jnp.float32) + br_ref[...]
        else:
            # Identity residual: plain VPU add (bf16-rounded x, intentional for the MXU path).
            res = xv.reshape(M, Cin_p).astype(jnp.float32)

        # Conv2 + SiLU, reusing the same plane scratch.
        scatter(p_ref, h1.astype(p_ref.dtype), Cmid_p)
        h2 = _silu(conv3x3(p_ref, w2_ref, b2_ref[...], Cmid_p))     # (M, Cout_p) f32

        o_ref[...] = (h2 + res).reshape(Bt, H, Wp, Cout_p).astype(o_ref.dtype)

    return kernel


def resnet_block_forward(x_nchw, params, *, batch_tile=None):
    """Fused Pallas ResnetBlock forward. x_nchw: (N, dim, H, W) -> (N, dim_out, H, W)."""
    # TODO(synk): for a chain of blocks, keep activations NHWC / channel-padded across blocks
    # and only convert at model boundaries (the transposes here are per-call convenience).
    x = jnp.transpose(x_nchw, (0, 2, 3, 1))       # NCHW -> NHWC (channels on the lane axis)
    N, H, W, Cin = x.shape
    Cmid = params["w1"].shape[-1]
    Cout = params["w2"].shape[-1]
    use_res = "wr" in params
    if not use_res:
        assert Cin == Cout, "identity residual requires dim == dim_out (unpadded)"

    LANE, SUB = 128, 8
    Cin_p = _round_up(Cin, LANE)
    Cmid_p = _round_up(Cmid, LANE)
    Cout_p = _round_up(Cout, LANE)
    Cmax_p = max(Cin_p, Cmid_p)
    Wp = _round_up(W, SUB)

    Bt = batch_tile if batch_tile is not None else _pick_batch_tile(N, H, Wp)
    assert N % Bt == 0

    # bf16 activations/weights for the MXU; fp32 biases and fp32 accumulation in-kernel.
    x_p = _pad_last(_pad_axis(x, 2, Wp), Cin_p).astype(jnp.bfloat16)

    def prep_w(w, cin_p, cout_p):
        w = _pad_last(_pad_axis(w, 2, cin_p), cout_p)                 # (3, 3, cin_p, cout_p)
        return w.reshape(3, 3 * cin_p, cout_p).astype(jnp.bfloat16)   # dy-major, dx folded into K

    w1 = prep_w(params["w1"], Cin_p, Cmid_p)
    b1 = _pad_last(params["b1"], Cmid_p).reshape(1, Cmid_p).astype(jnp.float32)
    w2 = prep_w(params["w2"], Cmid_p, Cout_p)
    b2 = _pad_last(params["b2"], Cout_p).reshape(1, Cout_p).astype(jnp.float32)

    inputs = [x_p, w1, b1, w2, b2]
    in_specs = [
        pl.BlockSpec((Bt, H, Wp, Cin_p), lambda n: (n, 0, 0, 0)),
        pl.BlockSpec((3, 3 * Cin_p, Cmid_p), lambda n: (0, 0, 0)),
        pl.BlockSpec((1, Cmid_p), lambda n: (0, 0)),
        pl.BlockSpec((3, 3 * Cmid_p, Cout_p), lambda n: (0, 0, 0)),
        pl.BlockSpec((1, Cout_p), lambda n: (0, 0)),
    ]
    bytes_accessed = (x_p.size * 2 + N * H * Wp * Cout_p * 2
                      + w1.size * 2 + w2.size * 2 + b1.size * 4 + b2.size * 4)
    flops = N * H * Wp * 2 * 9 * (Cin_p * Cmid_p + Cmid_p * Cout_p)
    if use_res:
        wr = _pad_last(_pad_axis(params["wr"], 0, Cin_p), Cout_p).astype(jnp.bfloat16)
        br = _pad_last(params["br"], Cout_p).reshape(1, Cout_p).astype(jnp.float32)
        inputs += [wr, br]
        in_specs += [
            pl.BlockSpec((Cin_p, Cout_p), lambda n: (0, 0)),
            pl.BlockSpec((1, Cout_p), lambda n: (0, 0)),
        ]
        bytes_accessed += wr.size * 2 + br.size * 4
        flops += N * H * Wp * 2 * Cin_p * Cout_p

    cost = pl.CostEstimate(
        flops=flops,
        transcendentals=N * H * Wp * (Cmid_p + Cout_p),
        bytes_accessed=bytes_accessed,
    )

    out = pl.pallas_call(
        _make_fused_kernel(Bt, H, W, Wp, Cin_p, Cmid_p, Cout_p, use_res),
        out_shape=jax.ShapeDtypeStruct((N, H, Wp, Cout_p), jnp.bfloat16),
        grid_spec=pltpu.PrefetchScalarGridSpec(
            num_scalar_prefetch=0,
            grid=(N // Bt,),
            in_specs=in_specs,
            out_specs=pl.BlockSpec((Bt, H, Wp, Cout_p), lambda n: (n, 0, 0, 0)),
            scratch_shapes=[
                # Single halo-plane buffer reused by both convs (lane-concatenated dx shifts).
                pltpu.VMEM((Bt, H + 2, Wp, 3 * Cmax_p), jnp.bfloat16),
            ],
        ),
        compiler_params=pltpu.CompilerParams(
            dimension_semantics=("parallel",),       # batch tiles across TensorCores (megacore)
            vmem_limit_bytes=_vmem_limit_bytes(),
        ),
        cost_estimate=cost,
    )(*inputs)

    # Drop spatial/channel padding, NHWC -> NCHW; fp32 cast only at the model boundary.
    return jnp.transpose(out[:, :, :W, :Cout], (0, 3, 1, 2)).astype(x_nchw.dtype)


def init_params(key, dim, dim_out):
    ks = jax.random.split(key, 6)
    s1 = 1.0 / (dim * 9.0) ** 0.5
    s2 = 1.0 / (dim_out * 9.0) ** 0.5
    params = {
        "w1": jax.random.uniform(ks[0], (3, 3, dim, dim_out), jnp.float32, -s1, s1),
        "b1": jax.random.uniform(ks[1], (dim_out,), jnp.float32, -s1, s1),
        "w2": jax.random.uniform(ks[2], (3, 3, dim_out, dim_out), jnp.float32, -s2, s2),
        "b2": jax.random.uniform(ks[3], (dim_out,), jnp.float32, -s2, s2),
    }
    if dim != dim_out:
        sr = 1.0 / float(dim) ** 0.5
        params["wr"] = jax.random.uniform(ks[4], (dim, dim_out), jnp.float32, -sr, sr)
        params["br"] = jax.random.uniform(ks[5], (dim_out,), jnp.float32, -sr, sr)
    # dim == dim_out: identity residual -> no wr/br, the kernel does a plain add.
    return params


def _reference_forward(x_nchw, params):
    # Pure-JAX fp32 reference (NHWC conv via lax) used to validate the Pallas result.
    x = jnp.transpose(x_nchw, (0, 2, 3, 1))
    dn = ("NHWC", "HWIO", "NHWC")

    def conv3(a, w, b):
        return lax.conv_general_dilated(a, w, (1, 1), "SAME", dimension_numbers=dn) + b

    h = conv3(x, params["w1"], params["b1"])
    h = h * jax.nn.sigmoid(h)
    h = conv3(h, params["w2"], params["b2"])
    h = h * jax.nn.sigmoid(h)
    if "wr" in params:
        res = jnp.einsum("nhwc,cd->nhwd", x, params["wr"]) + params["br"]
    else:
        res = x
    out = h + res
    return jnp.transpose(out, (0, 3, 1, 2))


if __name__ == "__main__":
    key = jax.random.PRNGKey(0)
    k_x, k_p1, k_p2 = jax.random.split(key, 3)

    N, dim, dim_out, H, W = 2, 4, 8, 16, 16
    x = jax.random.normal(k_x, (N, dim, H, W), jnp.float32)

    # Case 1: dim != dim_out (1x1 residual conv path).
    params = init_params(k_p1, dim, dim_out)
    out = jax.block_until_ready(resnet_block_forward(x, params))
    ref = jax.block_until_ready(_reference_forward(x, params))
    assert out.shape == (N, dim_out, H, W), out.shape
    tol = 5e-2 * max(1.0, float(jnp.max(jnp.abs(ref))))   # bf16 operands + bf16 output
    err = float(jnp.max(jnp.abs(out - ref)))
    assert err < tol, (err, tol)

    # Case 2: dim == dim_out (identity residual -> plain add, no eye-matrix matmul).
    params_id = init_params(k_p2, dim, dim)
    out_id = jax.block_until_ready(resnet_block_forward(x, params_id))
    ref_id = jax.block_until_ready(_reference_forward(x, params_id))
    assert out_id.shape == (N, dim, H, W), out_id.shape
    tol_id = 5e-2 * max(1.0, float(jnp.max(jnp.abs(ref_id))))
    err_id = float(jnp.max(jnp.abs(out_id - ref_id)))
    assert err_id < tol_id, (err_id, tol_id)

    print("KERNEL_OK")
</pallas_src>

<mosaic_0001>
module attributes {stable_mosaic.version = 11 : i64} {
  func.func @kernel(%arg0: i32, %arg1: memref<2x16x16x128xbf16, #tpu.memory_space<vmem>>, %arg2: memref<3x384x128xbf16, #tpu.memory_space<vmem>>, %arg3: memref<1x128xf32, #tpu.memory_space<vmem>>, %arg4: memref<3x384x128xbf16, #tpu.memory_space<vmem>>, %arg5: memref<1x128xf32, #tpu.memory_space<vmem>>, %arg6: memref<128x128xbf16, #tpu.memory_space<vmem>>, %arg7: memref<1x128xf32, #tpu.memory_space<vmem>>, %arg8: memref<2x16x16x128xbf16, #tpu.memory_space<vmem>>, %arg9: memref<2x18x16x384xbf16, #tpu.memory_space<vmem>>) attributes {dimension_semantics = [#tpu.dimension_semantics<parallel>], iteration_bounds = array<i64: 1>, scalar_prefetch = 0 : i64, scratch_operands = 1 : i64, tpu.core_type = #tpu.core_type<tc>, window_params = [{transform_indices = @transform_0, window_bounds = array<i64: 2, 16, 16, 128>}, {pipeline_mode = #tpu.pipeline_mode<synchronous>, transform_indices = @transform_1, window_bounds = array<i64: 3, 384, 128>}, {pipeline_mode = #tpu.pipeline_mode<synchronous>, transform_indices = @transform_2, window_bounds = array<i64: 1, 128>}, {pipeline_mode = #tpu.pipeline_mode<synchronous>, transform_indices = @transform_3, window_bounds = array<i64: 3, 384, 128>}, {pipeline_mode = #tpu.pipeline_mode<synchronous>, transform_indices = @transform_4, window_bounds = array<i64: 1, 128>}, {pipeline_mode = #tpu.pipeline_mode<synchronous>, transform_indices = @transform_5, window_bounds = array<i64: 128, 128>}, {pipeline_mode = #tpu.pipeline_mode<synchronous>, transform_indices = @transform_6, window_bounds = array<i64: 1, 128>}, {transform_indices = @transform_7, window_bounds = array<i64: 2, 16, 16, 128>}]} {
    %cst = arith.constant 0.000000e+00 : bf16
    %0 = vector.broadcast %cst : bf16 to vector<2x1x16x384xbf16>
    %c0 = arith.constant 0 : index
    %c0_0 = arith.constant 0 : index
    %c0_1 = arith.constant 0 : index
    %c0_2 = arith.constant 0 : index
    %1 = vector.load %arg9[%c0, %c0_0, %c0_1, %c0_2] : memref<2x18x16x384xbf16, #tpu.memory_space<vmem>>, vector<2x1x16x384xbf16>
    tpu.vector_store %arg9[%c0, %c0_0, %c0_1, %c0_2], %0 {strides = array<i32>} : memref<2x18x16x384xbf16, #tpu.memory_space<vmem>>, vector<2x1x16x384xbf16>,
    %c0_3 = arith.constant 0 : index
    %c17 = arith.constant 17 : index
    %c0_4 = arith.constant 0 : index
    %c0_5 = arith.constant 0 : index
    %2 = vector.load %arg9[%c0_3, %c17, %c0_4, %c0_5] : memref<2x18x16x384xbf16, #tpu.memory_space<vmem>>, vector<2x1x16x384xbf16>
    tpu.vector_store %arg9[%c0_3, %c17, %c0_4, %c0_5], %0 {strides = array<i32>} : memref<2x18x16x384xbf16, #tpu.memory_space<vmem>>, vector<2x1x16x384xbf16>,
    %c0_6 = arith.constant 0 : index
    %c0_7 = arith.constant 0 : index
    %c0_8 = arith.constant 0 : index
    %c0_9 = arith.constant 0 : index
    %3 = vector.load %arg1[%c0_6, %c0_7, %c0_8, %c0_9] : memref<2x16x16x128xbf16, #tpu.memory_space<vmem>>, vector<2x16x16x128xbf16>
    %cst_10 = arith.constant 0.000000e+00 : bf16
    %4 = vector.broadcast %cst_10 : bf16 to vector<2x16x1x128xbf16>
    %5 = vector.extract_strided_slice %3 {offsets = [0, 0, 0, 0], sizes = [2, 16, 15, 128], strides = [1, 1, 1, 1]} : vector<2x16x16x128xbf16> to vector<2x16x15x128xbf16>
    %6 = tpu.concatenate %4, %5 in 2 : vector<2x16x1x128xbf16>, vector<2x16x15x128xbf16> -> vector<2x16x16x128xbf16>
    %7 = vector.extract_strided_slice %3 {offsets = [0, 0, 1, 0], sizes = [2, 16, 15, 128], strides = [1, 1, 1, 1]} : vector<2x16x16x128xbf16> to vector<2x16x15x128xbf16>
    %8 = tpu.concatenate %7, %4 in 2 : vector<2x16x15x128xbf16>, vector<2x16x1x128xbf16> -> vector<2x16x16x128xbf16>
    %9 = tpu.concatenate %6, %3, %8 in 3 : vector<2x16x16x128xbf16>, vector<2x16x16x128xbf16>, vector<2x16x16x128xbf16> -> vector<2x16x16x384xbf16>
    %c0_11 = arith.constant 0 : index
    %c1 = arith.constant 1 : index
    %c0_12 = arith.constant 0 : index
    %c0_13 = arith.constant 0 : index
    %10 = vector.load %arg9[%c0_11, %c1, %c0_12, %c0_13] : memref<2x18x16x384xbf16, #tpu.memory_space<vmem>>, vector<2x16x16x384xbf16>
    tpu.vector_store %arg9[%c0_11, %c1, %c0_12, %c0_13], %9 {strides = array<i32>} : memref<2x18x16x384xbf16, #tpu.memory_space<vmem>>, vector<2x16x16x384xbf16>,
    %c0_14 = arith.constant 0 : index
    %c0_15 = arith.constant 0 : index
    %11 = vector.load %arg3[%c0_14, %c0_15] : memref<1x128xf32, #tpu.memory_space<vmem>>, vector<1x128xf32>
    %c0_16 = arith.constant 0 : index
    %c0_17 = arith.constant 0 : index
    %c0_18 = arith.constant 0 : index
    %c0_19 = arith.constant 0 : index
    %12 = vector.load %arg9[%c0_16, %c0_17, %c0_18, %c0_19] : memref<2x18x16x384xbf16, #tpu.memory_space<vmem>>, vector<2x16x16x384xbf16>
    %13 = vector.shape_cast %12 : vector<2x16x16x384xbf16> to vector<512x384xbf16>
    %c0_20 = arith.constant 0 : index
    %c0_21 = arith.constant 0 : index
    %c0_22 = arith.constant 0 : index
    %14 = vector.load %arg2[%c0_20, %c0_21, %c0_22] : memref<3x384x128xbf16, #tpu.memory_space<vmem>>, vector<1x384x128xbf16>
    %15 = vector.shape_cast %14 : vector<1x384x128xbf16> to vector<384x128xbf16>
    %cst_23 = arith.constant dense<0.000000e+00> : vector<512x128xf32>
    %16 = tpu.matmul %13, %15, %cst_23 {dimension_numbers = #tpu.dot_dimension_numbers<[1], [0], [0], [1], [0, 0, 1, 1], [], []>} : vector<512x384xbf16>, vector<384x128xbf16>, vector<512x128xf32> -> vector<512x128xf32>
    %c0_24 = arith.constant 0 : index
    %c1_25 = arith.constant 1 : index
    %c0_26 = arith.constant 0 : index
    %c0_27 = arith.constant 0 : index
    %17 = vector.load %arg9[%c0_24, %c1_25, %c0_26, %c0_27] : memref<2x18x16x384xbf16, #tpu.memory_space<vmem>>, vector<2x16x16x384xbf16>
    %18 = vector.shape_cast %17 : vector<2x16x16x384xbf16> to vector<512x384xbf16>
    %c1_28 = arith.constant 1 : index
    %c0_29 = arith.constant 0 : index
    %c0_30 = arith.constant 0 : index
    %19 = vector.load %arg2[%c1_28, %c0_29, %c0_30] : memref<3x384x128xbf16, #tpu.memory_space<vmem>>, vector<1x384x128xbf16>
    %20 = vector.shape_cast %19 : vector<1x384x128xbf16> to vector<384x128xbf16>
    %cst_31 = arith.constant dense<0.000000e+00> : vector<512x128xf32>
    %21 = tpu.matmul %18, %20, %cst_31 {dimension_numbers = #tpu.dot_dimension_numbers<[1], [0], [0], [1], [0, 0, 1, 1], [], []>} : vector<512x384xbf16>, vector<384x128xbf16>, vector<512x128xf32> -> vector<512x128xf32>
    %22 = arith.addf %16, %21 : vector<512x128xf32>
    %c0_32 = arith.constant 0 : index
    %c2 = arith.constant 2 : index
    %c0_33 = arith.constant 0 : index
    %c0_34 = arith.constant 0 : index
    %23 = vector.load %arg9[%c0_32, %c2, %c0_33, %c0_34] : memref<2x18x16x384xbf16, #tpu.memory_space<vmem>>, vector<2x16x16x384xbf16>
    %24 = vector.shape_cast %23 : vector<2x16x16x384xbf16> to vector<512x384xbf16>
    %c2_35 = arith.constant 2 : index
    %c0_36 = arith.constant 0 : index
    %c0_37 = arith.constant 0 : index
    %25 = vector.load %arg2[%c2_35, %c0_36, %c0_37] : memref<3x384x128xbf16, #tpu.memory_space<vmem>>, vector<1x384x128xbf16>
    %26 = vector.shape_cast %25 : vector<1x384x128xbf16> to vector<384x128xbf16>
    %cst_38 = arith.constant dense<0.000000e+00> : vector<512x128xf32>
    %27 = tpu.matmul %24, %26, %cst_38 {dimension_numbers = #tpu.dot_dimension_numbers<[1], [0], [0], [1], [0, 0, 1, 1], [], []>} : vector<512x384xbf16>, vector<384x128xbf16>, vector<512x128xf32> -> vector<512x128xf32>
    %28 = arith.addf %22, %27 : vector<512x128xf32>
    %29 = vector.broadcast %11 : vector<1x128xf32> to vector<512x128xf32>
    %30 = arith.addf %28, %29 : vector<512x128xf32>
    %cst_39 = arith.constant 5.000000e-01 : f32
    %31 = vector.broadcast %cst_39 : f32 to vector<512x128xf32>
    %32 = arith.mulf %31, %30 : vector<512x128xf32>
    %33 = math.tanh %32 : vector<512x128xf32>
    %cst_40 = arith.constant 5.000000e-01 : f32
    %34 = vector.broadcast %cst_40 : f32 to vector<512x128xf32>
    %35 = arith.mulf %34, %33 : vector<512x128xf32>
    %cst_41 = arith.constant 5.000000e-01 : f32
    %36 = vector.broadcast %cst_41 : f32 to vector<512x128xf32>
    %37 = arith.addf %35, %36 : vector<512x128xf32>
    %38 = arith.mulf %30, %37 : vector<512x128xf32>
    %39 = vector.shape_cast %38 : vector<512x128xf32> to vector<2x16x16x128xf32>
    %40 = vector.shape_cast %3 : vector<2x16x16x128xbf16> to vector<512x128xbf16>
    %c0_42 = arith.constant 0 : index
    %c0_43 = arith.constant 0 : index
    %41 = vector.load %arg6[%c0_42, %c0_43] : memref<128x128xbf16, #tpu.memory_space<vmem>>, vector<128x128xbf16>
    %cst_44 = arith.constant dense<0.000000e+00> : vector<512x128xf32>
    %42 = tpu.matmul %40, %41, %cst_44 {dimension_numbers = #tpu.dot_dimension_numbers<[1], [0], [0], [1], [0, 0, 1, 1], [], []>} : vector<512x128xbf16>, vector<128x128xbf16>, vector<512x128xf32> -> vector<512x128xf32>
    %c0_45 = arith.constant 0 : index
    %c0_46 = arith.constant 0 : index
    %43 = vector.load %arg7[%c0_45, %c0_46] : memref<1x128xf32, #tpu.memory_space<vmem>>, vector<1x128xf32>
    %44 = vector.broadcast %43 : vector<1x128xf32> to vector<512x128xf32>
    %45 = arith.addf %42, %44 : vector<512x128xf32>
    %46 = arith.truncf %39 : vector<2x16x16x128xf32> to vector<2x16x16x128xbf16>
    %cst_47 = arith.constant 0.000000e+00 : bf16
    %47 = vector.broadcast %cst_47 : bf16 to vector<2x16x1x128xbf16>
    %48 = vector.extract_strided_slice %46 {offsets = [0, 0, 0, 0], sizes = [2, 16, 15, 128], strides = [1, 1, 1, 1]} : vector<2x16x16x128xbf16> to vector<2x16x15x128xbf16>
    %49 = tpu.concatenate %47, %48 in 2 : vector<2x16x1x128xbf16>, vector<2x16x15x128xbf16> -> vector<2x16x16x128xbf16>
    %50 = vector.extract_strided_slice %46 {offsets = [0, 0, 1, 0], sizes = [2, 16, 15, 128], strides = [1, 1, 1, 1]} : vector<2x16x16x128xbf16> to vector<2x16x15x128xbf16>
    %51 = tpu.concatenate %50, %47 in 2 : vector<2x16x15x128xbf16>, vector<2x16x1x128xbf16> -> vector<2x16x16x128xbf16>
    %52 = tpu.concatenate %49, %46, %51 in 3 : vector<2x16x16x128xbf16>, vector<2x16x16x128xbf16>, vector<2x16x16x128xbf16> -> vector<2x16x16x384xbf16>
    %c0_48 = arith.constant 0 : index
    %c1_49 = arith.constant 1 : index
    %c0_50 = arith.constant 0 : index
    %c0_51 = arith.constant 0 : index
    %53 = vector.load %arg9[%c0_48, %c1_49, %c0_50, %c0_51] : memref<2x18x16x384xbf16, #tpu.memory_space<vmem>>, vector<2x16x16x384xbf16>
    tpu.vector_store %arg9[%c0_48, %c1_49, %c0_50, %c0_51], %52 {strides = array<i32>} : memref<2x18x16x384xbf16, #tpu.memory_space<vmem>>, vector<2x16x16x384xbf16>,
    %c0_52 = arith.constant 0 : index
    %c0_53 = arith.constant 0 : index
    %54 = vector.load %arg5[%c0_52, %c0_53] : memref<1x128xf32, #tpu.memory_space<vmem>>, vector<1x128xf32>
    %c0_54 = arith.constant 0 : index
    %c0_55 = arith.constant 0 : index
    %c0_56 = arith.constant 0 : index
    %c0_57 = arith.constant 0 : index
    %55 = vector.load %arg9[%c0_54, %c0_55, %c0_56, %c0_57] : memref<2x18x16x384xbf16, #tpu.memory_space<vmem>>, vector<2x16x16x384xbf16>
    %56 = vector.shape_cast %55 : vector<2x16x16x384xbf16> to vector<512x384xbf16>
    %c0_58 = arith.constant 0 : index
    %c0_59 = arith.constant 0 : index
    %c0_60 = arith.constant 0 : index
    %57 = vector.load %arg4[%c0_58, %c0_59, %c0_60] : memref<3x384x128xbf16, #tpu.memory_space<vmem>>, vector<1x384x128xbf16>
    %58 = vector.shape_cast %57 : vector<1x384x128xbf16> to vector<384x128xbf16>
    %cst_61 = arith.constant dense<0.000000e+00> : vector<512x128xf32>
    %59 = tpu.matmul %56, %58, %cst_61 {dimension_numbers = #tpu.dot_dimension_numbers<[1], [0], [0], [1], [0, 0, 1, 1], [], []>} : vector<512x384xbf16>, vector<384x128xbf16>, vector<512x128xf32> -> vector<512x128xf32>
    %c0_62 = arith.constant 0 : index
    %c1_63 = arith.constant 1 : index
    %c0_64 = arith.constant 0 : index
    %c0_65 = arith.constant 0 : index
    %60 = vector.load %arg9[%c0_62, %c1_63, %c0_64, %c0_65] : memref<2x18x16x384xbf16, #tpu.memory_space<vmem>>, vector<2x16x16x384xbf16>
    %61 = vector.shape_cast %60 : vector<2x16x16x384xbf16> to vector<512x384xbf16>
    %c1_66 = arith.constant 1 : index
    %c0_67 = arith.constant 0 : index
    %c0_68 = arith.constant 0 : index
    %62 = vector.load %arg4[%c1_66, %c0_67, %c0_68] : memref<3x384x128xbf16, #tpu.memory_space<vmem>>, vector<1x384x128xbf16>
    %63 = vector.shape_cast %62 : vector<1x384x128xbf16> to vector<384x128xbf16>
    %cst_69 = arith.constant dense<0.000000e+00> : vector<512x128xf32>
    %64 = tpu.matmul %61, %63, %cst_69 {dimension_numbers = #tpu.dot_dimension_numbers<[1], [0], [0], [1], [0, 0, 1, 1], [], []>} : vector<512x384xbf16>, vector<384x128xbf16>, vector<512x128xf32> -> vector<512x128xf32>
    %65 = arith.addf %59, %64 : vector<512x128xf32>
    %c0_70 = arith.constant 0 : index
    %c2_71 = arith.constant 2 : index
    %c0_72 = arith.constant 0 : index
    %c0_73 = arith.constant 0 : index
    %66 = vector.load %arg9[%c0_70, %c2_71, %c0_72, %c0_73] : memref<2x18x16x384xbf16, #tpu.memory_space<vmem>>, vector<2x16x16x384xbf16>
    %67 = vector.shape_cast %66 : vector<2x16x16x384xbf16> to vector<512x384xbf16>
    %c2_74 = arith.constant 2 : index
    %c0_75 = arith.constant 0 : index
    %c0_76 = arith.constant 0 : index
    %68 = vector.load %arg4[%c2_74, %c0_75, %c0_76] : memref<3x384x128xbf16, #tpu.memory_space<vmem>>, vector<1x384x128xbf16>
    %69 = vector.shape_cast %68 : vector<1x384x128xbf16> to vector<384x128xbf16>
    %cst_77 = arith.constant dense<0.000000e+00> : vector<512x128xf32>
    %70 = tpu.matmul %67, %69, %cst_77 {dimension_numbers = #tpu.dot_dimension_numbers<[1], [0], [0], [1], [0, 0, 1, 1], [], []>} : vector<512x384xbf16>, vector<384x128xbf16>, vector<512x128xf32> -> vector<512x128xf32>
    %71 = arith.addf %65, %70 : vector<512x128xf32>
    %72 = vector.broadcast %54 : vector<1x128xf32> to vector<512x128xf32>
    %73 = arith.addf %71, %72 : vector<512x128xf32>
    %cst_78 = arith.constant 5.000000e-01 : f32
    %74 = vector.broadcast %cst_78 : f32 to vector<512x128xf32>
    %75 = arith.mulf %74, %73 : vector<512x128xf32>
    %76 = math.tanh %75 : vector<512x128xf32>
    %cst_79 = arith.constant 5.000000e-01 : f32
    %77 = vector.broadcast %cst_79 : f32 to vector<512x128xf32>
    %78 = arith.mulf %77, %76 : vector<512x128xf32>
    %cst_80 = arith.constant 5.000000e-01 : f32
    %79 = vector.broadcast %cst_80 : f32 to vector<512x128xf32>
    %80 = arith.addf %78, %79 : vector<512x128xf32>
    %81 = arith.mulf %73, %80 : vector<512x128xf32>
    %82 = arith.addf %81, %45 : vector<512x128xf32>
    %83 = vector.shape_cast %82 : vector<512x128xf32> to vector<2x16x16x128xf32>
    %84 = arith.truncf %83 : vector<2x16x16x128xf32> to vector<2x16x16x128xbf16>
    %c0_81 = arith.constant 0 : index
    %c0_82 = arith.constant 0 : index
    %c0_83 = arith.constant 0 : index
    %c0_84 = arith.constant 0 : index
    %85 = vector.load %arg8[%c0_81, %c0_82, %c0_83, %c0_84] : memref<2x16x16x128xbf16, #tpu.memory_space<vmem>>, vector<2x16x16x128xbf16>
    tpu.vector_store %arg8[%c0_81, %c0_82, %c0_83, %c0_84], %84 {strides = array<i32>} : memref<2x16x16x128xbf16, #tpu.memory_space<vmem>>, vector<2x16x16x128xbf16>,
    return
  }
  func.func @transform_0(%arg0: i32) -> (i32, i32, i32, i32) {
    %c0_i32 = arith.constant 0 : i32
    %c0_i32_0 = arith.constant 0 : i32
    %c0_i32_1 = arith.constant 0 : i32
    %c0_i32_2 = arith.constant 0 : i32
    return %arg0, %c0_i32, %c0_i32_0, %c0_i32_1 : i32, i32, i32, i32
  }
  func.func @transform_1(%arg0: i32) -> (i32, i32, i32) {
    %c0_i32 = arith.constant 0 : i32
    %c0_i32_0 = arith.constant 0 : i32
    %c0_i32_1 = arith.constant 0 : i32
    %c0_i32_2 = arith.constant 0 : i32
    return %c0_i32, %c0_i32_0, %c0_i32_1 : i32, i32, i32
  }
  func.func @transform_2(%arg0: i32) -> (i32, i32) {
    %c0_i32 = arith.constant 0 : i32
    %c0_i32_0 = arith.constant 0 : i32
    %c0_i32_1 = arith.constant 0 : i32
    return %c0_i32, %c0_i32_0 : i32, i32
  }
  func.func @transform_3(%arg0: i32) -> (i32, i32, i32) {
    %c0_i32 = arith.constant 0 : i32
    %c0_i32_0 = arith.constant 0 : i32
    %c0_i32_1 = arith.constant 0 : i32
    %c0_i32_2 = arith.constant 0 : i32
    return %c0_i32, %c0_i32_0, %c0_i32_1 : i32, i32, i32
  }
  func.func @transform_4(%arg0: i32) -> (i32, i32) {
    %c0_i32 = arith.constant 0 : i32
    %c0_i32_0 = arith.constant 0 : i32
    %c0_i32_1 = arith.constant 0 : i32
    return %c0_i32, %c0_i32_0 : i32, i32
  }
  func.func @transform_5(%arg0: i32) -> (i32, i32) {
    %c0_i32 = arith.constant 0 : i32
    %c0_i32_0 = arith.constant 0 : i32
    %c0_i32_1 = arith.constant 0 : i32
    return %c0_i32, %c0_i32_0 : i32, i32
  }
  func.func @transform_6(%arg0: i32) -> (i32, i32) {
    %c0_i32 = arith.constant 0 : i32
    %c0_i32_0 = arith.constant 0 : i32
    %c0_i32_1 = arith.constant 0 : i32
    return %c0_i32, %c0_i32_0 : i32, i32
  }
  func.func @transform_7(%arg0: i32) -> (i32, i32, i32, i32) {
    %c0_i32 = arith.constant 0 : i32
    %c0_i32_0 = arith.constant 0 : i32
    %c0_i32_1 = arith.constant 0 : i32
    %c0_i32_2 = arith.constant 0 : i32
    return %arg0, %c0_i32, %c0_i32_0, %c0_i32_1 : i32, i32, i32, i32
  }
}

</mosaic_0001>

<llo_original>
// kernel: tpu_custom_call.1
$region0: #{tpu_custom_call.1}
  #allocation0 [shape = 'u32[]', space=smem, size = 0x4, offset = 0x4, fixed_abs, tag = 'smem constant byte address 0x4 - core index']
  #allocation1 [shape = 'u32[144,128]{1,0:T(1,128)}', space=vmem, size = 0x12000, scoped, tag = 'internal scratch']
  #allocation2 [shape = 'bf16[2,18,16,384]{3,2,1,0:T(8,128)(2,1)}', space=vmem, size = 0x6c000, scoped, tag = 'scratch operand']
  %s0 = inlined_call_operand.hbm [shape: bf16[2,16,16,128], index: 0, kind: input, shape index: {}]
  %s1 = inlined_call_operand.hbm [shape: bf16[3,384,128], index: 1, kind: input, shape index: {}]
  %s2 = inlined_call_operand.vmem [shape: f32[1,128], index: 2, kind: input, shape index: {}]
  %s3 = inlined_call_operand.hbm [shape: bf16[3,384,128], index: 3, kind: input, shape index: {}]
  %s4 = inlined_call_operand.vmem [shape: f32[1,128], index: 4, kind: input, shape index: {}]
  %s5 = inlined_call_operand.hbm [shape: bf16[128,128], index: 5, kind: input, shape index: {}]
  %s6 = inlined_call_operand.vmem [shape: f32[1,128], index: 6, kind: input, shape index: {}]
  %s7 = inlined_call_operand.hbm [shape: bf16[2,16,16,128], index: 7, kind: output, shape index: {}]
  %s8 = sld [smem:[#allocation0]]
  $region54: #{tpu_custom_call.1} parent=0
    _
  %s10 = ssub.s32 1, %s8
  %s11 = scalar_select 0, %s10, %s8
  $region1: #{tpu_custom_call.1} parent=0
    #allocation3 [shape = 'u8[131072]{0}', space=vmem, size = 0x20000, scoped, tag = 'input window, operand 0, single buffered']
    #allocation4 [shape = 's32[1]{0}', space=sflag, size = 0x4, scoped, tag = 'scoped memory for tpu_custom_call.1']
    #allocation5 [shape = 's32[1]{0}', space=sflag, size = 0x4, scoped, tag = 'scoped memory for tpu_custom_call.1']
    #allocation6 [shape = 'u8[294912]{0}', space=vmem, size = 0x48000, scoped, tag = 'input window, operand 1, single buffered']
    #allocation7 [shape = 's32[1]{0}', space=sflag, size = 0x4, scoped, tag = 'scoped memory for tpu_custom_call.1']
    #allocation8 [shape = 'u8[294912]{0}', space=vmem, size = 0x48000, scoped, tag = 'input window, operand 3, single buffered']
    #allocation9 [shape = 'u8[32768]{0}', space=vmem, size = 0x8000, scoped, tag = 'input window, operand 5, single buffered']
    #allocation10 [shape = 's32[1]{0}', space=sflag, size = 0x4, scoped, tag = 'scoped memory for tpu_custom_call.1']
    #allocation11 [shape = 'u8[131072]{0}', space=vmem, size = 0x20000, scoped, tag = 'output window, operand 0, single buffered']
    %12 = vsyncpa [#allocation4], 0
    %13 = vsyncpa [#allocation7], 0
    %14 = vsyncpa [#allocation10], 0
    %15 = vsyncpa [#allocation5], 0
    // Predicated region
    $region2: #{tpu_custom_call.1} parent=1 // pred_check
      _
    $region3: #{tpu_custom_call.1} parent=1 // pred_check_branch
      %17 = sbr.rel (0) target = $region5
    $region4: #{tpu_custom_call.1} parent=1 // pred_region
      %s19 = ssub.s32 4096, 4096
      %20 = vsyncadd [#allocation4], %s19
      %s21 = sshll.u32 [#allocation3], 4
      %s22 = int_to_ptr.vmem [resolvable:$true] %s21
      %27 = dma.hbm_to_vmem [thread:$0]  %s0, 4096, %s22, [#allocation4], 64, 64, 4
    $region5: #{tpu_custom_call.1} parent=1 // pred_fallthru
      _
    // Predicated region
    $region6: #{tpu_custom_call.1} parent=1 // pred_check
      _
    $region7: #{tpu_custom_call.1} parent=1 // pred_check_branch
      %29 = sbr.rel (0) target = $region9
    $region8: #{tpu_custom_call.1} parent=1 // pred_region
      %s31 = ssub.s32 9216, 9216
      %32 = vsyncadd [#allocation7], %s31
      %s33 = sshll.u32 [#allocation6], 4
      %s34 = int_to_ptr.vmem [resolvable:$true] %s33
      %39 = dma.hbm_to_vmem [thread:$0]  %s1, 9216, %s34, [#allocation7], 64, 64, 4
    $region9: #{tpu_custom_call.1} parent=1 // pred_fallthru
      _
    // Predicated region
    $region10: #{tpu_custom_call.1} parent=1 // pred_check
      _
    $region11: #{tpu_custom_call.1} parent=1 // pred_check_branch
      %41 = sbr.rel (0) target = $region13
    $region12: #{tpu_custom_call.1} parent=1 // pred_region
      _
    $region13: #{tpu_custom_call.1} parent=1 // pred_fallthru
      _
    // Predicated region
    $region14: #{tpu_custom_call.1} parent=1 // pred_check
      _
    $region15: #{tpu_custom_call.1} parent=1 // pred_check_branch
      %43 = sbr.rel (0) target = $region17
    $region16: #{tpu_custom_call.1} parent=1 // pred_region
      %s45 = ssub.s32 9216, 9216
      %46 = vsyncadd [#allocation7], %s45
      %s47 = sshll.u32 [#allocation8], 4
      %s48 = int_to_ptr.vmem [resolvable:$true] %s47
      %53 = dma.hbm_to_vmem [thread:$0]  %s3, 9216, %s48, [#allocation7], 64, 64, 4
    $region17: #{tpu_custom_call.1} parent=1 // pred_fallthru
      _
    // Predicated region
    $region18: #{tpu_custom_call.1} parent=1 // pred_check
      _
    $region19: #{tpu_custom_call.1} parent=1 // pred_check_branch
      %55 = sbr.rel (0) target = $region21
    $region20: #{tpu_custom_call.1} parent=1 // pred_region
      _
    $region21: #{tpu_custom_call.1} parent=1 // pred_fallthru
      _
    // Predicated region
    $region22: #{tpu_custom_call.1} parent=1 // pred_check
      _
    $region23: #{tpu_custom_call.1} parent=1 // pred_check_branch
      %57 = sbr.rel (0) target = $region25
    $region24: #{tpu_custom_call.1} parent=1 // pred_region
      %s59 = ssub.s32 1024, 1024
      %60 = vsyncadd [#allocation10], %s59
      %s61 = sshll.u32 [#allocation9], 4
      %s62 = int_to_ptr.vmem [resolvable:$true] %s61
      %67 = dma.hbm_to_vmem [thread:$0]  %s5, 1024, %s62, [#allocation10], 64, 64, 4
    $region25: #{tpu_custom_call.1} parent=1 // pred_fallthru
      _
    // Predicated region
    $region26: #{tpu_custom_call.1} parent=1 // pred_check
      _
    $region27: #{tpu_custom_call.1} parent=1 // pred_check_branch
      %69 = sbr.rel (0) target = $region29
    $region28: #{tpu_custom_call.1} parent=1 // pred_region
      _
    $region29: #{tpu_custom_call.1} parent=1 // pred_fallthru
      _
    // Predicated region
    $region30: #{tpu_custom_call.1} parent=1 // pred_check
      _
    $region31: #{tpu_custom_call.1} parent=1 // pred_check_branch
      %71 = sbr.rel (0) target = $region33
    $region32: #{tpu_custom_call.1} parent=1 // pred_region
      %72 = dma.done [#allocation4], 4096
    $region33: #{tpu_custom_call.1} parent=1 // pred_fallthru
      _
    // Predicated region
    $region34: #{tpu_custom_call.1} parent=1 // pred_check
      _
    $region35: #{tpu_custom_call.1} parent=1 // pred_check_branch
      %74 = sbr.rel (0) target = $region37
    $region36: #{tpu_custom_call.1} parent=1 // pred_region
      %75 = dma.done [#allocation7], 9216
    $region37: #{tpu_custom_call.1} parent=1 // pred_fallthru
      _
    // Predicated region
    $region38: #{tpu_custom_call.1} parent=1 // pred_check
      _
    $region39: #{tpu_custom_call.1} parent=1 // pred_check_branch
      %77 = sbr.rel (0) target = $region41
    $region40: #{tpu_custom_call.1} parent=1 // pred_region
      %78 = dma.done [#allocation7], 9216
    $region41: #{tpu_custom_call.1} parent=1 // pred_fallthru
      _
    // Predicated region
    $region42: #{tpu_custom_call.1} parent=1 // pred_check
      _
    $region43: #{tpu_custom_call.1} parent=1 // pred_check_branch
      %80 = sbr.rel (0) target = $region45
    $region44: #{tpu_custom_call.1} parent=1 // pred_region
      %81 = dma.done [#allocation10], 1024
    $region45: #{tpu_custom_call.1} parent=1 // pred_fallthru
      _
    %83 = vst [vmem:[#allocation2] sm:$0xff] 0
    %84 = vst [vmem:[#allocation2 + $0x8] sm:$0xf] 0
    %85 = vst [vmem:[#allocation2 + $0xc] sm:$0xff] 0
    %86 = vst [vmem:[#allocation2 + $0x14] sm:$0xf] 0
    %87 = vst [vmem:[#allocation2 + $0x1b0] sm:$0xff] 0
    %88 = vst [vmem:[#allocation2 + $0x1b8] sm:$0xf] 0
    %89 = vst [vmem:[#allocation2 + $0x1bc] sm:$0xff] 0
    %90 = vst [vmem:[#allocation2 + $0x1c4] sm:$0xf] 0
    %s91 = scalar_lea.vmem [#allocation2], 408
    %92 = vst [vmem:[%s91] sm:$0xff] 0
    %93 = vst [vmem:[%s91 + $0x8] sm:$0xf] 0
    %94 = vst [vmem:[%s91 + $0xc] sm:$0xff] 0
    %95 = vst [vmem:[%s91 + $0x14] sm:$0xf] 0
    %96 = vst [vmem:[%s91 + $0x1b0] sm:$0xff] 0
    %97 = vst [vmem:[%s91 + $0x1b8] sm:$0xf] 0
    %98 = vst [vmem:[%s91 + $0x1bc] sm:$0xff] 0
    %99 = vst [vmem:[%s91 + $0x1c4] sm:$0xf] 0
    %v100 = vld [vmem:[#allocation3] sm:$0xf]
    %v101 = vld [vmem:[#allocation3 + $0x4] sm:$0xf]
    %v102 = vld [vmem:[#allocation3 + $0x8] sm:$0xf]
    %v103 = vld [vmem:[#allocation3 + $0xc] sm:$0xf]
    %v104 = vld [vmem:[#allocation3 + $0x10] sm:$0xf]
    %v105 = vld [vmem:[#allocation3 + $0x14] sm:$0xf]
    %v106 = vld [vmem:[#allocation3 + $0x18] sm:$0xf]
    %v107 = vld [vmem:[#allocation3 + $0x1c] sm:$0xf]
    %v108 = vld [vmem:[#allocation3 + $0x20] sm:$0xf]
    %v109 = vld [vmem:[#allocation3 + $0x24] sm:$0xf]
    %v110 = vld [vmem:[#allocation3 + $0x28] sm:$0xf]
    %v111 = vld [vmem:[#allocation3 + $0x2c] sm:$0xf]
    %v112 = vld [vmem:[#allocation3 + $0x30] sm:$0xf]
    %v113 = vld [vmem:[#allocation3 + $0x34] sm:$0xf]
    %v114 = vld [vmem:[#allocation3 + $0x38] sm:$0xf]
    %v115 = vld [vmem:[#allocation3 + $0x3c] sm:$0xf]
    %v116 = vld [vmem:[#allocation3 + $0x40] sm:$0xf]
    %v117 = vld [vmem:[#allocation3 + $0x44] sm:$0xf]
    %v118 = vld [vmem:[#allocation3 + $0x48] sm:$0xf]
    %v119 = vld [vmem:[#allocation3 + $0x4c] sm:$0xf]
    %v120 = vld [vmem:[#allocation3 + $0x50] sm:$0xf]
    %v121 = vld [vmem:[#allocation3 + $0x54] sm:$0xf]
    %v122 = vld [vmem:[#allocation3 + $0x58] sm:$0xf]
    %v123 = vld [vmem:[#allocation3 + $0x5c] sm:$0xf]
    %v124 = vld [vmem:[#allocation3 + $0x60] sm:$0xf]
    %v125 = vld [vmem:[#allocation3 + $0x64] sm:$0xf]
    %v126 = vld [vmem:[#allocation3 + $0x68] sm:$0xf]
    %v127 = vld [vmem:[#allocation3 + $0x6c] sm:$0xf]
    %v128 = vld [vmem:[#allocation3 + $0x70] sm:$0xf]
    %v129 = vld [vmem:[#allocation3 + $0x74] sm:$0xf]
    %v130 = vld [vmem:[#allocation3 + $0x78] sm:$0xf]
    %v131 = vld [vmem:[#allocation3 + $0x7c] sm:$0xf]
    %v132 = vld [vmem:[#allocation3 + $0x80] sm:$0xf]
    %v133 = vld [vmem:[#allocation3 + $0x84] sm:$0xf]
    %v134 = vld [vmem:[#allocation3 + $0x88] sm:$0xf]
    %v135 = vld [vmem:[#allocation3 + $0x8c] sm:$0xf]
    %v136 = vld [vmem:[#allocation3 + $0x90] sm:$0xf]
    %v137 = vld [vmem:[#allocation3 + $0x94] sm:$0xf]
    %v138 = vld [vmem:[#allocation3 + $0x98] sm:$0xf]
    %v139 = vld [vmem:[#allocation3 + $0x9c] sm:$0xf]
    %v140 = vld [vmem:[#allocation3 + $0xa0] sm:$0xf]
    %v141 = vld [vmem:[#allocation3 + $0xa4] sm:$0xf]
    %v142 = vld [vmem:[#allocation3 + $0xa8] sm:$0xf]
    %v143 = vld [vmem:[#allocation3 + $0xac] sm:$0xf]
    %v144 = vld [vmem:[#allocation3 + $0xb0] sm:$0xf]
    %v145 = vld [vmem:[#allocation3 + $0xb4] sm:$0xf]
    %v146 = vld [vmem:[#allocation3 + $0xb8] sm:$0xf]
    %v147 = vld [vmem:[#allocation3 + $0xbc] sm:$0xf]
    %v148 = vld [vmem:[#allocation3 + $0xc0] sm:$0xf]
    %v149 = vld [vmem:[#allocation3 + $0xc4] sm:$0xf]
    %v150 = vld [vmem:[#allocation3 + $0xc8] sm:$0xf]
    %v151 = vld [vmem:[#allocation3 + $0xcc] sm:$0xf]
    %v152 = vld [vmem:[#allocation3 + $0xd0] sm:$0xf]
    %v153 = vld [vmem:[#allocation3 + $0xd4] sm:$0xf]
    %v154 = vld [vmem:[#allocation3 + $0xd8] sm:$0xf]
    %v155 = vld [vmem:[#allocation3 + $0xdc] sm:$0xf]
    %v156 = vld [vmem:[#allocation3 + $0xe0] sm:$0xf]
    %v157 = vld [vmem:[#allocation3 + $0xe4] sm:$0xf]
    %v158 = vld [vmem:[#allocation3 + $0xe8] sm:$0xf]
    %v159 = vld [vmem:[#allocation3 + $0xec] sm:$0xf]
    %v160 = vld [vmem:[#allocation3 + $0xf0] sm:$0xf]
    %v161 = vld [vmem:[#allocation3 + $0xf4] sm:$0xf]
    %v162 = vld [vmem:[#allocation3 + $0xf8] sm:$0xf]
    %v163 = vld [vmem:[#allocation3 + $0xfc] sm:$0xf]
    %v228 = vunpack.c.l.b16 %v100
    %v229 = vunpack.c.l.b16 %v101
    %v230 = vunpack.c.l.b16 %v102
    %v231 = vunpack.c.l.b16 %v103
    %v232 = vunpack.c.l.b16 %v104
    %v233 = vunpack.c.l.b16 %v105
    %v234 = vunpack.c.l.b16 %v106
    %v235 = vunpack.c.l.b16 %v107
    %v236 = vunpack.c.l.b16 %v108
    %v237 = vunpack.c.l.b16 %v109
    %v238 = vunpack.c.l.b16 %v110
    %v239 = vunpack.c.l.b16 %v111
    %v240 = vunpack.c.l.b16 %v112
    %v241 = vunpack.c.l.b16 %v113
    %v242 = vunpack.c.l.b16 %v114
    %v243 = vunpack.c.l.b16 %v115
    %v244 = vunpack.c.l.b16 %v116
    %v245 = vunpack.c.l.b16 %v117
    %v246 = vunpack.c.l.b16 %v118
    %v247 = vunpack.c.l.b16 %v119
    %v248 = vunpack.c.l.b16 %v120
    %v249 = vunpack.c.l.b16 %v121
    %v250 = vunpack.c.l.b16 %v122
    %v251 = vunpack.c.l.b16 %v123
    %v252 = vunpack.c.l.b16 %v124
    %v253 = vunpack.c.l.b16 %v125
    %v254 = vunpack.c.l.b16 %v126
    %v255 = vunpack.c.l.b16 %v127
    %v256 = vunpack.c.l.b16 %v128
    %v257 = vunpack.c.l.b16 %v129
    %v258 = vunpack.c.l.b16 %v130
    %v259 = vunpack.c.l.b16 %v131
    %v260 = vunpack.c.l.b16 %v132
    %v261 = vunpack.c.l.b16 %v133
    %v262 = vunpack.c.l.b16 %v134
    %v263 = vunpack.c.l.b16 %v135
    %v264 = vunpack.c.l.b16 %v136
    %v265 = vunpack.c.l.b16 %v137
    %v266 = vunpack.c.l.b16 %v138
    %v267 = vunpack.c.l.b16 %v139
    %v268 = vunpack.c.l.b16 %v140
    %v269 = vunpack.c.l.b16 %v141
    %v270 = vunpack.c.l.b16 %v142
    %v271 = vunpack.c.l.b16 %v143
    %v272 = vunpack.c.l.b16 %v144
    %v273 = vunpack.c.l.b16 %v145
    %v274 = vunpack.c.l.b16 %v146
    %v275 = vunpack.c.l.b16 %v147
    %v276 = vunpack.c.l.b16 %v148
    %v277 = vunpack.c.l.b16 %v149
    %v278 = vunpack.c.l.b16 %v150
    %v279 = vunpack.c.l.b16 %v151
    %v280 = vunpack.c.l.b16 %v152
    %v281 = vunpack.c.l.b16 %v153
    %v282 = vunpack.c.l.b16 %v154
    %v283 = vunpack.c.l.b16 %v155
    %v284 = vunpack.c.l.b16 %v156
    %v285 = vunpack.c.l.b16 %v157
    %v286 = vunpack.c.l.b16 %v158
    %v287 = vunpack.c.l.b16 %v159
    %v288 = vunpack.c.l.b16 %v160
    %v289 = vunpack.c.l.b16 %v161
    %v290 = vunpack.c.l.b16 %v162
    %v291 = vunpack.c.l.b16 %v163
    %v292 = vpack.c.b16 %v229, %v228
    %v293 = vpack.c.b16 %v231, %v230
    %v294 = vpack.c.b16 %v233, %v232
    %v295 = vpack.c.b16 %v235, %v234
    %v296 = vpack.c.b16 %v237, %v236
    %v297 = vpack.c.b16 %v239, %v238
    %v298 = vpack.c.b16 %v241, %v240
    %v299 = vpack.c.b16 %v243, %v242
    %v300 = vpack.c.b16 %v245, %v244
    %v301 = vpack.c.b16 %v247, %v246
    %v302 = vpack.c.b16 %v249, %v248
    %v303 = vpack.c.b16 %v251, %v250
    %v304 = vpack.c.b16 %v253, %v252
    %v305 = vpack.c.b16 %v255, %v254
    %v306 = vpack.c.b16 %v257, %v256
    %v307 = vpack.c.b16 %v259, %v258
    %v308 = vpack.c.b16 %v261, %v260
    %v309 = vpack.c.b16 %v263, %v262
    %v310 = vpack.c.b16 %v265, %v264
    %v311 = vpack.c.b16 %v267, %v266
    %v312 = vpack.c.b16 %v269, %v268
    %v313 = vpack.c.b16 %v271, %v270
    %v314 = vpack.c.b16 %v273, %v272
    %v315 = vpack.c.b16 %v275, %v274
    %v316 = vpack.c.b16 %v277, %v276
    %v317 = vpack.c.b16 %v279, %v278
    %v318 = vpack.c.b16 %v281, %v280
    %v319 = vpack.c.b16 %v283, %v282
    %v320 = vpack.c.b16 %v285, %v284
    %v321 = vpack.c.b16 %v287, %v286
    %v322 = vpack.c.b16 %v289, %v288
    %v323 = vpack.c.b16 %v291, %v290
    %v325 = vshrl.u32 %v292, 16
    %v327 = vrot.slane %v325, 7
    %v328 = vshll.u32 %v292, 16
    %v330 = vor.u32 %v327, %v328
    %v332 = vshrl.u32 %v293, 16
    %v334 = vrot.slane %v332, 7
    %v335 = vshll.u32 %v293, 16
    %v337 = vor.u32 %v334, %v335
    %v339 = vshrl.u32 %v294, 16
    %v341 = vrot.slane %v339, 7
    %v342 = vshll.u32 %v294, 16
    %v344 = vor.u32 %v341, %v342
    %v346 = vshrl.u32 %v295, 16
    %v348 = vrot.slane %v346, 7
    %v349 = vshll.u32 %v295, 16
    %v351 = vor.u32 %v348, %v349
    %v353 = vshrl.u32 %v296, 16
    %v355 = vrot.slane %v353, 7
    %v356 = vshll.u32 %v296, 16
    %v358 = vor.u32 %v355, %v356
    %v360 = vshrl.u32 %v297, 16
    %v362 = vrot.slane %v360, 7
    %v363 = vshll.u32 %v297, 16
    %v365 = vor.u32 %v362, %v363
    %v367 = vshrl.u32 %v298, 16
    %v369 = vrot.slane %v367, 7
    %v370 = vshll.u32 %v298, 16
    %v372 = vor.u32 %v369, %v370
    %v374 = vshrl.u32 %v299, 16
    %v376 = vrot.slane %v374, 7
    %v377 = vshll.u32 %v299, 16
    %v379 = vor.u32 %v376, %v377
    %v381 = vshrl.u32 %v300, 16
    %v383 = vrot.slane %v381, 7
    %v384 = vshll.u32 %v300, 16
    %v386 = vor.u32 %v383, %v384
    %v388 = vshrl.u32 %v301, 16
    %v390 = vrot.slane %v388, 7
    %v391 = vshll.u32 %v301, 16
    %v393 = vor.u32 %v390, %v391
    %v395 = vshrl.u32 %v302, 16
    %v397 = vrot.slane %v395, 7
    %v398 = vshll.u32 %v302, 16
    %v400 = vor.u32 %v397, %v398
    %v402 = vshrl.u32 %v303, 16
    %v404 = vrot.slane %v402, 7
    %v405 = vshll.u32 %v303, 16
    %v407 = vor.u32 %v404, %v405
    %v409 = vshrl.u32 %v304, 16
    %v411 = vrot.slane %v409, 7
    %v412 = vshll.u32 %v304, 16
    %v414 = vor.u32 %v411, %v412
    %v416 = vshrl.u32 %v305, 16
    %v418 = vrot.slane %v416, 7
    %v419 = vshll.u32 %v305, 16
    %v421 = vor.u32 %v418, %v419
    %v423 = vshrl.u32 %v306, 16
    %v425 = vrot.slane %v423, 7
    %v426 = vshll.u32 %v306, 16
    %v428 = vor.u32 %v425, %v426
    %v430 = vshrl.u32 %v307, 16
    %v432 = vrot.slane %v430, 7
    %v433 = vshll.u32 %v307, 16
    %v435 = vor.u32 %v432, %v433
    %v437 = vshrl.u32 %v308, 16
    %v439 = vrot.slane %v437, 7
    %v440 = vshll.u32 %v308, 16
    %v442 = vor.u32 %v439, %v440
    %v444 = vshrl.u32 %v309, 16
    %v446 = vrot.slane %v444, 7
    %v447 = vshll.u32 %v309, 16
    %v449 = vor.u32 %v446, %v447
    %v451 = vshrl.u32 %v310, 16
    %v453 = vrot.slane %v451, 7
    %v454 = vshll.u32 %v310, 16
    %v456 = vor.u32 %v453, %v454
    %v458 = vshrl.u32 %v311, 16
    %v460 = vrot.slane %v458, 7
    %v461 = vshll.u32 %v311, 16
    %v463 = vor.u32 %v460, %v461
    %v465 = vshrl.u32 %v312, 16
    %v467 = vrot.slane %v465, 7
    %v468 = vshll.u32 %v312, 16
    %v470 = vor.u32 %v467, %v468
    %v472 = vshrl.u32 %v313, 16
    %v474 = vrot.slane %v472, 7
    %v475 = vshll.u32 %v313, 16
    %v477 = vor.u32 %v474, %v475
    %v479 = vshrl.u32 %v314, 16
    %v481 = vrot.slane %v479, 7
    %v482 = vshll.u32 %v314, 16
    %v484 = vor.u32 %v481, %v482
    %v486 = vshrl.u32 %v315, 16
    %v488 = vrot.slane %v486, 7
    %v489 = vshll.u32 %v315, 16
    %v491 = vor.u32 %v488, %v489
    %v493 = vshrl.u32 %v316, 16
    %v495 = vrot.slane %v493, 7
    %v496 = vshll.u32 %v316, 16
    %v498 = vor.u32 %v495, %v496
    %v500 = vshrl.u32 %v317, 16
    %v502 = vrot.slane %v500, 7
    %v503 = vshll.u32 %v317, 16
    %v505 = vor.u32 %v502, %v503
    %v507 = vshrl.u32 %v318, 16
    %v509 = vrot.slane %v507, 7
    %v510 = vshll.u32 %v318, 16
    %v512 = vor.u32 %v509, %v510
    %v514 = vshrl.u32 %v319, 16
    %v516 = vrot.slane %v514, 7
    %v517 = vshll.u32 %v319, 16
    %v519 = vor.u32 %v516, %v517
    %v521 = vshrl.u32 %v320, 16
    %v523 = vrot.slane %v521, 7
    %v524 = vshll.u32 %v320, 16
    %v526 = vor.u32 %v523, %v524
    %v528 = vshrl.u32 %v321, 16
    %v530 = vrot.slane %v528, 7
    %v531 = vshll.u32 %v321, 16
    %v533 = vor.u32 %v530, %v531
    %v535 = vshrl.u32 %v322, 16
    %v537 = vrot.slane %v535, 7
    %v538 = vshll.u32 %v322, 16
    %v540 = vor.u32 %v537, %v538
    %v542 = vshrl.u32 %v323, 16
    %v544 = vrot.slane %v542, 7
    %v545 = vshll.u32 %v323, 16
    %v547 = vor.u32 %v544, %v545
    %vm580 = vcmask 1040384
    %vm581 = vsmask.f32 256
    %vm582 = vmand %vm580, %vm581
    %v583 = vsel %vm582, 0, %v330
    %v584 = vsel %vm582, 0, %v337
    %v585 = vsel %vm582, 0, %v344
    %v586 = vsel %vm582, 0, %v351
    %v587 = vsel %vm582, 0, %v358
    %v588 = vsel %vm582, 0, %v365
    %v589 = vsel %vm582, 0, %v372
    %v590 = vsel %vm582, 0, %v379
    %v591 = vsel %vm582, 0, %v386
    %v592 = vsel %vm582, 0, %v393
    %v593 = vsel %vm582, 0, %v400
    %v594 = vsel %vm582, 0, %v407
    %v595 = vsel %vm582, 0, %v414
    %v596 = vsel %vm582, 0, %v421
    %v597 = vsel %vm582, 0, %v428
    %v598 = vsel %vm582, 0, %v435
    %v599 = vsel %vm582, 0, %v442
    %v600 = vsel %vm582, 0, %v449
    %v601 = vsel %vm582, 0, %v456
    %v602 = vsel %vm582, 0, %v463
    %v603 = vsel %vm582, 0, %v470
    %v604 = vsel %vm582, 0, %v477
    %v605 = vsel %vm582, 0, %v484
    %v606 = vsel %vm582, 0, %v491
    %v607 = vsel %vm582, 0, %v498
    %v608 = vsel %vm582, 0, %v505
    %v609 = vsel %vm582, 0, %v512
    %v610 = vsel %vm582, 0, %v519
    %v611 = vsel %vm582, 0, %v526
    %v612 = vsel %vm582, 0, %v533
    %v613 = vsel %vm582, 0, %v540
    %v614 = vsel %vm582, 0, %v547
    %v615 = vrot.slane %v328, 1
    %v616 = vor.u32 %v325, %v615
    %v617 = vrot.slane %v335, 1
    %v618 = vor.u32 %v332, %v617
    %v619 = vrot.slane %v342, 1
    %v620 = vor.u32 %v339, %v619
    %v621 = vrot.slane %v349, 1
    %v622 = vor.u32 %v346, %v621
    %v623 = vrot.slane %v356, 1
    %v624 = vor.u32 %v353, %v623
    %v625 = vrot.slane %v363, 1
    %v626 = vor.u32 %v360, %v625
    %v627 = vrot.slane %v370, 1
    %v628 = vor.u32 %v367, %v627
    %v629 = vrot.slane %v377, 1
    %v630 = vor.u32 %v374, %v629
    %v631 = vrot.slane %v384, 1
    %v632 = vor.u32 %v381, %v631
    %v633 = vrot.slane %v391, 1
    %v634 = vor.u32 %v388, %v633
    %v635 = vrot.slane %v398, 1
    %v636 = vor.u32 %v395, %v635
    %v637 = vrot.slane %v405, 1
    %v638 = vor.u32 %v402, %v637
    %v639 = vrot.slane %v412, 1
    %v640 = vor.u32 %v409, %v639
    %v641 = vrot.slane %v419, 1
    %v642 = vor.u32 %v416, %v641
    %v643 = vrot.slane %v426, 1
    %v644 = vor.u32 %v423, %v643
    %v645 = vrot.slane %v433, 1
    %v646 = vor.u32 %v430, %v645
    %v647 = vrot.slane %v440, 1
    %v648 = vor.u32 %v437, %v647
    %v649 = vrot.slane %v447, 1
    %v650 = vor.u32 %v444, %v649
    %v651 = vrot.slane %v454, 1
    %v652 = vor.u32 %v451, %v651
    %v653 = vrot.slane %v461, 1
    %v654 = vor.u32 %v458, %v653
    %v655 = vrot.slane %v468, 1
    %v656 = vor.u32 %v465, %v655
    %v657 = vrot.slane %v475, 1
    %v658 = vor.u32 %v472, %v657
    %v659 = vrot.slane %v482, 1
    %v660 = vor.u32 %v479, %v659
    %v661 = vrot.slane %v489, 1
    %v662 = vor.u32 %v486, %v661
    %v663 = vrot.slane %v496, 1
    %v664 = vor.u32 %v493, %v663
    %v665 = vrot.slane %v503, 1
    %v666 = vor.u32 %v500, %v665
    %v667 = vrot.slane %v510, 1
    %v668 = vor.u32 %v507, %v667
    %v669 = vrot.slane %v517, 1
    %v670 = vor.u32 %v514, %v669
    %v671 = vrot.slane %v524, 1
    %v672 = vor.u32 %v521, %v671
    %v673 = vrot.slane %v531, 1
    %v674 = vor.u32 %v528, %v673
    %v675 = vrot.slane %v538, 1
    %v676 = vor.u32 %v535, %v675
    %v677 = vrot.slane %v545, 1
    %v678 = vor.u32 %v542, %v677
    %vm711 = vcmask 1047552
    %vm712 = vsmask.f32 7424
    %vm713 = vmand %vm711, %vm712
    %v714 = vsel %vm713, %v616, 0
    %v715 = vsel %vm713, %v618, 0
    %v716 = vsel %vm713, %v620, 0
    %v717 = vsel %vm713, %v622, 0
    %v718 = vsel %vm713, %v624, 0
    %v719 = vsel %vm713, %v626, 0
    %v720 = vsel %vm713, %v628, 0
    %v721 = vsel %vm713, %v630, 0
    %v722 = vsel %vm713, %v632, 0
    %v723 = vsel %vm713, %v634, 0
    %v724 = vsel %vm713, %v636, 0
    %v725 = vsel %vm713, %v638, 0
    %v726 = vsel %vm713, %v640, 0
    %v727 = vsel %vm713, %v642, 0
    %v728 = vsel %vm713, %v644, 0
    %v729 = vsel %vm713, %v646, 0
    %v730 = vsel %vm713, %v648, 0
    %v731 = vsel %vm713, %v650, 0
    %v732 = vsel %vm713, %v652, 0
    %v733 = vsel %vm713, %v654, 0
    %v734 = vsel %vm713, %v656, 0
    %v735 = vsel %vm713, %v658, 0
    %v736 = vsel %vm713, %v660, 0
    %v737 = vsel %vm713, %v662, 0
    %v738 = vsel %vm713, %v664, 0
    %v739 = vsel %vm713, %v666, 0
    %v740 = vsel %vm713, %v668, 0
    %v741 = vsel %vm713, %v670, 0
    %v742 = vsel %vm713, %v672, 0
    %v743 = vsel %vm713, %v674, 0
    %v744 = vsel %vm713, %v676, 0
    %v745 = vsel %vm713, %v678, 0
    %v810 = vunpack.c.l.b16 %v583
    %v811 = vunpack.c.l.b16 %v714
    %v812 = vunpack.c.h.b16 %v583
    %v813 = vunpack.c.h.b16 %v714
    %v814 = vunpack.c.l.b16 %v584
    %v815 = vunpack.c.l.b16 %v715
    %v816 = vunpack.c.h.b16 %v584
    %v817 = vunpack.c.h.b16 %v715
    %v818 = vunpack.c.l.b16 %v585
    %v819 = vunpack.c.l.b16 %v716
    %v820 = vunpack.c.h.b16 %v585
    %v821 = vunpack.c.h.b16 %v716
    %v822 = vunpack.c.l.b16 %v586
    %v823 = vunpack.c.l.b16 %v717
    %v824 = vunpack.c.h.b16 %v586
    %v825 = vunpack.c.h.b16 %v717
    %v826 = vunpack.c.l.b16 %v587
    %v827 = vunpack.c.l.b16 %v718
    %v828 = vunpack.c.h.b16 %v587
    %v829 = vunpack.c.h.b16 %v718
    %v830 = vunpack.c.l.b16 %v588
    %v831 = vunpack.c.l.b16 %v719
    %v832 = vunpack.c.h.b16 %v588
    %v833 = vunpack.c.h.b16 %v719
    %v834 = vunpack.c.l.b16 %v589
    %v835 = vunpack.c.l.b16 %v720
    %v836 = vunpack.c.h.b16 %v589
    %v837 = vunpack.c.h.b16 %v720
    %v838 = vunpack.c.l.b16 %v590
    %v839 = vunpack.c.l.b16 %v721
    %v840 = vunpack.c.h.b16 %v590
    %v841 = vunpack.c.h.b16 %v721
    %v842 = vunpack.c.l.b16 %v591
    %v843 = vunpack.c.l.b16 %v722
    %v844 = vunpack.c.h.b16 %v591
    %v845 = vunpack.c.h.b16 %v722
    %v846 = vunpack.c.l.b16 %v592
    %v847 = vunpack.c.l.b16 %v723
    %v848 = vunpack.c.h.b16 %v592
    %v849 = vunpack.c.h.b16 %v723
    %v850 = vunpack.c.l.b16 %v593
    %v851 = vunpack.c.l.b16 %v724
    %v852 = vunpack.c.h.b16 %v593
    %v853 = vunpack.c.h.b16 %v724
    %v854 = vunpack.c.l.b16 %v594
    %v855 = vunpack.c.l.b16 %v725
    %v856 = vunpack.c.h.b16 %v594
    %v857 = vunpack.c.h.b16 %v725
    %v858 = vunpack.c.l.b16 %v595
    %v859 = vunpack.c.l.b16 %v726
    %v860 = vunpack.c.h.b16 %v595
    %v861 = vunpack.c.h.b16 %v726
    %v862 = vunpack.c.l.b16 %v596
    %v863 = vunpack.c.l.b16 %v727
    %v864 = vunpack.c.h.b16 %v596
    %v865 = vunpack.c.h.b16 %v727
    %v866 = vunpack.c.l.b16 %v597
    %v867 = vunpack.c.l.b16 %v728
    %v868 = vunpack.c.h.b16 %v597
    %v869 = vunpack.c.h.b16 %v728
    %v870 = vunpack.c.l.b16 %v598
    %v871 = vunpack.c.l.b16 %v729
    %v872 = vunpack.c.h.b16 %v598
    %v873 = vunpack.c.h.b16 %v729
    %v874 = vunpack.c.l.b16 %v599
    %v875 = vunpack.c.l.b16 %v730
    %v876 = vunpack.c.h.b16 %v599
    %v877 = vunpack.c.h.b16 %v730
    %v878 = vunpack.c.l.b16 %v600
    %v879 = vunpack.c.l.b16 %v731
    %v880 = vunpack.c.h.b16 %v600
    %v881 = vunpack.c.h.b16 %v731
    %v882 = vunpack.c.l.b16 %v601
    %v883 = vunpack.c.l.b16 %v732
    %v884 = vunpack.c.h.b16 %v601
    %v885 = vunpack.c.h.b16 %v732
    %v886 = vunpack.c.l.b16 %v602
    %v887 = vunpack.c.l.b16 %v733
    %v888 = vunpack.c.h.b16 %v602
    %v889 = vunpack.c.h.b16 %v733
    %v890 = vunpack.c.l.b16 %v603
    %v891 = vunpack.c.l.b16 %v734
    %v892 = vunpack.c.h.b16 %v603
    %v893 = vunpack.c.h.b16 %v734
    %v894 = vunpack.c.l.b16 %v604
    %v895 = vunpack.c.l.b16 %v735
    %v896 = vunpack.c.h.b16 %v604
    %v897 = vunpack.c.h.b16 %v735
    %v898 = vunpack.c.l.b16 %v605
    %v899 = vunpack.c.l.b16 %v736
    %v900 = vunpack.c.h.b16 %v605
    %v901 = vunpack.c.h.b16 %v736
    %v902 = vunpack.c.l.b16 %v606
    %v903 = vunpack.c.l.b16 %v737
    %v904 = vunpack.c.h.b16 %v606
    %v905 = vunpack.c.h.b16 %v737
    %v906 = vunpack.c.l.b16 %v607
    %v907 = vunpack.c.l.b16 %v738
    %v908 = vunpack.c.h.b16 %v607
    %v909 = vunpack.c.h.b16 %v738
    %v910 = vunpack.c.l.b16 %v608
    %v911 = vunpack.c.l.b16 %v739
    %v912 = vunpack.c.h.b16 %v608
    %v913 = vunpack.c.h.b16 %v739
    %v914 = vunpack.c.l.b16 %v609
    %v915 = vunpack.c.l.b16 %v740
    %v916 = vunpack.c.h.b16 %v609
    %v917 = vunpack.c.h.b16 %v740
    %v918 = vunpack.c.l.b16 %v610
    %v919 = vunpack.c.l.b16 %v741
    %v920 = vunpack.c.h.b16 %v610
    %v921 = vunpack.c.h.b16 %v741
    %v922 = vunpack.c.l.b16 %v611
    %v923 = vunpack.c.l.b16 %v742
    %v924 = vunpack.c.h.b16 %v611
    %v925 = vunpack.c.h.b16 %v742
    %v926 = vunpack.c.l.b16 %v612
    %v927 = vunpack.c.l.b16 %v743
    %v928 = vunpack.c.h.b16 %v612
    %v929 = vunpack.c.h.b16 %v743
    %v930 = vunpack.c.l.b16 %v613
    %v931 = vunpack.c.l.b16 %v744
    %v932 = vunpack.c.h.b16 %v613
    %v933 = vunpack.c.h.b16 %v744
    %v934 = vunpack.c.l.b16 %v614
    %v935 = vunpack.c.l.b16 %v745
    %v936 = vunpack.c.h.b16 %v614
    %v937 = vunpack.c.h.b16 %v745
    %v938 = vpack.c.b16 %v228, %v810
    %v939 = vpack.c.b16 %v811, %v811
    %v940 = vpack.c.b16 %v229, %v812
    %v941 = vpack.c.b16 %v813, %v813
    %v942 = vpack.c.b16 %v230, %v814
    %v943 = vpack.c.b16 %v815, %v815
    %v944 = vpack.c.b16 %v231, %v816
    %v945 = vpack.c.b16 %v817, %v817
    %v946 = vpack.c.b16 %v232, %v818
    %v947 = vpack.c.b16 %v819, %v819
    %v948 = vpack.c.b16 %v233, %v820
    %v949 = vpack.c.b16 %v821, %v821
    %v950 = vpack.c.b16 %v234, %v822
    %v951 = vpack.c.b16 %v823, %v823
    %v952 = vpack.c.b16 %v235, %v824
    %v953 = vpack.c.b16 %v825, %v825
    %v954 = vpack.c.b16 %v236, %v826
    %v955 = vpack.c.b16 %v827, %v827
    %v956 = vpack.c.b16 %v237, %v828
    %v957 = vpack.c.b16 %v829, %v829
    %v958 = vpack.c.b16 %v238, %v830
    %v959 = vpack.c.b16 %v831, %v831
    %v960 = vpack.c.b16 %v239, %v832
    %v961 = vpack.c.b16 %v833, %v833
    %v962 = vpack.c.b16 %v240, %v834
    %v963 = vpack.c.b16 %v835, %v835
    %v964 = vpack.c.b16 %v241, %v836
    %v965 = vpack.c.b16 %v837, %v837
    %v966 = vpack.c.b16 %v242, %v838
    %v967 = vpack.c.b16 %v839, %v839
    %v968 = vpack.c.b16 %v243, %v840
    %v969 = vpack.c.b16 %v841, %v841
    %v970 = vpack.c.b16 %v244, %v842
    %v971 = vpack.c.b16 %v843, %v843
    %v972 = vpack.c.b16 %v245, %v844
    %v973 = vpack.c.b16 %v845, %v845
    %v974 = vpack.c.b16 %v246, %v846
    %v975 = vpack.c.b16 %v847, %v847
    %v976 = vpack.c.b16 %v247, %v848
    %v977 = vpack.c.b16 %v849, %v849
    %v978 = vpack.c.b16 %v248, %v850
    %v979 = vpack.c.b16 %v851, %v851
    %v980 = vpack.c.b16 %v249, %v852
    %v981 = vpack.c.b16 %v853, %v853
    %v982 = vpack.c.b16 %v250, %v854
    %v983 = vpack.c.b16 %v855, %v855
    %v984 = vpack.c.b16 %v251, %v856
    %v985 = vpack.c.b16 %v857, %v857
    %v986 = vpack.c.b16 %v252, %v858
    %v987 = vpack.c.b16 %v859, %v859
    %v988 = vpack.c.b16 %v253, %v860
    %v989 = vpack.c.b16 %v861, %v861
    %v990 = vpack.c.b16 %v254, %v862
    %v991 = vpack.c.b16 %v863, %v863
    %v992 = vpack.c.b16 %v255, %v864
    %v993 = vpack.c.b16 %v865, %v865
    %v994 = vpack.c.b16 %v256, %v866
    %v995 = vpack.c.b16 %v867, %v867
    %v996 = vpack.c.b16 %v257, %v868
    %v997 = vpack.c.b16 %v869, %v869
    %v998 = vpack.c.b16 %v258, %v870
    %v999 = vpack.c.b16 %v871, %v871
    %v1000 = vpack.c.b16 %v259, %v872
    %v1001 = vpack.c.b16 %v873, %v873
    %v1002 = vpack.c.b16 %v260, %v874
    %v1003 = vpack.c.b16 %v875, %v875
    %v1004 = vpack.c.b16 %v261, %v876
    %v1005 = vpack.c.b16 %v877, %v877
    %v1006 = vpack.c.b16 %v262, %v878
    %v1007 = vpack.c.b16 %v879, %v879
    %v1008 = vpack.c.b16 %v263, %v880
    %v1009 = vpack.c.b16 %v881, %v881
    %v1010 = vpack.c.b16 %v264, %v882
    %v1011 = vpack.c.b16 %v883, %v883
    %v1012 = vpack.c.b16 %v265, %v884
    %v1013 = vpack.c.b16 %v885, %v885
    %v1014 = vpack.c.b16 %v266, %v886
    %v1015 = vpack.c.b16 %v887, %v887
    %v1016 = vpack.c.b16 %v267, %v888
    %v1017 = vpack.c.b16 %v889, %v889
    %v1018 = vpack.c.b16 %v268, %v890
    %v1019 = vpack.c.b16 %v891, %v891
    %v1020 = vpack.c.b16 %v269, %v892
    %v1021 = vpack.c.b16 %v893, %v893
    %v1022 = vpack.c.b16 %v270, %v894
    %v1023 = vpack.c.b16 %v895, %v895
    %v1024 = vpack.c.b16 %v271, %v896
    %v1025 = vpack.c.b16 %v897, %v897
    %v1026 = vpack.c.b16 %v272, %v898
    %v1027 = vpack.c.b16 %v899, %v899
    %v1028 = vpack.c.b16 %v273, %v900
    %v1029 = vpack.c.b16 %v901, %v901
    %v1030 = vpack.c.b16 %v274, %v902
    %v1031 = vpack.c.b16 %v903, %v903
    %v1032 = vpack.c.b16 %v275, %v904
    %v1033 = vpack.c.b16 %v905, %v905
    %v1034 = vpack.c.b16 %v276, %v906
    %v1035 = vpack.c.b16 %v907, %v907
    %v1036 = vpack.c.b16 %v277, %v908
    %v1037 = vpack.c.b16 %v909, %v909
    %v1038 = vpack.c.b16 %v278, %v910
    %v1039 = vpack.c.b16 %v911, %v911
    %v1040 = vpack.c.b16 %v279, %v912
    %v1041 = vpack.c.b16 %v913, %v913
    %v1042 = vpack.c.b16 %v280, %v914
    %v1043 = vpack.c.b16 %v915, %v915
    %v1044 = vpack.c.b16 %v281, %v916
    %v1045 = vpack.c.b16 %v917, %v917
    %v1046 = vpack.c.b16 %v282, %v918
    %v1047 = vpack.c.b16 %v919, %v919
    %v1048 = vpack.c.b16 %v283, %v920
    %v1049 = vpack.c.b16 %v921, %v921
    %v1050 = vpack.c.b16 %v284, %v922
    %v1051 = vpack.c.b16 %v923, %v923
    %v1052 = vpack.c.b16 %v285, %v924
    %v1053 = vpack.c.b16 %v925, %v925
    %v1054 = vpack.c.b16 %v286, %v926
    %v1055 = vpack.c.b16 %v927, %v927
    %v1056 = vpack.c.b16 %v287, %v928
    %v1057 = vpack.c.b16 %v929, %v929
    %v1058 = vpack.c.b16 %v288, %v930
    %v1059 = vpack.c.b16 %v931, %v931
    %v1060 = vpack.c.b16 %v289, %v932
    %v1061 = vpack.c.b16 %v933, %v933
    %v1062 = vpack.c.b16 %v290, %v934
    %v1063 = vpack.c.b16 %v935, %v935
    %v1064 = vpack.c.b16 %v291, %v936
    %v1065 = vpack.c.b16 %v937, %v937
    %s1194 = scalar_lea.vmem [#allocation2], 24
    %1195 = vst [vmem:[%s1194] sm:$0xff] %v938
    %1196 = vst [vmem:[%s1194 + $0x8] sm:$0xf] %v939
    %1197 = vst [vmem:[%s1194 + $0xc] sm:$0xff] %v940
    %1198 = vst [vmem:[%s1194 + $0x14] sm:$0xf] %v941
    %1199 = vst [vmem:[%s1194 + $0x18] sm:$0xff] %v942
    %1200 = vst [vmem:[%s1194 + $0x20] sm:$0xf] %v943
    %1201 = vst [vmem:[%s1194 + $0x24] sm:$0xff] %v944
    %1202 = vst [vmem:[%s1194 + $0x2c] sm:$0xf] %v945
    %1203 = vst [vmem:[%s1194 + $0x30] sm:$0xff] %v946
    %1204 = vst [vmem:[%s1194 + $0x38] sm:$0xf] %v947
    %1205 = vst [vmem:[%s1194 + $0x3c] sm:$0xff] %v948
    %1206 = vst [vmem:[%s1194 + $0x44] sm:$0xf] %v949
    %1207 = vst [vmem:[%s1194 + $0x48] sm:$0xff] %v950
    %1208 = vst [vmem:[%s1194 + $0x50] sm:$0xf] %v951
    %1209 = vst [vmem:[%s1194 + $0x54] sm:$0xff] %v952
    %1210 = vst [vmem:[%s1194 + $0x5c] sm:$0xf] %v953
    %1211 = vst [vmem:[%s1194 + $0x60] sm:$0xff] %v954
    %1212 = vst [vmem:[%s1194 + $0x68] sm:$0xf] %v955
    %1213 = vst [vmem:[%s1194 + $0x6c] sm:$0xff] %v956
    %1214 = vst [vmem:[%s1194 + $0x74] sm:$0xf] %v957
    %1215 = vst [vmem:[%s1194 + $0x78] sm:$0xff] %v958
    %1216 = vst [vmem:[%s1194 + $0x80] sm:$0xf] %v959
    %1217 = vst [vmem:[%s1194 + $0x84] sm:$0xff] %v960
    %1218 = vst [vmem:[%s1194 + $0x8c] sm:$0xf] %v961
    %1219 = vst [vmem:[%s1194 + $0x90] sm:$0xff] %v962
    %1220 = vst [vmem:[%s1194 + $0x98] sm:$0xf] %v963
    %1221 = vst [vmem:[%s1194 + $0x9c] sm:$0xff] %v964
    %1222 = vst [vmem:[%s1194 + $0xa4] sm:$0xf] %v965
    %1223 = vst [vmem:[%s1194 + $0xa8] sm:$0xff] %v966
    %1224 = vst [vmem:[%s1194 + $0xb0] sm:$0xf] %v967
    %1225 = vst [vmem:[%s1194 + $0xb4] sm:$0xff] %v968
    %1226 = vst [vmem:[%s1194 + $0xbc] sm:$0xf] %v969
    %1227 = vst [vmem:[%s1194 + $0xc0] sm:$0xff] %v970
    %1228 = vst [vmem:[%s1194 + $0xc8] sm:$0xf] %v971
    %1229 = vst [vmem:[%s1194 + $0xcc] sm:$0xff] %v972
    %1230 = vst [vmem:[%s1194 + $0xd4] sm:$0xf] %v973
    %1231 = vst [vmem:[%s1194 + $0xd8] sm:$0xff] %v974
    %1232 = vst [vmem:[%s1194 + $0xe0] sm:$0xf] %v975
    %1233 = vst [vmem:[%s1194 + $0xe4] sm:$0xff] %v976
    %1234 = vst [vmem:[%s1194 + $0xec] sm:$0xf] %v977
    %1235 = vst [vmem:[%s1194 + $0xf0] sm:$0xff] %v978
    %1236 = vst [vmem:[%s1194 + $0xf8] sm:$0xf] %v979
    %1237 = vst [vmem:[%s1194 + $0xfc] sm:$0xff] %v980
    %1238 = vst [vmem:[%s1194 + $0x104] sm:$0xf] %v981
    %1239 = vst [vmem:[%s1194 + $0x108] sm:$0xff] %v982
    %1240 = vst [vmem:[%s1194 + $0x110] sm:$0xf] %v983
    %1241 = vst [vmem:[%s1194 + $0x114] sm:$0xff] %v984
    %1242 = vst [vmem:[%s1194 + $0x11c] sm:$0xf] %v985
    %1243 = vst [vmem:[%s1194 + $0x120] sm:$0xff] %v986
    %1244 = vst [vmem:[%s1194 + $0x128] sm:$0xf] %v987
    %1245 = vst [vmem:[%s1194 + $0x12c] sm:$0xff] %v988
    %1246 = vst [vmem:[%s1194 + $0x134] sm:$0xf] %v989
    %1247 = vst [vmem:[%s1194 + $0x138] sm:$0xff] %v990
    %1248 = vst [vmem:[%s1194 + $0x140] sm:$0xf] %v991
    %1249 = vst [vmem:[%s1194 + $0x144] sm:$0xff] %v992
    %1250 = vst [vmem:[%s1194 + $0x14c] sm:$0xf] %v993
    %1251 = vst [vmem:[%s1194 + $0x150] sm:$0xff] %v994
    %1252 = vst [vmem:[%s1194 + $0x158] sm:$0xf] %v995
    %1253 = vst [vmem:[%s1194 + $0x15c] sm:$0xff] %v996
    %1254 = vst [vmem:[%s1194 + $0x164] sm:$0xf] %v997
    %1255 = vst [vmem:[%s1194 + $0x168] sm:$0xff] %v998
    %1256 = vst [vmem:[%s1194 + $0x170] sm:$0xf] %v999
    %1257 = vst [vmem:[%s1194 + $0x174] sm:$0xff] %v1000
    %1258 = vst [vmem:[%s1194 + $0x17c] sm:$0xf] %v1001
    %1259 = vst [vmem:[%s1194 + $0x1b0] sm:$0xff] %v1002
    %1260 = vst [vmem:[%s1194 + $0x1b8] sm:$0xf] %v1003
    %1261 = vst [vmem:[%s1194 + $0x1bc] sm:$0xff] %v1004
    %1262 = vst [vmem:[%s1194 + $0x1c4] sm:$0xf] %v1005
    %1263 = vst [vmem:[%s1194 + $0x1c8] sm:$0xff] %v1006
    %1264 = vst [vmem:[%s1194 + $0x1d0] sm:$0xf] %v1007
    %1265 = vst [vmem:[%s1194 + $0x1d4] sm:$0xff] %v1008
    %1266 = vst [vmem:[%s1194 + $0x1dc] sm:$0xf] %v1009
    %1267 = vst [vmem:[%s1194 + $0x1e0] sm:$0xff] %v1010
    %1268 = vst [vmem:[%s1194 + $0x1e8] sm:$0xf] %v1011
    %1269 = vst [vmem:[%s1194 + $0x1ec] sm:$0xff] %v1012
    %1270 = vst [vmem:[%s1194 + $0x1f4] sm:$0xf] %v1013
    %1271 = vst [vmem:[%s1194 + $0x1f8] sm:$0xff] %v1014
    %1272 = vst [vmem:[%s1194 + $0x200] sm:$0xf] %v1015
    %1273 = vst [vmem:[%s1194 + $0x204] sm:$0xff] %v1016
    %1274 = vst [vmem:[%s1194 + $0x20c] sm:$0xf] %v1017
    %1275 = vst [vmem:[%s1194 + $0x210] sm:$0xff] %v1018
    %1276 = vst [vmem:[%s1194 + $0x218] sm:$0xf] %v1019
    %1277 = vst [vmem:[%s1194 + $0x21c] sm:$0xff] %v1020
    %1278 = vst [vmem:[%s1194 + $0x224] sm:$0xf] %v1021
    %1279 = vst [vmem:[%s1194 + $0x228] sm:$0xff] %v1022
    %1280 = vst [vmem:[%s1194 + $0x230] sm:$0xf] %v1023
    %1281 = vst [vmem:[%s1194 + $0x234] sm:$0xff] %v1024
    %1282 = vst [vmem:[%s1194 + $0x23c] sm:$0xf] %v1025
    %1283 = vst [vmem:[%s1194 + $0x240] sm:$0xff] %v1026
    %1284 = vst [vmem:[%s1194 + $0x248] sm:$0xf] %v1027
    %1285 = vst [vmem:[%s1194 + $0x24c] sm:$0xff] %v1028
    %1286 = vst [vmem:[%s1194 + $0x254] sm:$0xf] %v1029
    %1287 = vst [vmem:[%s1194 + $0x258] sm:$0xff] %v1030
    %1288 = vst [vmem:[%s1194 + $0x260] sm:$0xf] %v1031
    %1289 = vst [vmem:[%s1194 + $0x264] sm:$0xff] %v1032
    %1290 = vst [vmem:[%s1194 + $0x26c] sm:$0xf] %v1033
    %1291 = vst [vmem:[%s1194 + $0x270] sm:$0xff] %v1034
    %1292 = vst [vmem:[%s1194 + $0x278] sm:$0xf] %v1035
    %1293 = vst [vmem:[%s1194 + $0x27c] sm:$0xff] %v1036
    %1294 = vst [vmem:[%s1194 + $0x284] sm:$0xf] %v1037
    %1295 = vst [vmem:[%s1194 + $0x288] sm:$0xff] %v1038
    %1296 = vst [vmem:[%s1194 + $0x290] sm:$0xf] %v1039
    %1297 = vst [vmem:[%s1194 + $0x294] sm:$0xff] %v1040
    %1298 = vst [vmem:[%s1194 + $0x29c] sm:$0xf] %v1041
    %1299 = vst [vmem:[%s1194 + $0x2a0] sm:$0xff] %v1042
    %1300 = vst [vmem:[%s1194 + $0x2a8] sm:$0xf] %v1043
    %1301 = vst [vmem:[%s1194 + $0x2ac] sm:$0xff] %v1044
    %1302 = vst [vmem:[%s1194 + $0x2b4] sm:$0xf] %v1045
    %1303 = vst [vmem:[%s1194 + $0x2b8] sm:$0xff] %v1046
    %1304 = vst [vmem:[%s1194 + $0x2c0] sm:$0xf] %v1047
    %1305 = vst [vmem:[%s1194 + $0x2c4] sm:$0xff] %v1048
    %1306 = vst [vmem:[%s1194 + $0x2cc] sm:$0xf] %v1049
    %1307 = vst [vmem:[%s1194 + $0x2d0] sm:$0xff] %v1050
    %1308 = vst [vmem:[%s1194 + $0x2d8] sm:$0xf] %v1051
    %1309 = vst [vmem:[%s1194 + $0x2dc] sm:$0xff] %v1052
    %1310 = vst [vmem:[%s1194 + $0x2e4] sm:$0xf] %v1053
    %1311 = vst [vmem:[%s1194 + $0x2e8] sm:$0xff] %v1054
    %1312 = vst [vmem:[%s1194 + $0x2f0] sm:$0xf] %v1055
    %1313 = vst [vmem:[%s1194 + $0x2f4] sm:$0xff] %v1056
    %1314 = vst [vmem:[%s1194 + $0x2fc] sm:$0xf] %v1057
    %1315 = vst [vmem:[%s1194 + $0x300] sm:$0xff] %v1058
    %1316 = vst [vmem:[%s1194 + $0x308] sm:$0xf] %v1059
    %1317 = vst [vmem:[%s1194 + $0x30c] sm:$0xff] %v1060
    %1318 = vst [vmem:[%s1194 + $0x314] sm:$0xf] %v1061
    %1319 = vst [vmem:[%s1194 + $0x318] sm:$0xff] %v1062
    %1320 = vst [vmem:[%s1194 + $0x320] sm:$0xf] %v1063
    %1321 = vst [vmem:[%s1194 + $0x324] sm:$0xff] %v1064
    %1322 = vst [vmem:[%s1194 + $0x32c] sm:$0xf] %v1065
    %v1323 = vld [vmem:[%s2] sm:$0x1]
    %v1324 = vld [vmem:[#allocation2] sm:$0xff]
    %v1325 = vld [vmem:[#allocation2 + $0x8] sm:$0xf]
    %v1326 = vld [vmem:[#allocation2 + $0xc] sm:$0xff]
    %v1327 = vld [vmem:[#allocation2 + $0x14] sm:$0xf]
    %v1328 = vld [vmem:[#allocation2 + $0x18] sm:$0xff]
    %v1329 = vld [vmem:[#allocation2 + $0x20] sm:$0xf]
    %v1330 = vld [vmem:[#allocation2 + $0x24] sm:$0xff]
    %v1331 = vld [vmem:[#allocation2 + $0x2c] sm:$0xf]
    %v1332 = vld [vmem:[#allocation2 + $0x30] sm:$0xff]
    %v1333 = vld [vmem:[#allocation2 + $0x38] sm:$0xf]
    %v1334 = vld [vmem:[#allocation2 + $0x3c] sm:$0xff]
    %v1335 = vld [vmem:[#allocation2 + $0x44] sm:$0xf]
    %v1336 = vld [vmem:[#allocation2 + $0x48] sm:$0xff]
    %v1337 = vld [vmem:[#allocation2 + $0x50] sm:$0xf]
    %v1338 = vld [vmem:[#allocation2 + $0x54] sm:$0xff]
    %v1339 = vld [vmem:[#allocation2 + $0x5c] sm:$0xf]
    %v1340 = vld [vmem:[#allocation2 + $0x60] sm:$0xff]
    %v1341 = vld [vmem:[#allocation2 + $0x68] sm:$0xf]
    %v1342 = vld [vmem:[#allocation2 + $0x6c] sm:$0xff]
    %v1343 = vld [vmem:[#allocation2 + $0x74] sm:$0xf]
    %v1344 = vld [vmem:[#allocation2 + $0x78] sm:$0xff]
    %v1345 = vld [vmem:[#allocation2 + $0x80] sm:$0xf]
    %v1346 = vld [vmem:[#allocation2 + $0x84] sm:$0xff]
    %v1347 = vld [vmem:[#allocation2 + $0x8c] sm:$0xf]
    %v1348 = vld [vmem:[#allocation2 + $0x90] sm:$0xff]
    %v1349 = vld [vmem:[#allocation2 + $0x98] sm:$0xf]
    %v1350 = vld [vmem:[#allocation2 + $0x9c] sm:$0xff]
    %v1351 = vld [vmem:[#allocation2 + $0xa4] sm:$0xf]
    %v1352 = vld [vmem:[#allocation2 + $0xa8] sm:$0xff]
    %v1353 = vld [vmem:[#allocation2 + $0xb0] sm:$0xf]
    %v1354 = vld [vmem:[#allocation2 + $0xb4] sm:$0xff]
    %v1355 = vld [vmem:[#allocation2 + $0xbc] sm:$0xf]
    %v1356 = vld [vmem:[#allocation2 + $0xc0] sm:$0xff]
    %v1357 = vld [vmem:[#allocation2 + $0xc8] sm:$0xf]
    %v1358 = vld [vmem:[#allocation2 + $0xcc] sm:$0xff]
    %v1359 = vld [vmem:[#allocation2 + $0xd4] sm:$0xf]
    %v1360 = vld [vmem:[#allocation2 + $0xd8] sm:$0xff]
    %v1361 = vld [vmem:[#allocation2 + $0xe0] sm:$0xf]
    %v1362 = vld [vmem:[#allocation2 + $0xe4] sm:$0xff]
    %v1363 = vld [vmem:[#allocation2 + $0xec] sm:$0xf]
    %v1364 = vld [vmem:[#allocation2 + $0xf0] sm:$0xff]
    %v1365 = vld [vmem:[#allocation2 + $0xf8] sm:$0xf]
    %v1366 = vld [vmem:[#allocation2 + $0xfc] sm:$0xff]
    %v1367 = vld [vmem:[#allocation2 + $0x104] sm:$0xf]
    %v1368 = vld [vmem:[#allocation2 + $0x108] sm:$0xff]
    %v1369 = vld [vmem:[#allocation2 + $0x110] sm:$0xf]
    %v1370 = vld [vmem:[#allocation2 + $0x114] sm:$0xff]
    %v1371 = vld [vmem:[#allocation2 + $0x11c] sm:$0xf]
    %v1372 = vld [vmem:[#allocation2 + $0x120] sm:$0xff]
    %v1373 = vld [vmem:[#allocation2 + $0x128] sm:$0xf]
    %v1374 = vld [vmem:[#allocation2 + $0x12c] sm:$0xff]
    %v1375 = vld [vmem:[#allocation2 + $0x134] sm:$0xf]
    %v1376 = vld [vmem:[#allocation2 + $0x138] sm:$0xff]
    %v1377 = vld [vmem:[#allocation2 + $0x140] sm:$0xf]
    %v1378 = vld [vmem:[#allocation2 + $0x144] sm:$0xff]
    %v1379 = vld [vmem:[#allocation2 + $0x14c] sm:$0xf]
    %v1380 = vld [vmem:[#allocation2 + $0x150] sm:$0xff]
    %v1381 = vld [vmem:[#allocation2 + $0x158] sm:$0xf]
    %v1382 = vld [vmem:[#allocation2 + $0x15c] sm:$0xff]
    %v1383 = vld [vmem:[#allocation2 + $0x164] sm:$0xf]
    %v1384 = vld [vmem:[#allocation2 + $0x168] sm:$0xff]
    %v1385 = vld [vmem:[#allocation2 + $0x170] sm:$0xf]
    %v1386 = vld [vmem:[#allocation2 + $0x174] sm:$0xff]
    %v1387 = vld [vmem:[#allocation2 + $0x17c] sm:$0xf]
    %v1388 = vld [vmem:[#allocation2 + $0x1b0] sm:$0xff]
    %v1389 = vld [vmem:[#allocation2 + $0x1b8] sm:$0xf]
    %v1390 = vld [vmem:[#allocation2 + $0x1bc] sm:$0xff]
    %v1391 = vld [vmem:[#allocation2 + $0x1c4] sm:$0xf]
    %v1392 = vld [vmem:[#allocation2 + $0x1c8] sm:$0xff]
    %v1393 = vld [vmem:[#allocation2 + $0x1d0] sm:$0xf]
    %v1394 = vld [vmem:[#allocation2 + $0x1d4] sm:$0xff]
    %v1395 = vld [vmem:[#allocation2 + $0x1dc] sm:$0xf]
    %v1396 = vld [vmem:[#allocation2 + $0x1e0] sm:$0xff]
    %v1397 = vld [vmem:[#allocation2 + $0x1e8] sm:$0xf]
    %v1398 = vld [vmem:[#allocation2 + $0x1ec] sm:$0xff]
    %v1399 = vld [vmem:[#allocation2 + $0x1f4] sm:$0xf]
    %v1400 = vld [vmem:[#allocation2 + $0x1f8] sm:$0xff]
    %v1401 = vld [vmem:[#allocation2 + $0x200] sm:$0xf]
    %v1402 = vld [vmem:[#allocation2 + $0x204] sm:$0xff]
    %v1403 = vld [vmem:[#allocation2 + $0x20c] sm:$0xf]
    %v1404 = vld [vmem:[#allocation2 + $0x210] sm:$0xff]
    %v1405 = vld [vmem:[#allocation2 + $0x218] sm:$0xf]
    %v1406 = vld [vmem:[#allocation2 + $0x21c] sm:$0xff]
    %v1407 = vld [vmem:[#allocation2 + $0x224] sm:$0xf]
    %v1408 = vld [vmem:[#allocation2 + $0x228] sm:$0xff]
    %v1409 = vld [vmem:[#allocation2 + $0x230] sm:$0xf]
    %v1410 = vld [vmem:[#allocation2 + $0x234] sm:$0xff]
    %v1411 = vld [vmem:[#allocation2 + $0x23c] sm:$0xf]
    %v1412 = vld [vmem:[#allocation2 + $0x240] sm:$0xff]
    %v1413 = vld [vmem:[#allocation2 + $0x248] sm:$0xf]
    %v1414 = vld [vmem:[#allocation2 + $0x24c] sm:$0xff]
    %v1415 = vld [vmem:[#allocation2 + $0x254] sm:$0xf]
    %v1416 = vld [vmem:[#allocation2 + $0x258] sm:$0xff]
    %v1417 = vld [vmem:[#allocation2 + $0x260] sm:$0xf]
    %v1418 = vld [vmem:[#allocation2 + $0x264] sm:$0xff]
    %v1419 = vld [vmem:[#allocation2 + $0x26c] sm:$0xf]
    %v1420 = vld [vmem:[#allocation2 + $0x270] sm:$0xff]
    %v1421 = vld [vmem:[#allocation2 + $0x278] sm:$0xf]
    %v1422 = vld [vmem:[#allocation2 + $0x27c] sm:$0xff]
    %v1423 = vld [vmem:[#allocation2 + $0x284] sm:$0xf]
    %v1424 = vld [vmem:[#allocation2 + $0x288] sm:$0xff]
    %v1425 = vld [vmem:[#allocation2 + $0x290] sm:$0xf]
    %v1426 = vld [vmem:[#allocation2 + $0x294] sm:$0xff]
    %v1427 = vld [vmem:[#allocation2 + $0x29c] sm:$0xf]
    %v1428 = vld [vmem:[#allocation2 + $0x2a0] sm:$0xff]
    %v1429 = vld [vmem:[#allocation2 + $0x2a8] sm:$0xf]
    %v1430 = vld [vmem:[#allocation2 + $0x2ac] sm:$0xff]
    %v1431 = vld [vmem:[#allocation2 + $0x2b4] sm:$0xf]
    %v1432 = vld [vmem:[#allocation2 + $0x2b8] sm:$0xff]
    %v1433 = vld [vmem:[#allocation2 + $0x2c0] sm:$0xf]
    %v1434 = vld [vmem:[#allocation2 + $0x2c4] sm:$0xff]
    %v1435 = vld [vmem:[#allocation2 + $0x2cc] sm:$0xf]
    %v1436 = vld [vmem:[#allocation2 + $0x2d0] sm:$0xff]
    %v1437 = vld [vmem:[#allocation2 + $0x2d8] sm:$0xf]
    %v1438 = vld [vmem:[#allocation2 + $0x2dc] sm:$0xff]
    %v1439 = vld [vmem:[#allocation2 + $0x2e4] sm:$0xf]
    %v1440 = vld [vmem:[#allocation2 + $0x2e8] sm:$0xff]
    %v1441 = vld [vmem:[#allocation2 + $0x2f0] sm:$0xf]
    %v1442 = vld [vmem:[#allocation2 + $0x2f4] sm:$0xff]
    %v1443 = vld [vmem:[#allocation2 + $0x2fc] sm:$0xf]
    %v1444 = vld [vmem:[#allocation2 + $0x300] sm:$0xff]
    %v1445 = vld [vmem:[#allocation2 + $0x308] sm:$0xf]
    %v1446 = vld [vmem:[#allocation2 + $0x30c] sm:$0xff]
    %v1447 = vld [vmem:[#allocation2 + $0x314] sm:$0xf]
    %v1448 = vld [vmem:[#allocation2 + $0x318] sm:$0xff]
    %v1449 = vld [vmem:[#allocation2 + $0x320] sm:$0xf]
    %v1450 = vld [vmem:[#allocation2 + $0x324] sm:$0xff]
    %v1451 = vld [vmem:[#allocation2 + $0x32c] sm:$0xf]
    %v1452 = vld [vmem:[#allocation6] sm:$0xf]
    %v1453 = vld [vmem:[#allocation6 + $0x4] sm:$0xf]
    %v1454 = vld [vmem:[#allocation6 + $0x8] sm:$0xf]
    %v1455 = vld [vmem:[#allocation6 + $0xc] sm:$0xf]
    %v1456 = vld [vmem:[#allocation6 + $0x10] sm:$0xf]
    %v1457 = vld [vmem:[#allocation6 + $0x14] sm:$0xf]
    %v1458 = vld [vmem:[#allocation6 + $0x18] sm:$0xf]
    %v1459 = vld [vmem:[#allocation6 + $0x1c] sm:$0xf]
    %v1460 = vld [vmem:[#allocation6 + $0x20] sm:$0xf]
    %v1461 = vld [vmem:[#allocation6 + $0x24] sm:$0xf]
    %v1462 = vld [vmem:[#allocation6 + $0x28] sm:$0xf]
    %v1463 = vld [vmem:[#allocation6 + $0x2c] sm:$0xf]
    %v1464 = vld [vmem:[#allocation6 + $0x30] sm:$0xf]
    %v1465 = vld [vmem:[#allocation6 + $0x34] sm:$0xf]
    %v1466 = vld [vmem:[#allocation6 + $0x38] sm:$0xf]
    %v1467 = vld [vmem:[#allocation6 + $0x3c] sm:$0xf]
    %v1468 = vld [vmem:[#allocation6 + $0x40] sm:$0xf]
    %v1469 = vld [vmem:[#allocation6 + $0x44] sm:$0xf]
    %v1470 = vld [vmem:[#allocation6 + $0x48] sm:$0xf]
    %v1471 = vld [vmem:[#allocation6 + $0x4c] sm:$0xf]
    %v1472 = vld [vmem:[#allocation6 + $0x50] sm:$0xf]
    %v1473 = vld [vmem:[#allocation6 + $0x54] sm:$0xf]
    %v1474 = vld [vmem:[#allocation6 + $0x58] sm:$0xf]
    %v1475 = vld [vmem:[#allocation6 + $0x5c] sm:$0xf]
    %v1476 = vld [vmem:[#allocation6 + $0x60] sm:$0xf]
    %v1477 = vld [vmem:[#allocation6 + $0x64] sm:$0xf]
    %v1478 = vld [vmem:[#allocation6 + $0x68] sm:$0xf]
    %v1479 = vld [vmem:[#allocation6 + $0x6c] sm:$0xf]
    %v1480 = vld [vmem:[#allocation6 + $0x70] sm:$0xf]
    %v1481 = vld [vmem:[#allocation6 + $0x74] sm:$0xf]
    %v1482 = vld [vmem:[#allocation6 + $0x78] sm:$0xf]
    %v1483 = vld [vmem:[#allocation6 + $0x7c] sm:$0xf]
    %v1484 = vld [vmem:[#allocation6 + $0x80] sm:$0xf]
    %v1485 = vld [vmem:[#allocation6 + $0x84] sm:$0xf]
    %v1486 = vld [vmem:[#allocation6 + $0x88] sm:$0xf]
    %v1487 = vld [vmem:[#allocation6 + $0x8c] sm:$0xf]
    %v1488 = vld [vmem:[#allocation6 + $0x90] sm:$0xf]
    %v1489 = vld [vmem:[#allocation6 + $0x94] sm:$0xf]
    %v1490 = vld [vmem:[#allocation6 + $0x98] sm:$0xf]
    %v1491 = vld [vmem:[#allocation6 + $0x9c] sm:$0xf]
    %v1492 = vld [vmem:[#allocation6 + $0xa0] sm:$0xf]
    %v1493 = vld [vmem:[#allocation6 + $0xa4] sm:$0xf]
    %v1494 = vld [vmem:[#allocation6 + $0xa8] sm:$0xf]
    %v1495 = vld [vmem:[#allocation6 + $0xac] sm:$0xf]
    %v1496 = vld [vmem:[#allocation6 + $0xb0] sm:$0xf]
    %v1497 = vld [vmem:[#allocation6 + $0xb4] sm:$0xf]
    %v1498 = vld [vmem:[#allocation6 + $0xb8] sm:$0xf]
    %v1499 = vld [vmem:[#allocation6 + $0xbc] sm:$0xf]
    %v1500 = vld [vmem:[%s1194] sm:$0xff]
    %v1501 = vld [vmem:[%s1194 + $0x8] sm:$0xf]
    %v1502 = vld [vmem:[%s1194 + $0xc] sm:$0xff]
    %v1503 = vld [vmem:[%s1194 + $0x14] sm:$0xf]
    %v1504 = vld [vmem:[%s1194 + $0x18] sm:$0xff]
    %v1505 = vld [vmem:[%s1194 + $0x20] sm:$0xf]
    %v1506 = vld [vmem:[%s1194 + $0x24] sm:$0xff]
    %v1507 = vld [vmem:[%s1194 + $0x2c] sm:$0xf]
    %v1508 = vld [vmem:[%s1194 + $0x30] sm:$0xff]
    %v1509 = vld [vmem:[%s1194 + $0x38] sm:$0xf]
    %v1510 = vld [vmem:[%s1194 + $0x3c] sm:$0xff]
    %v1511 = vld [vmem:[%s1194 + $0x44] sm:$0xf]
    %v1512 = vld [vmem:[%s1194 + $0x48] sm:$0xff]
    %v1513 = vld [vmem:[%s1194 + $0x50] sm:$0xf]
    %v1514 = vld [vmem:[%s1194 + $0x54] sm:$0xff]
    %v1515 = vld [vmem:[%s1194 + $0x5c] sm:$0xf]
    %v1516 = vld [vmem:[%s1194 + $0x60] sm:$0xff]
    %v1517 = vld [vmem:[%s1194 + $0x68] sm:$0xf]
    %v1518 = vld [vmem:[%s1194 + $0x6c] sm:$0xff]
    %v1519 = vld [vmem:[%s1194 + $0x74] sm:$0xf]
    %v1520 = vld [vmem:[%s1194 + $0x78] sm:$0xff]
    %v1521 = vld [vmem:[%s1194 + $0x80] sm:$0xf]
    %v1522 = vld [vmem:[%s1194 + $0x84] sm:$0xff]
    %v1523 = vld [vmem:[%s1194 + $0x8c] sm:$0xf]
    %v1524 = vld [vmem:[%s1194 + $0x90] sm:$0xff]
    %v1525 = vld [vmem:[%s1194 + $0x98] sm:$0xf]
    %v1526 = vld [vmem:[%s1194 + $0x9c] sm:$0xff]
    %v1527 = vld [vmem:[%s1194 + $0xa4] sm:$0xf]
    %v1528 = vld [vmem:[%s1194 + $0xa8] sm:$0xff]
    %v1529 = vld [vmem:[%s1194 + $0xb0] sm:$0xf]
    %v1530 = vld [vmem:[%s1194 + $0xb4] sm:$0xff]
    %v1531 = vld [vmem:[%s1194 + $0xbc] sm:$0xf]
    %v1532 = vld [vmem:[%s1194 + $0xc0] sm:$0xff]
    %v1533 = vld [vmem:[%s1194 + $0xc8] sm:$0xf]
    %v1534 = vld [vmem:[%s1194 + $0xcc] sm:$0xff]
    %v1535 = vld [vmem:[%s1194 + $0xd4] sm:$0xf]
    %v1536 = vld [vmem:[%s1194 + $0xd8] sm:$0xff]
    %v1537 = vld [vmem:[%s1194 + $0xe0] sm:$0xf]
    %v1538 = vld [vmem:[%s1194 + $0xe4] sm:$0xff]
    %v1539 = vld [vmem:[%s1194 + $0xec] sm:$0xf]
    %v1540 = vld [vmem:[%s1194 + $0xf0] sm:$0xff]
    %v1541 = vld [vmem:[%s1194 + $0xf8] sm:$0xf]
    %v1542 = vld [vmem:[%s1194 + $0xfc] sm:$0xff]
    %v1543 = vld [vmem:[%s1194 + $0x104] sm:$0xf]
    %v1544 = vld [vmem:[%s1194 + $0x108] sm:$0xff]
    %v1545 = vld [vmem:[%s1194 + $0x110] sm:$0xf]
    %v1546 = vld [vmem:[%s1194 + $0x114] sm:$0xff]
    %v1547 = vld [vmem:[%s1194 + $0x11c] sm:$0xf]
    %v1548 = vld [vmem:[%s1194 + $0x120] sm:$0xff]
    %v1549 = vld [vmem:[%s1194 + $0x128] sm:$0xf]
    %v1550 = vld [vmem:[%s1194 + $0x12c] sm:$0xff]
    %v1551 = vld [vmem:[%s1194 + $0x134] sm:$0xf]
    %v1552 = vld [vmem:[%s1194 + $0x138] sm:$0xff]
    %v1553 = vld [vmem:[%s1194 + $0x140] sm:$0xf]
    %v1554 = vld [vmem:[%s1194 + $0x144] sm:$0xff]
    %v1555 = vld [vmem:[%s1194 + $0x14c] sm:$0xf]
    %v1556 = vld [vmem:[%s1194 + $0x150] sm:$0xff]
    %v1557 = vld [vmem:[%s1194 + $0x158] sm:$0xf]
    %v1558 = vld [vmem:[%s1194 + $0x15c] sm:$0xff]
    %v1559 = vld [vmem:[%s1194 + $0x164] sm:$0xf]
    %v1560 = vld [vmem:[%s1194 + $0x168] sm:$0xff]
    %v1561 = vld [vmem:[%s1194 + $0x170] sm:$0xf]
    %v1562 = vld [vmem:[%s1194 + $0x174] sm:$0xff]
    %v1563 = vld [vmem:[%s1194 + $0x17c] sm:$0xf]
    %v1564 = vld [vmem:[%s1194 + $0x1b0] sm:$0xff]
    %v1565 = vld [vmem:[%s1194 + $0x1b8] sm:$0xf]
    %v1566 = vld [vmem:[%s1194 + $0x1bc] sm:$0xff]
    %v1567 = vld [vmem:[%s1194 + $0x1c4] sm:$0xf]
    %v1568 = vld [vmem:[%s1194 + $0x1c8] sm:$0xff]
    %v1569 = vld [vmem:[%s1194 + $0x1d0] sm:$0xf]
    %v1570 = vld [vmem:[%s1194 + $0x1d4] sm:$0xff]
    %v1571 = vld [vmem:[%s1194 + $0x1dc] sm:$0xf]
    %v1572 = vld [vmem:[%s1194 + $0x1e0] sm:$0xff]
    %v1573 = vld [vmem:[%s1194 + $0x1e8] sm:$0xf]
    %v1574 = vld [vmem:[%s1194 + $0x1ec] sm:$0xff]
    %v1575 = vld [vmem:[%s1194 + $0x1f4] sm:$0xf]
    %v1576 = vld [vmem:[%s1194 + $0x1f8] sm:$0xff]
    %v1577 = vld [vmem:[%s1194 + $0x200] sm:$0xf]
    %v1578 = vld [vmem:[%s1194 + $0x204] sm:$0xff]
    %v1579 = vld [vmem:[%s1194 + $0x20c] sm:$0xf]
    %v1580 = vld [vmem:[%s1194 + $0x210] sm:$0xff]
    %v1581 = vld [vmem:[%s1194 + $0x218] sm:$0xf]
    %v1582 = vld [vmem:[%s1194 + $0x21c] sm:$0xff]
    %v1583 = vld [vmem:[%s1194 + $0x224] sm:$0xf]
    %v1584 = vld [vmem:[%s1194 + $0x228] sm:$0xff]
    %v1585 = vld [vmem:[%s1194 + $0x230] sm:$0xf]
    %v1586 = vld [vmem:[%s1194 + $0x234] sm:$0xff]
    %v1587 = vld [vmem:[%s1194 + $0x23c] sm:$0xf]
    %v1588 = vld [vmem:[%s1194 + $0x240] sm:$0xff]
    %v1589 = vld [vmem:[%s1194 + $0x248] sm:$0xf]
    %v1590 = vld [vmem:[%s1194 + $0x24c] sm:$0xff]
    %v1591 = vld [vmem:[%s1194 + $0x254] sm:$0xf]
    %v1592 = vld [vmem:[%s1194 + $0x258] sm:$0xff]
    %v1593 = vld [vmem:[%s1194 + $0x260] sm:$0xf]
    %v1594 = vld [vmem:[%s1194 + $0x264] sm:$0xff]
    %v1595 = vld [vmem:[%s1194 + $0x26c] sm:$0xf]
    %v1596 = vld [vmem:[%s1194 + $0x270] sm:$0xff]
    %v1597 = vld [vmem:[%s1194 + $0x278] sm:$0xf]
    %v1598 = vld [vmem:[%s1194 + $0x27c] sm:$0xff]
    %v1599 = vld [vmem:[%s1194 + $0x284] sm:$0xf]
    %v1600 = vld [vmem:[%s1194 + $0x288] sm:$0xff]
    %v1601 = vld [vmem:[%s1194 + $0x290] sm:$0xf]
    %v1602 = vld [vmem:[%s1194 + $0x294] sm:$0xff]
    %v1603 = vld [vmem:[%s1194 + $0x29c] sm:$0xf]
    %v1604 = vld [vmem:[%s1194 + $0x2a0] sm:$0xff]
    %v1605 = vld [vmem:[%s1194 + $0x2a8] sm:$0xf]
    %v1606 = vld [vmem:[%s1194 + $0x2ac] sm:$0xff]
    %v1607 = vld [vmem:[%s1194 + $0x2b4] sm:$0xf]
    %v1608 = vld [vmem:[%s1194 + $0x2b8] sm:$0xff]
    %v1609 = vld [vmem:[%s1194 + $0x2c0] sm:$0xf]
    %v1610 = vld [vmem:[%s1194 + $0x2c4] sm:$0xff]
    %v1611 = vld [vmem:[%s1194 + $0x2cc] sm:$0xf]
    %v1612 = vld [vmem:[%s1194 + $0x2d0] sm:$0xff]
    %v1613 = vld [vmem:[%s1194 + $0x2d8] sm:$0xf]
    %v1614 = vld [vmem:[%s1194 + $0x2dc] sm:$0xff]
    %v1615 = vld [vmem:[%s1194 + $0x2e4] sm:$0xf]
    %v1616 = vld [vmem:[%s1194 + $0x2e8] sm:$0xff]
    %v1617 = vld [vmem:[%s1194 + $0x2f0] sm:$0xf]
    %v1618 = vld [vmem:[%s1194 + $0x2f4] sm:$0xff]
    %v1619 = vld [vmem:[%s1194 + $0x2fc] sm:$0xf]
    %v1620 = vld [vmem:[%s1194 + $0x300] sm:$0xff]
    %v1621 = vld [vmem:[%s1194 + $0x308] sm:$0xf]
    %v1622 = vld [vmem:[%s1194 + $0x30c] sm:$0xff]
    %v1623 = vld [vmem:[%s1194 + $0x314] sm:$0xf]
    %v1624 = vld [vmem:[%s1194 + $0x318] sm:$0xff]
    %v1625 = vld [vmem:[%s1194 + $0x320] sm:$0xf]
    %v1626 = vld [vmem:[%s1194 + $0x324] sm:$0xff]
    %v1627 = vld [vmem:[%s1194 + $0x32c] sm:$0xf]
    %s1628 = scalar_lea.vmem [#allocation6], 192
    %v1629 = vld [vmem:[%s1628] sm:$0xf]
    %v1630 = vld [vmem:[%s1628 + $0x4] sm:$0xf]
    %v1631 = vld [vmem:[%s1628 + $0x8] sm:$0xf]
    %v1632 = vld [vmem:[%s1628 + $0xc] sm:$0xf]
    %v1633 = vld [vmem:[%s1628 + $0x10] sm:$0xf]
    %v1634 = vld [vmem:[%s1628 + $0x14] sm:$0xf]
    %v1635 = vld [vmem:[%s1628 + $0x18] sm:$0xf]
    %v1636 = vld [vmem:[%s1628 + $0x1c] sm:$0xf]
    %v1637 = vld [vmem:[%s1628 + $0x20] sm:$0xf]
    %v1638 = vld [vmem:[%s1628 + $0x24] sm:$0xf]
    %v1639 = vld [vmem:[%s1628 + $0x28] sm:$0xf]
    %v1640 = vld [vmem:[%s1628 + $0x2c] sm:$0xf]
    %v1641 = vld [vmem:[%s1628 + $0x30] sm:$0xf]
    %v1642 = vld [vmem:[%s1628 + $0x34] sm:$0xf]
    %v1643 = vld [vmem:[%s1628 + $0x38] sm:$0xf]
    %v1644 = vld [vmem:[%s1628 + $0x3c] sm:$0xf]
    %v1645 = vld [vmem:[%s1628 + $0x40] sm:$0xf]
    %v1646 = vld [vmem:[%s1628 + $0x44] sm:$0xf]
    %v1647 = vld [vmem:[%s1628 + $0x48] sm:$0xf]
    %v1648 = vld [vmem:[%s1628 + $0x4c] sm:$0xf]
    %v1649 = vld [vmem:[%s1628 + $0x50] sm:$0xf]
    %v1650 = vld [vmem:[%s1628 + $0x54] sm:$0xf]
    %v1651 = vld [vmem:[%s1628 + $0x58] sm:$0xf]
    %v1652 = vld [vmem:[%s1628 + $0x5c] sm:$0xf]
    %v1653 = vld [vmem:[%s1628 + $0x60] sm:$0xf]
    %v1654 = vld [vmem:[%s1628 + $0x64] sm:$0xf]
    %v1655 = vld [vmem:[%s1628 + $0x68] sm:$0xf]
    %v1656 = vld [vmem:[%s1628 + $0x6c] sm:$0xf]
    %v1657 = vld [vmem:[%s1628 + $0x70] sm:$0xf]
    %v1658 = vld [vmem:[%s1628 + $0x74] sm:$0xf]
    %v1659 = vld [vmem:[%s1628 + $0x78] sm:$0xf]
    %v1660 = vld [vmem:[%s1628 + $0x7c] sm:$0xf]
    %v1661 = vld [vmem:[%s1628 + $0x80] sm:$0xf]
    %v1662 = vld [vmem:[%s1628 + $0x84] sm:$0xf]
    %v1663 = vld [vmem:[%s1628 + $0x88] sm:$0xf]
    %v1664 = vld [vmem:[%s1628 + $0x8c] sm:$0xf]
    %v1665 = vld [vmem:[%s1628 + $0x90] sm:$0xf]
    %v1666 = vld [vmem:[%s1628 + $0x94] sm:$0xf]
    %v1667 = vld [vmem:[%s1628 + $0x98] sm:$0xf]
    %v1668 = vld [vmem:[%s1628 + $0x9c] sm:$0xf]
    %v1669 = vld [vmem:[%s1628 + $0xa0] sm:$0xf]
    %v1670 = vld [vmem:[%s1628 + $0xa4] sm:$0xf]
    %v1671 = vld [vmem:[%s1628 + $0xa8] sm:$0xf]
    %v1672 = vld [vmem:[%s1628 + $0xac] sm:$0xf]
    %v1673 = vld [vmem:[%s1628 + $0xb0] sm:$0xf]
    %v1674 = vld [vmem:[%s1628 + $0xb4] sm:$0xf]
    %v1675 = vld [vmem:[%s1628 + $0xb8] sm:$0xf]
    %v1676 = vld [vmem:[%s1628 + $0xbc] sm:$0xf]
    %v1805 = vunpack.c.l.b16 %v1500
    %v1806 = vunpack.c.h.b16 %v1500
    %v1807 = vunpack.c.l.b16 %v1501
    %v1808 = vunpack.c.l.b16 %v1502
    %v1809 = vunpack.c.h.b16 %v1502
    %v1810 = vunpack.c.l.b16 %v1503
    %v1811 = vunpack.c.l.b16 %v1504
    %v1812 = vunpack.c.h.b16 %v1504
    %v1813 = vunpack.c.l.b16 %v1505
    %v1814 = vunpack.c.l.b16 %v1506
    %v1815 = vunpack.c.h.b16 %v1506
    %v1816 = vunpack.c.l.b16 %v1507
    %v1817 = vunpack.c.l.b16 %v1508
    %v1818 = vunpack.c.h.b16 %v1508
    %v1819 = vunpack.c.l.b16 %v1509
    %v1820 = vunpack.c.l.b16 %v1510
    %v1821 = vunpack.c.h.b16 %v1510
    %v1822 = vunpack.c.l.b16 %v1511
    %v1823 = vunpack.c.l.b16 %v1512
    %v1824 = vunpack.c.h.b16 %v1512
    %v1825 = vunpack.c.l.b16 %v1513
    %v1826 = vunpack.c.l.b16 %v1514
    %v1827 = vunpack.c.h.b16 %v1514
    %v1828 = vunpack.c.l.b16 %v1515
    %v1829 = vunpack.c.l.b16 %v1516
    %v1830 = vunpack.c.h.b16 %v1516
    %v1831 = vunpack.c.l.b16 %v1517
    %v1832 = vunpack.c.l.b16 %v1518
    %v1833 = vunpack.c.h.b16 %v1518
    %v1834 = vunpack.c.l.b16 %v1519
    %v1835 = vunpack.c.l.b16 %v1520
    %v1836 = vunpack.c.h.b16 %v1520
    %v1837 = vunpack.c.l.b16 %v1521
    %v1838 = vunpack.c.l.b16 %v1522
    %v1839 = vunpack.c.h.b16 %v1522
    %v1840 = vunpack.c.l.b16 %v1523
    %v1841 = vunpack.c.l.b16 %v1524
    %v1842 = vunpack.c.h.b16 %v1524
    %v1843 = vunpack.c.l.b16 %v1525
    %v1844 = vunpack.c.l.b16 %v1526
    %v1845 = vunpack.c.h.b16 %v1526
    %v1846 = vunpack.c.l.b16 %v1527
    %v1847 = vunpack.c.l.b16 %v1528
    %v1848 = vunpack.c.h.b16 %v1528
    %v1849 = vunpack.c.l.b16 %v1529
    %v1850 = vunpack.c.l.b16 %v1530
    %v1851 = vunpack.c.h.b16 %v1530
    %v1852 = vunpack.c.l.b16 %v1531
    %v1853 = vunpack.c.l.b16 %v1532
    %v1854 = vunpack.c.h.b16 %v1532
    %v1855 = vunpack.c.l.b16 %v1533
    %v1856 = vunpack.c.l.b16 %v1534
    %v1857 = vunpack.c.h.b16 %v1534
    %v1858 = vunpack.c.l.b16 %v1535
    %v1859 = vunpack.c.l.b16 %v1536
    %v1860 = vunpack.c.h.b16 %v1536
    %v1861 = vunpack.c.l.b16 %v1537
    %v1862 = vunpack.c.l.b16 %v1538
    %v1863 = vunpack.c.h.b16 %v1538
    %v1864 = vunpack.c.l.b16 %v1539
    %v1865 = vunpack.c.l.b16 %v1540
    %v1866 = vunpack.c.h.b16 %v1540
    %v1867 = vunpack.c.l.b16 %v1541
    %v1868 = vunpack.c.l.b16 %v1542
    %v1869 = vunpack.c.h.b16 %v1542
    %v1870 = vunpack.c.l.b16 %v1543
    %v1871 = vunpack.c.l.b16 %v1544
    %v1872 = vunpack.c.h.b16 %v1544
    %v1873 = vunpack.c.l.b16 %v1545
    %v1874 = vunpack.c.l.b16 %v1546
    %v1875 = vunpack.c.h.b16 %v1546
    %v1876 = vunpack.c.l.b16 %v1547
    %v1877 = vunpack.c.l.b16 %v1548
    %v1878 = vunpack.c.h.b16 %v1548
    %v1879 = vunpack.c.l.b16 %v1549
    %v1880 = vunpack.c.l.b16 %v1550
    %v1881 = vunpack.c.h.b16 %v1550
    %v1882 = vunpack.c.l.b16 %v1551
    %v1883 = vunpack.c.l.b16 %v1552
    %v1884 = vunpack.c.h.b16 %v1552
    %v1885 = vunpack.c.l.b16 %v1553
    %v1886 = vunpack.c.l.b16 %v1554
    %v1887 = vunpack.c.h.b16 %v1554
    %v1888 = vunpack.c.l.b16 %v1555
    %v1889 = vunpack.c.l.b16 %v1556
    %v1890 = vunpack.c.h.b16 %v1556
    %v1891 = vunpack.c.l.b16 %v1557
    %v1892 = vunpack.c.l.b16 %v1558
    %v1893 = vunpack.c.h.b16 %v1558
    %v1894 = vunpack.c.l.b16 %v1559
    %v1895 = vunpack.c.l.b16 %v1560
    %v1896 = vunpack.c.h.b16 %v1560
    %v1897 = vunpack.c.l.b16 %v1561
    %v1898 = vunpack.c.l.b16 %v1562
    %v1899 = vunpack.c.h.b16 %v1562
    %v1900 = vunpack.c.l.b16 %v1563
    %v1901 = vunpack.c.l.b16 %v1564
    %v1902 = vunpack.c.h.b16 %v1564
    %v1903 = vunpack.c.l.b16 %v1565
    %v1904 = vunpack.c.l.b16 %v1566
    %v1905 = vunpack.c.h.b16 %v1566
    %v1906 = vunpack.c.l.b16 %v1567
    %v1907 = vunpack.c.l.b16 %v1568
    %v1908 = vunpack.c.h.b16 %v1568
    %v1909 = vunpack.c.l.b16 %v1569
    %v1910 = vunpack.c.l.b16 %v1570
    %v1911 = vunpack.c.h.b16 %v1570
    %v1912 = vunpack.c.l.b16 %v1571
    %v1913 = vunpack.c.l.b16 %v1572
    %v1914 = vunpack.c.h.b16 %v1572
    %v1915 = vunpack.c.l.b16 %v1573
    %v1916 = vunpack.c.l.b16 %v1574
    %v1917 = vunpack.c.h.b16 %v1574
    %v1918 = vunpack.c.l.b16 %v1575
    %v1919 = vunpack.c.l.b16 %v1576
    %v1920 = vunpack.c.h.b16 %v1576
    %v1921 = vunpack.c.l.b16 %v1577
    %v1922 = vunpack.c.l.b16 %v1578
    %v1923 = vunpack.c.h.b16 %v1578
    %v1924 = vunpack.c.l.b16 %v1579
    %v1925 = vunpack.c.l.b16 %v1580
    %v1926 = vunpack.c.h.b16 %v1580
    %v1927 = vunpack.c.l.b16 %v1581
    %v1928 = vunpack.c.l.b16 %v1582
    %v1929 = vunpack.c.h.b16 %v1582
    %v1930 = vunpack.c.l.b16 %v1583
    %v1931 = vunpack.c.l.b16 %v1584
    %v1932 = vunpack.c.h.b16 %v1584
    %v1933 = vunpack.c.l.b16 %v1585
    %v1934 = vunpack.c.l.b16 %v1586
    %v1935 = vunpack.c.h.b16 %v1586
    %v1936 = vunpack.c.l.b16 %v1587
    %v1937 = vunpack.c.l.b16 %v1588
    %v1938 = vunpack.c.h.b16 %v1588
    %v1939 = vunpack.c.l.b16 %v1589
    %v1940 = vunpack.c.l.b16 %v1590
    %v1941 = vunpack.c.h.b16 %v1590
    %v1942 = vunpack.c.l.b16 %v1591
    %v1943 = vunpack.c.l.b16 %v1592
    %v1944 = vunpack.c.h.b16 %v1592
    %v1945 = vunpack.c.l.b16 %v1593
    %v1946 = vunpack.c.l.b16 %v1594
    %v1947 = vunpack.c.h.b16 %v1594
    %v1948 = vunpack.c.l.b16 %v1595
    %v1949 = vunpack.c.l.b16 %v1596
    %v1950 = vunpack.c.h.b16 %v1596
    %v1951 = vunpack.c.l.b16 %v1597
    %v1952 = vunpack.c.l.b16 %v1598
    %v1953 = vunpack.c.h.b16 %v1598
    %v1954 = vunpack.c.l.b16 %v1599
    %v1955 = vunpack.c.l.b16 %v1600
    %v1956 = vunpack.c.h.b16 %v1600
    %v1957 = vunpack.c.l.b16 %v1601
    %v1958 = vunpack.c.l.b16 %v1602
    %v1959 = vunpack.c.h.b16 %v1602
    %v1960 = vunpack.c.l.b16 %v1603
    %v1961 = vunpack.c.l.b16 %v1604
    %v1962 = vunpack.c.h.b16 %v1604
    %v1963 = vunpack.c.l.b16 %v1605
    %v1964 = vunpack.c.l.b16 %v1606
    %v1965 = vunpack.c.h.b16 %v1606
    %v1966 = vunpack.c.l.b16 %v1607
    %v1967 = vunpack.c.l.b16 %v1608
    %v1968 = vunpack.c.h.b16 %v1608
    %v1969 = vunpack.c.l.b16 %v1609
    %v1970 = vunpack.c.l.b16 %v1610
    %v1971 = vunpack.c.h.b16 %v1610
    %v1972 = vunpack.c.l.b16 %v1611
    %v1973 = vunpack.c.l.b16 %v1612
    %v1974 = vunpack.c.h.b16 %v1612
    %v1975 = vunpack.c.l.b16 %v1613
    %v1976 = vunpack.c.l.b16 %v1614
    %v1977 = vunpack.c.h.b16 %v1614
    %v1978 = vunpack.c.l.b16 %v1615
    %v1979 = vunpack.c.l.b16 %v1616
    %v1980 = vunpack.c.h.b16 %v1616
    %v1981 = vunpack.c.l.b16 %v1617
    %v1982 = vunpack.c.l.b16 %v1618
    %v1983 = vunpack.c.h.b16 %v1618
    %v1984 = vunpack.c.l.b16 %v1619
    %v1985 = vunpack.c.l.b16 %v1620
    %v1986 = vunpack.c.h.b16 %v1620
    %v1987 = vunpack.c.l.b16 %v1621
    %v1988 = vunpack.c.l.b16 %v1622
    %v1989 = vunpack.c.h.b16 %v1622
    %v1990 = vunpack.c.l.b16 %v1623
    %v1991 = vunpack.c.l.b16 %v1624
    %v1992 = vunpack.c.h.b16 %v1624
    %v1993 = vunpack.c.l.b16 %v1625
    %v1994 = vunpack.c.l.b16 %v1626
    %v1995 = vunpack.c.h.b16 %v1626
    %v1996 = vunpack.c.l.b16 %v1627
    %v1997 = vpack.c.b16 %v1808, %v1805
    %v1998 = vpack.c.b16 %v1809, %v1806
    %v1999 = vpack.c.b16 %v1810, %v1807
    %v2000 = vpack.c.b16 %v1814, %v1811
    %v2001 = vpack.c.b16 %v1815, %v1812
    %v2002 = vpack.c.b16 %v1816, %v1813
    %v2003 = vpack.c.b16 %v1820, %v1817
    %v2004 = vpack.c.b16 %v1821, %v1818
    %v2005 = vpack.c.b16 %v1822, %v1819
    %v2006 = vpack.c.b16 %v1826, %v1823
    %v2007 = vpack.c.b16 %v1827, %v1824
    %v2008 = vpack.c.b16 %v1828, %v1825
    %v2009 = vpack.c.b16 %v1832, %v1829
    %v2010 = vpack.c.b16 %v1833, %v1830
    %v2011 = vpack.c.b16 %v1834, %v1831
    %v2012 = vpack.c.b16 %v1838, %v1835
    %v2013 = vpack.c.b16 %v1839, %v1836
    %v2014 = vpack.c.b16 %v1840, %v1837
    %v2015 = vpack.c.b16 %v1844, %v1841
    %v2016 = vpack.c.b16 %v1845, %v1842
    %v2017 = vpack.c.b16 %v1846, %v1843
    %v2018 = vpack.c.b16 %v1850, %v1847
    %v2019 = vpack.c.b16 %v1851, %v1848
    %v2020 = vpack.c.b16 %v1852, %v1849
    %v2021 = vpack.c.b16 %v1856, %v1853
    %v2022 = vpack.c.b16 %v1857, %v1854
    %v2023 = vpack.c.b16 %v1858, %v1855
    %v2024 = vpack.c.b16 %v1862, %v1859
    %v2025 = vpack.c.b16 %v1863, %v1860
    %v2026 = vpack.c.b16 %v1864, %v1861
    %v2027 = vpack.c.b16 %v1868, %v1865
    %v2028 = vpack.c.b16 %v1869, %v1866
    %v2029 = vpack.c.b16 %v1870, %v1867
    %v2030 = vpack.c.b16 %v1874, %v1871
    %v2031 = vpack.c.b16 %v1875, %v1872
    %v2032 = vpack.c.b16 %v1876, %v1873
    %v2033 = vpack.c.b16 %v1880, %v1877
    %v2034 = vpack.c.b16 %v1881, %v1878
    %v2035 = vpack.c.b16 %v1882, %v1879
    %v2036 = vpack.c.b16 %v1886, %v1883
    %v2037 = vpack.c.b16 %v1887, %v1884
    %v2038 = vpack.c.b16 %v1888, %v1885
    %v2039 = vpack.c.b16 %v1892, %v1889
    %v2040 = vpack.c.b16 %v1893, %v1890
    %v2041 = vpack.c.b16 %v1894, %v1891
    %v2042 = vpack.c.b16 %v1898, %v1895
    %v2043 = vpack.c.b16 %v1899, %v1896
    %v2044 = vpack.c.b16 %v1900, %v1897
    %v2045 = vpack.c.b16 %v1904, %v1901
    %v2046 = vpack.c.b16 %v1905, %v1902
    %v2047 = vpack.c.b16 %v1906, %v1903
    %v2048 = vpack.c.b16 %v1910, %v1907
    %v2049 = vpack.c.b16 %v1911, %v1908
    %v2050 = vpack.c.b16 %v1912, %v1909
    %v2051 = vpack.c.b16 %v1916, %v1913
    %v2052 = vpack.c.b16 %v1917, %v1914
    %v2053 = vpack.c.b16 %v1918, %v1915
    %v2054 = vpack.c.b16 %v1922, %v1919
    %v2055 = vpack.c.b16 %v1923, %v1920
    %v2056 = vpack.c.b16 %v1924, %v1921
    %v2057 = vpack.c.b16 %v1928, %v1925
    %v2058 = vpack.c.b16 %v1929, %v1926
    %v2059 = vpack.c.b16 %v1930, %v1927
    %v2060 = vpack.c.b16 %v1934, %v1931
    %v2061 = vpack.c.b16 %v1935, %v1932
    %v2062 = vpack.c.b16 %v1936, %v1933
    %v2063 = vpack.c.b16 %v1940, %v1937
    %v2064 = vpack.c.b16 %v1941, %v1938
    %v2065 = vpack.c.b16 %v1942, %v1939
    %v2066 = vpack.c.b16 %v1946, %v1943
    %v2067 = vpack.c.b16 %v1947, %v1944
    %v2068 = vpack.c.b16 %v1948, %v1945
    %v2069 = vpack.c.b16 %v1952, %v1949
    %v2070 = vpack.c.b16 %v1953, %v1950
    %v2071 = vpack.c.b16 %v1954, %v1951
    %v2072 = vpack.c.b16 %v1958, %v1955
    %v2073 = vpack.c.b16 %v1959, %v1956
    %v2074 = vpack.c.b16 %v1960, %v1957
    %v2075 = vpack.c.b16 %v1964, %v1961
    %v2076 = vpack.c.b16 %v1965, %v1962
    %v2077 = vpack.c.b16 %v1966, %v1963
    %v2078 = vpack.c.b16 %v1970, %v1967
    %v2079 = vpack.c.b16 %v1971, %v1968
    %v2080 = vpack.c.b16 %v1972, %v1969
    %v2081 = vpack.c.b16 %v1976, %v1973
    %v2082 = vpack.c.b16 %v1977, %v1974
    %v2083 = vpack.c.b16 %v1978, %v1975
    %v2084 = vpack.c.b16 %v1982, %v1979
    %v2085 = vpack.c.b16 %v1983, %v1980
    %v2086 = vpack.c.b16 %v1984, %v1981
    %v2087 = vpack.c.b16 %v1988, %v1985
    %v2088 = vpack.c.b16 %v1989, %v1986
    %v2089 = vpack.c.b16 %v1990, %v1987
    %v2090 = vpack.c.b16 %v1994, %v1991
    %v2091 = vpack.c.b16 %v1995, %v1992
    %v2092 = vpack.c.b16 %v1996, %v1993
    %v2237 = vunpack.c.l.b16 %v1629
    %v2238 = vunpack.c.l.b16 %v1630
    %v2239 = vunpack.c.l.b16 %v1631
    %v2240 = vunpack.c.l.b16 %v1632
    %v2241 = vunpack.c.l.b16 %v1633
    %v2242 = vunpack.c.l.b16 %v1634
    %v2243 = vunpack.c.l.b16 %v1635
    %v2244 = vunpack.c.l.b16 %v1636
    %v2245 = vunpack.c.l.b16 %v1637
    %v2246 = vunpack.c.l.b16 %v1638
    %v2247 = vunpack.c.l.b16 %v1639
    %v2248 = vunpack.c.l.b16 %v1640
    %v2249 = vunpack.c.l.b16 %v1641
    %v2250 = vunpack.c.l.b16 %v1642
    %v2251 = vunpack.c.l.b16 %v1643
    %v2252 = vunpack.c.l.b16 %v1644
    %v2253 = vunpack.c.l.b16 %v1645
    %v2254 = vunpack.c.l.b16 %v1646
    %v2255 = vunpack.c.l.b16 %v1647
    %v2256 = vunpack.c.l.b16 %v1648
    %v2257 = vunpack.c.l.b16 %v1649
    %v2258 = vunpack.c.l.b16 %v1650
    %v2259 = vunpack.c.l.b16 %v1651
    %v2260 = vunpack.c.l.b16 %v1652
    %v2261 = vunpack.c.l.b16 %v1653
    %v2262 = vunpack.c.l.b16 %v1654
    %v2263 = vunpack.c.l.b16 %v1655
    %v2264 = vunpack.c.l.b16 %v1656
    %v2265 = vunpack.c.l.b16 %v1657
    %v2266 = vunpack.c.l.b16 %v1658
    %v2267 = vunpack.c.l.b16 %v1659
    %v2268 = vunpack.c.l.b16 %v1660
    %v2269 = vunpack.c.l.b16 %v1661
    %v2270 = vunpack.c.l.b16 %v1662
    %v2271 = vunpack.c.l.b16 %v1663
    %v2272 = vunpack.c.l.b16 %v1664
    %v2273 = vunpack.c.l.b16 %v1665
    %v2274 = vunpack.c.l.b16 %v1666
    %v2275 = vunpack.c.l.b16 %v1667
    %v2276 = vunpack.c.l.b16 %v1668
    %v2277 = vunpack.c.l.b16 %v1669
    %v2278 = vunpack.c.l.b16 %v1670
    %v2279 = vunpack.c.l.b16 %v1671
    %v2280 = vunpack.c.l.b16 %v1672
    %v2281 = vunpack.c.l.b16 %v1673
    %v2282 = vunpack.c.l.b16 %v1674
    %v2283 = vunpack.c.l.b16 %v1675
    %v2284 = vunpack.c.l.b16 %v1676
    %v2285 = vpack.c.b16 %v2238, %v2237
    %v2286 = vpack.c.b16 %v2240, %v2239
    %v2287 = vpack.c.b16 %v2242, %v2241
    %v2288 = vpack.c.b16 %v2244, %v2243
    %v2289 = vpack.c.b16 %v2246, %v2245
    %v2290 = vpack.c.b16 %v2248, %v2247
    %v2291 = vpack.c.b16 %v2250, %v2249
    %v2292 = vpack.c.b16 %v2252, %v2251
    %v2293 = vpack.c.b16 %v2254, %v2253
    %v2294 = vpack.c.b16 %v2256, %v2255
    %v2295 = vpack.c.b16 %v2258, %v2257
    %v2296 = vpack.c.b16 %v2260, %v2259
    %v2297 = vpack.c.b16 %v2262, %v2261
    %v2298 = vpack.c.b16 %v2264, %v2263
    %v2299 = vpack.c.b16 %v2266, %v2265
    %v2300 = vpack.c.b16 %v2268, %v2267
    %v2301 = vpack.c.b16 %v2270, %v2269
    %v2302 = vpack.c.b16 %v2272, %v2271
    %v2303 = vpack.c.b16 %v2274, %v2273
    %v2304 = vpack.c.b16 %v2276, %v2275
    %v2305 = vpack.c.b16 %v2278, %v2277
    %v2306 = vpack.c.b16 %v2280, %v2279
    %v2307 = vpack.c.b16 %v2282, %v2281
    %v2308 = vpack.c.b16 %v2284, %v2283
    %2333 = vmatprep.subr.bf16.mxu0 0
    %2334 = vmatpush1.bf16.msra.mxu0 %v2292
    %2335 = vmatprep.subr.bf16.mxu0 0
    %2336 = vmatpush1.bf16.msra.mxu0 %v2291
    %2337 = vmatprep.subr.bf16.mxu0 0
    %2338 = vmatpush1.bf16.msra.mxu0 %v2290
    %2339 = vmatprep.subr.bf16.mxu0 0
    %2340 = vmatpush1.bf16.msra.mxu0 %v2289
    %2341 = vmatprep.subr.bf16.mxu0 0
    %2342 = vmatpush1.bf16.msra.mxu0 %v2288
    %2343 = vmatprep.subr.bf16.mxu0 0
    %2344 = vmatpush1.bf16.msra.mxu0 %v2287
    %2345 = vmatprep.subr.bf16.mxu0 0
    %2346 = vmatpush1.bf16.msra.mxu0 %v2286
    %2347 = vmatprep.subr.bf16.mxu0 0
    %2348 = vmatpush1.bf16.msra.mxu0 %v2285
    %2349 = vmatprep.subr.bf16.mxu0 0
    %2350 = vmatpush2.bf16.msra.mxu0 %v2300
    %2351 = vmatprep.subr.bf16.mxu0 0
    %2352 = vmatpush2.bf16.msra.mxu0 %v2299
    %2353 = vmatprep.subr.bf16.mxu0 0
    %2354 = vmatpush2.bf16.msra.mxu0 %v2298
    %2355 = vmatprep.subr.bf16.mxu0 0
    %2356 = vmatpush2.bf16.msra.mxu0 %v2297
    %2357 = vmatprep.subr.bf16.mxu0 0
    %2358 = vmatpush2.bf16.msra.mxu0 %v2296
    %2359 = vmatprep.subr.bf16.mxu0 0
    %2360 = vmatpush2.bf16.msra.mxu0 %v2295
    %2361 = vmatprep.subr.bf16.mxu0 0
    %2362 = vmatpush2.bf16.msra.mxu0 %v2294
    %2363 = vmatprep.subr.bf16.mxu0 0
    %2364 = vmatpush2.bf16.msra.mxu0 %v2293
    %2365 = vmatprep.mubr.bf16.mxu0 %v1998
    %2366 = vmatmul.mubr.bf16.gmra.mxu0 %v1997
    %v2367 = vpop.f32.mrf.mxu0
    %v2368 = vadd.f32 0.0, %v2367
    %v2369 = vpop.f32.mrf.mxu0
    %v2370 = vpop.f32.mrf.mxu0
    %v2371 = vadd.f32 0.0, %v2370
    %v2372 = vpop.f32.mrf.mxu0
    %2373 = vmatprep.mubr.bf16.mxu0 %v2001
    %2374 = vmatmul.mubr.bf16.gmra.mxu0 %v2000
    %v2375 = vpop.f32.mrf.mxu0
    %v2376 = vadd.f32 0.0, %v2375
    %v2377 = vpop.f32.mrf.mxu0
    %v2378 = vpop.f32.mrf.mxu0
    %v2379 = vadd.f32 0.0, %v2378
    %v2380 = vpop.f32.mrf.mxu0
    %2381 = vmatprep.mubr.bf16.mxu0 %v2004
    %2382 = vmatmul.mubr.bf16.gmra.mxu0 %v2003
    %v2383 = vpop.f32.mrf.mxu0
    %v2384 = vadd.f32 0.0, %v2383
    %v2385 = vpop.f32.mrf.mxu0
    %v2386 = vpop.f32.mrf.mxu0
    %v2387 = vadd.f32 0.0, %v2386
    %v2388 = vpop.f32.mrf.mxu0
    %2389 = vmatprep.mubr.bf16.mxu0 %v2007
    %2390 = vmatmul.mubr.bf16.gmra.mxu0 %v2006
    %v2391 = vpop.f32.mrf.mxu0
    %v2392 = vadd.f32 0.0, %v2391
    %v2393 = vpop.f32.mrf.mxu0
    %v2394 = vpop.f32.mrf.mxu0
    %v2395 = vadd.f32 0.0, %v2394
    %v2396 = vpop.f32.mrf.mxu0
    %2397 = vmatprep.mubr.bf16.mxu0 %v2010
    %2398 = vmatmul.mubr.bf16.gmra.mxu0 %v2009
    %v2399 = vpop.f32.mrf.mxu0
    %v2400 = vadd.f32 0.0, %v2399
    %v2401 = vpop.f32.mrf.mxu0
    %v2402 = vpop.f32.mrf.mxu0
    %v2403 = vadd.f32 0.0, %v2402
    %v2404 = vpop.f32.mrf.mxu0
    %2405 = vmatprep.mubr.bf16.mxu0 %v2013
    %2406 = vmatmul.mubr.bf16.gmra.mxu0 %v2012
    %v2407 = vpop.f32.mrf.mxu0
    %v2408 = vadd.f32 0.0, %v2407
    %v2409 = vpop.f32.mrf.mxu0
    %v2410 = vpop.f32.mrf.mxu0
    %v2411 = vadd.f32 0.0, %v2410
    %v2412 = vpop.f32.mrf.mxu0
    %2413 = vmatprep.mubr.bf16.mxu0 %v2016
    %2414 = vmatmul.mubr.bf16.gmra.mxu0 %v2015
    %v2415 = vpop.f32.mrf.mxu0
    %v2416 = vadd.f32 0.0, %v2415
    %v2417 = vpop.f32.mrf.mxu0
    %v2418 = vpop.f32.mrf.mxu0
    %v2419 = vadd.f32 0.0, %v2418
    %v2420 = vpop.f32.mrf.mxu0
    %2421 = vmatprep.mubr.bf16.mxu0 %v2019
    %2422 = vmatmul.mubr.bf16.gmra.mxu0 %v2018
    %v2423 = vpop.f32.mrf.mxu0
    %v2424 = vadd.f32 0.0, %v2423
    %v2425 = vpop.f32.mrf.mxu0
    %v2426 = vpop.f32.mrf.mxu0
    %v2427 = vadd.f32 0.0, %v2426
    %v2428 = vpop.f32.mrf.mxu0
    %2429 = vmatprep.mubr.bf16.mxu0 %v2022
    %2430 = vmatmul.mubr.bf16.gmra.mxu0 %v2021
    %v2431 = vpop.f32.mrf.mxu0
    %v2432 = vadd.f32 0.0, %v2431
    %v2433 = vpop.f32.mrf.mxu0
    %v2434 = vpop.f32.mrf.mxu0
    %v2435 = vadd.f32 0.0, %v2434
    %v2436 = vpop.f32.mrf.mxu0
    %2437 = vmatprep.mubr.bf16.mxu0 %v2025
    %2438 = vmatmul.mubr.bf16.gmra.mxu0 %v2024
    %v2439 = vpop.f32.mrf.mxu0
    %v2440 = vadd.f32 0.0, %v2439
    %v2441 = vpop.f32.mrf.mxu0
    %v2442 = vpop.f32.mrf.mxu0
    %v2443 = vadd.f32 0.0, %v2442
    %v2444 = vpop.f32.mrf.mxu0
    %2445 = vmatprep.mubr.bf16.mxu0 %v2028
    %2446 = vmatmul.mubr.bf16.gmra.mxu0 %v2027
    %v2447 = vpop.f32.mrf.mxu0
    %v2448 = vadd.f32 0.0, %v2447
    %v2449 = vpop.f32.mrf.mxu0
    %v2450 = vpop.f32.mrf.mxu0
    %v2451 = vadd.f32 0.0, %v2450
    %v2452 = vpop.f32.mrf.mxu0
    %2453 = vmatprep.mubr.bf16.mxu0 %v2031
    %2454 = vmatmul.mubr.bf16.gmra.mxu0 %v2030
    %v2455 = vpop.f32.mrf.mxu0
    %v2456 = vadd.f32 0.0, %v2455
    %v2457 = vpop.f32.mrf.mxu0
    %v2458 = vpop.f32.mrf.mxu0
    %v2459 = vadd.f32 0.0, %v2458
    %v2460 = vpop.f32.mrf.mxu0
    %2461 = vmatprep.mubr.bf16.mxu0 %v2034
    %2462 = vmatmul.mubr.bf16.gmra.mxu0 %v2033
    %v2463 = vpop.f32.mrf.mxu0
    %v2464 = vadd.f32 0.0, %v2463
    %v2465 = vpop.f32.mrf.mxu0
    %v2466 = vpop.f32.mrf.mxu0
    %v2467 = vadd.f32 0.0, %v2466
    %v2468 = vpop.f32.mrf.mxu0
    %2469 = vmatprep.mubr.bf16.mxu0 %v2037
    %2470 = vmatmul.mubr.bf16.gmra.mxu0 %v2036
    %v2471 = vpop.f32.mrf.mxu0
    %v2472 = vadd.f32 0.0, %v2471
    %v2473 = vpop.f32.mrf.mxu0
    %v2474 = vpop.f32.mrf.mxu0
    %v2475 = vadd.f32 0.0, %v2474
    %v2476 = vpop.f32.mrf.mxu0
    %2477 = vmatprep.mubr.bf16.mxu0 %v2040
    %2478 = vmatmul.mubr.bf16.gmra.mxu0 %v2039
    %v2479 = vpop.f32.mrf.mxu0
    %v2480 = vadd.f32 0.0, %v2479
    %v2481 = vpop.f32.mrf.mxu0
    %v2482 = vpop.f32.mrf.mxu0
    %v2483 = vadd.f32 0.0, %v2482
    %v2484 = vpop.f32.mrf.mxu0
    %2485 = vmatprep.mubr.bf16.mxu0 %v2043
    %2486 = vmatmul.mubr.bf16.gmra.mxu0 %v2042
    %v2487 = vpop.f32.mrf.mxu0
    %v2488 = vadd.f32 0.0, %v2487
    %v2489 = vpop.f32.mrf.mxu0
    %v2490 = vpop.f32.mrf.mxu0
    %v2491 = vadd.f32 0.0, %v2490
    %v2492 = vpop.f32.mrf.mxu0
    %2493 = vmatprep.mubr.bf16.mxu0 %v2046
    %2494 = vmatmul.mubr.bf16.gmra.mxu0 %v2045
    %v2495 = vpop.f32.mrf.mxu0
    %v2496 = vadd.f32 0.0, %v2495
    %v2497 = vpop.f32.mrf.mxu0
    %v2498 = vpop.f32.mrf.mxu0
    %v2499 = vadd.f32 0.0, %v2498
    %v2500 = vpop.f32.mrf.mxu0
    %2501 = vmatprep.mubr.bf16.mxu0 %v2049
    %2502 = vmatmul.mubr.bf16.gmra.mxu0 %v2048
    %v2503 = vpop.f32.mrf.mxu0
    %v2504 = vadd.f32 0.0, %v2503
    %v2505 = vpop.f32.mrf.mxu0
    %v2506 = vpop.f32.mrf.mxu0
    %v2507 = vadd.f32 0.0, %v2506
    %v2508 = vpop.f32.mrf.mxu0
    %2509 = vmatprep.mubr.bf16.mxu0 %v2052
    %2510 = vmatmul.mubr.bf16.gmra.mxu0 %v2051
    %v2511 = vpop.f32.mrf.mxu0
    %v2512 = vadd.f32 0.0, %v2511
    %v2513 = vpop.f32.mrf.mxu0
    %v2514 = vpop.f32.mrf.mxu0
    %v2515 = vadd.f32 0.0, %v2514
    %v2516 = vpop.f32.mrf.mxu0
    %2517 = vmatprep.mubr.bf16.mxu0 %v2055
    %2518 = vmatmul.mubr.bf16.gmra.mxu0 %v2054
    %v2519 = vpop.f32.mrf.mxu0
    %v2520 = vadd.f32 0.0, %v2519
    %v2521 = vpop.f32.mrf.mxu0
    %v2522 = vpop.f32.mrf.mxu0
    %v2523 = vadd.f32 0.0, %v2522
    %v2524 = vpop.f32.mrf.mxu0
    %2525 = vmatprep.mubr.bf16.mxu0 %v2058
    %2526 = vmatmul.mubr.bf16.gmra.mxu0 %v2057
    %v2527 = vpop.f32.mrf.mxu0
    %v2528 = vadd.f32 0.0, %v2527
    %v2529 = vpop.f32.mrf.mxu0
    %v2530 = vpop.f32.mrf.mxu0
    %v2531 = vadd.f32 0.0, %v2530
    %v2532 = vpop.f32.mrf.mxu0
    %2533 = vmatprep.mubr.bf16.mxu0 %v2061
    %2534 = vmatmul.mubr.bf16.gmra.mxu0 %v2060
    %v2535 = vpop.f32.mrf.mxu0
    %v2536 = vadd.f32 0.0, %v2535
    %v2537 = vpop.f32.mrf.mxu0
    %v2538 = vpop.f32.mrf.mxu0
    %v2539 = vadd.f32 0.0, %v2538
    %v2540 = vpop.f32.mrf.mxu0
    %2541 = vmatprep.mubr.bf16.mxu0 %v2064
    %2542 = vmatmul.mubr.bf16.gmra.mxu0 %v2063
    %v2543 = vpop.f32.mrf.mxu0
    %v2544 = vadd.f32 0.0, %v2543
    %v2545 = vpop.f32.mrf.mxu0
    %v2546 = vpop.f32.mrf.mxu0
    %v2547 = vadd.f32 0.0, %v2546
    %v2548 = vpop.f32.mrf.mxu0
    %2549 = vmatprep.mubr.bf16.mxu0 %v2067
    %2550 = vmatmul.mubr.bf16.gmra.mxu0 %v2066
    %v2551 = vpop.f32.mrf.mxu0
    %v2552 = vadd.f32 0.0, %v2551
    %v2553 = vpop.f32.mrf.mxu0
    %v2554 = vpop.f32.mrf.mxu0
    %v2555 = vadd.f32 0.0, %v2554
    %v2556 = vpop.f32.mrf.mxu0
    %2557 = vmatprep.mubr.bf16.mxu0 %v2070
    %2558 = vmatmul.mubr.bf16.gmra.mxu0 %v2069
    %v2559 = vpop.f32.mrf.mxu0
    %v2560 = vadd.f32 0.0, %v2559
    %v2561 = vpop.f32.mrf.mxu0
    %v2562 = vpop.f32.mrf.mxu0
    %v2563 = vadd.f32 0.0, %v2562
    %v2564 = vpop.f32.mrf.mxu0
    %2565 = vmatprep.mubr.bf16.mxu0 %v2073
    %2566 = vmatmul.mubr.bf16.gmra.mxu0 %v2072
    %v2567 = vpop.f32.mrf.mxu0
    %v2568 = vadd.f32 0.0, %v2567
    %v2569 = vpop.f32.mrf.mxu0
    %v2570 = vpop.f32.mrf.mxu0
    %v2571 = vadd.f32 0.0, %v2570
    %v2572 = vpop.f32.mrf.mxu0
    %2573 = vmatprep.mubr.bf16.mxu0 %v2076
    %2574 = vmatmul.mubr.bf16.gmra.mxu0 %v2075
    %v2575 = vpop.f32.mrf.mxu0
    %v2576 = vadd.f32 0.0, %v2575
    %v2577 = vpop.f32.mrf.mxu0
    %v2578 = vpop.f32.mrf.mxu0
    %v2579 = vadd.f32 0.0, %v2578
    %v2580 = vpop.f32.mrf.mxu0
    %2581 = vmatprep.mubr.bf16.mxu0 %v2079
    %2582 = vmatmul.mubr.bf16.gmra.mxu0 %v2078
    %v2583 = vpop.f32.mrf.mxu0
    %v2584 = vadd.f32 0.0, %v2583
    %v2585 = vpop.f32.mrf.mxu0
    %v2586 = vpop.f32.mrf.mxu0
    %v2587 = vadd.f32 0.0, %v2586
    %v2588 = vpop.f32.mrf.mxu0
    %2589 = vmatprep.mubr.bf16.mxu0 %v2082
    %2590 = vmatmul.mubr.bf16.gmra.mxu0 %v2081
    %v2591 = vpop.f32.mrf.mxu0
    %v2592 = vadd.f32 0.0, %v2591
    %v2593 = vpop.f32.mrf.mxu0
    %v2594 = vpop.f32.mrf.mxu0
    %v2595 = vadd.f32 0.0, %v2594
    %v2596 = vpop.f32.mrf.mxu0
    %2597 = vmatprep.mubr.bf16.mxu0 %v2085
    %2598 = vmatmul.mubr.bf16.gmra.mxu0 %v2084
    %v2599 = vpop.f32.mrf.mxu0
    %v2600 = vadd.f32 0.0, %v2599
    %v2601 = vpop.f32.mrf.mxu0
    %v2602 = vpop.f32.mrf.mxu0
    %v2603 = vadd.f32 0.0, %v2602
    %v2604 = vpop.f32.mrf.mxu0
    %2605 = vmatprep.mubr.bf16.mxu0 %v2088
    %2606 = vmatmul.mubr.bf16.gmra.mxu0 %v2087
    %v2607 = vpop.f32.mrf.mxu0
    %v2608 = vadd.f32 0.0, %v2607
    %v2609 = vpop.f32.mrf.mxu0
    %v2610 = vpop.f32.mrf.mxu0
    %v2611 = vadd.f32 0.0, %v2610
    %v2612 = vpop.f32.mrf.mxu0
    %2613 = vmatprep.mubr.bf16.mxu0 %v2091
    %2614 = vmatmul.mubr.bf16.gmra.mxu0 %v2090
    %v2615 = vpop.f32.mrf.mxu0
    %v2616 = vadd.f32 0.0, %v2615
    %v2617 = vpop.f32.mrf.mxu0
    %v2618 = vpop.f32.mrf.mxu0
    %v2619 = vadd.f32 0.0, %v2618
    %v2620 = vpop.f32.mrf.mxu0
    %2621 = vdwg.mxu0
    %2622 = vmatprep.subr.bf16.mxu0 0
    %2623 = vmatpush1.bf16.msra.mxu0 %v2308
    %2624 = vmatprep.subr.bf16.mxu0 0
    %2625 = vmatpush1.bf16.msra.mxu0 %v2307
    %2626 = vmatprep.subr.bf16.mxu0 0
    %2627 = vmatpush1.bf16.msra.mxu0 %v2306
    %2628 = vmatprep.subr.bf16.mxu0 0
    %2629 = vmatpush1.bf16.msra.mxu0 %v2305
    %2630 = vmatprep.subr.bf16.mxu0 0
    %2631 = vmatpush1.bf16.msra.mxu0 %v2304
    %2632 = vmatprep.subr.bf16.mxu0 0
    %2633 = vmatpush1.bf16.msra.mxu0 %v2303
    %2634 = vmatprep.subr.bf16.mxu0 0
    %2635 = vmatpush1.bf16.msra.mxu0 %v2302
    %2636 = vmatprep.subr.bf16.mxu0 0
    %2637 = vmatpush1.bf16.msra.mxu0 %v2301
    %2638 = vmatprep.subr.bf16.mxu0 0
    %2639 = vmatpush2.bf16.msra.mxu0 0
    %2640 = vmatprep.subr.bf16.mxu0 0
    %2641 = vmatpush2.bf16.msra.mxu0 0
    %2642 = vmatprep.subr.bf16.mxu0 0
    %2643 = vmatpush2.bf16.msra.mxu0 0
    %2644 = vmatprep.subr.bf16.mxu0 0
    %2645 = vmatpush2.bf16.msra.mxu0 0
    %2646 = vmatprep.subr.bf16.mxu0 0
    %2647 = vmatpush2.bf16.msra.mxu0 0
    %2648 = vmatprep.subr.bf16.mxu0 0
    %2649 = vmatpush2.bf16.msra.mxu0 0
    %2650 = vmatprep.subr.bf16.mxu0 0
    %2651 = vmatpush2.bf16.msra.mxu0 0
    %2652 = vmatprep.subr.bf16.mxu0 0
    %2653 = vmatpush2.bf16.msra.mxu0 0
    %2654 = vmatprep.mubr.bf16.mxu0 0
    %2655 = vmatmul.mubr.bf16.gmra.mxu0 %v1999
    %v2656 = vpop.f32.mrf.mxu0
    %v2657 = vadd.f32 %v2368, %v2656
    %v2658 = vpop.f32.mrf.mxu0
    %v2659 = vpop.f32.mrf.mxu0
    %v2660 = vadd.f32 %v2371, %v2659
    %v2661 = vpop.f32.mrf.mxu0
    %2662 = vmatprep.mubr.bf16.mxu0 0
    %2663 = vmatmul.mubr.bf16.gmra.mxu0 %v2002
    %v2664 = vpop.f32.mrf.mxu0
    %v2665 = vadd.f32 %v2376, %v2664
    %v2666 = vpop.f32.mrf.mxu0
    %v2667 = vpop.f32.mrf.mxu0
    %v2668 = vadd.f32 %v2379, %v2667
    %v2669 = vpop.f32.mrf.mxu0
    %2670 = vmatprep.mubr.bf16.mxu0 0
    %2671 = vmatmul.mubr.bf16.gmra.mxu0 %v2005
    %v2672 = vpop.f32.mrf.mxu0
    %v2673 = vadd.f32 %v2384, %v2672
    %v2674 = vpop.f32.mrf.mxu0
    %v2675 = vpop.f32.mrf.mxu0
    %v2676 = vadd.f32 %v2387, %v2675
    %v2677 = vpop.f32.mrf.mxu0
    %2678 = vmatprep.mubr.bf16.mxu0 0
    %2679 = vmatmul.mubr.bf16.gmra.mxu0 %v2008
    %v2680 = vpop.f32.mrf.mxu0
    %v2681 = vadd.f32 %v2392, %v2680
    %v2682 = vpop.f32.mrf.mxu0
    %v2683 = vpop.f32.mrf.mxu0
    %v2684 = vadd.f32 %v2395, %v2683
    %v2685 = vpop.f32.mrf.mxu0
    %2686 = vmatprep.mubr.bf16.mxu0 0
    %2687 = vmatmul.mubr.bf16.gmra.mxu0 %v2011
    %v2688 = vpop.f32.mrf.mxu0
    %v2689 = vadd.f32 %v2400, %v2688
    %v2690 = vpop.f32.mrf.mxu0
    %v2691 = vpop.f32.mrf.mxu0
    %v2692 = vadd.f32 %v2403, %v2691
    %v2693 = vpop.f32.mrf.mxu0
    %2694 = vmatprep.mubr.bf16.mxu0 0
    %2695 = vmatmul.mubr.bf16.gmra.mxu0 %v2014
    %v2696 = vpop.f32.mrf.mxu0
    %v2697 = vadd.f32 %v2408, %v2696
    %v2698 = vpop.f32.mrf.mxu0
    %v2699 = vpop.f32.mrf.mxu0
    %v2700 = vadd.f32 %v2411, %v2699
    %v2701 = vpop.f32.mrf.mxu0
    %2702 = vmatprep.mubr.bf16.mxu0 0
    %2703 = vmatmul.mubr.bf16.gmra.mxu0 %v2017
    %v2704 = vpop.f32.mrf.mxu0
    %v2705 = vadd.f32 %v2416, %v2704
    %v2706 = vpop.f32.mrf.mxu0
    %v2707 = vpop.f32.mrf.mxu0
    %v2708 = vadd.f32 %v2419, %v2707
    %v2709 = vpop.f32.mrf.mxu0
    %2710 = vmatprep.mubr.bf16.mxu0 0
    %2711 = vmatmul.mubr.bf16.gmra.mxu0 %v2020
    %v2712 = vpop.f32.mrf.mxu0
    %v2713 = vadd.f32 %v2424, %v2712
    %v2714 = vpop.f32.mrf.mxu0
    %v2715 = vpop.f32.mrf.mxu0
    %v2716 = vadd.f32 %v2427, %v2715
    %v2717 = vpop.f32.mrf.mxu0
    %2718 = vmatprep.mubr.bf16.mxu0 0
    %2719 = vmatmul.mubr.bf16.gmra.mxu0 %v2023
    %v2720 = vpop.f32.mrf.mxu0
    %v2721 = vadd.f32 %v2432, %v2720
    %v2722 = vpop.f32.mrf.mxu0
    %v2723 = vpop.f32.mrf.mxu0
    %v2724 = vadd.f32 %v2435, %v2723
    %v2725 = vpop.f32.mrf.mxu0
    %2726 = vmatprep.mubr.bf16.mxu0 0
    %2727 = vmatmul.mubr.bf16.gmra.mxu0 %v2026
    %v2728 = vpop.f32.mrf.mxu0
    %v2729 = vadd.f32 %v2440, %v2728
    %v2730 = vpop.f32.mrf.mxu0
    %v2731 = vpop.f32.mrf.mxu0
    %v2732 = vadd.f32 %v2443, %v2731
    %v2733 = vpop.f32.mrf.mxu0
    %2734 = vmatprep.mubr.bf16.mxu0 0
    %2735 = vmatmul.mubr.bf16.gmra.mxu0 %v2029
    %v2736 = vpop.f32.mrf.mxu0
    %v2737 = vadd.f32 %v2448, %v2736
    %v2738 = vpop.f32.mrf.mxu0
    %v2739 = vpop.f32.mrf.mxu0
    %v2740 = vadd.f32 %v2451, %v2739
    %v2741 = vpop.f32.mrf.mxu0
    %2742 = vmatprep.mubr.bf16.mxu0 0
    %2743 = vmatmul.mubr.bf16.gmra.mxu0 %v2032
    %v2744 = vpop.f32.mrf.mxu0
    %v2745 = vadd.f32 %v2456, %v2744
    %v2746 = vpop.f32.mrf.mxu0
    %v2747 = vpop.f32.mrf.mxu0
    %v2748 = vadd.f32 %v2459, %v2747
    %v2749 = vpop.f32.mrf.mxu0
    %2750 = vmatprep.mubr.bf16.mxu0 0
    %2751 = vmatmul.mubr.bf16.gmra.mxu0 %v2035
    %v2752 = vpop.f32.mrf.mxu0
    %v2753 = vadd.f32 %v2464, %v2752
    %v2754 = vpop.f32.mrf.mxu0
    %v2755 = vpop.f32.mrf.mxu0
    %v2756 = vadd.f32 %v2467, %v2755
    %v2757 = vpop.f32.mrf.mxu0
    %2758 = vmatprep.mubr.bf16.mxu0 0
    %2759 = vmatmul.mubr.bf16.gmra.mxu0 %v2038
    %v2760 = vpop.f32.mrf.mxu0
    %v2761 = vadd.f32 %v2472, %v2760
    %v2762 = vpop.f32.mrf.mxu0
    %v2763 = vpop.f32.mrf.mxu0
    %v2764 = vadd.f32 %v2475, %v2763
    %v2765 = vpop.f32.mrf.mxu0
    %2766 = vmatprep.mubr.bf16.mxu0 0
    %2767 = vmatmul.mubr.bf16.gmra.mxu0 %v2041
    %v2768 = vpop.f32.mrf.mxu0
    %v2769 = vadd.f32 %v2480, %v2768
    %v2770 = vpop.f32.mrf.mxu0
    %v2771 = vpop.f32.mrf.mxu0
    %v2772 = vadd.f32 %v2483, %v2771
    %v2773 = vpop.f32.mrf.mxu0
    %2774 = vmatprep.mubr.bf16.mxu0 0
    %2775 = vmatmul.mubr.bf16.gmra.mxu0 %v2044
    %v2776 = vpop.f32.mrf.mxu0
    %v2777 = vadd.f32 %v2488, %v2776
    %v2778 = vpop.f32.mrf.mxu0
    %v2779 = vpop.f32.mrf.mxu0
    %v2780 = vadd.f32 %v2491, %v2779
    %v2781 = vpop.f32.mrf.mxu0
    %2782 = vmatprep.mubr.bf16.mxu0 0
    %2783 = vmatmul.mubr.bf16.gmra.mxu0 %v2047
    %v2784 = vpop.f32.mrf.mxu0
    %v2785 = vadd.f32 %v2496, %v2784
    %v2786 = vpop.f32.mrf.mxu0
    %v2787 = vpop.f32.mrf.mxu0
    %v2788 = vadd.f32 %v2499, %v2787
    %v2789 = vpop.f32.mrf.mxu0
    %2790 = vmatprep.mubr.bf16.mxu0 0
    %2791 = vmatmul.mubr.bf16.gmra.mxu0 %v2050
    %v2792 = vpop.f32.mrf.mxu0
    %v2793 = vadd.f32 %v2504, %v2792
    %v2794 = vpop.f32.mrf.mxu0
    %v2795 = vpop.f32.mrf.mxu0
    %v2796 = vadd.f32 %v2507, %v2795
    %v2797 = vpop.f32.mrf.mxu0
    %2798 = vmatprep.mubr.bf16.mxu0 0
    %2799 = vmatmul.mubr.bf16.gmra.mxu0 %v2053
    %v2800 = vpop.f32.mrf.mxu0
    %v2801 = vadd.f32 %v2512, %v2800
    %v2802 = vpop.f32.mrf.mxu0
    %v2803 = vpop.f32.mrf.mxu0
    %v2804 = vadd.f32 %v2515, %v2803
    %v2805 = vpop.f32.mrf.mxu0
    %2806 = vmatprep.mubr.bf16.mxu0 0
    %2807 = vmatmul.mubr.bf16.gmra.mxu0 %v2056
    %v2808 = vpop.f32.mrf.mxu0
    %v2809 = vadd.f32 %v2520, %v2808
    %v2810 = vpop.f32.mrf.mxu0
    %v2811 = vpop.f32.mrf.mxu0
    %v2812 = vadd.f32 %v2523, %v2811
    %v2813 = vpop.f32.mrf.mxu0
    %2814 = vmatprep.mubr.bf16.mxu0 0
    %2815 = vmatmul.mubr.bf16.gmra.mxu0 %v2059
    %v2816 = vpop.f32.mrf.mxu0
    %v2817 = vadd.f32 %v2528, %v2816
    %v2818 = vpop.f32.mrf.mxu0
    %v2819 = vpop.f32.mrf.mxu0
    %v2820 = vadd.f32 %v2531, %v2819
    %v2821 = vpop.f32.mrf.mxu0
    %2822 = vmatprep.mubr.bf16.mxu0 0
    %2823 = vmatmul.mubr.bf16.gmra.mxu0 %v2062
    %v2824 = vpop.f32.mrf.mxu0
    %v2825 = vadd.f32 %v2536, %v2824
    %v2826 = vpop.f32.mrf.mxu0
    %v2827 = vpop.f32.mrf.mxu0
    %v2828 = vadd.f32 %v2539, %v2827
    %v2829 = vpop.f32.mrf.mxu0
    %2830 = vmatprep.mubr.bf16.mxu0 0
    %2831 = vmatmul.mubr.bf16.gmra.mxu0 %v2065
    %v2832 = vpop.f32.mrf.mxu0
    %v2833 = vadd.f32 %v2544, %v2832
    %v2834 = vpop.f32.mrf.mxu0
    %v2835 = vpop.f32.mrf.mxu0
    %v2836 = vadd.f32 %v2547, %v2835
    %v2837 = vpop.f32.mrf.mxu0
    %2838 = vmatprep.mubr.bf16.mxu0 0
    %2839 = vmatmul.mubr.bf16.gmra.mxu0 %v2068
    %v2840 = vpop.f32.mrf.mxu0
    %v2841 = vadd.f32 %v2552, %v2840
    %v2842 = vpop.f32.mrf.mxu0
    %v2843 = vpop.f32.mrf.mxu0
    %v2844 = vadd.f32 %v2555, %v2843
    %v2845 = vpop.f32.mrf.mxu0
    %2846 = vmatprep.mubr.bf16.mxu0 0
    %2847 = vmatmul.mubr.bf16.gmra.mxu0 %v2071
    %v2848 = vpop.f32.mrf.mxu0
    %v2849 = vadd.f32 %v2560, %v2848
    %v2850 = vpop.f32.mrf.mxu0
    %v2851 = vpop.f32.mrf.mxu0
    %v2852 = vadd.f32 %v2563, %v2851
    %v2853 = vpop.f32.mrf.mxu0
    %2854 = vmatprep.mubr.bf16.mxu0 0
    %2855 = vmatmul.mubr.bf16.gmra.mxu0 %v2074
    %v2856 = vpop.f32.mrf.mxu0
    %v2857 = vadd.f32 %v2568, %v2856
    %v2858 = vpop.f32.mrf.mxu0
    %v2859 = vpop.f32.mrf.mxu0
    %v2860 = vadd.f32 %v2571, %v2859
    %v2861 = vpop.f32.mrf.mxu0
    %2862 = vmatprep.mubr.bf16.mxu0 0
    %2863 = vmatmul.mubr.bf16.gmra.mxu0 %v2077
    %v2864 = vpop.f32.mrf.mxu0
    %v2865 = vadd.f32 %v2576, %v2864
    %v2866 = vpop.f32.mrf.mxu0
    %v2867 = vpop.f32.mrf.mxu0
    %v2868 = vadd.f32 %v2579, %v2867
    %v2869 = vpop.f32.mrf.mxu0
    %2870 = vmatprep.mubr.bf16.mxu0 0
    %2871 = vmatmul.mubr.bf16.gmra.mxu0 %v2080
    %v2872 = vpop.f32.mrf.mxu0
    %v2873 = vadd.f32 %v2584, %v2872
    %v2874 = vpop.f32.mrf.mxu0
    %v2875 = vpop.f32.mrf.mxu0
    %v2876 = vadd.f32 %v2587, %v2875
    %v2877 = vpop.f32.mrf.mxu0
    %2878 = vmatprep.mubr.bf16.mxu0 0
    %2879 = vmatmul.mubr.bf16.gmra.mxu0 %v2083
    %v2880 = vpop.f32.mrf.mxu0
    %v2881 = vadd.f32 %v2592, %v2880
    %v2882 = vpop.f32.mrf.mxu0
    %v2883 = vpop.f32.mrf.mxu0
    %v2884 = vadd.f32 %v2595, %v2883
    %v2885 = vpop.f32.mrf.mxu0
    %2886 = vmatprep.mubr.bf16.mxu0 0
    %2887 = vmatmul.mubr.bf16.gmra.mxu0 %v2086
    %v2888 = vpop.f32.mrf.mxu0
    %v2889 = vadd.f32 %v2600, %v2888
    %v2890 = vpop.f32.mrf.mxu0
    %v2891 = vpop.f32.mrf.mxu0
    %v2892 = vadd.f32 %v2603, %v2891
    %v2893 = vpop.f32.mrf.mxu0
    %2894 = vmatprep.mubr.bf16.mxu0 0
    %2895 = vmatmul.mubr.bf16.gmra.mxu0 %v2089
    %v2896 = vpop.f32.mrf.mxu0
    %v2897 = vadd.f32 %v2608, %v2896
    %v2898 = vpop.f32.mrf.mxu0
    %v2899 = vpop.f32.mrf.mxu0
    %v2900 = vadd.f32 %v2611, %v2899
    %v2901 = vpop.f32.mrf.mxu0
    %2902 = vmatprep.mubr.bf16.mxu0 0
    %2903 = vmatmul.mubr.bf16.gmra.mxu0 %v2092
    %v2904 = vpop.f32.mrf.mxu0
    %v2905 = vadd.f32 %v2616, %v2904
    %v2906 = vpop.f32.mrf.mxu0
    %v2907 = vpop.f32.mrf.mxu0
    %v2908 = vadd.f32 %v2619, %v2907
    %v2909 = vpop.f32.mrf.mxu0
    %2910 = vdwg.mxu0
    %v3039 = vunpack.c.l.b16 %v1324
    %v3040 = vunpack.c.h.b16 %v1324
    %v3041 = vunpack.c.l.b16 %v1325
    %v3042 = vunpack.c.l.b16 %v1326
    %v3043 = vunpack.c.h.b16 %v1326
    %v3044 = vunpack.c.l.b16 %v1327
    %v3045 = vunpack.c.l.b16 %v1328
    %v3046 = vunpack.c.h.b16 %v1328
    %v3047 = vunpack.c.l.b16 %v1329
    %v3048 = vunpack.c.l.b16 %v1330
    %v3049 = vunpack.c.h.b16 %v1330
    %v3050 = vunpack.c.l.b16 %v1331
    %v3051 = vunpack.c.l.b16 %v1332
    %v3052 = vunpack.c.h.b16 %v1332
    %v3053 = vunpack.c.l.b16 %v1333
    %v3054 = vunpack.c.l.b16 %v1334
    %v3055 = vunpack.c.h.b16 %v1334
    %v3056 = vunpack.c.l.b16 %v1335
    %v3057 = vunpack.c.l.b16 %v1336
    %v3058 = vunpack.c.h.b16 %v1336
    %v3059 = vunpack.c.l.b16 %v1337
    %v3060 = vunpack.c.l.b16 %v1338
    %v3061 = vunpack.c.h.b16 %v1338
    %v3062 = vunpack.c.l.b16 %v1339
    %v3063 = vunpack.c.l.b16 %v1340
    %v3064 = vunpack.c.h.b16 %v1340
    %v3065 = vunpack.c.l.b16 %v1341
    %v3066 = vunpack.c.l.b16 %v1342
    %v3067 = vunpack.c.h.b16 %v1342
    %v3068 = vunpack.c.l.b16 %v1343
    %v3069 = vunpack.c.l.b16 %v1344
    %v3070 = vunpack.c.h.b16 %v1344
    %v3071 = vunpack.c.l.b16 %v1345
    %v3072 = vunpack.c.l.b16 %v1346
    %v3073 = vunpack.c.h.b16 %v1346
    %v3074 = vunpack.c.l.b16 %v1347
    %v3075 = vunpack.c.l.b16 %v1348
    %v3076 = vunpack.c.h.b16 %v1348
    %v3077 = vunpack.c.l.b16 %v1349
    %v3078 = vunpack.c.l.b16 %v1350
    %v3079 = vunpack.c.h.b16 %v1350
    %v3080 = vunpack.c.l.b16 %v1351
    %v3081 = vunpack.c.l.b16 %v1352
    %v3082 = vunpack.c.h.b16 %v1352
    %v3083 = vunpack.c.l.b16 %v1353
    %v3084 = vunpack.c.l.b16 %v1354
    %v3085 = vunpack.c.h.b16 %v1354
    %v3086 = vunpack.c.l.b16 %v1355
    %v3087 = vunpack.c.l.b16 %v1356
    %v3088 = vunpack.c.h.b16 %v1356
    %v3089 = vunpack.c.l.b16 %v1357
    %v3090 = vunpack.c.l.b16 %v1358
    %v3091 = vunpack.c.h.b16 %v1358
    %v3092 = vunpack.c.l.b16 %v1359
    %v3093 = vunpack.c.l.b16 %v1360
    %v3094 = vunpack.c.h.b16 %v1360
    %v3095 = vunpack.c.l.b16 %v1361
    %v3096 = vunpack.c.l.b16 %v1362
    %v3097 = vunpack.c.h.b16 %v1362
    %v3098 = vunpack.c.l.b16 %v1363
    %v3099 = vunpack.c.l.b16 %v1364
    %v3100 = vunpack.c.h.b16 %v1364
    %v3101 = vunpack.c.l.b16 %v1365
    %v3102 = vunpack.c.l.b16 %v1366
    %v3103 = vunpack.c.h.b16 %v1366
    %v3104 = vunpack.c.l.b16 %v1367
    %v3105 = vunpack.c.l.b16 %v1368
    %v3106 = vunpack.c.h.b16 %v1368
    %v3107 = vunpack.c.l.b16 %v1369
    %v3108 = vunpack.c.l.b16 %v1370
    %v3109 = vunpack.c.h.b16 %v1370
    %v3110 = vunpack.c.l.b16 %v1371
    %v3111 = vunpack.c.l.b16 %v1372
    %v3112 = vunpack.c.h.b16 %v1372
    %v3113 = vunpack.c.l.b16 %v1373
    %v3114 = vunpack.c.l.b16 %v1374
    %v3115 = vunpack.c.h.b16 %v1374
    %v3116 = vunpack.c.l.b16 %v1375
    %v3117 = vunpack.c.l.b16 %v1376
    %v3118 = vunpack.c.h.b16 %v1376
    %v3119 = vunpack.c.l.b16 %v1377
    %v3120 = vunpack.c.l.b16 %v1378
    %v3121 = vunpack.c.h.b16 %v1378
    %v3122 = vunpack.c.l.b16 %v1379
    %v3123 = vunpack.c.l.b16 %v1380
    %v3124 = vunpack.c.h.b16 %v1380
    %v3125 = vunpack.c.l.b16 %v1381
    %v3126 = vunpack.c.l.b16 %v1382
    %v3127 = vunpack.c.h.b16 %v1382
    %v3128 = vunpack.c.l.b16 %v1383
    %v3129 = vunpack.c.l.b16 %v1384
    %v3130 = vunpack.c.h.b16 %v1384
    %v3131 = vunpack.c.l.b16 %v1385
    %v3132 = vunpack.c.l.b16 %v1386
    %v3133 = vunpack.c.h.b16 %v1386
    %v3134 = vunpack.c.l.b16 %v1387
    %v3135 = vunpack.c.l.b16 %v1388
    %v3136 = vunpack.c.h.b16 %v1388
    %v3137 = vunpack.c.l.b16 %v1389
    %v3138 = vunpack.c.l.b16 %v1390
    %v3139 = vunpack.c.h.b16 %v1390
    %v3140 = vunpack.c.l.b16 %v1391
    %v3141 = vunpack.c.l.b16 %v1392
    %v3142 = vunpack.c.h.b16 %v1392
    %v3143 = vunpack.c.l.b16 %v1393
    %v3144 = vunpack.c.l.b16 %v1394
    %v3145 = vunpack.c.h.b16 %v1394
    %v3146 = vunpack.c.l.b16 %v1395
    %v3147 = vunpack.c.l.b16 %v1396
    %v3148 = vunpack.c.h.b16 %v1396
    %v3149 = vunpack.c.l.b16 %v1397
    %v3150 = vunpack.c.l.b16 %v1398
    %v3151 = vunpack.c.h.b16 %v1398
    %v3152 = vunpack.c.l.b16 %v1399
    %v3153 = vunpack.c.l.b16 %v1400
    %v3154 = vunpack.c.h.b16 %v1400
    %v3155 = vunpack.c.l.b16 %v1401
    %v3156 = vunpack.c.l.b16 %v1402
    %v3157 = vunpack.c.h.b16 %v1402
    %v3158 = vunpack.c.l.b16 %v1403
    %v3159 = vunpack.c.l.b16 %v1404
    %v3160 = vunpack.c.h.b16 %v1404
    %v3161 = vunpack.c.l.b16 %v1405
    %v3162 = vunpack.c.l.b16 %v1406
    %v3163 = vunpack.c.h.b16 %v1406
    %v3164 = vunpack.c.l.b16 %v1407
    %v3165 = vunpack.c.l.b16 %v1408
    %v3166 = vunpack.c.h.b16 %v1408
    %v3167 = vunpack.c.l.b16 %v1409
    %v3168 = vunpack.c.l.b16 %v1410
    %v3169 = vunpack.c.h.b16 %v1410
    %v3170 = vunpack.c.l.b16 %v1411
    %v3171 = vunpack.c.l.b16 %v1412
    %v3172 = vunpack.c.h.b16 %v1412
    %v3173 = vunpack.c.l.b16 %v1413
    %v3174 = vunpack.c.l.b16 %v1414
    %v3175 = vunpack.c.h.b16 %v1414
    %v3176 = vunpack.c.l.b16 %v1415
    %v3177 = vunpack.c.l.b16 %v1416
    %v3178 = vunpack.c.h.b16 %v1416
    %v3179 = vunpack.c.l.b16 %v1417
    %v3180 = vunpack.c.l.b16 %v1418
    %v3181 = vunpack.c.h.b16 %v1418
    %v3182 = vunpack.c.l.b16 %v1419
    %v3183 = vunpack.c.l.b16 %v1420
    %v3184 = vunpack.c.h.b16 %v1420
    %v3185 = vunpack.c.l.b16 %v1421
    %v3186 = vunpack.c.l.b16 %v1422
    %v3187 = vunpack.c.h.b16 %v1422
    %v3188 = vunpack.c.l.b16 %v1423
    %v3189 = vunpack.c.l.b16 %v1424
    %v3190 = vunpack.c.h.b16 %v1424
    %v3191 = vunpack.c.l.b16 %v1425
    %v3192 = vunpack.c.l.b16 %v1426
    %v3193 = vunpack.c.h.b16 %v1426
    %v3194 = vunpack.c.l.b16 %v1427
    %v3195 = vunpack.c.l.b16 %v1428
    %v3196 = vunpack.c.h.b16 %v1428
    %v3197 = vunpack.c.l.b16 %v1429
    %v3198 = vunpack.c.l.b16 %v1430
    %v3199 = vunpack.c.h.b16 %v1430
    %v3200 = vunpack.c.l.b16 %v1431
    %v3201 = vunpack.c.l.b16 %v1432
    %v3202 = vunpack.c.h.b16 %v1432
    %v3203 = vunpack.c.l.b16 %v1433
    %v3204 = vunpack.c.l.b16 %v1434
    %v3205 = vunpack.c.h.b16 %v1434
    %v3206 = vunpack.c.l.b16 %v1435
    %v3207 = vunpack.c.l.b16 %v1436
    %v3208 = vunpack.c.h.b16 %v1436
    %v3209 = vunpack.c.l.b16 %v1437
    %v3210 = vunpack.c.l.b16 %v1438
    %v3211 = vunpack.c.h.b16 %v1438
    %v3212 = vunpack.c.l.b16 %v1439
    %v3213 = vunpack.c.l.b16 %v1440
    %v3214 = vunpack.c.h.b16 %v1440
    %v3215 = vunpack.c.l.b16 %v1441
    %v3216 = vunpack.c.l.b16 %v1442
    %v3217 = vunpack.c.h.b16 %v1442
    %v3218 = vunpack.c.l.b16 %v1443
    %v3219 = vunpack.c.l.b16 %v1444
    %v3220 = vunpack.c.h.b16 %v1444
    %v3221 = vunpack.c.l.b16 %v1445
    %v3222 = vunpack.c.l.b16 %v1446
    %v3223 = vunpack.c.h.b16 %v1446
    %v3224 = vunpack.c.l.b16 %v1447
    %v3225 = vunpack.c.l.b16 %v1448
    %v3226 = vunpack.c.h.b16 %v1448
    %v3227 = vunpack.c.l.b16 %v1449
    %v3228 = vunpack.c.l.b16 %v1450
    %v3229 = vunpack.c.h.b16 %v1450
    %v3230 = vunpack.c.l.b16 %v1451
    %v3231 = vpack.c.b16 %v3042, %v3039
    %v3232 = vpack.c.b16 %v3043, %v3040
    %v3233 = vpack.c.b16 %v3044, %v3041
    %v3234 = vpack.c.b16 %v3048, %v3045
    %v3235 = vpack.c.b16 %v3049, %v3046
    %v3236 = vpack.c.b16 %v3050, %v3047
    %v3237 = vpack.c.b16 %v3054, %v3051
    %v3238 = vpack.c.b16 %v3055, %v3052
    %v3239 = vpack.c.b16 %v3056, %v3053
    %v3240 = vpack.c.b16 %v3060, %v3057
    %v3241 = vpack.c.b16 %v3061, %v3058
    %v3242 = vpack.c.b16 %v3062, %v3059
    %v3243 = vpack.c.b16 %v3066, %v3063
    %v3244 = vpack.c.b16 %v3067, %v3064
    %v3245 = vpack.c.b16 %v3068, %v3065
    %v3246 = vpack.c.b16 %v3072, %v3069
    %v3247 = vpack.c.b16 %v3073, %v3070
    %v3248 = vpack.c.b16 %v3074, %v3071
    %v3249 = vpack.c.b16 %v3078, %v3075
    %v3250 = vpack.c.b16 %v3079, %v3076
    %v3251 = vpack.c.b16 %v3080, %v3077
    %v3252 = vpack.c.b16 %v3084, %v3081
    %v3253 = vpack.c.b16 %v3085, %v3082
    %v3254 = vpack.c.b16 %v3086, %v3083
    %v3255 = vpack.c.b16 %v3090, %v3087
    %v3256 = vpack.c.b16 %v3091, %v3088
    %v3257 = vpack.c.b16 %v3092, %v3089
    %v3258 = vpack.c.b16 %v3096, %v3093
    %v3259 = vpack.c.b16 %v3097, %v3094
    %v3260 = vpack.c.b16 %v3098, %v3095
    %v3261 = vpack.c.b16 %v3102, %v3099
    %v3262 = vpack.c.b16 %v3103, %v3100
    %v3263 = vpack.c.b16 %v3104, %v3101
    %v3264 = vpack.c.b16 %v3108, %v3105
    %v3265 = vpack.c.b16 %v3109, %v3106
    %v3266 = vpack.c.b16 %v3110, %v3107
    %v3267 = vpack.c.b16 %v3114, %v3111
    %v3268 = vpack.c.b16 %v3115, %v3112
    %v3269 = vpack.c.b16 %v3116, %v3113
    %v3270 = vpack.c.b16 %v3120, %v3117
    %v3271 = vpack.c.b16 %v3121, %v3118
    %v3272 = vpack.c.b16 %v3122, %v3119
    %v3273 = vpack.c.b16 %v3126, %v3123
    %v3274 = vpack.c.b16 %v3127, %v3124
    %v3275 = vpack.c.b16 %v3128, %v3125
    %v3276 = vpack.c.b16 %v3132, %v3129
    %v3277 = vpack.c.b16 %v3133, %v3130
    %v3278 = vpack.c.b16 %v3134, %v3131
    %v3279 = vpack.c.b16 %v3138, %v3135
    %v3280 = vpack.c.b16 %v3139, %v3136
    %v3281 = vpack.c.b16 %v3140, %v3137
    %v3282 = vpack.c.b16 %v3144, %v3141
    %v3283 = vpack.c.b16 %v3145, %v3142
    %v3284 = vpack.c.b16 %v3146, %v3143
    %v3285 = vpack.c.b16 %v3150, %v3147
    %v3286 = vpack.c.b16 %v3151, %v3148
    %v3287 = vpack.c.b16 %v3152, %v3149
    %v3288 = vpack.c.b16 %v3156, %v3153
    %v3289 = vpack.c.b16 %v3157, %v3154
    %v3290 = vpack.c.b16 %v3158, %v3155
    %v3291 = vpack.c.b16 %v3162, %v3159
    %v3292 = vpack.c.b16 %v3163, %v3160
    %v3293 = vpack.c.b16 %v3164, %v3161
    %v3294 = vpack.c.b16 %v3168, %v3165
    %v3295 = vpack.c.b16 %v3169, %v3166
    %v3296 = vpack.c.b16 %v3170, %v3167
    %v3297 = vpack.c.b16 %v3174, %v3171
    %v3298 = vpack.c.b16 %v3175, %v3172
    %v3299 = vpack.c.b16 %v3176, %v3173
    %v3300 = vpack.c.b16 %v3180, %v3177
    %v3301 = vpack.c.b16 %v3181, %v3178
    %v3302 = vpack.c.b16 %v3182, %v3179
    %v3303 = vpack.c.b16 %v3186, %v3183
    %v3304 = vpack.c.b16 %v3187, %v3184
    %v3305 = vpack.c.b16 %v3188, %v3185
    %v3306 = vpack.c.b16 %v3192, %v3189
    %v3307 = vpack.c.b16 %v3193, %v3190
    %v3308 = vpack.c.b16 %v3194, %v3191
    %v3309 = vpack.c.b16 %v3198, %v3195
    %v3310 = vpack.c.b16 %v3199, %v3196
    %v3311 = vpack.c.b16 %v3200, %v3197
    %v3312 = vpack.c.b16 %v3204, %v3201
    %v3313 = vpack.c.b16 %v3205, %v3202
    %v3314 = vpack.c.b16 %v3206, %v3203
    %v3315 = vpack.c.b16 %v3210, %v3207
    %v3316 = vpack.c.b16 %v3211, %v3208
    %v3317 = vpack.c.b16 %v3212, %v3209
    %v3318 = vpack.c.b16 %v3216, %v3213
    %v3319 = vpack.c.b16 %v3217, %v3214
    %v3320 = vpack.c.b16 %v3218, %v3215
    %v3321 = vpack.c.b16 %v3222, %v3219
    %v3322 = vpack.c.b16 %v3223, %v3220
    %v3323 = vpack.c.b16 %v3224, %v3221
    %v3324 = vpack.c.b16 %v3228, %v3225
    %v3325 = vpack.c.b16 %v3229, %v3226
    %v3326 = vpack.c.b16 %v3230, %v3227
    %v3471 = vunpack.c.l.b16 %v1452
    %v3472 = vunpack.c.l.b16 %v1453
    %v3473 = vunpack.c.l.b16 %v1454
    %v3474 = vunpack.c.l.b16 %v1455
    %v3475 = vunpack.c.l.b16 %v1456
    %v3476 = vunpack.c.l.b16 %v1457
    %v3477 = vunpack.c.l.b16 %v1458
    %v3478 = vunpack.c.l.b16 %v1459
    %v3479 = vunpack.c.l.b16 %v1460
    %v3480 = vunpack.c.l.b16 %v1461
    %v3481 = vunpack.c.l.b16 %v1462
    %v3482 = vunpack.c.l.b16 %v1463
    %v3483 = vunpack.c.l.b16 %v1464
    %v3484 = vunpack.c.l.b16 %v1465
    %v3485 = vunpack.c.l.b16 %v1466
    %v3486 = vunpack.c.l.b16 %v1467
    %v3487 = vunpack.c.l.b16 %v1468
    %v3488 = vunpack.c.l.b16 %v1469
    %v3489 = vunpack.c.l.b16 %v1470
    %v3490 = vunpack.c.l.b16 %v1471
    %v3491 = vunpack.c.l.b16 %v1472
    %v3492 = vunpack.c.l.b16 %v1473
    %v3493 = vunpack.c.l.b16 %v1474
    %v3494 = vunpack.c.l.b16 %v1475
    %v3495 = vunpack.c.l.b16 %v1476
    %v3496 = vunpack.c.l.b16 %v1477
    %v3497 = vunpack.c.l.b16 %v1478
    %v3498 = vunpack.c.l.b16 %v1479
    %v3499 = vunpack.c.l.b16 %v1480
    %v3500 = vunpack.c.l.b16 %v1481
    %v3501 = vunpack.c.l.b16 %v1482
    %v3502 = vunpack.c.l.b16 %v1483
    %v3503 = vunpack.c.l.b16 %v1484
    %v3504 = vunpack.c.l.b16 %v1485
    %v3505 = vunpack.c.l.b16 %v1486
    %v3506 = vunpack.c.l.b16 %v1487
    %v3507 = vunpack.c.l.b16 %v1488
    %v3508 = vunpack.c.l.b16 %v1489
    %v3509 = vunpack.c.l.b16 %v1490
    %v3510 = vunpack.c.l.b16 %v1491
    %v3511 = vunpack.c.l.b16 %v1492
    %v3512 = vunpack.c.l.b16 %v1493
    %v3513 = vunpack.c.l.b16 %v1494
    %v3514 = vunpack.c.l.b16 %v1495
    %v3515 = vunpack.c.l.b16 %v1496
    %v3516 = vunpack.c.l.b16 %v1497
    %v3517 = vunpack.c.l.b16 %v1498
    %v3518 = vunpack.c.l.b16 %v1499
    %v3519 = vpack.c.b16 %v3472, %v3471
    %v3520 = vpack.c.b16 %v3474, %v3473
    %v3521 = vpack.c.b16 %v3476, %v3475
    %v3522 = vpack.c.b16 %v3478, %v3477
    %v3523 = vpack.c.b16 %v3480, %v3479
    %v3524 = vpack.c.b16 %v3482, %v3481
    %v3525 = vpack.c.b16 %v3484, %v3483
    %v3526 = vpack.c.b16 %v3486, %v3485
    %v3527 = vpack.c.b16 %v3488, %v3487
    %v3528 = vpack.c.b16 %v3490, %v3489
    %v3529 = vpack.c.b16 %v3492, %v3491
    %v3530 = vpack.c.b16 %v3494, %v3493
    %v3531 = vpack.c.b16 %v3496, %v3495
    %v3532 = vpack.c.b16 %v3498, %v3497
    %v3533 = vpack.c.b16 %v3500, %v3499
    %v3534 = vpack.c.b16 %v3502, %v3501
    %v3535 = vpack.c.b16 %v3504, %v3503
    %v3536 = vpack.c.b16 %v3506, %v3505
    %v3537 = vpack.c.b16 %v3508, %v3507
    %v3538 = vpack.c.b16 %v3510, %v3509
    %v3539 = vpack.c.b16 %v3512, %v3511
    %v3540 = vpack.c.b16 %v3514, %v3513
    %v3541 = vpack.c.b16 %v3516, %v3515
    %v3542 = vpack.c.b16 %v3518, %v3517
    %3567 = vmatprep.subr.bf16.mxu0 0
    %3568 = vmatpush1.bf16.msra.mxu0 %v3526
    %3569 = vmatprep.subr.bf16.mxu0 0
    %3570 = vmatpush1.bf16.msra.mxu0 %v3525
    %3571 = vmatprep.subr.bf16.mxu0 0
    %3572 = vmatpush1.bf16.msra.mxu0 %v3524
    %3573 = vmatprep.subr.bf16.mxu0 0
    %3574 = vmatpush1.bf16.msra.mxu0 %v3523
    %3575 = vmatprep.subr.bf16.mxu0 0
    %3576 = vmatpush1.bf16.msra.mxu0 %v3522
    %3577 = vmatprep.subr.bf16.mxu0 0
    %3578 = vmatpush1.bf16.msra.mxu0 %v3521
    %3579 = vmatprep.subr.bf16.mxu0 0
    %3580 = vmatpush1.bf16.msra.mxu0 %v3520
    %3581 = vmatprep.subr.bf16.mxu0 0
    %3582 = vmatpush1.bf16.msra.mxu0 %v3519
    %3583 = vmatprep.subr.bf16.mxu0 0
    %3584 = vmatpush2.bf16.msra.mxu0 %v3534
    %3585 = vmatprep.subr.bf16.mxu0 0
    %3586 = vmatpush2.bf16.msra.mxu0 %v3533
    %3587 = vmatprep.subr.bf16.mxu0 0
    %3588 = vmatpush2.bf16.msra.mxu0 %v3532
    %3589 = vmatprep.subr.bf16.mxu0 0
    %3590 = vmatpush2.bf16.msra.mxu0 %v3531
    %3591 = vmatprep.subr.bf16.mxu0 0
    %3592 = vmatpush2.bf16.msra.mxu0 %v3530
    %3593 = vmatprep.subr.bf16.mxu0 0
    %3594 = vmatpush2.bf16.msra.mxu0 %v3529
    %3595 = vmatprep.subr.bf16.mxu0 0
    %3596 = vmatpush2.bf16.msra.mxu0 %v3528
    %3597 = vmatprep.subr.bf16.mxu0 0
    %3598 = vmatpush2.bf16.msra.mxu0 %v3527
    %3599 = vmatprep.mubr.bf16.mxu0 %v3232
    %3600 = vmatmul.mubr.bf16.gmra.mxu0 %v3231
    %v3601 = vpop.f32.mrf.mxu0
    %v3602 = vadd.f32 %v2657, %v3601
    %v3603 = vpop.f32.mrf.mxu0
    %v3604 = vpop.f32.mrf.mxu0
    %v3605 = vadd.f32 %v2660, %v3604
    %v3606 = vpop.f32.mrf.mxu0
    %3607 = vmatprep.mubr.bf16.mxu0 %v3235
    %3608 = vmatmul.mubr.bf16.gmra.mxu0 %v3234
    %v3609 = vpop.f32.mrf.mxu0
    %v3610 = vadd.f32 %v2665, %v3609
    %v3611 = vpop.f32.mrf.mxu0
    %v3612 = vpop.f32.mrf.mxu0
    %v3613 = vadd.f32 %v2668, %v3612
    %v3614 = vpop.f32.mrf.mxu0
    %3615 = vmatprep.mubr.bf16.mxu0 %v3238
    %3616 = vmatmul.mubr.bf16.gmra.mxu0 %v3237
    %v3617 = vpop.f32.mrf.mxu0
    %v3618 = vadd.f32 %v2673, %v3617
    %v3619 = vpop.f32.mrf.mxu0
    %v3620 = vpop.f32.mrf.mxu0
    %v3621 = vadd.f32 %v2676, %v3620
    %v3622 = vpop.f32.mrf.mxu0
    %3623 = vmatprep.mubr.bf16.mxu0 %v3241
    %3624 = vmatmul.mubr.bf16.gmra.mxu0 %v3240
    %v3625 = vpop.f32.mrf.mxu0
    %v3626 = vadd.f32 %v2681, %v3625
    %v3627 = vpop.f32.mrf.mxu0
    %v3628 = vpop.f32.mrf.mxu0
    %v3629 = vadd.f32 %v2684, %v3628
    %v3630 = vpop.f32.mrf.mxu0
    %3631 = vmatprep.mubr.bf16.mxu0 %v3244
    %3632 = vmatmul.mubr.bf16.gmra.mxu0 %v3243
    %v3633 = vpop.f32.mrf.mxu0
    %v3634 = vadd.f32 %v2689, %v3633
    %v3635 = vpop.f32.mrf.mxu0
    %v3636 = vpop.f32.mrf.mxu0
    %v3637 = vadd.f32 %v2692, %v3636
    %v3638 = vpop.f32.mrf.mxu0
    %3639 = vmatprep.mubr.bf16.mxu0 %v3247
    %3640 = vmatmul.mubr.bf16.gmra.mxu0 %v3246
    %v3641 = vpop.f32.mrf.mxu0
    %v3642 = vadd.f32 %v2697, %v3641
    %v3643 = vpop.f32.mrf.mxu0
    %v3644 = vpop.f32.mrf.mxu0
    %v3645 = vadd.f32 %v2700, %v3644
    %v3646 = vpop.f32.mrf.mxu0
    %3647 = vmatprep.mubr.bf16.mxu0 %v3250
    %3648 = vmatmul.mubr.bf16.gmra.mxu0 %v3249
    %v3649 = vpop.f32.mrf.mxu0
    %v3650 = vadd.f32 %v2705, %v3649
    %v3651 = vpop.f32.mrf.mxu0
    %v3652 = vpop.f32.mrf.mxu0
    %v3653 = vadd.f32 %v2708, %v3652
    %v3654 = vpop.f32.mrf.mxu0
    %3655 = vmatprep.mubr.bf16.mxu0 %v3253
    %3656 = vmatmul.mubr.bf16.gmra.mxu0 %v3252
    %v3657 = vpop.f32.mrf.mxu0
    %v3658 = vadd.f32 %v2713, %v3657
    %v3659 = vpop.f32.mrf.mxu0
    %v3660 = vpop.f32.mrf.mxu0
    %v3661 = vadd.f32 %v2716, %v3660
    %v3662 = vpop.f32.mrf.mxu0
    %3663 = vmatprep.mubr.bf16.mxu0 %v3256
    %3664 = vmatmul.mubr.bf16.gmra.mxu0 %v3255
    %v3665 = vpop.f32.mrf.mxu0
    %v3666 = vadd.f32 %v2721, %v3665
    %v3667 = vpop.f32.mrf.mxu0
    %v3668 = vpop.f32.mrf.mxu0
    %v3669 = vadd.f32 %v2724, %v3668
    %v3670 = vpop.f32.mrf.mxu0
    %3671 = vmatprep.mubr.bf16.mxu0 %v3259
    %3672 = vmatmul.mubr.bf16.gmra.mxu0 %v3258
    %v3673 = vpop.f32.mrf.mxu0
    %v3674 = vadd.f32 %v2729, %v3673
    %v3675 = vpop.f32.mrf.mxu0
    %v3676 = vpop.f32.mrf.mxu0
    %v3677 = vadd.f32 %v2732, %v3676
    %v3678 = vpop.f32.mrf.mxu0
    %3679 = vmatprep.mubr.bf16.mxu0 %v3262
    %3680 = vmatmul.mubr.bf16.gmra.mxu0 %v3261
    %v3681 = vpop.f32.mrf.mxu0
    %v3682 = vadd.f32 %v2737, %v3681
    %v3683 = vpop.f32.mrf.mxu0
    %v3684 = vpop.f32.mrf.mxu0
    %v3685 = vadd.f32 %v2740, %v3684
    %v3686 = vpop.f32.mrf.mxu0
    %3687 = vmatprep.mubr.bf16.mxu0 %v3265
    %3688 = vmatmul.mubr.bf16.gmra.mxu0 %v3264
    %v3689 = vpop.f32.mrf.mxu0
    %v3690 = vadd.f32 %v2745, %v3689
    %v3691 = vpop.f32.mrf.mxu0
    %v3692 = vpop.f32.mrf.mxu0
    %v3693 = vadd.f32 %v2748, %v3692
    %v3694 = vpop.f32.mrf.mxu0
    %3695 = vmatprep.mubr.bf16.mxu0 %v3268
    %3696 = vmatmul.mubr.bf16.gmra.mxu0 %v3267
    %v3697 = vpop.f32.mrf.mxu0
    %v3698 = vadd.f32 %v2753, %v3697
    %v3699 = vpop.f32.mrf.mxu0
    %v3700 = vpop.f32.mrf.mxu0
    %v3701 = vadd.f32 %v2756, %v3700
    %v3702 = vpop.f32.mrf.mxu0
    %3703 = vmatprep.mubr.bf16.mxu0 %v3271
    %3704 = vmatmul.mubr.bf16.gmra.mxu0 %v3270
    %v3705 = vpop.f32.mrf.mxu0
    %v3706 = vadd.f32 %v2761, %v3705
    %v3707 = vpop.f32.mrf.mxu0
    %v3708 = vpop.f32.mrf.mxu0
    %v3709 = vadd.f32 %v2764, %v3708
    %v3710 = vpop.f32.mrf.mxu0
    %3711 = vmatprep.mubr.bf16.mxu0 %v3274
    %3712 = vmatmul.mubr.bf16.gmra.mxu0 %v3273
    %v3713 = vpop.f32.mrf.mxu0
    %v3714 = vadd.f32 %v2769, %v3713
    %v3715 = vpop.f32.mrf.mxu0
    %v3716 = vpop.f32.mrf.mxu0
    %v3717 = vadd.f32 %v2772, %v3716
    %v3718 = vpop.f32.mrf.mxu0
    %3719 = vmatprep.mubr.bf16.mxu0 %v3277
    %3720 = vmatmul.mubr.bf16.gmra.mxu0 %v3276
    %v3721 = vpop.f32.mrf.mxu0
    %v3722 = vadd.f32 %v2777, %v3721
    %v3723 = vpop.f32.mrf.mxu0
    %v3724 = vpop.f32.mrf.mxu0
    %v3725 = vadd.f32 %v2780, %v3724
    %v3726 = vpop.f32.mrf.mxu0
    %3727 = vmatprep.mubr.bf16.mxu0 %v3280
    %3728 = vmatmul.mubr.bf16.gmra.mxu0 %v3279
    %v3729 = vpop.f32.mrf.mxu0
    %v3730 = vadd.f32 %v2785, %v3729
    %v3731 = vpop.f32.mrf.mxu0
    %v3732 = vpop.f32.mrf.mxu0
    %v3733 = vadd.f32 %v2788, %v3732
    %v3734 = vpop.f32.mrf.mxu0
    %3735 = vmatprep.mubr.bf16.mxu0 %v3283
    %3736 = vmatmul.mubr.bf16.gmra.mxu0 %v3282
    %v3737 = vpop.f32.mrf.mxu0
    %v3738 = vadd.f32 %v2793, %v3737
    %v3739 = vpop.f32.mrf.mxu0
    %v3740 = vpop.f32.mrf.mxu0
    %v3741 = vadd.f32 %v2796, %v3740
    %v3742 = vpop.f32.mrf.mxu0
    %3743 = vmatprep.mubr.bf16.mxu0 %v3286
    %3744 = vmatmul.mubr.bf16.gmra.mxu0 %v3285
    %v3745 = vpop.f32.mrf.mxu0
    %v3746 = vadd.f32 %v2801, %v3745
    %v3747 = vpop.f32.mrf.mxu0
    %v3748 = vpop.f32.mrf.mxu0
    %v3749 = vadd.f32 %v2804, %v3748
    %v3750 = vpop.f32.mrf.mxu0
    %3751 = vmatprep.mubr.bf16.mxu0 %v3289
    %3752 = vmatmul.mubr.bf16.gmra.mxu0 %v3288
    %v3753 = vpop.f32.mrf.mxu0
    %v3754 = vadd.f32 %v2809, %v3753
    %v3755 = vpop.f32.mrf.mxu0
    %v3756 = vpop.f32.mrf.mxu0
    %v3757 = vadd.f32 %v2812, %v3756
    %v3758 = vpop.f32.mrf.mxu0
    %3759 = vmatprep.mubr.bf16.mxu0 %v3292
    %3760 = vmatmul.mubr.bf16.gmra.mxu0 %v3291
    %v3761 = vpop.f32.mrf.mxu0
    %v3762 = vadd.f32 %v2817, %v3761
    %v3763 = vpop.f32.mrf.mxu0
    %v3764 = vpop.f32.mrf.mxu0
    %v3765 = vadd.f32 %v2820, %v3764
    %v3766 = vpop.f32.mrf.mxu0
    %3767 = vmatprep.mubr.bf16.mxu0 %v3295
    %3768 = vmatmul.mubr.bf16.gmra.mxu0 %v3294
    %v3769 = vpop.f32.mrf.mxu0
    %v3770 = vadd.f32 %v2825, %v3769
    %v3771 = vpop.f32.mrf.mxu0
    %v3772 = vpop.f32.mrf.mxu0
    %v3773 = vadd.f32 %v2828, %v3772
    %v3774 = vpop.f32.mrf.mxu0
    %3775 = vmatprep.mubr.bf16.mxu0 %v3298
    %3776 = vmatmul.mubr.bf16.gmra.mxu0 %v3297
    %v3777 = vpop.f32.mrf.mxu0
    %v3778 = vadd.f32 %v2833, %v3777
    %v3779 = vpop.f32.mrf.mxu0
    %v3780 = vpop.f32.mrf.mxu0
    %v3781 = vadd.f32 %v2836, %v3780
    %v3782 = vpop.f32.mrf.mxu0
    %3783 = vmatprep.mubr.bf16.mxu0 %v3301
    %3784 = vmatmul.mubr.bf16.gmra.mxu0 %v3300
    %v3785 = vpop.f32.mrf.mxu0
    %v3786 = vadd.f32 %v2841, %v3785
    %v3787 = vpop.f32.mrf.mxu0
    %v3788 = vpop.f32.mrf.mxu0
    %v3789 = vadd.f32 %v2844, %v3788
    %v3790 = vpop.f32.mrf.mxu0
    %3791 = vmatprep.mubr.bf16.mxu0 %v3304
    %3792 = vmatmul.mubr.bf16.gmra.mxu0 %v3303
    %v3793 = vpop.f32.mrf.mxu0
    %v3794 = vadd.f32 %v2849, %v3793
    %v3795 = vpop.f32.mrf.mxu0
    %v3796 = vpop.f32.mrf.mxu0
    %v3797 = vadd.f32 %v2852, %v3796
    %v3798 = vpop.f32.mrf.mxu0
    %3799 = vmatprep.mubr.bf16.mxu0 %v3307
    %3800 = vmatmul.mubr.bf16.gmra.mxu0 %v3306
    %v3801 = vpop.f32.mrf.mxu0
    %v3802 = vadd.f32 %v2857, %v3801
    %v3803 = vpop.f32.mrf.mxu0
    %v3804 = vpop.f32.mrf.mxu0
    %v3805 = vadd.f32 %v2860, %v3804
    %v3806 = vpop.f32.mrf.mxu0
    %3807 = vmatprep.mubr.bf16.mxu0 %v3310
    %3808 = vmatmul.mubr.bf16.gmra.mxu0 %v3309
    %v3809 = vpop.f32.mrf.mxu0
    %v3810 = vadd.f32 %v2865, %v3809
    %v3811 = vpop.f32.mrf.mxu0
    %v3812 = vpop.f32.mrf.mxu0
    %v3813 = vadd.f32 %v2868, %v3812
    %v3814 = vpop.f32.mrf.mxu0
    %3815 = vmatprep.mubr.bf16.mxu0 %v3313
    %3816 = vmatmul.mubr.bf16.gmra.mxu0 %v3312
    %v3817 = vpop.f32.mrf.mxu0
    %v3818 = vadd.f32 %v2873, %v3817
    %v3819 = vpop.f32.mrf.mxu0
    %v3820 = vpop.f32.mrf.mxu0
    %v3821 = vadd.f32 %v2876, %v3820
    %v3822 = vpop.f32.mrf.mxu0
    %3823 = vmatprep.mubr.bf16.mxu0 %v3316
    %3824 = vmatmul.mubr.bf16.gmra.mxu0 %v3315
    %v3825 = vpop.f32.mrf.mxu0
    %v3826 = vadd.f32 %v2881, %v3825
    %v3827 = vpop.f32.mrf.mxu0
    %v3828 = vpop.f32.mrf.mxu0
    %v3829 = vadd.f32 %v2884, %v3828
    %v3830 = vpop.f32.mrf.mxu0
    %3831 = vmatprep.mubr.bf16.mxu0 %v3319
    %3832 = vmatmul.mubr.bf16.gmra.mxu0 %v3318
    %v3833 = vpop.f32.mrf.mxu0
    %v3834 = vadd.f32 %v2889, %v3833
    %v3835 = vpop.f32.mrf.mxu0
    %v3836 = vpop.f32.mrf.mxu0
    %v3837 = vadd.f32 %v2892, %v3836
    %v3838 = vpop.f32.mrf.mxu0
    %3839 = vmatprep.mubr.bf16.mxu0 %v3322
    %3840 = vmatmul.mubr.bf16.gmra.mxu0 %v3321
    %v3841 = vpop.f32.mrf.mxu0
    %v3842 = vadd.f32 %v2897, %v3841
    %v3843 = vpop.f32.mrf.mxu0
    %v3844 = vpop.f32.mrf.mxu0
    %v3845 = vadd.f32 %v2900, %v3844
    %v3846 = vpop.f32.mrf.mxu0
    %3847 = vmatprep.mubr.bf16.mxu0 %v3325
    %3848 = vmatmul.mubr.bf16.gmra.mxu0 %v3324
    %v3849 = vpop.f32.mrf.mxu0
    %v3850 = vadd.f32 %v2905, %v3849
    %v3851 = vpop.f32.mrf.mxu0
    %v3852 = vpop.f32.mrf.mxu0
    %v3853 = vadd.f32 %v2908, %v3852
    %v3854 = vpop.f32.mrf.mxu0
    %3855 = vdwg.mxu0
    %3856 = vmatprep.subr.bf16.mxu0 0
    %3857 = vmatpush1.bf16.msra.mxu0 %v3542
    %3858 = vmatprep.subr.bf16.mxu0 0
    %3859 = vmatpush1.bf16.msra.mxu0 %v3541
    %3860 = vmatprep.subr.bf16.mxu0 0
    %3861 = vmatpush1.bf16.msra.mxu0 %v3540
    %3862 = vmatprep.subr.bf16.mxu0 0
    %3863 = vmatpush1.bf16.msra.mxu0 %v3539
    %3864 = vmatprep.subr.bf16.mxu0 0
    %3865 = vmatpush1.bf16.msra.mxu0 %v3538
    %3866 = vmatprep.subr.bf16.mxu0 0
    %3867 = vmatpush1.bf16.msra.mxu0 %v3537
    %3868 = vmatprep.subr.bf16.mxu0 0
    %3869 = vmatpush1.bf16.msra.mxu0 %v3536
    %3870 = vmatprep.subr.bf16.mxu0 0
    %3871 = vmatpush1.bf16.msra.mxu0 %v3535
    %3872 = vmatprep.subr.bf16.mxu0 0
    %3873 = vmatpush2.bf16.msra.mxu0 0
    %3874 = vmatprep.subr.bf16.mxu0 0
    %3875 = vmatpush2.bf16.msra.mxu0 0
    %3876 = vmatprep.subr.bf16.mxu0 0
    %3877 = vmatpush2.bf16.msra.mxu0 0
    %3878 = vmatprep.subr.bf16.mxu0 0
    %3879 = vmatpush2.bf16.msra.mxu0 0
    %3880 = vmatprep.subr.bf16.mxu0 0
    %3881 = vmatpush2.bf16.msra.mxu0 0
    %3882 = vmatprep.subr.bf16.mxu0 0
    %3883 = vmatpush2.bf16.msra.mxu0 0
    %3884 = vmatprep.subr.bf16.mxu0 0
    %3885 = vmatpush2.bf16.msra.mxu0 0
    %3886 = vmatprep.subr.bf16.mxu0 0
    %3887 = vmatpush2.bf16.msra.mxu0 0
    %3888 = vmatprep.mubr.bf16.mxu0 0
    %3889 = vmatmul.mubr.bf16.gmra.mxu0 %v3233
    %v3890 = vpop.f32.mrf.mxu0
    %v3891 = vadd.f32 %v3602, %v3890
    %v3892 = vpop.f32.mrf.mxu0
    %v3893 = vpop.f32.mrf.mxu0
    %v3894 = vadd.f32 %v3605, %v3893
    %v3895 = vpop.f32.mrf.mxu0
    %3896 = vmatprep.mubr.bf16.mxu0 0
    %3897 = vmatmul.mubr.bf16.gmra.mxu0 %v3236
    %v3898 = vpop.f32.mrf.mxu0
    %v3899 = vadd.f32 %v3610, %v3898
    %v3900 = vpop.f32.mrf.mxu0
    %v3901 = vpop.f32.mrf.mxu0
    %v3902 = vadd.f32 %v3613, %v3901
    %v3903 = vpop.f32.mrf.mxu0
    %3904 = vmatprep.mubr.bf16.mxu0 0
    %3905 = vmatmul.mubr.bf16.gmra.mxu0 %v3239
    %v3906 = vpop.f32.mrf.mxu0
    %v3907 = vadd.f32 %v3618, %v3906
    %v3908 = vpop.f32.mrf.mxu0
    %v3909 = vpop.f32.mrf.mxu0
    %v3910 = vadd.f32 %v3621, %v3909
    %v3911 = vpop.f32.mrf.mxu0
    %3912 = vmatprep.mubr.bf16.mxu0 0
    %3913 = vmatmul.mubr.bf16.gmra.mxu0 %v3242
    %v3914 = vpop.f32.mrf.mxu0
    %v3915 = vadd.f32 %v3626, %v3914
    %v3916 = vpop.f32.mrf.mxu0
    %v3917 = vpop.f32.mrf.mxu0
    %v3918 = vadd.f32 %v3629, %v3917
    %v3919 = vpop.f32.mrf.mxu0
    %3920 = vmatprep.mubr.bf16.mxu0 0
    %3921 = vmatmul.mubr.bf16.gmra.mxu0 %v3245
    %v3922 = vpop.f32.mrf.mxu0
    %v3923 = vadd.f32 %v3634, %v3922
    %v3924 = vpop.f32.mrf.mxu0
    %v3925 = vpop.f32.mrf.mxu0
    %v3926 = vadd.f32 %v3637, %v3925
    %v3927 = vpop.f32.mrf.mxu0
    %3928 = vmatprep.mubr.bf16.mxu0 0
    %3929 = vmatmul.mubr.bf16.gmra.mxu0 %v3248
    %v3930 = vpop.f32.mrf.mxu0
    %v3931 = vadd.f32 %v3642, %v3930
    %v3932 = vpop.f32.mrf.mxu0
    %v3933 = vpop.f32.mrf.mxu0
    %v3934 = vadd.f32 %v3645, %v3933
    %v3935 = vpop.f32.mrf.mxu0
    %3936 = vmatprep.mubr.bf16.mxu0 0
    %3937 = vmatmul.mubr.bf16.gmra.mxu0 %v3251
    %v3938 = vpop.f32.mrf.mxu0
    %v3939 = vadd.f32 %v3650, %v3938
    %v3940 = vpop.f32.mrf.mxu0
    %v3941 = vpop.f32.mrf.mxu0
    %v3942 = vadd.f32 %v3653, %v3941
    %v3943 = vpop.f32.mrf.mxu0
    %3944 = vmatprep.mubr.bf16.mxu0 0
    %3945 = vmatmul.mubr.bf16.gmra.mxu0 %v3254
    %v3946 = vpop.f32.mrf.mxu0
    %v3947 = vadd.f32 %v3658, %v3946
    %v3948 = vpop.f32.mrf.mxu0
    %v3949 = vpop.f32.mrf.mxu0
    %v3950 = vadd.f32 %v3661, %v3949
    %v3951 = vpop.f32.mrf.mxu0
    %3952 = vmatprep.mubr.bf16.mxu0 0
    %3953 = vmatmul.mubr.bf16.gmra.mxu0 %v3257
    %v3954 = vpop.f32.mrf.mxu0
    %v3955 = vadd.f32 %v3666, %v3954
    %v3956 = vpop.f32.mrf.mxu0
    %v3957 = vpop.f32.mrf.mxu0
    %v3958 = vadd.f32 %v3669, %v3957
    %v3959 = vpop.f32.mrf.mxu0
    %3960 = vmatprep.mubr.bf16.mxu0 0
    %3961 = vmatmul.mubr.bf16.gmra.mxu0 %v3260
    %v3962 = vpop.f32.mrf.mxu0
    %v3963 = vadd.f32 %v3674, %v3962
    %v3964 = vpop.f32.mrf.mxu0
    %v3965 = vpop.f32.mrf.mxu0
    %v3966 = vadd.f32 %v3677, %v3965
    %v3967 = vpop.f32.mrf.mxu0
    %3968 = vmatprep.mubr.bf16.mxu0 0
    %3969 = vmatmul.mubr.bf16.gmra.mxu0 %v3263
    %v3970 = vpop.f32.mrf.mxu0
    %v3971 = vadd.f32 %v3682, %v3970
    %v3972 = vpop.f32.mrf.mxu0
    %v3973 = vpop.f32.mrf.mxu0
    %v3974 = vadd.f32 %v3685, %v3973
    %v3975 = vpop.f32.mrf.mxu0
    %3976 = vmatprep.mubr.bf16.mxu0 0
    %3977 = vmatmul.mubr.bf16.gmra.mxu0 %v3266
    %v3978 = vpop.f32.mrf.mxu0
    %v3979 = vadd.f32 %v3690, %v3978
    %v3980 = vpop.f32.mrf.mxu0
    %v3981 = vpop.f32.mrf.mxu0
    %v3982 = vadd.f32 %v3693, %v3981
    %v3983 = vpop.f32.mrf.mxu0
    %3984 = vmatprep.mubr.bf16.mxu0 0
    %3985 = vmatmul.mubr.bf16.gmra.mxu0 %v3269
    %v3986 = vpop.f32.mrf.mxu0
    %v3987 = vadd.f32 %v3698, %v3986
    %v3988 = vpop.f32.mrf.mxu0
    %v3989 = vpop.f32.mrf.mxu0
    %v3990 = vadd.f32 %v3701, %v3989
    %v3991 = vpop.f32.mrf.mxu0
    %3992 = vmatprep.mubr.bf16.mxu0 0
    %3993 = vmatmul.mubr.bf16.gmra.mxu0 %v3272
    %v3994 = vpop.f32.mrf.mxu0
    %v3995 = vadd.f32 %v3706, %v3994
    %v3996 = vpop.f32.mrf.mxu0
    %v3997 = vpop.f32.mrf.mxu0
    %v3998 = vadd.f32 %v3709, %v3997
    %v3999 = vpop.f32.mrf.mxu0
    %4000 = vmatprep.mubr.bf16.mxu0 0
    %4001 = vmatmul.mubr.bf16.gmra.mxu0 %v3275
    %v4002 = vpop.f32.mrf.mxu0
    %v4003 = vadd.f32 %v3714, %v4002
    %v4004 = vpop.f32.mrf.mxu0
    %v4005 = vpop.f32.mrf.mxu0
    %v4006 = vadd.f32 %v3717, %v4005
    %v4007 = vpop.f32.mrf.mxu0
    %4008 = vmatprep.mubr.bf16.mxu0 0
    %4009 = vmatmul.mubr.bf16.gmra.mxu0 %v3278
    %v4010 = vpop.f32.mrf.mxu0
    %v4011 = vadd.f32 %v3722, %v4010
    %v4012 = vpop.f32.mrf.mxu0
    %v4013 = vpop.f32.mrf.mxu0
    %v4014 = vadd.f32 %v3725, %v4013
    %v4015 = vpop.f32.mrf.mxu0
    %4016 = vmatprep.mubr.bf16.mxu0 0
    %4017 = vmatmul.mubr.bf16.gmra.mxu0 %v3281
    %v4018 = vpop.f32.mrf.mxu0
    %v4019 = vadd.f32 %v3730, %v4018
    %v4020 = vpop.f32.mrf.mxu0
    %v4021 = vpop.f32.mrf.mxu0
    %v4022 = vadd.f32 %v3733, %v4021
    %v4023 = vpop.f32.mrf.mxu0
    %4024 = vmatprep.mubr.bf16.mxu0 0
    %4025 = vmatmul.mubr.bf16.gmra.mxu0 %v3284
    %v4026 = vpop.f32.mrf.mxu0
    %v4027 = vadd.f32 %v3738, %v4026
    %v4028 = vpop.f32.mrf.mxu0
    %v4029 = vpop.f32.mrf.mxu0
    %v4030 = vadd.f32 %v3741, %v4029
    %v4031 = vpop.f32.mrf.mxu0
    %4032 = vmatprep.mubr.bf16.mxu0 0
    %4033 = vmatmul.mubr.bf16.gmra.mxu0 %v3287
    %v4034 = vpop.f32.mrf.mxu0
    %v4035 = vadd.f32 %v3746, %v4034
    %v4036 = vpop.f32.mrf.mxu0
    %v4037 = vpop.f32.mrf.mxu0
    %v4038 = vadd.f32 %v3749, %v4037
    %v4039 = vpop.f32.mrf.mxu0
    %4040 = vmatprep.mubr.bf16.mxu0 0
    %4041 = vmatmul.mubr.bf16.gmra.mxu0 %v3290
    %v4042 = vpop.f32.mrf.mxu0
    %v4043 = vadd.f32 %v3754, %v4042
    %v4044 = vpop.f32.mrf.mxu0
    %v4045 = vpop.f32.mrf.mxu0
    %v4046 = vadd.f32 %v3757, %v4045
    %v4047 = vpop.f32.mrf.mxu0
    %4048 = vmatprep.mubr.bf16.mxu0 0
    %4049 = vmatmul.mubr.bf16.gmra.mxu0 %v3293
    %v4050 = vpop.f32.mrf.mxu0
    %v4051 = vadd.f32 %v3762, %v4050
    %v4052 = vpop.f32.mrf.mxu0
    %v4053 = vpop.f32.mrf.mxu0
    %v4054 = vadd.f32 %v3765, %v4053
    %v4055 = vpop.f32.mrf.mxu0
    %4056 = vmatprep.mubr.bf16.mxu0 0
    %4057 = vmatmul.mubr.bf16.gmra.mxu0 %v3296
    %v4058 = vpop.f32.mrf.mxu0
    %v4059 = vadd.f32 %v3770, %v4058
    %v4060 = vpop.f32.mrf.mxu0
    %v4061 = vpop.f32.mrf.mxu0
    %v4062 = vadd.f32 %v3773, %v4061
    %v4063 = vpop.f32.mrf.mxu0
    %4064 = vmatprep.mubr.bf16.mxu0 0
    %4065 = vmatmul.mubr.bf16.gmra.mxu0 %v3299
    %v4066 = vpop.f32.mrf.mxu0
    %v4067 = vadd.f32 %v3778, %v4066
    %v4068 = vpop.f32.mrf.mxu0
    %v4069 = vpop.f32.mrf.mxu0
    %v4070 = vadd.f32 %v3781, %v4069
    %v4071 = vpop.f32.mrf.mxu0
    %4072 = vmatprep.mubr.bf16.mxu0 0
    %4073 = vmatmul.mubr.bf16.gmra.mxu0 %v3302
    %v4074 = vpop.f32.mrf.mxu0
    %v4075 = vadd.f32 %v3786, %v4074
    %v4076 = vpop.f32.mrf.mxu0
    %v4077 = vpop.f32.mrf.mxu0
    %v4078 = vadd.f32 %v3789, %v4077
    %v4079 = vpop.f32.mrf.mxu0
    %4080 = vmatprep.mubr.bf16.mxu0 0
    %4081 = vmatmul.mubr.bf16.gmra.mxu0 %v3305
    %v4082 = vpop.f32.mrf.mxu0
    %v4083 = vadd.f32 %v3794, %v4082
    %v4084 = vpop.f32.mrf.mxu0
    %v4085 = vpop.f32.mrf.mxu0
    %v4086 = vadd.f32 %v3797, %v4085
    %v4087 = vpop.f32.mrf.mxu0
    %4088 = vmatprep.mubr.bf16.mxu0 0
    %4089 = vmatmul.mubr.bf16.gmra.mxu0 %v3308
    %v4090 = vpop.f32.mrf.mxu0
    %v4091 = vadd.f32 %v3802, %v4090
    %v4092 = vpop.f32.mrf.mxu0
    %v4093 = vpop.f32.mrf.mxu0
    %v4094 = vadd.f32 %v3805, %v4093
    %v4095 = vpop.f32.mrf.mxu0
    %4096 = vmatprep.mubr.bf16.mxu0 0
    %4097 = vmatmul.mubr.bf16.gmra.mxu0 %v3311
    %v4098 = vpop.f32.mrf.mxu0
    %v4099 = vadd.f32 %v3810, %v4098
    %v4100 = vpop.f32.mrf.mxu0
    %v4101 = vpop.f32.mrf.mxu0
    %v4102 = vadd.f32 %v3813, %v4101
    %v4103 = vpop.f32.mrf.mxu0
    %4104 = vmatprep.mubr.bf16.mxu0 0
    %4105 = vmatmul.mubr.bf16.gmra.mxu0 %v3314
    %v4106 = vpop.f32.mrf.mxu0
    %v4107 = vadd.f32 %v3818, %v4106
    %v4108 = vpop.f32.mrf.mxu0
    %v4109 = vpop.f32.mrf.mxu0
    %v4110 = vadd.f32 %v3821, %v4109
    %v4111 = vpop.f32.mrf.mxu0
    %4112 = vmatprep.mubr.bf16.mxu0 0
    %4113 = vmatmul.mubr.bf16.gmra.mxu0 %v3317
    %v4114 = vpop.f32.mrf.mxu0
    %v4115 = vadd.f32 %v3826, %v4114
    %v4116 = vpop.f32.mrf.mxu0
    %v4117 = vpop.f32.mrf.mxu0
    %v4118 = vadd.f32 %v3829, %v4117
    %v4119 = vpop.f32.mrf.mxu0
    %4120 = vmatprep.mubr.bf16.mxu0 0
    %4121 = vmatmul.mubr.bf16.gmra.mxu0 %v3320
    %v4122 = vpop.f32.mrf.mxu0
    %v4123 = vadd.f32 %v3834, %v4122
    %v4124 = vpop.f32.mrf.mxu0
    %v4125 = vpop.f32.mrf.mxu0
    %v4126 = vadd.f32 %v3837, %v4125
    %v4127 = vpop.f32.mrf.mxu0
    %4128 = vmatprep.mubr.bf16.mxu0 0
    %4129 = vmatmul.mubr.bf16.gmra.mxu0 %v3323
    %v4130 = vpop.f32.mrf.mxu0
    %v4131 = vadd.f32 %v3842, %v4130
    %v4132 = vpop.f32.mrf.mxu0
    %v4133 = vpop.f32.mrf.mxu0
    %v4134 = vadd.f32 %v3845, %v4133
    %v4135 = vpop.f32.mrf.mxu0
    %4136 = vmatprep.mubr.bf16.mxu0 0
    %4137 = vmatmul.mubr.bf16.gmra.mxu0 %v3326
    %v4138 = vpop.f32.mrf.mxu0
    %v4139 = vadd.f32 %v3850, %v4138
    %v4140 = vpop.f32.mrf.mxu0
    %v4141 = vpop.f32.mrf.mxu0
    %v4142 = vadd.f32 %v3853, %v4141
    %v4143 = vpop.f32.mrf.mxu0
    %4144 = vdwg.mxu0
    %s4145 = scalar_lea.vmem [#allocation2], 48
    %v4146 = vld [vmem:[%s4145] sm:$0xff]
    %v4147 = vld [vmem:[%s4145 + $0x8] sm:$0xf]
    %v4148 = vld [vmem:[%s4145 + $0xc] sm:$0xff]
    %v4149 = vld [vmem:[%s4145 + $0x14] sm:$0xf]
    %v4150 = vld [vmem:[%s4145 + $0x18] sm:$0xff]
    %v4151 = vld [vmem:[%s4145 + $0x20] sm:$0xf]
    %v4152 = vld [vmem:[%s4145 + $0x24] sm:$0xff]
    %v4153 = vld [vmem:[%s4145 + $0x2c] sm:$0xf]
    %v4154 = vld [vmem:[%s4145 + $0x30] sm:$0xff]
    %v4155 = vld [vmem:[%s4145 + $0x38] sm:$0xf]
    %v4156 = vld [vmem:[%s4145 + $0x3c] sm:$0xff]
    %v4157 = vld [vmem:[%s4145 + $0x44] sm:$0xf]
    %v4158 = vld [vmem:[%s4145 + $0x48] sm:$0xff]
    %v4159 = vld [vmem:[%s4145 + $0x50] sm:$0xf]
    %v4160 = vld [vmem:[%s4145 + $0x54] sm:$0xff]
    %v4161 = vld [vmem:[%s4145 + $0x5c] sm:$0xf]
    %v4162 = vld [vmem:[%s4145 + $0x60] sm:$0xff]
    %v4163 = vld [vmem:[%s4145 + $0x68] sm:$0xf]
    %v4164 = vld [vmem:[%s4145 + $0x6c] sm:$0xff]
    %v4165 = vld [vmem:[%s4145 + $0x74] sm:$0xf]
    %v4166 = vld [vmem:[%s4145 + $0x78] sm:$0xff]
    %v4167 = vld [vmem:[%s4145 + $0x80] sm:$0xf]
    %v4168 = vld [vmem:[%s4145 + $0x84] sm:$0xff]
    %v4169 = vld [vmem:[%s4145 + $0x8c] sm:$0xf]
    %v4170 = vld [vmem:[%s4145 + $0x90] sm:$0xff]
    %v4171 = vld [vmem:[%s4145 + $0x98] sm:$0xf]
    %v4172 = vld [vmem:[%s4145 + $0x9c] sm:$0xff]
    %v4173 = vld [vmem:[%s4145 + $0xa4] sm:$0xf]
    %v4174 = vld [vmem:[%s4145 + $0xa8] sm:$0xff]
    %v4175 = vld [vmem:[%s4145 + $0xb0] sm:$0xf]
    %v4176 = vld [vmem:[%s4145 + $0xb4] sm:$0xff]
    %v4177 = vld [vmem:[%s4145 + $0xbc] sm:$0xf]
    %v4178 = vld [vmem:[%s4145 + $0xc0] sm:$0xff]
    %v4179 = vld [vmem:[%s4145 + $0xc8] sm:$0xf]
    %v4180 = vld [vmem:[%s4145 + $0xcc] sm:$0xff]
    %v4181 = vld [vmem:[%s4145 + $0xd4] sm:$0xf]
    %v4182 = vld [vmem:[%s4145 + $0xd8] sm:$0xff]
    %v4183 = vld [vmem:[%s4145 + $0xe0] sm:$0xf]
    %v4184 = vld [vmem:[%s4145 + $0xe4] sm:$0xff]
    %v4185 = vld [vmem:[%s4145 + $0xec] sm:$0xf]
    %v4186 = vld [vmem:[%s4145 + $0xf0] sm:$0xff]
    %v4187 = vld [vmem:[%s4145 + $0xf8] sm:$0xf]
    %v4188 = vld [vmem:[%s4145 + $0xfc] sm:$0xff]
    %v4189 = vld [vmem:[%s4145 + $0x104] sm:$0xf]
    %v4190 = vld [vmem:[%s4145 + $0x108] sm:$0xff]
    %v4191 = vld [vmem:[%s4145 + $0x110] sm:$0xf]
    %v4192 = vld [vmem:[%s4145 + $0x114] sm:$0xff]
    %v4193 = vld [vmem:[%s4145 + $0x11c] sm:$0xf]
    %v4194 = vld [vmem:[%s4145 + $0x120] sm:$0xff]
    %v4195 = vld [vmem:[%s4145 + $0x128] sm:$0xf]
    %v4196 = vld [vmem:[%s4145 + $0x12c] sm:$0xff]
    %v4197 = vld [vmem:[%s4145 + $0x134] sm:$0xf]
    %v4198 = vld [vmem:[%s4145 + $0x138] sm:$0xff]
    %v4199 = vld [vmem:[%s4145 + $0x140] sm:$0xf]
    %v4200 = vld [vmem:[%s4145 + $0x144] sm:$0xff]
    %v4201 = vld [vmem:[%s4145 + $0x14c] sm:$0xf]
    %v4202 = vld [vmem:[%s4145 + $0x150] sm:$0xff]
    %v4203 = vld [vmem:[%s4145 + $0x158] sm:$0xf]
    %v4204 = vld [vmem:[%s4145 + $0x15c] sm:$0xff]
    %v4205 = vld [vmem:[%s4145 + $0x164] sm:$0xf]
    %v4206 = vld [vmem:[%s4145 + $0x168] sm:$0xff]
    %v4207 = vld [vmem:[%s4145 + $0x170] sm:$0xf]
    %v4208 = vld [vmem:[%s4145 + $0x174] sm:$0xff]
    %v4209 = vld [vmem:[%s4145 + $0x17c] sm:$0xf]
    %v4210 = vld [vmem:[%s4145 + $0x1b0] sm:$0xff]
    %v4211 = vld [vmem:[%s4145 + $0x1b8] sm:$0xf]
    %v4212 = vld [vmem:[%s4145 + $0x1bc] sm:$0xff]
    %v4213 = vld [vmem:[%s4145 + $0x1c4] sm:$0xf]
    %v4214 = vld [vmem:[%s4145 + $0x1c8] sm:$0xff]
    %v4215 = vld [vmem:[%s4145 + $0x1d0] sm:$0xf]
    %v4216 = vld [vmem:[%s4145 + $0x1d4] sm:$0xff]
    %v4217 = vld [vmem:[%s4145 + $0x1dc] sm:$0xf]
    %v4218 = vld [vmem:[%s4145 + $0x1e0] sm:$0xff]
    %v4219 = vld [vmem:[%s4145 + $0x1e8] sm:$0xf]
    %v4220 = vld [vmem:[%s4145 + $0x1ec] sm:$0xff]
    %v4221 = vld [vmem:[%s4145 + $0x1f4] sm:$0xf]
    %v4222 = vld [vmem:[%s4145 + $0x1f8] sm:$0xff]
    %v4223 = vld [vmem:[%s4145 + $0x200] sm:$0xf]
    %v4224 = vld [vmem:[%s4145 + $0x204] sm:$0xff]
    %v4225 = vld [vmem:[%s4145 + $0x20c] sm:$0xf]
    %v4226 = vld [vmem:[%s4145 + $0x210] sm:$0xff]
    %v4227 = vld [vmem:[%s4145 + $0x218] sm:$0xf]
    %v4228 = vld [vmem:[%s4145 + $0x21c] sm:$0xff]
    %v4229 = vld [vmem:[%s4145 + $0x224] sm:$0xf]
    %v4230 = vld [vmem:[%s4145 + $0x228] sm:$0xff]
    %v4231 = vld [vmem:[%s4145 + $0x230] sm:$0xf]
    %v4232 = vld [vmem:[%s4145 + $0x234] sm:$0xff]
    %v4233 = vld [vmem:[%s4145 + $0x23c] sm:$0xf]
    %v4234 = vld [vmem:[%s4145 + $0x240] sm:$0xff]
    %v4235 = vld [vmem:[%s4145 + $0x248] sm:$0xf]
    %v4236 = vld [vmem:[%s4145 + $0x24c] sm:$0xff]
    %v4237 = vld [vmem:[%s4145 + $0x254] sm:$0xf]
    %v4238 = vld [vmem:[%s4145 + $0x258] sm:$0xff]
    %v4239 = vld [vmem:[%s4145 + $0x260] sm:$0xf]
    %v4240 = vld [vmem:[%s4145 + $0x264] sm:$0xff]
    %v4241 = vld [vmem:[%s4145 + $0x26c] sm:$0xf]
    %v4242 = vld [vmem:[%s4145 + $0x270] sm:$0xff]
    %v4243 = vld [vmem:[%s4145 + $0x278] sm:$0xf]
    %v4244 = vld [vmem:[%s4145 + $0x27c] sm:$0xff]
    %v4245 = vld [vmem:[%s4145 + $0x284] sm:$0xf]
    %v4246 = vld [vmem:[%s4145 + $0x288] sm:$0xff]
    %v4247 = vld [vmem:[%s4145 + $0x290] sm:$0xf]
    %v4248 = vld [vmem:[%s4145 + $0x294] sm:$0xff]
    %v4249 = vld [vmem:[%s4145 + $0x29c] sm:$0xf]
    %v4250 = vld [vmem:[%s4145 + $0x2a0] sm:$0xff]
    %v4251 = vld [vmem:[%s4145 + $0x2a8] sm:$0xf]
    %v4252 = vld [vmem:[%s4145 + $0x2ac] sm:$0xff]
    %v4253 = vld [vmem:[%s4145 + $0x2b4] sm:$0xf]
    %v4254 = vld [vmem:[%s4145 + $0x2b8] sm:$0xff]
    %v4255 = vld [vmem:[%s4145 + $0x2c0] sm:$0xf]
    %v4256 = vld [vmem:[%s4145 + $0x2c4] sm:$0xff]
    %v4257 = vld [vmem:[%s4145 + $0x2cc] sm:$0xf]
    %v4258 = vld [vmem:[%s4145 + $0x2d0] sm:$0xff]
    %v4259 = vld [vmem:[%s4145 + $0x2d8] sm:$0xf]
    %v4260 = vld [vmem:[%s4145 + $0x2dc] sm:$0xff]
    %v4261 = vld [vmem:[%s4145 + $0x2e4] sm:$0xf]
    %v4262 = vld [vmem:[%s4145 + $0x2e8] sm:$0xff]
    %v4263 = vld [vmem:[%s4145 + $0x2f0] sm:$0xf]
    %v4264 = vld [vmem:[%s4145 + $0x2f4] sm:$0xff]
    %v4265 = vld [vmem:[%s4145 + $0x2fc] sm:$0xf]
    %v4266 = vld [vmem:[%s4145 + $0x300] sm:$0xff]
    %v4267 = vld [vmem:[%s4145 + $0x308] sm:$0xf]
    %v4268 = vld [vmem:[%s4145 + $0x30c] sm:$0xff]
    %v4269 = vld [vmem:[%s4145 + $0x314] sm:$0xf]
    %v4270 = vld [vmem:[%s4145 + $0x318] sm:$0xff]
    %v4271 = vld [vmem:[%s4145 + $0x320] sm:$0xf]
    %v4272 = vld [vmem:[%s4145 + $0x324] sm:$0xff]
    %v4273 = vld [vmem:[%s4145 + $0x32c] sm:$0xf]
    %s4274 = scalar_lea.vmem [#allocation6], 384
    %v4275 = vld [vmem:[%s4274] sm:$0xf]
    %v4276 = vld [vmem:[%s4274 + $0x4] sm:$0xf]
    %v4277 = vld [vmem:[%s4274 + $0x8] sm:$0xf]
    %v4278 = vld [vmem:[%s4274 + $0xc] sm:$0xf]
    %v4279 = vld [vmem:[%s4274 + $0x10] sm:$0xf]
    %v4280 = vld [vmem:[%s4274 + $0x14] sm:$0xf]
    %v4281 = vld [vmem:[%s4274 + $0x18] sm:$0xf]
    %v4282 = vld [vmem:[%s4274 + $0x1c] sm:$0xf]
    %v4283 = vld [vmem:[%s4274 + $0x20] sm:$0xf]
    %v4284 = vld [vmem:[%s4274 + $0x24] sm:$0xf]
    %v4285 = vld [vmem:[%s4274 + $0x28] sm:$0xf]
    %v4286 = vld [vmem:[%s4274 + $0x2c] sm:$0xf]
    %v4287 = vld [vmem:[%s4274 + $0x30] sm:$0xf]
    %v4288 = vld [vmem:[%s4274 + $0x34] sm:$0xf]
    %v4289 = vld [vmem:[%s4274 + $0x38] sm:$0xf]
    %v4290 = vld [vmem:[%s4274 + $0x3c] sm:$0xf]
    %v4291 = vld [vmem:[%s4274 + $0x40] sm:$0xf]
    %v4292 = vld [vmem:[%s4274 + $0x44] sm:$0xf]
    %v4293 = vld [vmem:[%s4274 + $0x48] sm:$0xf]
    %v4294 = vld [vmem:[%s4274 + $0x4c] sm:$0xf]
    %v4295 = vld [vmem:[%s4274 + $0x50] sm:$0xf]
    %v4296 = vld [vmem:[%s4274 + $0x54] sm:$0xf]
    %v4297 = vld [vmem:[%s4274 + $0x58] sm:$0xf]
    %v4298 = vld [vmem:[%s4274 + $0x5c] sm:$0xf]
    %v4299 = vld [vmem:[%s4274 + $0x60] sm:$0xf]
    %v4300 = vld [vmem:[%s4274 + $0x64] sm:$0xf]
    %v4301 = vld [vmem:[%s4274 + $0x68] sm:$0xf]
    %v4302 = vld [vmem:[%s4274 + $0x6c] sm:$0xf]
    %v4303 = vld [vmem:[%s4274 + $0x70] sm:$0xf]
    %v4304 = vld [vmem:[%s4274 + $0x74] sm:$0xf]
    %v4305 = vld [vmem:[%s4274 + $0x78] sm:$0xf]
    %v4306 = vld [vmem:[%s4274 + $0x7c] sm:$0xf]
    %v4307 = vld [vmem:[%s4274 + $0x80] sm:$0xf]
    %v4308 = vld [vmem:[%s4274 + $0x84] sm:$0xf]
    %v4309 = vld [vmem:[%s4274 + $0x88] sm:$0xf]
    %v4310 = vld [vmem:[%s4274 + $0x8c] sm:$0xf]
    %v4311 = vld [vmem:[%s4274 + $0x90] sm:$0xf]
    %v4312 = vld [vmem:[%s4274 + $0x94] sm:$0xf]
    %v4313 = vld [vmem:[%s4274 + $0x98] sm:$0xf]
    %v4314 = vld [vmem:[%s4274 + $0x9c] sm:$0xf]
    %v4315 = vld [vmem:[%s4274 + $0xa0] sm:$0xf]
    %v4316 = vld [vmem:[%s4274 + $0xa4] sm:$0xf]
    %v4317 = vld [vmem:[%s4274 + $0xa8] sm:$0xf]
    %v4318 = vld [vmem:[%s4274 + $0xac] sm:$0xf]
    %v4319 = vld [vmem:[%s4274 + $0xb0] sm:$0xf]
    %v4320 = vld [vmem:[%s4274 + $0xb4] sm:$0xf]
    %v4321 = vld [vmem:[%s4274 + $0xb8] sm:$0xf]
    %v4322 = vld [vmem:[%s4274 + $0xbc] sm:$0xf]
    %v4451 = vunpack.c.l.b16 %v4146
    %v4452 = vunpack.c.h.b16 %v4146
    %v4453 = vunpack.c.l.b16 %v4147
    %v4454 = vunpack.c.l.b16 %v4148
    %v4455 = vunpack.c.h.b16 %v4148
    %v4456 = vunpack.c.l.b16 %v4149
    %v4457 = vunpack.c.l.b16 %v4150
    %v4458 = vunpack.c.h.b16 %v4150
    %v4459 = vunpack.c.l.b16 %v4151
    %v4460 = vunpack.c.l.b16 %v4152
    %v4461 = vunpack.c.h.b16 %v4152
    %v4462 = vunpack.c.l.b16 %v4153
    %v4463 = vunpack.c.l.b16 %v4154
    %v4464 = vunpack.c.h.b16 %v4154
    %v4465 = vunpack.c.l.b16 %v4155
    %v4466 = vunpack.c.l.b16 %v4156
    %v4467 = vunpack.c.h.b16 %v4156
    %v4468 = vunpack.c.l.b16 %v4157
    %v4469 = vunpack.c.l.b16 %v4158
    %v4470 = vunpack.c.h.b16 %v4158
    %v4471 = vunpack.c.l.b16 %v4159
    %v4472 = vunpack.c.l.b16 %v4160
    %v4473 = vunpack.c.h.b16 %v4160
    %v4474 = vunpack.c.l.b16 %v4161
    %v4475 = vunpack.c.l.b16 %v4162
    %v4476 = vunpack.c.h.b16 %v4162
    %v4477 = vunpack.c.l.b16 %v4163
    %v4478 = vunpack.c.l.b16 %v4164
    %v4479 = vunpack.c.h.b16 %v4164
    %v4480 = vunpack.c.l.b16 %v4165
    %v4481 = vunpack.c.l.b16 %v4166
    %v4482 = vunpack.c.h.b16 %v4166
    %v4483 = vunpack.c.l.b16 %v4167
    %v4484 = vunpack.c.l.b16 %v4168
    %v4485 = vunpack.c.h.b16 %v4168
    %v4486 = vunpack.c.l.b16 %v4169
    %v4487 = vunpack.c.l.b16 %v4170
    %v4488 = vunpack.c.h.b16 %v4170
    %v4489 = vunpack.c.l.b16 %v4171
    %v4490 = vunpack.c.l.b16 %v4172
    %v4491 = vunpack.c.h.b16 %v4172
    %v4492 = vunpack.c.l.b16 %v4173
    %v4493 = vunpack.c.l.b16 %v4174
    %v4494 = vunpack.c.h.b16 %v4174
    %v4495 = vunpack.c.l.b16 %v4175
    %v4496 = vunpack.c.l.b16 %v4176
    %v4497 = vunpack.c.h.b16 %v4176
    %v4498 = vunpack.c.l.b16 %v4177
    %v4499 = vunpack.c.l.b16 %v4178
    %v4500 = vunpack.c.h.b16 %v4178
    %v4501 = vunpack.c.l.b16 %v4179
    %v4502 = vunpack.c.l.b16 %v4180
    %v4503 = vunpack.c.h.b16 %v4180
    %v4504 = vunpack.c.l.b16 %v4181
    %v4505 = vunpack.c.l.b16 %v4182
    %v4506 = vunpack.c.h.b16 %v4182
    %v4507 = vunpack.c.l.b16 %v4183
    %v4508 = vunpack.c.l.b16 %v4184
    %v4509 = vunpack.c.h.b16 %v4184
    %v4510 = vunpack.c.l.b16 %v4185
    %v4511 = vunpack.c.l.b16 %v4186
    %v4512 = vunpack.c.h.b16 %v4186
    %v4513 = vunpack.c.l.b16 %v4187
    %v4514 = vunpack.c.l.b16 %v4188
    %v4515 = vunpack.c.h.b16 %v4188
    %v4516 = vunpack.c.l.b16 %v4189
    %v4517 = vunpack.c.l.b16 %v4190
    %v4518 = vunpack.c.h.b16 %v4190
    %v4519 = vunpack.c.l.b16 %v4191
    %v4520 = vunpack.c.l.b16 %v4192
    %v4521 = vunpack.c.h.b16 %v4192
    %v4522 = vunpack.c.l.b16 %v4193
    %v4523 = vunpack.c.l.b16 %v4194
    %v4524 = vunpack.c.h.b16 %v4194
    %v4525 = vunpack.c.l.b16 %v4195
    %v4526 = vunpack.c.l.b16 %v4196
    %v4527 = vunpack.c.h.b16 %v4196
    %v4528 = vunpack.c.l.b16 %v4197
    %v4529 = vunpack.c.l.b16 %v4198
    %v4530 = vunpack.c.h.b16 %v4198
    %v4531 = vunpack.c.l.b16 %v4199
    %v4532 = vunpack.c.l.b16 %v4200
    %v4533 = vunpack.c.h.b16 %v4200
    %v4534 = vunpack.c.l.b16 %v4201
    %v4535 = vunpack.c.l.b16 %v4202
    %v4536 = vunpack.c.h.b16 %v4202
    %v4537 = vunpack.c.l.b16 %v4203
    %v4538 = vunpack.c.l.b16 %v4204
    %v4539 = vunpack.c.h.b16 %v4204
    %v4540 = vunpack.c.l.b16 %v4205
    %v4541 = vunpack.c.l.b16 %v4206
    %v4542 = vunpack.c.h.b16 %v4206
    %v4543 = vunpack.c.l.b16 %v4207
    %v4544 = vunpack.c.l.b16 %v4208
    %v4545 = vunpack.c.h.b16 %v4208
    %v4546 = vunpack.c.l.b16 %v4209
    %v4547 = vunpack.c.l.b16 %v4210
    %v4548 = vunpack.c.h.b16 %v4210
    %v4549 = vunpack.c.l.b16 %v4211
    %v4550 = vunpack.c.l.b16 %v4212
    %v4551 = vunpack.c.h.b16 %v4212
    %v4552 = vunpack.c.l.b16 %v4213
    %v4553 = vunpack.c.l.b16 %v4214
    %v4554 = vunpack.c.h.b16 %v4214
    %v4555 = vunpack.c.l.b16 %v4215
    %v4556 = vunpack.c.l.b16 %v4216
    %v4557 = vunpack.c.h.b16 %v4216
    %v4558 = vunpack.c.l.b16 %v4217
    %v4559 = vunpack.c.l.b16 %v4218
    %v4560 = vunpack.c.h.b16 %v4218
    %v4561 = vunpack.c.l.b16 %v4219
    %v4562 = vunpack.c.l.b16 %v4220
    %v4563 = vunpack.c.h.b16 %v4220
    %v4564 = vunpack.c.l.b16 %v4221
    %v4565 = vunpack.c.l.b16 %v4222
    %v4566 = vunpack.c.h.b16 %v4222
    %v4567 = vunpack.c.l.b16 %v4223
    %v4568 = vunpack.c.l.b16 %v4224
    %v4569 = vunpack.c.h.b16 %v4224
    %v4570 = vunpack.c.l.b16 %v4225
    %v4571 = vunpack.c.l.b16 %v4226
    %v4572 = vunpack.c.h.b16 %v4226
    %v4573 = vunpack.c.l.b16 %v4227
    %v4574 = vunpack.c.l.b16 %v4228
    %v4575 = vunpack.c.h.b16 %v4228
    %v4576 = vunpack.c.l.b16 %v4229
    %v4577 = vunpack.c.l.b16 %v4230
    %v4578 = vunpack.c.h.b16 %v4230
    %v4579 = vunpack.c.l.b16 %v4231
    %v4580 = vunpack.c.l.b16 %v4232
    %v4581 = vunpack.c.h.b16 %v4232
    %v4582 = vunpack.c.l.b16 %v4233
    %v4583 = vunpack.c.l.b16 %v4234
    %v4584 = vunpack.c.h.b16 %v4234
    %v4585 = vunpack.c.l.b16 %v4235
    %v4586 = vunpack.c.l.b16 %v4236
    %v4587 = vunpack.c.h.b16 %v4236
    %v4588 = vunpack.c.l.b16 %v4237
    %v4589 = vunpack.c.l.b16 %v4238
    %v4590 = vunpack.c.h.b16 %v4238
    %v4591 = vunpack.c.l.b16 %v4239
    %v4592 = vunpack.c.l.b16 %v4240
    %v4593 = vunpack.c.h.b16 %v4240
    %v4594 = vunpack.c.l.b16 %v4241
    %v4595 = vunpack.c.l.b16 %v4242
    %v4596 = vunpack.c.h.b16 %v4242
    %v4597 = vunpack.c.l.b16 %v4243
    %v4598 = vunpack.c.l.b16 %v4244
    %v4599 = vunpack.c.h.b16 %v4244
    %v4600 = vunpack.c.l.b16 %v4245
    %v4601 = vunpack.c.l.b16 %v4246
    %v4602 = vunpack.c.h.b16 %v4246
    %v4603 = vunpack.c.l.b16 %v4247
    %v4604 = vunpack.c.l.b16 %v4248
    %v4605 = vunpack.c.h.b16 %v4248
    %v4606 = vunpack.c.l.b16 %v4249
    %v4607 = vunpack.c.l.b16 %v4250
    %v4608 = vunpack.c.h.b16 %v4250
    %v4609 = vunpack.c.l.b16 %v4251
    %v4610 = vunpack.c.l.b16 %v4252
    %v4611 = vunpack.c.h.b16 %v4252
    %v4612 = vunpack.c.l.b16 %v4253
    %v4613 = vunpack.c.l.b16 %v4254
    %v4614 = vunpack.c.h.b16 %v4254
    %v4615 = vunpack.c.l.b16 %v4255
    %v4616 = vunpack.c.l.b16 %v4256
    %v4617 = vunpack.c.h.b16 %v4256
    %v4618 = vunpack.c.l.b16 %v4257
    %v4619 = vunpack.c.l.b16 %v4258
    %v4620 = vunpack.c.h.b16 %v4258
    %v4621 = vunpack.c.l.b16 %v4259
    %v4622 = vunpack.c.l.b16 %v4260
    %v4623 = vunpack.c.h.b16 %v4260
    %v4624 = vunpack.c.l.b16 %v4261
    %v4625 = vunpack.c.l.b16 %v4262
    %v4626 = vunpack.c.h.b16 %v4262
    %v4627 = vunpack.c.l.b16 %v4263
    %v4628 = vunpack.c.l.b16 %v4264
    %v4629 = vunpack.c.h.b16 %v4264
    %v4630 = vunpack.c.l.b16 %v4265
    %v4631 = vunpack.c.l.b16 %v4266
    %v4632 = vunpack.c.h.b16 %v4266
    %v4633 = vunpack.c.l.b16 %v4267
    %v4634 = vunpack.c.l.b16 %v4268
    %v4635 = vunpack.c.h.b16 %v4268
    %v4636 = vunpack.c.l.b16 %v4269
    %v4637 = vunpack.c.l.b16 %v4270
    %v4638 = vunpack.c.h.b16 %v4270
    %v4639 = vunpack.c.l.b16 %v4271
    %v4640 = vunpack.c.l.b16 %v4272
    %v4641 = vunpack.c.h.b16 %v4272
    %v4642 = vunpack.c.l.b16 %v4273
    %v4643 = vpack.c.b16 %v4454, %v4451
    %v4644 = vpack.c.b16 %v4455, %v4452
    %v4645 = vpack.c.b16 %v4456, %v4453
    %v4646 = vpack.c.b16 %v4460, %v4457
    %v4647 = vpack.c.b16 %v4461, %v4458
    %v4648 = vpack.c.b16 %v4462, %v4459
    %v4649 = vpack.c.b16 %v4466, %v4463
    %v4650 = vpack.c.b16 %v4467, %v4464
    %v4651 = vpack.c.b16 %v4468, %v4465
    %v4652 = vpack.c.b16 %v4472, %v4469
    %v4653 = vpack.c.b16 %v4473, %v4470
    %v4654 = vpack.c.b16 %v4474, %v4471
    %v4655 = vpack.c.b16 %v4478, %v4475
    %v4656 = vpack.c.b16 %v4479, %v4476
    %v4657 = vpack.c.b16 %v4480, %v4477
    %v4658 = vpack.c.b16 %v4484, %v4481
    %v4659 = vpack.c.b16 %v4485, %v4482
    %v4660 = vpack.c.b16 %v4486, %v4483
    %v4661 = vpack.c.b16 %v4490, %v4487
    %v4662 = vpack.c.b16 %v4491, %v4488
    %v4663 = vpack.c.b16 %v4492, %v4489
    %v4664 = vpack.c.b16 %v4496, %v4493
    %v4665 = vpack.c.b16 %v4497, %v4494
    %v4666 = vpack.c.b16 %v4498, %v4495
    %v4667 = vpack.c.b16 %v4502, %v4499
    %v4668 = vpack.c.b16 %v4503, %v4500
    %v4669 = vpack.c.b16 %v4504, %v4501
    %v4670 = vpack.c.b16 %v4508, %v4505
    %v4671 = vpack.c.b16 %v4509, %v4506
    %v4672 = vpack.c.b16 %v4510, %v4507
    %v4673 = vpack.c.b16 %v4514, %v4511
    %v4674 = vpack.c.b16 %v4515, %v4512
    %v4675 = vpack.c.b16 %v4516, %v4513
    %v4676 = vpack.c.b16 %v4520, %v4517
    %v4677 = vpack.c.b16 %v4521, %v4518
    %v4678 = vpack.c.b16 %v4522, %v4519
    %v4679 = vpack.c.b16 %v4526, %v4523
    %v4680 = vpack.c.b16 %v4527, %v4524
    %v4681 = vpack.c.b16 %v4528, %v4525
    %v4682 = vpack.c.b16 %v4532, %v4529
    %v4683 = vpack.c.b16 %v4533, %v4530
    %v4684 = vpack.c.b16 %v4534, %v4531
    %v4685 = vpack.c.b16 %v4538, %v4535
    %v4686 = vpack.c.b16 %v4539, %v4536
    %v4687 = vpack.c.b16 %v4540, %v4537
    %v4688 = vpack.c.b16 %v4544, %v4541
    %v4689 = vpack.c.b16 %v4545, %v4542
    %v4690 = vpack.c.b16 %v4546, %v4543
    %v4691 = vpack.c.b16 %v4550, %v4547
    %v4692 = vpack.c.b16 %v4551, %v4548
    %v4693 = vpack.c.b16 %v4552, %v4549
    %v4694 = vpack.c.b16 %v4556, %v4553
    %v4695 = vpack.c.b16 %v4557, %v4554
    %v4696 = vpack.c.b16 %v4558, %v4555
    %v4697 = vpack.c.b16 %v4562, %v4559
    %v4698 = vpack.c.b16 %v4563, %v4560
    %v4699 = vpack.c.b16 %v4564, %v4561
    %v4700 = vpack.c.b16 %v4568, %v4565
    %v4701 = vpack.c.b16 %v4569, %v4566
    %v4702 = vpack.c.b16 %v4570, %v4567
    %v4703 = vpack.c.b16 %v4574, %v4571
    %v4704 = vpack.c.b16 %v4575, %v4572
    %v4705 = vpack.c.b16 %v4576, %v4573
    %v4706 = vpack.c.b16 %v4580, %v4577
    %v4707 = vpack.c.b16 %v4581, %v4578
    %v4708 = vpack.c.b16 %v4582, %v4579
    %v4709 = vpack.c.b16 %v4586, %v4583
    %v4710 = vpack.c.b16 %v4587, %v4584
    %v4711 = vpack.c.b16 %v4588, %v4585
    %v4712 = vpack.c.b16 %v4592, %v4589
    %v4713 = vpack.c.b16 %v4593, %v4590
    %v4714 = vpack.c.b16 %v4594, %v4591
    %v4715 = vpack.c.b16 %v4598, %v4595
    %v4716 = vpack.c.b16 %v4599, %v4596
    %v4717 = vpack.c.b16 %v4600, %v4597
    %v4718 = vpack.c.b16 %v4604, %v4601
    %v4719 = vpack.c.b16 %v4605, %v4602
    %v4720 = vpack.c.b16 %v4606, %v4603
    %v4721 = vpack.c.b16 %v4610, %v4607
    %v4722 = vpack.c.b16 %v4611, %v4608
    %v4723 = vpack.c.b16 %v4612, %v4609
    %v4724 = vpack.c.b16 %v4616, %v4613
    %v4725 = vpack.c.b16 %v4617, %v4614
    %v4726 = vpack.c.b16 %v4618, %v4615
    %v4727 = vpack.c.b16 %v4622, %v4619
    %v4728 = vpack.c.b16 %v4623, %v4620
    %v4729 = vpack.c.b16 %v4624, %v4621
    %v4730 = vpack.c.b16 %v4628, %v4625
    %v4731 = vpack.c.b16 %v4629, %v4626
    %v4732 = vpack.c.b16 %v4630, %v4627
    %v4733 = vpack.c.b16 %v4634, %v4631
    %v4734 = vpack.c.b16 %v4635, %v4632
    %v4735 = vpack.c.b16 %v4636, %v4633
    %v4736 = vpack.c.b16 %v4640, %v4637
    %v4737 = vpack.c.b16 %v4641, %v4638
    %v4738 = vpack.c.b16 %v4642, %v4639
    %v4883 = vunpack.c.l.b16 %v4275
    %v4884 = vunpack.c.l.b16 %v4276
    %v4885 = vunpack.c.l.b16 %v4277
    %v4886 = vunpack.c.l.b16 %v4278
    %v4887 = vunpack.c.l.b16 %v4279
    %v4888 = vunpack.c.l.b16 %v4280
    %v4889 = vunpack.c.l.b16 %v4281
    %v4890 = vunpack.c.l.b16 %v4282
    %v4891 = vunpack.c.l.b16 %v4283
    %v4892 = vunpack.c.l.b16 %v4284
    %v4893 = vunpack.c.l.b16 %v4285
    %v4894 = vunpack.c.l.b16 %v4286
    %v4895 = vunpack.c.l.b16 %v4287
    %v4896 = vunpack.c.l.b16 %v4288
    %v4897 = vunpack.c.l.b16 %v4289
    %v4898 = vunpack.c.l.b16 %v4290
    %v4899 = vunpack.c.l.b16 %v4291
    %v4900 = vunpack.c.l.b16 %v4292
    %v4901 = vunpack.c.l.b16 %v4293
    %v4902 = vunpack.c.l.b16 %v4294
    %v4903 = vunpack.c.l.b16 %v4295
    %v4904 = vunpack.c.l.b16 %v4296
    %v4905 = vunpack.c.l.b16 %v4297
    %v4906 = vunpack.c.l.b16 %v4298
    %v4907 = vunpack.c.l.b16 %v4299
    %v4908 = vunpack.c.l.b16 %v4300
    %v4909 = vunpack.c.l.b16 %v4301
    %v4910 = vunpack.c.l.b16 %v4302
    %v4911 = vunpack.c.l.b16 %v4303
    %v4912 = vunpack.c.l.b16 %v4304
    %v4913 = vunpack.c.l.b16 %v4305
    %v4914 = vunpack.c.l.b16 %v4306
    %v4915 = vunpack.c.l.b16 %v4307
    %v4916 = vunpack.c.l.b16 %v4308
    %v4917 = vunpack.c.l.b16 %v4309
    %v4918 = vunpack.c.l.b16 %v4310
    %v4919 = vunpack.c.l.b16 %v4311
    %v4920 = vunpack.c.l.b16 %v4312
    %v4921 = vunpack.c.l.b16 %v4313
    %v4922 = vunpack.c.l.b16 %v4314
    %v4923 = vunpack.c.l.b16 %v4315
    %v4924 = vunpack.c.l.b16 %v4316
    %v4925 = vunpack.c.l.b16 %v4317
    %v4926 = vunpack.c.l.b16 %v4318
    %v4927 = vunpack.c.l.b16 %v4319
    %v4928 = vunpack.c.l.b16 %v4320
    %v4929 = vunpack.c.l.b16 %v4321
    %v4930 = vunpack.c.l.b16 %v4322
    %v4931 = vpack.c.b16 %v4884, %v4883
    %v4932 = vpack.c.b16 %v4886, %v4885
    %v4933 = vpack.c.b16 %v4888, %v4887
    %v4934 = vpack.c.b16 %v4890, %v4889
    %v4935 = vpack.c.b16 %v4892, %v4891
    %v4936 = vpack.c.b16 %v4894, %v4893
    %v4937 = vpack.c.b16 %v4896, %v4895
    %v4938 = vpack.c.b16 %v4898, %v4897
    %v4939 = vpack.c.b16 %v4900, %v4899
    %v4940 = vpack.c.b16 %v4902, %v4901
    %v4941 = vpack.c.b16 %v4904, %v4903
    %v4942 = vpack.c.b16 %v4906, %v4905
    %v4943 = vpack.c.b16 %v4908, %v4907
    %v4944 = vpack.c.b16 %v4910, %v4909
    %v4945 = vpack.c.b16 %v4912, %v4911
    %v4946 = vpack.c.b16 %v4914, %v4913
    %v4947 = vpack.c.b16 %v4916, %v4915
    %v4948 = vpack.c.b16 %v4918, %v4917
    %v4949 = vpack.c.b16 %v4920, %v4919
    %v4950 = vpack.c.b16 %v4922, %v4921
    %v4951 = vpack.c.b16 %v4924, %v4923
    %v4952 = vpack.c.b16 %v4926, %v4925
    %v4953 = vpack.c.b16 %v4928, %v4927
    %v4954 = vpack.c.b16 %v4930, %v4929
    %4979 = vmatprep.subr.bf16.mxu0 0
    %4980 = vmatpush1.bf16.msra.mxu0 %v4938
    %4981 = vmatprep.subr.bf16.mxu0 0
    %4982 = vmatpush1.bf16.msra.mxu0 %v4937
    %4983 = vmatprep.subr.bf16.mxu0 0
    %4984 = vmatpush1.bf16.msra.mxu0 %v4936
    %4985 = vmatprep.subr.bf16.mxu0 0
    %4986 = vmatpush1.bf16.msra.mxu0 %v4935
    %4987 = vmatprep.subr.bf16.mxu0 0
    %4988 = vmatpush1.bf16.msra.mxu0 %v4934
    %4989 = vmatprep.subr.bf16.mxu0 0
    %4990 = vmatpush1.bf16.msra.mxu0 %v4933
    %4991 = vmatprep.subr.bf16.mxu0 0
    %4992 = vmatpush1.bf16.msra.mxu0 %v4932
    %4993 = vmatprep.subr.bf16.mxu0 0
    %4994 = vmatpush1.bf16.msra.mxu0 %v4931
    %4995 = vmatprep.subr.bf16.mxu0 0
    %4996 = vmatpush2.bf16.msra.mxu0 %v4946
    %4997 = vmatprep.subr.bf16.mxu0 0
    %4998 = vmatpush2.bf16.msra.mxu0 %v4945
    %4999 = vmatprep.subr.bf16.mxu0 0
    %5000 = vmatpush2.bf16.msra.mxu0 %v4944
    %5001 = vmatprep.subr.bf16.mxu0 0
    %5002 = vmatpush2.bf16.msra.mxu0 %v4943
    %5003 = vmatprep.subr.bf16.mxu0 0
    %5004 = vmatpush2.bf16.msra.mxu0 %v4942
    %5005 = vmatprep.subr.bf16.mxu0 0
    %5006 = vmatpush2.bf16.msra.mxu0 %v4941
    %5007 = vmatprep.subr.bf16.mxu0 0
    %5008 = vmatpush2.bf16.msra.mxu0 %v4940
    %5009 = vmatprep.subr.bf16.mxu0 0
    %5010 = vmatpush2.bf16.msra.mxu0 %v4939
    %5011 = vmatprep.mubr.bf16.mxu0 %v4644
    %5012 = vmatmul.mubr.bf16.gmra.mxu0 %v4643
    %v5013 = vpop.f32.mrf.mxu0
    %v5014 = vadd.f32 0.0, %v5013
    %v5015 = vpop.f32.mrf.mxu0
    %v5016 = vpop.f32.mrf.mxu0
    %v5017 = vadd.f32 0.0, %v5016
    %v5018 = vpop.f32.mrf.mxu0
    %5019 = vmatprep.mubr.bf16.mxu0 %v4647
    %5020 = vmatmul.mubr.bf16.gmra.mxu0 %v4646
    %v5021 = vpop.f32.mrf.mxu0
    %v5022 = vadd.f32 0.0, %v5021
    %v5023 = vpop.f32.mrf.mxu0
    %v5024 = vpop.f32.mrf.mxu0
    %v5025 = vadd.f32 0.0, %v5024
    %v5026 = vpop.f32.mrf.mxu0
    %5027 = vmatprep.mubr.bf16.mxu0 %v4650
    %5028 = vmatmul.mubr.bf16.gmra.mxu0 %v4649
    %v5029 = vpop.f32.mrf.mxu0
    %v5030 = vadd.f32 0.0, %v5029
    %v5031 = vpop.f32.mrf.mxu0
    %v5032 = vpop.f32.mrf.mxu0
    %v5033 = vadd.f32 0.0, %v5032
    %v5034 = vpop.f32.mrf.mxu0
    %5035 = vmatprep.mubr.bf16.mxu0 %v4653
    %5036 = vmatmul.mubr.bf16.gmra.mxu0 %v4652
    %v5037 = vpop.f32.mrf.mxu0
    %v5038 = vadd.f32 0.0, %v5037
    %v5039 = vpop.f32.mrf.mxu0
    %v5040 = vpop.f32.mrf.mxu0
    %v5041 = vadd.f32 0.0, %v5040
    %v5042 = vpop.f32.mrf.mxu0
    %5043 = vmatprep.mubr.bf16.mxu0 %v4656
    %5044 = vmatmul.mubr.bf16.gmra.mxu0 %v4655
    %v5045 = vpop.f32.mrf.mxu0
    %v5046 = vadd.f32 0.0, %v5045
    %v5047 = vpop.f32.mrf.mxu0
    %v5048 = vpop.f32.mrf.mxu0
    %v5049 = vadd.f32 0.0, %v5048
    %v5050 = vpop.f32.mrf.mxu0
    %5051 = vmatprep.mubr.bf16.mxu0 %v4659
    %5052 = vmatmul.mubr.bf16.gmra.mxu0 %v4658
    %v5053 = vpop.f32.mrf.mxu0
    %v5054 = vadd.f32 0.0, %v5053
    %v5055 = vpop.f32.mrf.mxu0
    %v5056 = vpop.f32.mrf.mxu0
    %v5057 = vadd.f32 0.0, %v5056
    %v5058 = vpop.f32.mrf.mxu0
    %5059 = vmatprep.mubr.bf16.mxu0 %v4662
    %5060 = vmatmul.mubr.bf16.gmra.mxu0 %v4661
    %v5061 = vpop.f32.mrf.mxu0
    %v5062 = vadd.f32 0.0, %v5061
    %v5063 = vpop.f32.mrf.mxu0
    %v5064 = vpop.f32.mrf.mxu0
    %v5065 = vadd.f32 0.0, %v5064
    %v5066 = vpop.f32.mrf.mxu0
    %5067 = vmatprep.mubr.bf16.mxu0 %v4665
    %5068 = vmatmul.mubr.bf16.gmra.mxu0 %v4664
    %v5069 = vpop.f32.mrf.mxu0
    %v5070 = vadd.f32 0.0, %v5069
    %v5071 = vpop.f32.mrf.mxu0
    %v5072 = vpop.f32.mrf.mxu0
    %v5073 = vadd.f32 0.0, %v5072
    %v5074 = vpop.f32.mrf.mxu0
    %5075 = vmatprep.mubr.bf16.mxu0 %v4668
    %5076 = vmatmul.mubr.bf16.gmra.mxu0 %v4667
    %v5077 = vpop.f32.mrf.mxu0
    %v5078 = vadd.f32 0.0, %v5077
    %v5079 = vpop.f32.mrf.mxu0
    %v5080 = vpop.f32.mrf.mxu0
    %v5081 = vadd.f32 0.0, %v5080
    %v5082 = vpop.f32.mrf.mxu0
    %5083 = vmatprep.mubr.bf16.mxu0 %v4671
    %5084 = vmatmul.mubr.bf16.gmra.mxu0 %v4670
    %v5085 = vpop.f32.mrf.mxu0
    %v5086 = vadd.f32 0.0, %v5085
    %v5087 = vpop.f32.mrf.mxu0
    %v5088 = vpop.f32.mrf.mxu0
    %v5089 = vadd.f32 0.0, %v5088
    %v5090 = vpop.f32.mrf.mxu0
    %5091 = vmatprep.mubr.bf16.mxu0 %v4674
    %5092 = vmatmul.mubr.bf16.gmra.mxu0 %v4673
    %v5093 = vpop.f32.mrf.mxu0
    %v5094 = vadd.f32 0.0, %v5093
    %v5095 = vpop.f32.mrf.mxu0
    %v5096 = vpop.f32.mrf.mxu0
    %v5097 = vadd.f32 0.0, %v5096
    %v5098 = vpop.f32.mrf.mxu0
    %5099 = vmatprep.mubr.bf16.mxu0 %v4677
    %5100 = vmatmul.mubr.bf16.gmra.mxu0 %v4676
    %v5101 = vpop.f32.mrf.mxu0
    %v5102 = vadd.f32 0.0, %v5101
    %v5103 = vpop.f32.mrf.mxu0
    %v5104 = vpop.f32.mrf.mxu0
    %v5105 = vadd.f32 0.0, %v5104
    %v5106 = vpop.f32.mrf.mxu0
    %5107 = vmatprep.mubr.bf16.mxu0 %v4680
    %5108 = vmatmul.mubr.bf16.gmra.mxu0 %v4679
    %v5109 = vpop.f32.mrf.mxu0
    %v5110 = vadd.f32 0.0, %v5109
    %v5111 = vpop.f32.mrf.mxu0
    %v5112 = vpop.f32.mrf.mxu0
    %v5113 = vadd.f32 0.0, %v5112
    %v5114 = vpop.f32.mrf.mxu0
    %5115 = vmatprep.mubr.bf16.mxu0 %v4683
    %5116 = vmatmul.mubr.bf16.gmra.mxu0 %v4682
    %v5117 = vpop.f32.mrf.mxu0
    %v5118 = vadd.f32 0.0, %v5117
    %v5119 = vpop.f32.mrf.mxu0
    %v5120 = vpop.f32.mrf.mxu0
    %v5121 = vadd.f32 0.0, %v5120
    %v5122 = vpop.f32.mrf.mxu0
    %5123 = vmatprep.mubr.bf16.mxu0 %v4686
    %5124 = vmatmul.mubr.bf16.gmra.mxu0 %v4685
    %v5125 = vpop.f32.mrf.mxu0
    %v5126 = vadd.f32 0.0, %v5125
    %v5127 = vpop.f32.mrf.mxu0
    %v5128 = vpop.f32.mrf.mxu0
    %v5129 = vadd.f32 0.0, %v5128
    %v5130 = vpop.f32.mrf.mxu0
    %5131 = vmatprep.mubr.bf16.mxu0 %v4689
    %5132 = vmatmul.mubr.bf16.gmra.mxu0 %v4688
    %v5133 = vpop.f32.mrf.mxu0
    %v5134 = vadd.f32 0.0, %v5133
    %v5135 = vpop.f32.mrf.mxu0
    %v5136 = vpop.f32.mrf.mxu0
    %v5137 = vadd.f32 0.0, %v5136
    %v5138 = vpop.f32.mrf.mxu0
    %5139 = vmatprep.mubr.bf16.mxu0 %v4692
    %5140 = vmatmul.mubr.bf16.gmra.mxu0 %v4691
    %v5141 = vpop.f32.mrf.mxu0
    %v5142 = vadd.f32 0.0, %v5141
    %v5143 = vpop.f32.mrf.mxu0
    %v5144 = vpop.f32.mrf.mxu0
    %v5145 = vadd.f32 0.0, %v5144
    %v5146 = vpop.f32.mrf.mxu0
    %5147 = vmatprep.mubr.bf16.mxu0 %v4695
    %5148 = vmatmul.mubr.bf16.gmra.mxu0 %v4694
    %v5149 = vpop.f32.mrf.mxu0
    %v5150 = vadd.f32 0.0, %v5149
    %v5151 = vpop.f32.mrf.mxu0
    %v5152 = vpop.f32.mrf.mxu0
    %v5153 = vadd.f32 0.0, %v5152
    %v5154 = vpop.f32.mrf.mxu0
    %5155 = vmatprep.mubr.bf16.mxu0 %v4698
    %5156 = vmatmul.mubr.bf16.gmra.mxu0 %v4697
    %v5157 = vpop.f32.mrf.mxu0
    %v5158 = vadd.f32 0.0, %v5157
    %v5159 = vpop.f32.mrf.mxu0
    %v5160 = vpop.f32.mrf.mxu0
    %v5161 = vadd.f32 0.0, %v5160
    %v5162 = vpop.f32.mrf.mxu0
    %5163 = vmatprep.mubr.bf16.mxu0 %v4701
    %5164 = vmatmul.mubr.bf16.gmra.mxu0 %v4700
    %v5165 = vpop.f32.mrf.mxu0
    %v5166 = vadd.f32 0.0, %v5165
    %v5167 = vpop.f32.mrf.mxu0
    %v5168 = vpop.f32.mrf.mxu0
    %v5169 = vadd.f32 0.0, %v5168
    %v5170 = vpop.f32.mrf.mxu0
    %5171 = vmatprep.mubr.bf16.mxu0 %v4704
    %5172 = vmatmul.mubr.bf16.gmra.mxu0 %v4703
    %v5173 = vpop.f32.mrf.mxu0
    %v5174 = vadd.f32 0.0, %v5173
    %v5175 = vpop.f32.mrf.mxu0
    %v5176 = vpop.f32.mrf.mxu0
    %v5177 = vadd.f32 0.0, %v5176
    %v5178 = vpop.f32.mrf.mxu0
    %5179 = vmatprep.mubr.bf16.mxu0 %v4707
    %5180 = vmatmul.mubr.bf16.gmra.mxu0 %v4706
    %v5181 = vpop.f32.mrf.mxu0
    %v5182 = vadd.f32 0.0, %v5181
    %v5183 = vpop.f32.mrf.mxu0
    %v5184 = vpop.f32.mrf.mxu0
    %v5185 = vadd.f32 0.0, %v5184
    %v5186 = vpop.f32.mrf.mxu0
    %5187 = vmatprep.mubr.bf16.mxu0 %v4710
    %5188 = vmatmul.mubr.bf16.gmra.mxu0 %v4709
    %v5189 = vpop.f32.mrf.mxu0
    %v5190 = vadd.f32 0.0, %v5189
    %v5191 = vpop.f32.mrf.mxu0
    %v5192 = vpop.f32.mrf.mxu0
    %v5193 = vadd.f32 0.0, %v5192
    %v5194 = vpop.f32.mrf.mxu0
    %5195 = vmatprep.mubr.bf16.mxu0 %v4713
    %5196 = vmatmul.mubr.bf16.gmra.mxu0 %v4712
    %v5197 = vpop.f32.mrf.mxu0
    %v5198 = vadd.f32 0.0, %v5197
    %v5199 = vpop.f32.mrf.mxu0
    %v5200 = vpop.f32.mrf.mxu0
    %v5201 = vadd.f32 0.0, %v5200
    %v5202 = vpop.f32.mrf.mxu0
    %5203 = vmatprep.mubr.bf16.mxu0 %v4716
    %5204 = vmatmul.mubr.bf16.gmra.mxu0 %v4715
    %v5205 = vpop.f32.mrf.mxu0
    %v5206 = vadd.f32 0.0, %v5205
    %v5207 = vpop.f32.mrf.mxu0
    %v5208 = vpop.f32.mrf.mxu0
    %v5209 = vadd.f32 0.0, %v5208
    %v5210 = vpop.f32.mrf.mxu0
    %5211 = vmatprep.mubr.bf16.mxu0 %v4719
    %5212 = vmatmul.mubr.bf16.gmra.mxu0 %v4718
    %v5213 = vpop.f32.mrf.mxu0
    %v5214 = vadd.f32 0.0, %v5213
    %v5215 = vpop.f32.mrf.mxu0
    %v5216 = vpop.f32.mrf.mxu0
    %v5217 = vadd.f32 0.0, %v5216
    %v5218 = vpop.f32.mrf.mxu0
    %5219 = vmatprep.mubr.bf16.mxu0 %v4722
    %5220 = vmatmul.mubr.bf16.gmra.mxu0 %v4721
    %v5221 = vpop.f32.mrf.mxu0
    %v5222 = vadd.f32 0.0, %v5221
    %v5223 = vpop.f32.mrf.mxu0
    %v5224 = vpop.f32.mrf.mxu0
    %v5225 = vadd.f32 0.0, %v5224
    %v5226 = vpop.f32.mrf.mxu0
    %5227 = vmatprep.mubr.bf16.mxu0 %v4725
    %5228 = vmatmul.mubr.bf16.gmra.mxu0 %v4724
    %v5229 = vpop.f32.mrf.mxu0
    %v5230 = vadd.f32 0.0, %v5229
    %v5231 = vpop.f32.mrf.mxu0
    %v5232 = vpop.f32.mrf.mxu0
    %v5233 = vadd.f32 0.0, %v5232
    %v5234 = vpop.f32.mrf.mxu0
    %5235 = vmatprep.mubr.bf16.mxu0 %v4728
    %5236 = vmatmul.mubr.bf16.gmra.mxu0 %v4727
    %v5237 = vpop.f32.mrf.mxu0
    %v5238 = vadd.f32 0.0, %v5237
    %v5239 = vpop.f32.mrf.mxu0
    %v5240 = vpop.f32.mrf.mxu0
    %v5241 = vadd.f32 0.0, %v5240
    %v5242 = vpop.f32.mrf.mxu0
    %5243 = vmatprep.mubr.bf16.mxu0 %v4731
    %5244 = vmatmul.mubr.bf16.gmra.mxu0 %v4730
    %v5245 = vpop.f32.mrf.mxu0
    %v5246 = vadd.f32 0.0, %v5245
    %v5247 = vpop.f32.mrf.mxu0
    %v5248 = vpop.f32.mrf.mxu0
    %v5249 = vadd.f32 0.0, %v5248
    %v5250 = vpop.f32.mrf.mxu0
    %5251 = vmatprep.mubr.bf16.mxu0 %v4734
    %5252 = vmatmul.mubr.bf16.gmra.mxu0 %v4733
    %v5253 = vpop.f32.mrf.mxu0
    %v5254 = vadd.f32 0.0, %v5253
    %v5255 = vpop.f32.mrf.mxu0
    %v5256 = vpop.f32.mrf.mxu0
    %v5257 = vadd.f32 0.0, %v5256
    %v5258 = vpop.f32.mrf.mxu0
    %5259 = vmatprep.mubr.bf16.mxu0 %v4737
    %5260 = vmatmul.mubr.bf16.gmra.mxu0 %v4736
    %v5261 = vpop.f32.mrf.mxu0
    %v5262 = vadd.f32 0.0, %v5261
    %v5263 = vpop.f32.mrf.mxu0
    %v5264 = vpop.f32.mrf.mxu0
    %v5265 = vadd.f32 0.0, %v5264
    %v5266 = vpop.f32.mrf.mxu0
    %5267 = vdwg.mxu0
    %5268 = vmatprep.subr.bf16.mxu0 0
    %5269 = vmatpush1.bf16.msra.mxu0 %v4954
    %5270 = vmatprep.subr.bf16.mxu0 0
    %5271 = vmatpush1.bf16.msra.mxu0 %v4953
    %5272 = vmatprep.subr.bf16.mxu0 0
    %5273 = vmatpush1.bf16.msra.mxu0 %v4952
    %5274 = vmatprep.subr.bf16.mxu0 0
    %5275 = vmatpush1.bf16.msra.mxu0 %v4951
    %5276 = vmatprep.subr.bf16.mxu0 0
    %5277 = vmatpush1.bf16.msra.mxu0 %v4950
    %5278 = vmatprep.subr.bf16.mxu0 0
    %5279 = vmatpush1.bf16.msra.mxu0 %v4949
    %5280 = vmatprep.subr.bf16.mxu0 0
    %5281 = vmatpush1.bf16.msra.mxu0 %v4948
    %5282 = vmatprep.subr.bf16.mxu0 0
    %5283 = vmatpush1.bf16.msra.mxu0 %v4947
    %5284 = vmatprep.subr.bf16.mxu0 0
    %5285 = vmatpush2.bf16.msra.mxu0 0
    %5286 = vmatprep.subr.bf16.mxu0 0
    %5287 = vmatpush2.bf16.msra.mxu0 0
    %5288 = vmatprep.subr.bf16.mxu0 0
    %5289 = vmatpush2.bf16.msra.mxu0 0
    %5290 = vmatprep.subr.bf16.mxu0 0
    %5291 = vmatpush2.bf16.msra.mxu0 0
    %5292 = vmatprep.subr.bf16.mxu0 0
    %5293 = vmatpush2.bf16.msra.mxu0 0
    %5294 = vmatprep.subr.bf16.mxu0 0
    %5295 = vmatpush2.bf16.msra.mxu0 0
    %5296 = vmatprep.subr.bf16.mxu0 0
    %5297 = vmatpush2.bf16.msra.mxu0 0
    %5298 = vmatprep.subr.bf16.mxu0 0
    %5299 = vmatpush2.bf16.msra.mxu0 0
    %5300 = vmatprep.mubr.bf16.mxu0 0
    %5301 = vmatmul.mubr.bf16.gmra.mxu0 %v4645
    %v5302 = vpop.f32.mrf.mxu0
    %v5303 = vadd.f32 %v5014, %v5302
    %v5304 = vpop.f32.mrf.mxu0
    %v5305 = vpop.f32.mrf.mxu0
    %v5306 = vadd.f32 %v5017, %v5305
    %v5307 = vpop.f32.mrf.mxu0
    %5308 = vmatprep.mubr.bf16.mxu0 0
    %5309 = vmatmul.mubr.bf16.gmra.mxu0 %v4648
    %v5310 = vpop.f32.mrf.mxu0
    %v5311 = vadd.f32 %v5022, %v5310
    %v5312 = vpop.f32.mrf.mxu0
    %v5313 = vpop.f32.mrf.mxu0
    %v5314 = vadd.f32 %v5025, %v5313
    %v5315 = vpop.f32.mrf.mxu0
    %5316 = vmatprep.mubr.bf16.mxu0 0
    %5317 = vmatmul.mubr.bf16.gmra.mxu0 %v4651
    %v5318 = vpop.f32.mrf.mxu0
    %v5319 = vadd.f32 %v5030, %v5318
    %v5320 = vpop.f32.mrf.mxu0
    %v5321 = vpop.f32.mrf.mxu0
    %v5322 = vadd.f32 %v5033, %v5321
    %v5323 = vpop.f32.mrf.mxu0
    %5324 = vmatprep.mubr.bf16.mxu0 0
    %5325 = vmatmul.mubr.bf16.gmra.mxu0 %v4654
    %v5326 = vpop.f32.mrf.mxu0
    %v5327 = vadd.f32 %v5038, %v5326
    %v5328 = vpop.f32.mrf.mxu0
    %v5329 = vpop.f32.mrf.mxu0
    %v5330 = vadd.f32 %v5041, %v5329
    %v5331 = vpop.f32.mrf.mxu0
    %5332 = vmatprep.mubr.bf16.mxu0 0
    %5333 = vmatmul.mubr.bf16.gmra.mxu0 %v4657
    %v5334 = vpop.f32.mrf.mxu0
    %v5335 = vadd.f32 %v5046, %v5334
    %v5336 = vpop.f32.mrf.mxu0
    %v5337 = vpop.f32.mrf.mxu0
    %v5338 = vadd.f32 %v5049, %v5337
    %v5339 = vpop.f32.mrf.mxu0
    %5340 = vmatprep.mubr.bf16.mxu0 0
    %5341 = vmatmul.mubr.bf16.gmra.mxu0 %v4660
    %v5342 = vpop.f32.mrf.mxu0
    %v5343 = vadd.f32 %v5054, %v5342
    %v5344 = vpop.f32.mrf.mxu0
    %v5345 = vpop.f32.mrf.mxu0
    %v5346 = vadd.f32 %v5057, %v5345
    %v5347 = vpop.f32.mrf.mxu0
    %5348 = vmatprep.mubr.bf16.mxu0 0
    %5349 = vmatmul.mubr.bf16.gmra.mxu0 %v4663
    %v5350 = vpop.f32.mrf.mxu0
    %v5351 = vadd.f32 %v5062, %v5350
    %v5352 = vpop.f32.mrf.mxu0
    %v5353 = vpop.f32.mrf.mxu0
    %v5354 = vadd.f32 %v5065, %v5353
    %v5355 = vpop.f32.mrf.mxu0
    %5356 = vmatprep.mubr.bf16.mxu0 0
    %5357 = vmatmul.mubr.bf16.gmra.mxu0 %v4666
    %v5358 = vpop.f32.mrf.mxu0
    %v5359 = vadd.f32 %v5070, %v5358
    %v5360 = vpop.f32.mrf.mxu0
    %v5361 = vpop.f32.mrf.mxu0
    %v5362 = vadd.f32 %v5073, %v5361
    %v5363 = vpop.f32.mrf.mxu0
    %5364 = vmatprep.mubr.bf16.mxu0 0
    %5365 = vmatmul.mubr.bf16.gmra.mxu0 %v4669
    %v5366 = vpop.f32.mrf.mxu0
    %v5367 = vadd.f32 %v5078, %v5366
    %v5368 = vpop.f32.mrf.mxu0
    %v5369 = vpop.f32.mrf.mxu0
    %v5370 = vadd.f32 %v5081, %v5369
    %v5371 = vpop.f32.mrf.mxu0
    %5372 = vmatprep.mubr.bf16.mxu0 0
    %5373 = vmatmul.mubr.bf16.gmra.mxu0 %v4672
    %v5374 = vpop.f32.mrf.mxu0
    %v5375 = vadd.f32 %v5086, %v5374
    %v5376 = vpop.f32.mrf.mxu0
    %v5377 = vpop.f32.mrf.mxu0
    %v5378 = vadd.f32 %v5089, %v5377
    %v5379 = vpop.f32.mrf.mxu0
    %5380 = vmatprep.mubr.bf16.mxu0 0
    %5381 = vmatmul.mubr.bf16.gmra.mxu0 %v4675
    %v5382 = vpop.f32.mrf.mxu0
    %v5383 = vadd.f32 %v5094, %v5382
    %v5384 = vpop.f32.mrf.mxu0
    %v5385 = vpop.f32.mrf.mxu0
    %v5386 = vadd.f32 %v5097, %v5385
    %v5387 = vpop.f32.mrf.mxu0
    %5388 = vmatprep.mubr.bf16.mxu0 0
    %5389 = vmatmul.mubr.bf16.gmra.mxu0 %v4678
    %v5390 = vpop.f32.mrf.mxu0
    %v5391 = vadd.f32 %v5102, %v5390
    %v5392 = vpop.f32.mrf.mxu0
    %v5393 = vpop.f32.mrf.mxu0
    %v5394 = vadd.f32 %v5105, %v5393
    %v5395 = vpop.f32.mrf.mxu0
    %5396 = vmatprep.mubr.bf16.mxu0 0
    %5397 = vmatmul.mubr.bf16.gmra.mxu0 %v4681
    %v5398 = vpop.f32.mrf.mxu0
    %v5399 = vadd.f32 %v5110, %v5398
    %v5400 = vpop.f32.mrf.mxu0
    %v5401 = vpop.f32.mrf.mxu0
    %v5402 = vadd.f32 %v5113, %v5401
    %v5403 = vpop.f32.mrf.mxu0
    %5404 = vmatprep.mubr.bf16.mxu0 0
    %5405 = vmatmul.mubr.bf16.gmra.mxu0 %v4684
    %v5406 = vpop.f32.mrf.mxu0
    %v5407 = vadd.f32 %v5118, %v5406
    %v5408 = vpop.f32.mrf.mxu0
    %v5409 = vpop.f32.mrf.mxu0
    %v5410 = vadd.f32 %v5121, %v5409
    %v5411 = vpop.f32.mrf.mxu0
    %5412 = vmatprep.mubr.bf16.mxu0 0
    %5413 = vmatmul.mubr.bf16.gmra.mxu0 %v4687
    %v5414 = vpop.f32.mrf.mxu0
    %v5415 = vadd.f32 %v5126, %v5414
    %v5416 = vpop.f32.mrf.mxu0
    %v5417 = vpop.f32.mrf.mxu0
    %v5418 = vadd.f32 %v5129, %v5417
    %v5419 = vpop.f32.mrf.mxu0
    %5420 = vmatprep.mubr.bf16.mxu0 0
    %5421 = vmatmul.mubr.bf16.gmra.mxu0 %v4690
    %v5422 = vpop.f32.mrf.mxu0
    %v5423 = vadd.f32 %v5134, %v5422
    %v5424 = vpop.f32.mrf.mxu0
    %v5425 = vpop.f32.mrf.mxu0
    %v5426 = vadd.f32 %v5137, %v5425
    %v5427 = vpop.f32.mrf.mxu0
    %5428 = vmatprep.mubr.bf16.mxu0 0
    %5429 = vmatmul.mubr.bf16.gmra.mxu0 %v4693
    %v5430 = vpop.f32.mrf.mxu0
    %v5431 = vadd.f32 %v5142, %v5430
    %v5432 = vpop.f32.mrf.mxu0
    %v5433 = vpop.f32.mrf.mxu0
    %v5434 = vadd.f32 %v5145, %v5433
    %v5435 = vpop.f32.mrf.mxu0
    %5436 = vmatprep.mubr.bf16.mxu0 0
    %5437 = vmatmul.mubr.bf16.gmra.mxu0 %v4696
    %v5438 = vpop.f32.mrf.mxu0
    %v5439 = vadd.f32 %v5150, %v5438
    %v5440 = vpop.f32.mrf.mxu0
    %v5441 = vpop.f32.mrf.mxu0
    %v5442 = vadd.f32 %v5153, %v5441
    %v5443 = vpop.f32.mrf.mxu0
    %5444 = vmatprep.mubr.bf16.mxu0 0
    %5445 = vmatmul.mubr.bf16.gmra.mxu0 %v4699
    %v5446 = vpop.f32.mrf.mxu0
    %v5447 = vadd.f32 %v5158, %v5446
    %v5448 = vpop.f32.mrf.mxu0
    %v5449 = vpop.f32.mrf.mxu0
    %v5450 = vadd.f32 %v5161, %v5449
    %v5451 = vpop.f32.mrf.mxu0
    %5452 = vmatprep.mubr.bf16.mxu0 0
    %5453 = vmatmul.mubr.bf16.gmra.mxu0 %v4702
    %v5454 = vpop.f32.mrf.mxu0
    %v5455 = vadd.f32 %v5166, %v5454
    %v5456 = vpop.f32.mrf.mxu0
    %v5457 = vpop.f32.mrf.mxu0
    %v5458 = vadd.f32 %v5169, %v5457
    %v5459 = vpop.f32.mrf.mxu0
    %5460 = vmatprep.mubr.bf16.mxu0 0
    %5461 = vmatmul.mubr.bf16.gmra.mxu0 %v4705
    %v5462 = vpop.f32.mrf.mxu0
    %v5463 = vadd.f32 %v5174, %v5462
    %v5464 = vpop.f32.mrf.mxu0
    %v5465 = vpop.f32.mrf.mxu0
    %v5466 = vadd.f32 %v5177, %v5465
    %v5467 = vpop.f32.mrf.mxu0
    %5468 = vmatprep.mubr.bf16.mxu0 0
    %5469 = vmatmul.mubr.bf16.gmra.mxu0 %v4708
    %v5470 = vpop.f32.mrf.mxu0
    %v5471 = vadd.f32 %v5182, %v5470
    %v5472 = vpop.f32.mrf.mxu0
    %v5473 = vpop.f32.mrf.mxu0
    %v5474 = vadd.f32 %v5185, %v5473
    %v5475 = vpop.f32.mrf.mxu0
    %5476 = vmatprep.mubr.bf16.mxu0 0
    %5477 = vmatmul.mubr.bf16.gmra.mxu0 %v4711
    %v5478 = vpop.f32.mrf.mxu0
    %v5479 = vadd.f32 %v5190, %v5478
    %v5480 = vpop.f32.mrf.mxu0
    %v5481 = vpop.f32.mrf.mxu0
    %v5482 = vadd.f32 %v5193, %v5481
    %v5483 = vpop.f32.mrf.mxu0
    %5484 = vmatprep.mubr.bf16.mxu0 0
    %5485 = vmatmul.mubr.bf16.gmra.mxu0 %v4714
    %v5486 = vpop.f32.mrf.mxu0
    %v5487 = vadd.f32 %v5198, %v5486
    %v5488 = vpop.f32.mrf.mxu0
    %v5489 = vpop.f32.mrf.mxu0
    %v5490 = vadd.f32 %v5201, %v5489
    %v5491 = vpop.f32.mrf.mxu0
    %5492 = vmatprep.mubr.bf16.mxu0 0
    %5493 = vmatmul.mubr.bf16.gmra.mxu0 %v4717
    %v5494 = vpop.f32.mrf.mxu0
    %v5495 = vadd.f32 %v5206, %v5494
    %v5496 = vpop.f32.mrf.mxu0
    %v5497 = vpop.f32.mrf.mxu0
    %v5498 = vadd.f32 %v5209, %v5497
    %v5499 = vpop.f32.mrf.mxu0
    %5500 = vmatprep.mubr.bf16.mxu0 0
    %5501 = vmatmul.mubr.bf16.gmra.mxu0 %v4720
    %v5502 = vpop.f32.mrf.mxu0
    %v5503 = vadd.f32 %v5214, %v5502
    %v5504 = vpop.f32.mrf.mxu0
    %v5505 = vpop.f32.mrf.mxu0
    %v5506 = vadd.f32 %v5217, %v5505
    %v5507 = vpop.f32.mrf.mxu0
    %5508 = vmatprep.mubr.bf16.mxu0 0
    %5509 = vmatmul.mubr.bf16.gmra.mxu0 %v4723
    %v5510 = vpop.f32.mrf.mxu0
    %v5511 = vadd.f32 %v5222, %v5510
    %v5512 = vpop.f32.mrf.mxu0
    %v5513 = vpop.f32.mrf.mxu0
    %v5514 = vadd.f32 %v5225, %v5513
    %v5515 = vpop.f32.mrf.mxu0
    %5516 = vmatprep.mubr.bf16.mxu0 0
    %5517 = vmatmul.mubr.bf16.gmra.mxu0 %v4726
    %v5518 = vpop.f32.mrf.mxu0
    %v5519 = vadd.f32 %v5230, %v5518
    %v5520 = vpop.f32.mrf.mxu0
    %v5521 = vpop.f32.mrf.mxu0
    %v5522 = vadd.f32 %v5233, %v5521
    %v5523 = vpop.f32.mrf.mxu0
    %5524 = vmatprep.mubr.bf16.mxu0 0
    %5525 = vmatmul.mubr.bf16.gmra.mxu0 %v4729
    %v5526 = vpop.f32.mrf.mxu0
    %v5527 = vadd.f32 %v5238, %v5526
    %v5528 = vpop.f32.mrf.mxu0
    %v5529 = vpop.f32.mrf.mxu0
    %v5530 = vadd.f32 %v5241, %v5529
    %v5531 = vpop.f32.mrf.mxu0
    %5532 = vmatprep.mubr.bf16.mxu0 0
    %5533 = vmatmul.mubr.bf16.gmra.mxu0 %v4732
    %v5534 = vpop.f32.mrf.mxu0
    %v5535 = vadd.f32 %v5246, %v5534
    %v5536 = vpop.f32.mrf.mxu0
    %v5537 = vpop.f32.mrf.mxu0
    %v5538 = vadd.f32 %v5249, %v5537
    %v5539 = vpop.f32.mrf.mxu0
    %5540 = vmatprep.mubr.bf16.mxu0 0
    %5541 = vmatmul.mubr.bf16.gmra.mxu0 %v4735
    %v5542 = vpop.f32.mrf.mxu0
    %v5543 = vadd.f32 %v5254, %v5542
    %v5544 = vpop.f32.mrf.mxu0
    %v5545 = vpop.f32.mrf.mxu0
    %v5546 = vadd.f32 %v5257, %v5545
    %v5547 = vpop.f32.mrf.mxu0
    %5548 = vmatprep.mubr.bf16.mxu0 0
    %5549 = vmatmul.mubr.bf16.gmra.mxu0 %v4738
    %v5550 = vpop.f32.mrf.mxu0
    %v5551 = vadd.f32 %v5262, %v5550
    %v5552 = vpop.f32.mrf.mxu0
    %v5553 = vpop.f32.mrf.mxu0
    %v5554 = vadd.f32 %v5265, %v5553
    %v5555 = vpop.f32.mrf.mxu0
    %5556 = vdwg.mxu0
    %v5557 = vadd.f32 %v3891, %v5303
    %v5558 = vadd.f32 %v3894, %v5306
    %v5559 = vadd.f32 %v3899, %v5311
    %v5560 = vadd.f32 %v3902, %v5314
    %v5561 = vadd.f32 %v3907, %v5319
    %v5562 = vadd.f32 %v3910, %v5322
    %v5563 = vadd.f32 %v3915, %v5327
    %v5564 = vadd.f32 %v3918, %v5330
    %v5565 = vadd.f32 %v3923, %v5335
    %v5566 = vadd.f32 %v3926, %v5338
    %v5567 = vadd.f32 %v3931, %v5343
    %v5568 = vadd.f32 %v3934, %v5346
    %v5569 = vadd.f32 %v3939, %v5351
    %v5570 = vadd.f32 %v3942, %v5354
    %v5571 = vadd.f32 %v3947, %v5359
    %v5572 = vadd.f32 %v3950, %v5362
    %v5573 = vadd.f32 %v3955, %v5367
    %v5574 = vadd.f32 %v3958, %v5370
    %v5575 = vadd.f32 %v3963, %v5375
    %v5576 = vadd.f32 %v3966, %v5378
    %v5577 = vadd.f32 %v3971, %v5383
    %v5578 = vadd.f32 %v3974, %v5386
    %v5579 = vadd.f32 %v3979, %v5391
    %v5580 = vadd.f32 %v3982, %v5394
    %v5581 = vadd.f32 %v3987, %v5399
    %v5582 = vadd.f32 %v3990, %v5402
    %v5583 = vadd.f32 %v3995, %v5407
    %v5584 = vadd.f32 %v3998, %v5410
    %v5585 = vadd.f32 %v4003, %v5415
    %v5586 = vadd.f32 %v4006, %v5418
    %v5587 = vadd.f32 %v4011, %v5423
    %v5588 = vadd.f32 %v4014, %v5426
    %v5589 = vadd.f32 %v4019, %v5431
    %v5590 = vadd.f32 %v4022, %v5434
    %v5591 = vadd.f32 %v4027, %v5439
    %v5592 = vadd.f32 %v4030, %v5442
    %v5593 = vadd.f32 %v4035, %v5447
    %v5594 = vadd.f32 %v4038, %v5450
    %v5595 = vadd.f32 %v4043, %v5455
    %v5596 = vadd.f32 %v4046, %v5458
    %v5597 = vadd.f32 %v4051, %v5463
    %v5598 = vadd.f32 %v4054, %v5466
    %v5599 = vadd.f32 %v4059, %v5471
    %v5600 = vadd.f32 %v4062, %v5474
    %v5601 = vadd.f32 %v4067, %v5479
    %v5602 = vadd.f32 %v4070, %v5482
    %v5603 = vadd.f32 %v4075, %v5487
    %v5604 = vadd.f32 %v4078, %v5490
    %v5605 = vadd.f32 %v4083, %v5495
    %v5606 = vadd.f32 %v4086, %v5498
    %v5607 = vadd.f32 %v4091, %v5503
    %v5608 = vadd.f32 %v4094, %v5506
    %v5609 = vadd.f32 %v4099, %v5511
    %v5610 = vadd.f32 %v4102, %v5514
    %v5611 = vadd.f32 %v4107, %v5519
    %v5612 = vadd.f32 %v4110, %v5522
    %v5613 = vadd.f32 %v4115, %v5527
    %v5614 = vadd.f32 %v4118, %v5530
    %v5615 = vadd.f32 %v4123, %v5535
    %v5616 = vadd.f32 %v4126, %v5538
    %v5617 = vadd.f32 %v4131, %v5543
    %v5618 = vadd.f32 %v4134, %v5546
    %v5619 = vadd.f32 %v4139, %v5551
    %v5620 = vadd.f32 %v4142, %v5554
    %v5622 = vlaneseq
    %v5623 = vshrl.u32 %v5622, 7
    %v5624 = vsub.s32 0, %v5623
    %v5625 = vrot.slane %v1323, %v5624
    %v5627 = vadd.f32 %v5557, %v5625
    %v5628 = vadd.f32 %v5558, %v5625
    %v5629 = vadd.f32 %v5559, %v5625
    %v5630 = vadd.f32 %v5560, %v5625
    %v5631 = vadd.f32 %v5561, %v5625
    %v5632 = vadd.f32 %v5562, %v5625
    %v5633 = vadd.f32 %v5563, %v5625
    %v5634 = vadd.f32 %v5564, %v5625
    %v5635 = vadd.f32 %v5565, %v5625
    %v5636 = vadd.f32 %v5566, %v5625
    %v5637 = vadd.f32 %v5567, %v5625
    %v5638 = vadd.f32 %v5568, %v5625
    %v5639 = vadd.f32 %v5569, %v5625
    %v5640 = vadd.f32 %v5570, %v5625
    %v5641 = vadd.f32 %v5571, %v5625
    %v5642 = vadd.f32 %v5572, %v5625
    %v5643 = vadd.f32 %v5573, %v5625
    %v5644 = vadd.f32 %v5574, %v5625
    %v5645 = vadd.f32 %v5575, %v5625
    %v5646 = vadd.f32 %v5576, %v5625
    %v5647 = vadd.f32 %v5577, %v5625
    %v5648 = vadd.f32 %v5578, %v5625
    %v5649 = vadd.f32 %v5579, %v5625
    %v5650 = vadd.f32 %v5580, %v5625
    %v5651 = vadd.f32 %v5581, %v5625
    %v5652 = vadd.f32 %v5582, %v5625
    %v5653 = vadd.f32 %v5583, %v5625
    %v5654 = vadd.f32 %v5584, %v5625
    %v5655 = vadd.f32 %v5585, %v5625
    %v5656 = vadd.f32 %v5586, %v5625
    %v5657 = vadd.f32 %v5587, %v5625
    %v5658 = vadd.f32 %v5588, %v5625
    %v5659 = vadd.f32 %v5589, %v5625
    %v5660 = vadd.f32 %v5590, %v5625
    %v5661 = vadd.f32 %v5591, %v5625
    %v5662 = vadd.f32 %v5592, %v5625
    %v5663 = vadd.f32 %v5593, %v5625
    %v5664 = vadd.f32 %v5594, %v5625
    %v5665 = vadd.f32 %v5595, %v5625
    %v5666 = vadd.f32 %v5596, %v5625
    %v5667 = vadd.f32 %v5597, %v5625
    %v5668 = vadd.f32 %v5598, %v5625
    %v5669 = vadd.f32 %v5599, %v5625
    %v5670 = vadd.f32 %v5600, %v5625
    %v5671 = vadd.f32 %v5601, %v5625
    %v5672 = vadd.f32 %v5602, %v5625
    %v5673 = vadd.f32 %v5603, %v5625
    %v5674 = vadd.f32 %v5604, %v5625
    %v5675 = vadd.f32 %v5605, %v5625
    %v5676 = vadd.f32 %v5606, %v5625
    %v5677 = vadd.f32 %v5607, %v5625
    %v5678 = vadd.f32 %v5608, %v5625
    %v5679 = vadd.f32 %v5609, %v5625
    %v5680 = vadd.f32 %v5610, %v5625
    %v5681 = vadd.f32 %v5611, %v5625
    %v5682 = vadd.f32 %v5612, %v5625
    %v5683 = vadd.f32 %v5613, %v5625
    %v5684 = vadd.f32 %v5614, %v5625
    %v5685 = vadd.f32 %v5615, %v5625
    %v5686 = vadd.f32 %v5616, %v5625
    %v5687 = vadd.f32 %v5617, %v5625
    %v5688 = vadd.f32 %v5618, %v5625
    %v5689 = vadd.f32 %v5619, %v5625
    %v5690 = vadd.f32 %v5620, %v5625
    %v5691 = vmul.f32 %v5627, 0.5
    %v5692 = vmul.f32 %v5628, 0.5
    %v5693 = vmul.f32 %v5629, 0.5
    %v5694 = vmul.f32 %v5630, 0.5
    %v5695 = vmul.f32 %v5631, 0.5
    %v5696 = vmul.f32 %v5632, 0.5
    %v5697 = vmul.f32 %v5633, 0.5
    %v5698 = vmul.f32 %v5634, 0.5
    %v5699 = vmul.f32 %v5635, 0.5
    %v5700 = vmul.f32 %v5636, 0.5
    %v5701 = vmul.f32 %v5637, 0.5
    %v5702 = vmul.f32 %v5638, 0.5
    %v5703 = vmul.f32 %v5639, 0.5
    %v5704 = vmul.f32 %v5640, 0.5
    %v5705 = vmul.f32 %v5641, 0.5
    %v5706 = vmul.f32 %v5642, 0.5
    %v5707 = vmul.f32 %v5643, 0.5
    %v5708 = vmul.f32 %v5644, 0.5
    %v5709 = vmul.f32 %v5645, 0.5
    %v5710 = vmul.f32 %v5646, 0.5
    %v5711 = vmul.f32 %v5647, 0.5
    %v5712 = vmul.f32 %v5648, 0.5
    %v5713 = vmul.f32 %v5649, 0.5
    %v5714 = vmul.f32 %v5650, 0.5
    %v5715 = vmul.f32 %v5651, 0.5
    %v5716 = vmul.f32 %v5652, 0.5
    %v5717 = vmul.f32 %v5653, 0.5
    %v5718 = vmul.f32 %v5654, 0.5
    %v5719 = vmul.f32 %v5655, 0.5
    %v5720 = vmul.f32 %v5656, 0.5
    %v5721 = vmul.f32 %v5657, 0.5
    %v5722 = vmul.f32 %v5658, 0.5
    %v5723 = vmul.f32 %v5659, 0.5
    %v5724 = vmul.f32 %v5660, 0.5
    %v5725 = vmul.f32 %v5661, 0.5
    %v5726 = vmul.f32 %v5662, 0.5
    %v5727 = vmul.f32 %v5663, 0.5
    %v5728 = vmul.f32 %v5664, 0.5
    %v5729 = vmul.f32 %v5665, 0.5
    %v5730 = vmul.f32 %v5666, 0.5
    %v5731 = vmul.f32 %v5667, 0.5
    %v5732 = vmul.f32 %v5668, 0.5
    %v5733 = vmul.f32 %v5669, 0.5
    %v5734 = vmul.f32 %v5670, 0.5
    %v5735 = vmul.f32 %v5671, 0.5
    %v5736 = vmul.f32 %v5672, 0.5
    %v5737 = vmul.f32 %v5673, 0.5
    %v5738 = vmul.f32 %v5674, 0.5
    %v5739 = vmul.f32 %v5675, 0.5
    %v5740 = vmul.f32 %v5676, 0.5
    %v5741 = vmul.f32 %v5677, 0.5
    %v5742 = vmul.f32 %v5678, 0.5
    %v5743 = vmul.f32 %v5679, 0.5
    %v5744 = vmul.f32 %v5680, 0.5
    %v5745 = vmul.f32 %v5681, 0.5
    %v5746 = vmul.f32 %v5682, 0.5
    %v5747 = vmul.f32 %v5683, 0.5
    %v5748 = vmul.f32 %v5684, 0.5
    %v5749 = vmul.f32 %v5685, 0.5
    %v5750 = vmul.f32 %v5686, 0.5
    %v5751 = vmul.f32 %v5687, 0.5
    %v5752 = vmul.f32 %v5688, 0.5
    %v5753 = vmul.f32 %v5689, 0.5
    %v5754 = vmul.f32 %v5690, 0.5
    %v5755 = vtanh.pop %v5691
    %v5756 = vtanh.pop %v5692
    %v5757 = vtanh.pop %v5693
    %v5758 = vtanh.pop %v5694
    %v5759 = vtanh.pop %v5695
    %v5760 = vtanh.pop %v5696
    %v5761 = vtanh.pop %v5697
    %v5762 = vtanh.pop %v5698
    %v5763 = vtanh.pop %v5699
    %v5764 = vtanh.pop %v5700
    %v5765 = vtanh.pop %v5701
    %v5766 = vtanh.pop %v5702
    %v5767 = vtanh.pop %v5703
    %v5768 = vtanh.pop %v5704
    %v5769 = vtanh.pop %v5705
    %v5770 = vtanh.pop %v5706
    %v5771 = vtanh.pop %v5707
    %v5772 = vtanh.pop %v5708
    %v5773 = vtanh.pop %v5709
    %v5774 = vtanh.pop %v5710
    %v5775 = vtanh.pop %v5711
    %v5776 = vtanh.pop %v5712
    %v5777 = vtanh.pop %v5713
    %v5778 = vtanh.pop %v5714
    %v5779 = vtanh.pop %v5715
    %v5780 = vtanh.pop %v5716
    %v5781 = vtanh.pop %v5717
    %v5782 = vtanh.pop %v5718
    %v5783 = vtanh.pop %v5719
    %v5784 = vtanh.pop %v5720
    %v5785 = vtanh.pop %v5721
    %v5786 = vtanh.pop %v5722
    %v5787 = vtanh.pop %v5723
    %v5788 = vtanh.pop %v5724
    %v5789 = vtanh.pop %v5725
    %v5790 = vtanh.pop %v5726
    %v5791 = vtanh.pop %v5727
    %v5792 = vtanh.pop %v5728
    %v5793 = vtanh.pop %v5729
    %v5794 = vtanh.pop %v5730
    %v5795 = vtanh.pop %v5731
    %v5796 = vtanh.pop %v5732
    %v5797 = vtanh.pop %v5733
    %v5798 = vtanh.pop %v5734
    %v5799 = vtanh.pop %v5735
    %v5800 = vtanh.pop %v5736
    %v5801 = vtanh.pop %v5737
    %v5802 = vtanh.pop %v5738
    %v5803 = vtanh.pop %v5739
    %v5804 = vtanh.pop %v5740
    %v5805 = vtanh.pop %v5741
    %v5806 = vtanh.pop %v5742
    %v5807 = vtanh.pop %v5743
    %v5808 = vtanh.pop %v5744
    %v5809 = vtanh.pop %v5745
    %v5810 = vtanh.pop %v5746
    %v5811 = vtanh.pop %v5747
    %v5812 = vtanh.pop %v5748
    %v5813 = vtanh.pop %v5749
    %v5814 = vtanh.pop %v5750
    %v5815 = vtanh.pop %v5751
    %v5816 = vtanh.pop %v5752
    %v5817 = vtanh.pop %v5753
    %v5818 = vtanh.pop %v5754
    %v5819 = vmul.f32 %v5755, 0.5
    %v5820 = vmul.f32 %v5756, 0.5
    %v5821 = vmul.f32 %v5757, 0.5
    %v5822 = vmul.f32 %v5758, 0.5
    %v5823 = vmul.f32 %v5759, 0.5
    %v5824 = vmul.f32 %v5760, 0.5
    %v5825 = vmul.f32 %v5761, 0.5
    %v5826 = vmul.f32 %v5762, 0.5
    %v5827 = vmul.f32 %v5763, 0.5
    %v5828 = vmul.f32 %v5764, 0.5
    %v5829 = vmul.f32 %v5765, 0.5
    %v5830 = vmul.f32 %v5766, 0.5
    %v5831 = vmul.f32 %v5767, 0.5
    %v5832 = vmul.f32 %v5768, 0.5
    %v5833 = vmul.f32 %v5769, 0.5
    %v5834 = vmul.f32 %v5770, 0.5
    %v5835 = vmul.f32 %v5771, 0.5
    %v5836 = vmul.f32 %v5772, 0.5
    %v5837 = vmul.f32 %v5773, 0.5
    %v5838 = vmul.f32 %v5774, 0.5
    %v5839 = vmul.f32 %v5775, 0.5
    %v5840 = vmul.f32 %v5776, 0.5
    %v5841 = vmul.f32 %v5777, 0.5
    %v5842 = vmul.f32 %v5778, 0.5
    %v5843 = vmul.f32 %v5779, 0.5
    %v5844 = vmul.f32 %v5780, 0.5
    %v5845 = vmul.f32 %v5781, 0.5
    %v5846 = vmul.f32 %v5782, 0.5
    %v5847 = vmul.f32 %v5783, 0.5
    %v5848 = vmul.f32 %v5784, 0.5
    %v5849 = vmul.f32 %v5785, 0.5
    %v5850 = vmul.f32 %v5786, 0.5
    %v5851 = vmul.f32 %v5787, 0.5
    %v5852 = vmul.f32 %v5788, 0.5
    %v5853 = vmul.f32 %v5789, 0.5
    %v5854 = vmul.f32 %v5790, 0.5
    %v5855 = vmul.f32 %v5791, 0.5
    %v5856 = vmul.f32 %v5792, 0.5
    %v5857 = vmul.f32 %v5793, 0.5
    %v5858 = vmul.f32 %v5794, 0.5
    %v5859 = vmul.f32 %v5795, 0.5
    %v5860 = vmul.f32 %v5796, 0.5
    %v5861 = vmul.f32 %v5797, 0.5
    %v5862 = vmul.f32 %v5798, 0.5
    %v5863 = vmul.f32 %v5799, 0.5
    %v5864 = vmul.f32 %v5800, 0.5
    %v5865 = vmul.f32 %v5801, 0.5
    %v5866 = vmul.f32 %v5802, 0.5
    %v5867 = vmul.f32 %v5803, 0.5
    %v5868 = vmul.f32 %v5804, 0.5
    %v5869 = vmul.f32 %v5805, 0.5
    %v5870 = vmul.f32 %v5806, 0.5
    %v5871 = vmul.f32 %v5807, 0.5
    %v5872 = vmul.f32 %v5808, 0.5
    %v5873 = vmul.f32 %v5809, 0.5
    %v5874 = vmul.f32 %v5810, 0.5
    %v5875 = vmul.f32 %v5811, 0.5
    %v5876 = vmul.f32 %v5812, 0.5
    %v5877 = vmul.f32 %v5813, 0.5
    %v5878 = vmul.f32 %v5814, 0.5
    %v5879 = vmul.f32 %v5815, 0.5
    %v5880 = vmul.f32 %v5816, 0.5
    %v5881 = vmul.f32 %v5817, 0.5
    %v5882 = vmul.f32 %v5818, 0.5
    %v5883 = vadd.f32 %v5819, 0.5
    %v5884 = vadd.f32 %v5820, 0.5
    %v5885 = vadd.f32 %v5821, 0.5
    %v5886 = vadd.f32 %v5822, 0.5
    %v5887 = vadd.f32 %v5823, 0.5
    %v5888 = vadd.f32 %v5824, 0.5
    %v5889 = vadd.f32 %v5825, 0.5
    %v5890 = vadd.f32 %v5826, 0.5
    %v5891 = vadd.f32 %v5827, 0.5
    %v5892 = vadd.f32 %v5828, 0.5
    %v5893 = vadd.f32 %v5829, 0.5
    %v5894 = vadd.f32 %v5830, 0.5
    %v5895 = vadd.f32 %v5831, 0.5
    %v5896 = vadd.f32 %v5832, 0.5
    %v5897 = vadd.f32 %v5833, 0.5
    %v5898 = vadd.f32 %v5834, 0.5
    %v5899 = vadd.f32 %v5835, 0.5
    %v5900 = vadd.f32 %v5836, 0.5
    %v5901 = vadd.f32 %v5837, 0.5
    %v5902 = vadd.f32 %v5838, 0.5
    %v5903 = vadd.f32 %v5839, 0.5
    %v5904 = vadd.f32 %v5840, 0.5
    %v5905 = vadd.f32 %v5841, 0.5
    %v5906 = vadd.f32 %v5842, 0.5
    %v5907 = vadd.f32 %v5843, 0.5
    %v5908 = vadd.f32 %v5844, 0.5
    %v5909 = vadd.f32 %v5845, 0.5
    %v5910 = vadd.f32 %v5846, 0.5
    %v5911 = vadd.f32 %v5847, 0.5
    %v5912 = vadd.f32 %v5848, 0.5
    %v5913 = vadd.f32 %v5849, 0.5
    %v5914 = vadd.f32 %v5850, 0.5
    %v5915 = vadd.f32 %v5851, 0.5
    %v5916 = vadd.f32 %v5852, 0.5
    %v5917 = vadd.f32 %v5853, 0.5
    %v5918 = vadd.f32 %v5854, 0.5
    %v5919 = vadd.f32 %v5855, 0.5
    %v5920 = vadd.f32 %v5856, 0.5
    %v5921 = vadd.f32 %v5857, 0.5
    %v5922 = vadd.f32 %v5858, 0.5
    %v5923 = vadd.f32 %v5859, 0.5
    %v5924 = vadd.f32 %v5860, 0.5
    %v5925 = vadd.f32 %v5861, 0.5
    %v5926 = vadd.f32 %v5862, 0.5
    %v5927 = vadd.f32 %v5863, 0.5
    %v5928 = vadd.f32 %v5864, 0.5
    %v5929 = vadd.f32 %v5865, 0.5
    %v5930 = vadd.f32 %v5866, 0.5
    %v5931 = vadd.f32 %v5867, 0.5
    %v5932 = vadd.f32 %v5868, 0.5
    %v5933 = vadd.f32 %v5869, 0.5
    %v5934 = vadd.f32 %v5870, 0.5
    %v5935 = vadd.f32 %v5871, 0.5
    %v5936 = vadd.f32 %v5872, 0.5
    %v5937 = vadd.f32 %v5873, 0.5
    %v5938 = vadd.f32 %v5874, 0.5
    %v5939 = vadd.f32 %v5875, 0.5
    %v5940 = vadd.f32 %v5876, 0.5
    %v5941 = vadd.f32 %v5877, 0.5
    %v5942 = vadd.f32 %v5878, 0.5
    %v5943 = vadd.f32 %v5879, 0.5
    %v5944 = vadd.f32 %v5880, 0.5
    %v5945 = vadd.f32 %v5881, 0.5
    %v5946 = vadd.f32 %v5882, 0.5
    %v5947 = vmul.f32 %v5627, %v5883
    %v5948 = vmul.f32 %v5628, %v5884
    %v5949 = vmul.f32 %v5629, %v5885
    %v5950 = vmul.f32 %v5630, %v5886
    %v5951 = vmul.f32 %v5631, %v5887
    %v5952 = vmul.f32 %v5632, %v5888
    %v5953 = vmul.f32 %v5633, %v5889
    %v5954 = vmul.f32 %v5634, %v5890
    %v5955 = vmul.f32 %v5635, %v5891
    %v5956 = vmul.f32 %v5636, %v5892
    %v5957 = vmul.f32 %v5637, %v5893
    %v5958 = vmul.f32 %v5638, %v5894
    %v5959 = vmul.f32 %v5639, %v5895
    %v5960 = vmul.f32 %v5640, %v5896
    %v5961 = vmul.f32 %v5641, %v5897
    %v5962 = vmul.f32 %v5642, %v5898
    %v5963 = vmul.f32 %v5643, %v5899
    %v5964 = vmul.f32 %v5644, %v5900
    %v5965 = vmul.f32 %v5645, %v5901
    %v5966 = vmul.f32 %v5646, %v5902
    %v5967 = vmul.f32 %v5647, %v5903
    %v5968 = vmul.f32 %v5648, %v5904
    %v5969 = vmul.f32 %v5649, %v5905
    %v5970 = vmul.f32 %v5650, %v5906
    %v5971 = vmul.f32 %v5651, %v5907
    %v5972 = vmul.f32 %v5652, %v5908
    %v5973 = vmul.f32 %v5653, %v5909
    %v5974 = vmul.f32 %v5654, %v5910
    %v5975 = vmul.f32 %v5655, %v5911
    %v5976 = vmul.f32 %v5656, %v5912
    %v5977 = vmul.f32 %v5657, %v5913
    %v5978 = vmul.f32 %v5658, %v5914
    %v5979 = vmul.f32 %v5659, %v5915
    %v5980 = vmul.f32 %v5660, %v5916
    %v5981 = vmul.f32 %v5661, %v5917
    %v5982 = vmul.f32 %v5662, %v5918
    %v5983 = vmul.f32 %v5663, %v5919
    %v5984 = vmul.f32 %v5664, %v5920
    %v5985 = vmul.f32 %v5665, %v5921
    %v5986 = vmul.f32 %v5666, %v5922
    %v5987 = vmul.f32 %v5667, %v5923
    %v5988 = vmul.f32 %v5668, %v5924
    %v5989 = vmul.f32 %v5669, %v5925
    %v5990 = vmul.f32 %v5670, %v5926
    %v5991 = vmul.f32 %v5671, %v5927
    %v5992 = vmul.f32 %v5672, %v5928
    %v5993 = vmul.f32 %v5673, %v5929
    %v5994 = vmul.f32 %v5674, %v5930
    %v5995 = vmul.f32 %v5675, %v5931
    %v5996 = vmul.f32 %v5676, %v5932
    %v5997 = vmul.f32 %v5677, %v5933
    %v5998 = vmul.f32 %v5678, %v5934
    %v5999 = vmul.f32 %v5679, %v5935
    %v6000 = vmul.f32 %v5680, %v5936
    %v6001 = vmul.f32 %v5681, %v5937
    %v6002 = vmul.f32 %v5682, %v5938
    %v6003 = vmul.f32 %v5683, %v5939
    %v6004 = vmul.f32 %v5684, %v5940
    %v6005 = vmul.f32 %v5685, %v5941
    %v6006 = vmul.f32 %v5686, %v5942
    %v6007 = vmul.f32 %v5687, %v5943
    %v6008 = vmul.f32 %v5688, %v5944
    %v6009 = vmul.f32 %v5689, %v5945
    %v6010 = vmul.f32 %v5690, %v5946
    %v6011 = vld [vmem:[#allocation9] sm:$0xf]
    %v6012 = vld [vmem:[#allocation9 + $0x4] sm:$0xf]
    %v6013 = vld [vmem:[#allocation9 + $0x8] sm:$0xf]
    %v6014 = vld [vmem:[#allocation9 + $0xc] sm:$0xf]
    %v6015 = vld [vmem:[#allocation9 + $0x10] sm:$0xf]
    %v6016 = vld [vmem:[#allocation9 + $0x14] sm:$0xf]
    %v6017 = vld [vmem:[#allocation9 + $0x18] sm:$0xf]
    %v6018 = vld [vmem:[#allocation9 + $0x1c] sm:$0xf]
    %v6019 = vld [vmem:[#allocation9 + $0x20] sm:$0xf]
    %v6020 = vld [vmem:[#allocation9 + $0x24] sm:$0xf]
    %v6021 = vld [vmem:[#allocation9 + $0x28] sm:$0xf]
    %v6022 = vld [vmem:[#allocation9 + $0x2c] sm:$0xf]
    %v6023 = vld [vmem:[#allocation9 + $0x30] sm:$0xf]
    %v6024 = vld [vmem:[#allocation9 + $0x34] sm:$0xf]
    %v6025 = vld [vmem:[#allocation9 + $0x38] sm:$0xf]
    %v6026 = vld [vmem:[#allocation9 + $0x3c] sm:$0xf]
    %v6027 = vld [vmem:[%s6] sm:$0x1]
    %v6029 = vlaneseq
    %v6030 = vshrl.u32 %v6029, 7
    %v6031 = vsub.s32 0, %v6030
    %v6032 = vrot.slane %v6027, %v6031
    %v6082 = vunpack.c.l.b16 %v6011
    %v6083 = vunpack.c.l.b16 %v6012
    %v6084 = vunpack.c.l.b16 %v6013
    %v6085 = vunpack.c.l.b16 %v6014
    %v6086 = vunpack.c.l.b16 %v6015
    %v6087 = vunpack.c.l.b16 %v6016
    %v6088 = vunpack.c.l.b16 %v6017
    %v6089 = vunpack.c.l.b16 %v6018
    %v6090 = vunpack.c.l.b16 %v6019
    %v6091 = vunpack.c.l.b16 %v6020
    %v6092 = vunpack.c.l.b16 %v6021
    %v6093 = vunpack.c.l.b16 %v6022
    %v6094 = vunpack.c.l.b16 %v6023
    %v6095 = vunpack.c.l.b16 %v6024
    %v6096 = vunpack.c.l.b16 %v6025
    %v6097 = vunpack.c.l.b16 %v6026
    %v6098 = vpack.c.b16 %v6083, %v6082
    %v6099 = vpack.c.b16 %v6085, %v6084
    %v6100 = vpack.c.b16 %v6087, %v6086
    %v6101 = vpack.c.b16 %v6089, %v6088
    %v6102 = vpack.c.b16 %v6091, %v6090
    %v6103 = vpack.c.b16 %v6093, %v6092
    %v6104 = vpack.c.b16 %v6095, %v6094
    %v6105 = vpack.c.b16 %v6097, %v6096
    %6114 = vmatprep.subr.bf16.mxu0 0
    %6115 = vmatpush1.bf16.msra.mxu0 %v6105
    %6116 = vmatprep.subr.bf16.mxu0 0
    %6117 = vmatpush1.bf16.msra.mxu0 %v6104
    %6118 = vmatprep.subr.bf16.mxu0 0
    %6119 = vmatpush1.bf16.msra.mxu0 %v6103
    %6120 = vmatprep.subr.bf16.mxu0 0
    %6121 = vmatpush1.bf16.msra.mxu0 %v6102
    %6122 = vmatprep.subr.bf16.mxu0 0
    %6123 = vmatpush1.bf16.msra.mxu0 %v6101
    %6124 = vmatprep.subr.bf16.mxu0 0
    %6125 = vmatpush1.bf16.msra.mxu0 %v6100
    %6126 = vmatprep.subr.bf16.mxu0 0
    %6127 = vmatpush1.bf16.msra.mxu0 %v6099
    %6128 = vmatprep.subr.bf16.mxu0 0
    %6129 = vmatpush1.bf16.msra.mxu0 %v6098
    %6130 = vmatprep.subr.bf16.mxu0 0
    %6131 = vmatpush2.bf16.msra.mxu0 0
    %6132 = vmatprep.subr.bf16.mxu0 0
    %6133 = vmatpush2.bf16.msra.mxu0 0
    %6134 = vmatprep.subr.bf16.mxu0 0
    %6135 = vmatpush2.bf16.msra.mxu0 0
    %6136 = vmatprep.subr.bf16.mxu0 0
    %6137 = vmatpush2.bf16.msra.mxu0 0
    %6138 = vmatprep.subr.bf16.mxu0 0
    %6139 = vmatpush2.bf16.msra.mxu0 0
    %6140 = vmatprep.subr.bf16.mxu0 0
    %6141 = vmatpush2.bf16.msra.mxu0 0
    %6142 = vmatprep.subr.bf16.mxu0 0
    %6143 = vmatpush2.bf16.msra.mxu0 0
    %6144 = vmatprep.subr.bf16.mxu0 0
    %6145 = vmatpush2.bf16.msra.mxu0 0
    %6146 = vmatprep.mubr.bf16.mxu0 0
    %6147 = vmatmul.mubr.bf16.gmra.mxu0 %v292
    %v6148 = vpop.f32.mrf.mxu0
    %v6149 = vadd.f32 %v6032, %v6148
    %v6150 = vpop.f32.mrf.mxu0
    %v6151 = vpop.f32.mrf.mxu0
    %v6152 = vadd.f32 %v6032, %v6151
    %v6153 = vpop.f32.mrf.mxu0
    %6154 = vmatprep.mubr.bf16.mxu0 0
    %6155 = vmatmul.mubr.bf16.gmra.mxu0 %v293
    %v6156 = vpop.f32.mrf.mxu0
    %v6157 = vadd.f32 %v6032, %v6156
    %v6158 = vpop.f32.mrf.mxu0
    %v6159 = vpop.f32.mrf.mxu0
    %v6160 = vadd.f32 %v6032, %v6159
    %v6161 = vpop.f32.mrf.mxu0
    %6162 = vmatprep.mubr.bf16.mxu0 0
    %6163 = vmatmul.mubr.bf16.gmra.mxu0 %v294
    %v6164 = vpop.f32.mrf.mxu0
    %v6165 = vadd.f32 %v6032, %v6164
    %v6166 = vpop.f32.mrf.mxu0
    %v6167 = vpop.f32.mrf.mxu0
    %v6168 = vadd.f32 %v6032, %v6167
    %v6169 = vpop.f32.mrf.mxu0
    %6170 = vmatprep.mubr.bf16.mxu0 0
    %6171 = vmatmul.mubr.bf16.gmra.mxu0 %v295
    %v6172 = vpop.f32.mrf.mxu0
    %v6173 = vadd.f32 %v6032, %v6172
    %v6174 = vpop.f32.mrf.mxu0
    %v6175 = vpop.f32.mrf.mxu0
    %v6176 = vadd.f32 %v6032, %v6175
    %v6177 = vpop.f32.mrf.mxu0
    %6178 = vmatprep.mubr.bf16.mxu0 0
    %6179 = vmatmul.mubr.bf16.gmra.mxu0 %v296
    %v6180 = vpop.f32.mrf.mxu0
    %v6181 = vadd.f32 %v6032, %v6180
    %v6182 = vpop.f32.mrf.mxu0
    %v6183 = vpop.f32.mrf.mxu0
    %v6184 = vadd.f32 %v6032, %v6183
    %v6185 = vpop.f32.mrf.mxu0
    %6186 = vmatprep.mubr.bf16.mxu0 0
    %6187 = vmatmul.mubr.bf16.gmra.mxu0 %v297
    %v6188 = vpop.f32.mrf.mxu0
    %v6189 = vadd.f32 %v6032, %v6188
    %v6190 = vpop.f32.mrf.mxu0
    %v6191 = vpop.f32.mrf.mxu0
    %v6192 = vadd.f32 %v6032, %v6191
    %v6193 = vpop.f32.mrf.mxu0
    %6194 = vmatprep.mubr.bf16.mxu0 0
    %6195 = vmatmul.mubr.bf16.gmra.mxu0 %v298
    %v6196 = vpop.f32.mrf.mxu0
    %v6197 = vadd.f32 %v6032, %v6196
    %v6198 = vpop.f32.mrf.mxu0
    %v6199 = vpop.f32.mrf.mxu0
    %v6200 = vadd.f32 %v6032, %v6199
    %v6201 = vpop.f32.mrf.mxu0
    %6202 = vmatprep.mubr.bf16.mxu0 0
    %6203 = vmatmul.mubr.bf16.gmra.mxu0 %v299
    %v6204 = vpop.f32.mrf.mxu0
    %v6205 = vadd.f32 %v6032, %v6204
    %v6206 = vpop.f32.mrf.mxu0
    %v6207 = vpop.f32.mrf.mxu0
    %v6208 = vadd.f32 %v6032, %v6207
    %v6209 = vpop.f32.mrf.mxu0
    %6210 = vmatprep.mubr.bf16.mxu0 0
    %6211 = vmatmul.mubr.bf16.gmra.mxu0 %v300
    %v6212 = vpop.f32.mrf.mxu0
    %v6213 = vadd.f32 %v6032, %v6212
    %v6214 = vpop.f32.mrf.mxu0
    %v6215 = vpop.f32.mrf.mxu0
    %v6216 = vadd.f32 %v6032, %v6215
    %v6217 = vpop.f32.mrf.mxu0
    %6218 = vmatprep.mubr.bf16.mxu0 0
    %6219 = vmatmul.mubr.bf16.gmra.mxu0 %v301
    %v6220 = vpop.f32.mrf.mxu0
    %v6221 = vadd.f32 %v6032, %v6220
    %v6222 = vpop.f32.mrf.mxu0
    %v6223 = vpop.f32.mrf.mxu0
    %v6224 = vadd.f32 %v6032, %v6223
    %v6225 = vpop.f32.mrf.mxu0
    %6226 = vmatprep.mubr.bf16.mxu0 0
    %6227 = vmatmul.mubr.bf16.gmra.mxu0 %v302
    %v6228 = vpop.f32.mrf.mxu0
    %v6229 = vadd.f32 %v6032, %v6228
    %v6230 = vpop.f32.mrf.mxu0
    %v6231 = vpop.f32.mrf.mxu0
    %v6232 = vadd.f32 %v6032, %v6231
    %v6233 = vpop.f32.mrf.mxu0
    %6234 = vmatprep.mubr.bf16.mxu0 0
    %6235 = vmatmul.mubr.bf16.gmra.mxu0 %v303
    %v6236 = vpop.f32.mrf.mxu0
    %v6237 = vadd.f32 %v6032, %v6236
    %v6238 = vpop.f32.mrf.mxu0
    %v6239 = vpop.f32.mrf.mxu0
    %v6240 = vadd.f32 %v6032, %v6239
    %v6241 = vpop.f32.mrf.mxu0
    %6242 = vmatprep.mubr.bf16.mxu0 0
    %6243 = vmatmul.mubr.bf16.gmra.mxu0 %v304
    %v6244 = vpop.f32.mrf.mxu0
    %v6245 = vadd.f32 %v6032, %v6244
    %v6246 = vpop.f32.mrf.mxu0
    %v6247 = vpop.f32.mrf.mxu0
    %v6248 = vadd.f32 %v6032, %v6247
    %v6249 = vpop.f32.mrf.mxu0
    %6250 = vmatprep.mubr.bf16.mxu0 0
    %6251 = vmatmul.mubr.bf16.gmra.mxu0 %v305
    %v6252 = vpop.f32.mrf.mxu0
    %v6253 = vadd.f32 %v6032, %v6252
    %v6254 = vpop.f32.mrf.mxu0
    %v6255 = vpop.f32.mrf.mxu0
    %v6256 = vadd.f32 %v6032, %v6255
    %v6257 = vpop.f32.mrf.mxu0
    %6258 = vmatprep.mubr.bf16.mxu0 0
    %6259 = vmatmul.mubr.bf16.gmra.mxu0 %v306
    %v6260 = vpop.f32.mrf.mxu0
    %v6261 = vadd.f32 %v6032, %v6260
    %v6262 = vpop.f32.mrf.mxu0
    %v6263 = vpop.f32.mrf.mxu0
    %v6264 = vadd.f32 %v6032, %v6263
    %v6265 = vpop.f32.mrf.mxu0
    %6266 = vmatprep.mubr.bf16.mxu0 0
    %6267 = vmatmul.mubr.bf16.gmra.mxu0 %v307
    %v6268 = vpop.f32.mrf.mxu0
    %v6269 = vadd.f32 %v6032, %v6268
    %v6270 = vpop.f32.mrf.mxu0
    %v6271 = vpop.f32.mrf.mxu0
    %v6272 = vadd.f32 %v6032, %v6271
    %v6273 = vpop.f32.mrf.mxu0
    %6274 = vmatprep.mubr.bf16.mxu0 0
    %6275 = vmatmul.mubr.bf16.gmra.mxu0 %v308
    %v6276 = vpop.f32.mrf.mxu0
    %v6277 = vadd.f32 %v6032, %v6276
    %v6278 = vpop.f32.mrf.mxu0
    %v6279 = vpop.f32.mrf.mxu0
    %v6280 = vadd.f32 %v6032, %v6279
    %v6281 = vpop.f32.mrf.mxu0
    %6282 = vmatprep.mubr.bf16.mxu0 0
    %6283 = vmatmul.mubr.bf16.gmra.mxu0 %v309
    %v6284 = vpop.f32.mrf.mxu0
    %v6285 = vadd.f32 %v6032, %v6284
    %v6286 = vpop.f32.mrf.mxu0
    %v6287 = vpop.f32.mrf.mxu0
    %v6288 = vadd.f32 %v6032, %v6287
    %v6289 = vpop.f32.mrf.mxu0
    %6290 = vmatprep.mubr.bf16.mxu0 0
    %6291 = vmatmul.mubr.bf16.gmra.mxu0 %v310
    %v6292 = vpop.f32.mrf.mxu0
    %v6293 = vadd.f32 %v6032, %v6292
    %v6294 = vpop.f32.mrf.mxu0
    %v6295 = vpop.f32.mrf.mxu0
    %v6296 = vadd.f32 %v6032, %v6295
    %v6297 = vpop.f32.mrf.mxu0
    %6298 = vmatprep.mubr.bf16.mxu0 0
    %6299 = vmatmul.mubr.bf16.gmra.mxu0 %v311
    %v6300 = vpop.f32.mrf.mxu0
    %v6301 = vadd.f32 %v6032, %v6300
    %v6302 = vpop.f32.mrf.mxu0
    %v6303 = vpop.f32.mrf.mxu0
    %v6304 = vadd.f32 %v6032, %v6303
    %v6305 = vpop.f32.mrf.mxu0
    %6306 = vmatprep.mubr.bf16.mxu0 0
    %6307 = vmatmul.mubr.bf16.gmra.mxu0 %v312
    %v6308 = vpop.f32.mrf.mxu0
    %v6309 = vadd.f32 %v6032, %v6308
    %v6310 = vpop.f32.mrf.mxu0
    %v6311 = vpop.f32.mrf.mxu0
    %v6312 = vadd.f32 %v6032, %v6311
    %v6313 = vpop.f32.mrf.mxu0
    %6314 = vmatprep.mubr.bf16.mxu0 0
    %6315 = vmatmul.mubr.bf16.gmra.mxu0 %v313
    %v6316 = vpop.f32.mrf.mxu0
    %v6317 = vadd.f32 %v6032, %v6316
    %v6318 = vpop.f32.mrf.mxu0
    %v6319 = vpop.f32.mrf.mxu0
    %v6320 = vadd.f32 %v6032, %v6319
    %v6321 = vpop.f32.mrf.mxu0
    %6322 = vmatprep.mubr.bf16.mxu0 0
    %6323 = vmatmul.mubr.bf16.gmra.mxu0 %v314
    %v6324 = vpop.f32.mrf.mxu0
    %v6325 = vadd.f32 %v6032, %v6324
    %v6326 = vpop.f32.mrf.mxu0
    %v6327 = vpop.f32.mrf.mxu0
    %v6328 = vadd.f32 %v6032, %v6327
    %v6329 = vpop.f32.mrf.mxu0
    %6330 = vmatprep.mubr.bf16.mxu0 0
    %6331 = vmatmul.mubr.bf16.gmra.mxu0 %v315
    %v6332 = vpop.f32.mrf.mxu0
    %v6333 = vadd.f32 %v6032, %v6332
    %v6334 = vpop.f32.mrf.mxu0
    %v6335 = vpop.f32.mrf.mxu0
    %v6336 = vadd.f32 %v6032, %v6335
    %v6337 = vpop.f32.mrf.mxu0
    %6338 = vmatprep.mubr.bf16.mxu0 0
    %6339 = vmatmul.mubr.bf16.gmra.mxu0 %v316
    %v6340 = vpop.f32.mrf.mxu0
    %v6341 = vadd.f32 %v6032, %v6340
    %v6342 = vpop.f32.mrf.mxu0
    %v6343 = vpop.f32.mrf.mxu0
    %v6344 = vadd.f32 %v6032, %v6343
    %v6345 = vpop.f32.mrf.mxu0
    %6346 = vmatprep.mubr.bf16.mxu0 0
    %6347 = vmatmul.mubr.bf16.gmra.mxu0 %v317
    %v6348 = vpop.f32.mrf.mxu0
    %v6349 = vadd.f32 %v6032, %v6348
    %v6350 = vpop.f32.mrf.mxu0
    %v6351 = vpop.f32.mrf.mxu0
    %v6352 = vadd.f32 %v6032, %v6351
    %v6353 = vpop.f32.mrf.mxu0
    %6354 = vmatprep.mubr.bf16.mxu0 0
    %6355 = vmatmul.mubr.bf16.gmra.mxu0 %v318
    %v6356 = vpop.f32.mrf.mxu0
    %v6357 = vadd.f32 %v6032, %v6356
    %v6358 = vpop.f32.mrf.mxu0
    %v6359 = vpop.f32.mrf.mxu0
    %v6360 = vadd.f32 %v6032, %v6359
    %v6361 = vpop.f32.mrf.mxu0
    %6362 = vmatprep.mubr.bf16.mxu0 0
    %6363 = vmatmul.mubr.bf16.gmra.mxu0 %v319
    %v6364 = vpop.f32.mrf.mxu0
    %v6365 = vadd.f32 %v6032, %v6364
    %v6366 = vpop.f32.mrf.mxu0
    %v6367 = vpop.f32.mrf.mxu0
    %v6368 = vadd.f32 %v6032, %v6367
    %v6369 = vpop.f32.mrf.mxu0
    %6370 = vmatprep.mubr.bf16.mxu0 0
    %6371 = vmatmul.mubr.bf16.gmra.mxu0 %v320
    %v6372 = vpop.f32.mrf.mxu0
    %v6373 = vadd.f32 %v6032, %v6372
    %v6374 = vpop.f32.mrf.mxu0
    %v6375 = vpop.f32.mrf.mxu0
    %v6376 = vadd.f32 %v6032, %v6375
    %v6377 = vpop.f32.mrf.mxu0
    %6378 = vmatprep.mubr.bf16.mxu0 0
    %6379 = vmatmul.mubr.bf16.gmra.mxu0 %v321
    %v6380 = vpop.f32.mrf.mxu0
    %v6381 = vadd.f32 %v6032, %v6380
    %v6382 = vpop.f32.mrf.mxu0
    %v6383 = vpop.f32.mrf.mxu0
    %v6384 = vadd.f32 %v6032, %v6383
    %v6385 = vpop.f32.mrf.mxu0
    %6386 = vmatprep.mubr.bf16.mxu0 0
    %6387 = vmatmul.mubr.bf16.gmra.mxu0 %v322
    %v6388 = vpop.f32.mrf.mxu0
    %v6389 = vadd.f32 %v6032, %v6388
    %v6390 = vpop.f32.mrf.mxu0
    %v6391 = vpop.f32.mrf.mxu0
    %v6392 = vadd.f32 %v6032, %v6391
    %v6393 = vpop.f32.mrf.mxu0
    %6394 = vmatprep.mubr.bf16.mxu0 0
    %6395 = vmatmul.mubr.bf16.gmra.mxu0 %v323
    %v6396 = vpop.f32.mrf.mxu0
    %v6397 = vadd.f32 %v6032, %v6396
    %v6398 = vpop.f32.mrf.mxu0
    %v6399 = vpop.f32.mrf.mxu0
    %v6400 = vadd.f32 %v6032, %v6399
    %v6401 = vpop.f32.mrf.mxu0
    %6402 = vdwg.mxu0
    %v6403 = vpack.c.bf16 %v5948, %v5947
    %v6404 = vpack.c.bf16 %v5950, %v5949
    %v6405 = vpack.c.bf16 %v5952, %v5951
    %v6406 = vpack.c.bf16 %v5954, %v5953
    %v6407 = vpack.c.bf16 %v5956, %v5955
    %v6408 = vpack.c.bf16 %v5958, %v5957
    %v6409 = vpack.c.bf16 %v5960, %v5959
    %v6410 = vpack.c.bf16 %v5962, %v5961
    %v6411 = vpack.c.bf16 %v5964, %v5963
    %v6412 = vpack.c.bf16 %v5966, %v5965
    %v6413 = vpack.c.bf16 %v5968, %v5967
    %v6414 = vpack.c.bf16 %v5970, %v5969
    %v6415 = vpack.c.bf16 %v5972, %v5971
    %v6416 = vpack.c.bf16 %v5974, %v5973
    %v6417 = vpack.c.bf16 %v5976, %v5975
    %v6418 = vpack.c.bf16 %v5978, %v5977
    %v6419 = vpack.c.bf16 %v5980, %v5979
    %v6420 = vpack.c.bf16 %v5982, %v5981
    %v6421 = vpack.c.bf16 %v5984, %v5983
    %v6422 = vpack.c.bf16 %v5986, %v5985
    %v6423 = vpack.c.bf16 %v5988, %v5987
    %v6424 = vpack.c.bf16 %v5990, %v5989
    %v6425 = vpack.c.bf16 %v5992, %v5991
    %v6426 = vpack.c.bf16 %v5994, %v5993
    %v6427 = vpack.c.bf16 %v5996, %v5995
    %v6428 = vpack.c.bf16 %v5998, %v5997
    %v6429 = vpack.c.bf16 %v6000, %v5999
    %v6430 = vpack.c.bf16 %v6002, %v6001
    %v6431 = vpack.c.bf16 %v6004, %v6003
    %v6432 = vpack.c.bf16 %v6006, %v6005
    %v6433 = vpack.c.bf16 %v6008, %v6007
    %v6434 = vpack.c.bf16 %v6010, %v6009
    %v6436 = vshrl.u32 %v6403, 16
    %v6438 = vrot.slane %v6436, 7
    %v6439 = vshll.u32 %v6403, 16
    %v6441 = vor.u32 %v6438, %v6439
    %v6443 = vshrl.u32 %v6404, 16
    %v6445 = vrot.slane %v6443, 7
    %v6446 = vshll.u32 %v6404, 16
    %v6448 = vor.u32 %v6445, %v6446
    %v6450 = vshrl.u32 %v6405, 16
    %v6452 = vrot.slane %v6450, 7
    %v6453 = vshll.u32 %v6405, 16
    %v6455 = vor.u32 %v6452, %v6453
    %v6457 = vshrl.u32 %v6406, 16
    %v6459 = vrot.slane %v6457, 7
    %v6460 = vshll.u32 %v6406, 16
    %v6462 = vor.u32 %v6459, %v6460
    %v6464 = vshrl.u32 %v6407, 16
    %v6466 = vrot.slane %v6464, 7
    %v6467 = vshll.u32 %v6407, 16
    %v6469 = vor.u32 %v6466, %v6467
    %v6471 = vshrl.u32 %v6408, 16
    %v6473 = vrot.slane %v6471, 7
    %v6474 = vshll.u32 %v6408, 16
    %v6476 = vor.u32 %v6473, %v6474
    %v6478 = vshrl.u32 %v6409, 16
    %v6480 = vrot.slane %v6478, 7
    %v6481 = vshll.u32 %v6409, 16
    %v6483 = vor.u32 %v6480, %v6481
    %v6485 = vshrl.u32 %v6410, 16
    %v6487 = vrot.slane %v6485, 7
    %v6488 = vshll.u32 %v6410, 16
    %v6490 = vor.u32 %v6487, %v6488
    %v6492 = vshrl.u32 %v6411, 16
    %v6494 = vrot.slane %v6492, 7
    %v6495 = vshll.u32 %v6411, 16
    %v6497 = vor.u32 %v6494, %v6495
    %v6499 = vshrl.u32 %v6412, 16
    %v6501 = vrot.slane %v6499, 7
    %v6502 = vshll.u32 %v6412, 16
    %v6504 = vor.u32 %v6501, %v6502
    %v6506 = vshrl.u32 %v6413, 16
    %v6508 = vrot.slane %v6506, 7
    %v6509 = vshll.u32 %v6413, 16
    %v6511 = vor.u32 %v6508, %v6509
    %v6513 = vshrl.u32 %v6414, 16
    %v6515 = vrot.slane %v6513, 7
    %v6516 = vshll.u32 %v6414, 16
    %v6518 = vor.u32 %v6515, %v6516
    %v6520 = vshrl.u32 %v6415, 16
    %v6522 = vrot.slane %v6520, 7
    %v6523 = vshll.u32 %v6415, 16
    %v6525 = vor.u32 %v6522, %v6523
    %v6527 = vshrl.u32 %v6416, 16
    %v6529 = vrot.slane %v6527, 7
    %v6530 = vshll.u32 %v6416, 16
    %v6532 = vor.u32 %v6529, %v6530
    %v6534 = vshrl.u32 %v6417, 16
    %v6536 = vrot.slane %v6534, 7
    %v6537 = vshll.u32 %v6417, 16
    %v6539 = vor.u32 %v6536, %v6537
    %v6541 = vshrl.u32 %v6418, 16
    %v6543 = vrot.slane %v6541, 7
    %v6544 = vshll.u32 %v6418, 16
    %v6546 = vor.u32 %v6543, %v6544
    %v6548 = vshrl.u32 %v6419, 16
    %v6550 = vrot.slane %v6548, 7
    %v6551 = vshll.u32 %v6419, 16
    %v6553 = vor.u32 %v6550, %v6551
    %v6555 = vshrl.u32 %v6420, 16
    %v6557 = vrot.slane %v6555, 7
    %v6558 = vshll.u32 %v6420, 16
    %v6560 = vor.u32 %v6557, %v6558
    %v6562 = vshrl.u32 %v6421, 16
    %v6564 = vrot.slane %v6562, 7
    %v6565 = vshll.u32 %v6421, 16
    %v6567 = vor.u32 %v6564, %v6565
    %v6569 = vshrl.u32 %v6422, 16
    %v6571 = vrot.slane %v6569, 7
    %v6572 = vshll.u32 %v6422, 16
    %v6574 = vor.u32 %v6571, %v6572
    %v6576 = vshrl.u32 %v6423, 16
    %v6578 = vrot.slane %v6576, 7
    %v6579 = vshll.u32 %v6423, 16
    %v6581 = vor.u32 %v6578, %v6579
    %v6583 = vshrl.u32 %v6424, 16
    %v6585 = vrot.slane %v6583, 7
    %v6586 = vshll.u32 %v6424, 16
    %v6588 = vor.u32 %v6585, %v6586
    %v6590 = vshrl.u32 %v6425, 16
    %v6592 = vrot.slane %v6590, 7
    %v6593 = vshll.u32 %v6425, 16
    %v6595 = vor.u32 %v6592, %v6593
    %v6597 = vshrl.u32 %v6426, 16
    %v6599 = vrot.slane %v6597, 7
    %v6600 = vshll.u32 %v6426, 16
    %v6602 = vor.u32 %v6599, %v6600
    %v6604 = vshrl.u32 %v6427, 16
    %v6606 = vrot.slane %v6604, 7
    %v6607 = vshll.u32 %v6427, 16
    %v6609 = vor.u32 %v6606, %v6607
    %v6611 = vshrl.u32 %v6428, 16
    %v6613 = vrot.slane %v6611, 7
    %v6614 = vshll.u32 %v6428, 16
    %v6616 = vor.u32 %v6613, %v6614
    %v6618 = vshrl.u32 %v6429, 16
    %v6620 = vrot.slane %v6618, 7
    %v6621 = vshll.u32 %v6429, 16
    %v6623 = vor.u32 %v6620, %v6621
    %v6625 = vshrl.u32 %v6430, 16
    %v6627 = vrot.slane %v6625, 7
    %v6628 = vshll.u32 %v6430, 16
    %v6630 = vor.u32 %v6627, %v6628
    %v6632 = vshrl.u32 %v6431, 16
    %v6634 = vrot.slane %v6632, 7
    %v6635 = vshll.u32 %v6431, 16
    %v6637 = vor.u32 %v6634, %v6635
    %v6639 = vshrl.u32 %v6432, 16
    %v6641 = vrot.slane %v6639, 7
    %v6642 = vshll.u32 %v6432, 16
    %v6644 = vor.u32 %v6641, %v6642
    %v6646 = vshrl.u32 %v6433, 16
    %v6648 = vrot.slane %v6646, 7
    %v6649 = vshll.u32 %v6433, 16
    %v6651 = vor.u32 %v6648, %v6649
    %v6653 = vshrl.u32 %v6434, 16
    %v6655 = vrot.slane %v6653, 7
    %v6656 = vshll.u32 %v6434, 16
    %v6658 = vor.u32 %v6655, %v6656
    %v6691 = vsel %vm582, 0, %v6441
    %v6692 = vsel %vm582, 0, %v6448
    %v6693 = vsel %vm582, 0, %v6455
    %v6694 = vsel %vm582, 0, %v6462
    %v6695 = vsel %vm582, 0, %v6469
    %v6696 = vsel %vm582, 0, %v6476
    %v6697 = vsel %vm582, 0, %v6483
    %v6698 = vsel %vm582, 0, %v6490
    %v6699 = vsel %vm582, 0, %v6497
    %v6700 = vsel %vm582, 0, %v6504
    %v6701 = vsel %vm582, 0, %v6511
    %v6702 = vsel %vm582, 0, %v6518
    %v6703 = vsel %vm582, 0, %v6525
    %v6704 = vsel %vm582, 0, %v6532
    %v6705 = vsel %vm582, 0, %v6539
    %v6706 = vsel %vm582, 0, %v6546
    %v6707 = vsel %vm582, 0, %v6553
    %v6708 = vsel %vm582, 0, %v6560
    %v6709 = vsel %vm582, 0, %v6567
    %v6710 = vsel %vm582, 0, %v6574
    %v6711 = vsel %vm582, 0, %v6581
    %v6712 = vsel %vm582, 0, %v6588
    %v6713 = vsel %vm582, 0, %v6595
    %v6714 = vsel %vm582, 0, %v6602
    %v6715 = vsel %vm582, 0, %v6609
    %v6716 = vsel %vm582, 0, %v6616
    %v6717 = vsel %vm582, 0, %v6623
    %v6718 = vsel %vm582, 0, %v6630
    %v6719 = vsel %vm582, 0, %v6637
    %v6720 = vsel %vm582, 0, %v6644
    %v6721 = vsel %vm582, 0, %v6651
    %v6722 = vsel %vm582, 0, %v6658
    %v6723 = vrot.slane %v6439, 1
    %v6724 = vor.u32 %v6436, %v6723
    %v6725 = vrot.slane %v6446, 1
    %v6726 = vor.u32 %v6443, %v6725
    %v6727 = vrot.slane %v6453, 1
    %v6728 = vor.u32 %v6450, %v6727
    %v6729 = vrot.slane %v6460, 1
    %v6730 = vor.u32 %v6457, %v6729
    %v6731 = vrot.slane %v6467, 1
    %v6732 = vor.u32 %v6464, %v6731
    %v6733 = vrot.slane %v6474, 1
    %v6734 = vor.u32 %v6471, %v6733
    %v6735 = vrot.slane %v6481, 1
    %v6736 = vor.u32 %v6478, %v6735
    %v6737 = vrot.slane %v6488, 1
    %v6738 = vor.u32 %v6485, %v6737
    %v6739 = vrot.slane %v6495, 1
    %v6740 = vor.u32 %v6492, %v6739
    %v6741 = vrot.slane %v6502, 1
    %v6742 = vor.u32 %v6499, %v6741
    %v6743 = vrot.slane %v6509, 1
    %v6744 = vor.u32 %v6506, %v6743
    %v6745 = vrot.slane %v6516, 1
    %v6746 = vor.u32 %v6513, %v6745
    %v6747 = vrot.slane %v6523, 1
    %v6748 = vor.u32 %v6520, %v6747
    %v6749 = vrot.slane %v6530, 1
    %v6750 = vor.u32 %v6527, %v6749
    %v6751 = vrot.slane %v6537, 1
    %v6752 = vor.u32 %v6534, %v6751
    %v6753 = vrot.slane %v6544, 1
    %v6754 = vor.u32 %v6541, %v6753
    %v6755 = vrot.slane %v6551, 1
    %v6756 = vor.u32 %v6548, %v6755
    %v6757 = vrot.slane %v6558, 1
    %v6758 = vor.u32 %v6555, %v6757
    %v6759 = vrot.slane %v6565, 1
    %v6760 = vor.u32 %v6562, %v6759
    %v6761 = vrot.slane %v6572, 1
    %v6762 = vor.u32 %v6569, %v6761
    %v6763 = vrot.slane %v6579, 1
    %v6764 = vor.u32 %v6576, %v6763
    %v6765 = vrot.slane %v6586, 1
    %v6766 = vor.u32 %v6583, %v6765
    %v6767 = vrot.slane %v6593, 1
    %v6768 = vor.u32 %v6590, %v6767
    %v6769 = vrot.slane %v6600, 1
    %v6770 = vor.u32 %v6597, %v6769
    %v6771 = vrot.slane %v6607, 1
    %v6772 = vor.u32 %v6604, %v6771
    %v6773 = vrot.slane %v6614, 1
    %v6774 = vor.u32 %v6611, %v6773
    %v6775 = vrot.slane %v6621, 1
    %v6776 = vor.u32 %v6618, %v6775
    %v6777 = vrot.slane %v6628, 1
    %v6778 = vor.u32 %v6625, %v6777
    %v6779 = vrot.slane %v6635, 1
    %v6780 = vor.u32 %v6632, %v6779
    %v6781 = vrot.slane %v6642, 1
    %v6782 = vor.u32 %v6639, %v6781
    %v6783 = vrot.slane %v6649, 1
    %v6784 = vor.u32 %v6646, %v6783
    %v6785 = vrot.slane %v6656, 1
    %v6786 = vor.u32 %v6653, %v6785
    %v6819 = vsel %vm713, %v6724, 0
    %v6820 = vsel %vm713, %v6726, 0
    %v6821 = vsel %vm713, %v6728, 0
    %v6822 = vsel %vm713, %v6730, 0
    %v6823 = vsel %vm713, %v6732, 0
    %v6824 = vsel %vm713, %v6734, 0
    %v6825 = vsel %vm713, %v6736, 0
    %v6826 = vsel %vm713, %v6738, 0
    %v6827 = vsel %vm713, %v6740, 0
    %v6828 = vsel %vm713, %v6742, 0
    %v6829 = vsel %vm713, %v6744, 0
    %v6830 = vsel %vm713, %v6746, 0
    %v6831 = vsel %vm713, %v6748, 0
    %v6832 = vsel %vm713, %v6750, 0
    %v6833 = vsel %vm713, %v6752, 0
    %v6834 = vsel %vm713, %v6754, 0
    %v6835 = vsel %vm713, %v6756, 0
    %v6836 = vsel %vm713, %v6758, 0
    %v6837 = vsel %vm713, %v6760, 0
    %v6838 = vsel %vm713, %v6762, 0
    %v6839 = vsel %vm713, %v6764, 0
    %v6840 = vsel %vm713, %v6766, 0
    %v6841 = vsel %vm713, %v6768, 0
    %v6842 = vsel %vm713, %v6770, 0
    %v6843 = vsel %vm713, %v6772, 0
    %v6844 = vsel %vm713, %v6774, 0
    %v6845 = vsel %vm713, %v6776, 0
    %v6846 = vsel %vm713, %v6778, 0
    %v6847 = vsel %vm713, %v6780, 0
    %v6848 = vsel %vm713, %v6782, 0
    %v6849 = vsel %vm713, %v6784, 0
    %v6850 = vsel %vm713, %v6786, 0
    %v6947 = vunpack.c.l.b16 %v6691
    %v6948 = vunpack.c.l.b16 %v6403
    %v6949 = vunpack.c.l.b16 %v6819
    %v6950 = vunpack.c.h.b16 %v6691
    %v6951 = vunpack.c.h.b16 %v6403
    %v6952 = vunpack.c.h.b16 %v6819
    %v6953 = vunpack.c.l.b16 %v6692
    %v6954 = vunpack.c.l.b16 %v6404
    %v6955 = vunpack.c.l.b16 %v6820
    %v6956 = vunpack.c.h.b16 %v6692
    %v6957 = vunpack.c.h.b16 %v6404
    %v6958 = vunpack.c.h.b16 %v6820
    %v6959 = vunpack.c.l.b16 %v6693
    %v6960 = vunpack.c.l.b16 %v6405
    %v6961 = vunpack.c.l.b16 %v6821
    %v6962 = vunpack.c.h.b16 %v6693
    %v6963 = vunpack.c.h.b16 %v6405
    %v6964 = vunpack.c.h.b16 %v6821
    %v6965 = vunpack.c.l.b16 %v6694
    %v6966 = vunpack.c.l.b16 %v6406
    %v6967 = vunpack.c.l.b16 %v6822
    %v6968 = vunpack.c.h.b16 %v6694
    %v6969 = vunpack.c.h.b16 %v6406
    %v6970 = vunpack.c.h.b16 %v6822
    %v6971 = vunpack.c.l.b16 %v6695
    %v6972 = vunpack.c.l.b16 %v6407
    %v6973 = vunpack.c.l.b16 %v6823
    %v6974 = vunpack.c.h.b16 %v6695
    %v6975 = vunpack.c.h.b16 %v6407
    %v6976 = vunpack.c.h.b16 %v6823
    %v6977 = vunpack.c.l.b16 %v6696
    %v6978 = vunpack.c.l.b16 %v6408
    %v6979 = vunpack.c.l.b16 %v6824
    %v6980 = vunpack.c.h.b16 %v6696
    %v6981 = vunpack.c.h.b16 %v6408
    %v6982 = vunpack.c.h.b16 %v6824
    %v6983 = vunpack.c.l.b16 %v6697
    %v6984 = vunpack.c.l.b16 %v6409
    %v6985 = vunpack.c.l.b16 %v6825
    %v6986 = vunpack.c.h.b16 %v6697
    %v6987 = vunpack.c.h.b16 %v6409
    %v6988 = vunpack.c.h.b16 %v6825
    %v6989 = vunpack.c.l.b16 %v6698
    %v6990 = vunpack.c.l.b16 %v6410
    %v6991 = vunpack.c.l.b16 %v6826
    %v6992 = vunpack.c.h.b16 %v6698
    %v6993 = vunpack.c.h.b16 %v6410
    %v6994 = vunpack.c.h.b16 %v6826
    %v6995 = vunpack.c.l.b16 %v6699
    %v6996 = vunpack.c.l.b16 %v6411
    %v6997 = vunpack.c.l.b16 %v6827
    %v6998 = vunpack.c.h.b16 %v6699
    %v6999 = vunpack.c.h.b16 %v6411
    %v7000 = vunpack.c.h.b16 %v6827
    %v7001 = vunpack.c.l.b16 %v6700
    %v7002 = vunpack.c.l.b16 %v6412
    %v7003 = vunpack.c.l.b16 %v6828
    %v7004 = vunpack.c.h.b16 %v6700
    %v7005 = vunpack.c.h.b16 %v6412
    %v7006 = vunpack.c.h.b16 %v6828
    %v7007 = vunpack.c.l.b16 %v6701
    %v7008 = vunpack.c.l.b16 %v6413
    %v7009 = vunpack.c.l.b16 %v6829
    %v7010 = vunpack.c.h.b16 %v6701
    %v7011 = vunpack.c.h.b16 %v6413
    %v7012 = vunpack.c.h.b16 %v6829
    %v7013 = vunpack.c.l.b16 %v6702
    %v7014 = vunpack.c.l.b16 %v6414
    %v7015 = vunpack.c.l.b16 %v6830
    %v7016 = vunpack.c.h.b16 %v6702
    %v7017 = vunpack.c.h.b16 %v6414
    %v7018 = vunpack.c.h.b16 %v6830
    %v7019 = vunpack.c.l.b16 %v6703
    %v7020 = vunpack.c.l.b16 %v6415
    %v7021 = vunpack.c.l.b16 %v6831
    %v7022 = vunpack.c.h.b16 %v6703
    %v7023 = vunpack.c.h.b16 %v6415
    %v7024 = vunpack.c.h.b16 %v6831
    %v7025 = vunpack.c.l.b16 %v6704
    %v7026 = vunpack.c.l.b16 %v6416
    %v7027 = vunpack.c.l.b16 %v6832
    %v7028 = vunpack.c.h.b16 %v6704
    %v7029 = vunpack.c.h.b16 %v6416
    %v7030 = vunpack.c.h.b16 %v6832
    %v7031 = vunpack.c.l.b16 %v6705
    %v7032 = vunpack.c.l.b16 %v6417
    %v7033 = vunpack.c.l.b16 %v6833
    %v7034 = vunpack.c.h.b16 %v6705
    %v7035 = vunpack.c.h.b16 %v6417
    %v7036 = vunpack.c.h.b16 %v6833
    %v7037 = vunpack.c.l.b16 %v6706
    %v7038 = vunpack.c.l.b16 %v6418
    %v7039 = vunpack.c.l.b16 %v6834
    %v7040 = vunpack.c.h.b16 %v6706
    %v7041 = vunpack.c.h.b16 %v6418
    %v7042 = vunpack.c.h.b16 %v6834
    %v7043 = vunpack.c.l.b16 %v6707
    %v7044 = vunpack.c.l.b16 %v6419
    %v7045 = vunpack.c.l.b16 %v6835
    %v7046 = vunpack.c.h.b16 %v6707
    %v7047 = vunpack.c.h.b16 %v6419
    %v7048 = vunpack.c.h.b16 %v6835
    %v7049 = vunpack.c.l.b16 %v6708
    %v7050 = vunpack.c.l.b16 %v6420
    %v7051 = vunpack.c.l.b16 %v6836
    %v7052 = vunpack.c.h.b16 %v6708
    %v7053 = vunpack.c.h.b16 %v6420
    %v7054 = vunpack.c.h.b16 %v6836
    %v7055 = vunpack.c.l.b16 %v6709
    %v7056 = vunpack.c.l.b16 %v6421
    %v7057 = vunpack.c.l.b16 %v6837
    %v7058 = vunpack.c.h.b16 %v6709
    %v7059 = vunpack.c.h.b16 %v6421
    %v7060 = vunpack.c.h.b16 %v6837
    %v7061 = vunpack.c.l.b16 %v6710
    %v7062 = vunpack.c.l.b16 %v6422
    %v7063 = vunpack.c.l.b16 %v6838
    %v7064 = vunpack.c.h.b16 %v6710
    %v7065 = vunpack.c.h.b16 %v6422
    %v7066 = vunpack.c.h.b16 %v6838
    %v7067 = vunpack.c.l.b16 %v6711
    %v7068 = vunpack.c.l.b16 %v6423
    %v7069 = vunpack.c.l.b16 %v6839
    %v7070 = vunpack.c.h.b16 %v6711
    %v7071 = vunpack.c.h.b16 %v6423
    %v7072 = vunpack.c.h.b16 %v6839
    %v7073 = vunpack.c.l.b16 %v6712
    %v7074 = vunpack.c.l.b16 %v6424
    %v7075 = vunpack.c.l.b16 %v6840
    %v7076 = vunpack.c.h.b16 %v6712
    %v7077 = vunpack.c.h.b16 %v6424
    %v7078 = vunpack.c.h.b16 %v6840
    %v7079 = vunpack.c.l.b16 %v6713
    %v7080 = vunpack.c.l.b16 %v6425
    %v7081 = vunpack.c.l.b16 %v6841
    %v7082 = vunpack.c.h.b16 %v6713
    %v7083 = vunpack.c.h.b16 %v6425
    %v7084 = vunpack.c.h.b16 %v6841
    %v7085 = vunpack.c.l.b16 %v6714
    %v7086 = vunpack.c.l.b16 %v6426
    %v7087 = vunpack.c.l.b16 %v6842
    %v7088 = vunpack.c.h.b16 %v6714
    %v7089 = vunpack.c.h.b16 %v6426
    %v7090 = vunpack.c.h.b16 %v6842
    %v7091 = vunpack.c.l.b16 %v6715
    %v7092 = vunpack.c.l.b16 %v6427
    %v7093 = vunpack.c.l.b16 %v6843
    %v7094 = vunpack.c.h.b16 %v6715
    %v7095 = vunpack.c.h.b16 %v6427
    %v7096 = vunpack.c.h.b16 %v6843
    %v7097 = vunpack.c.l.b16 %v6716
    %v7098 = vunpack.c.l.b16 %v6428
    %v7099 = vunpack.c.l.b16 %v6844
    %v7100 = vunpack.c.h.b16 %v6716
    %v7101 = vunpack.c.h.b16 %v6428
    %v7102 = vunpack.c.h.b16 %v6844
    %v7103 = vunpack.c.l.b16 %v6717
    %v7104 = vunpack.c.l.b16 %v6429
    %v7105 = vunpack.c.l.b16 %v6845
    %v7106 = vunpack.c.h.b16 %v6717
    %v7107 = vunpack.c.h.b16 %v6429
    %v7108 = vunpack.c.h.b16 %v6845
    %v7109 = vunpack.c.l.b16 %v6718
    %v7110 = vunpack.c.l.b16 %v6430
    %v7111 = vunpack.c.l.b16 %v6846
    %v7112 = vunpack.c.h.b16 %v6718
    %v7113 = vunpack.c.h.b16 %v6430
    %v7114 = vunpack.c.h.b16 %v6846
    %v7115 = vunpack.c.l.b16 %v6719
    %v7116 = vunpack.c.l.b16 %v6431
    %v7117 = vunpack.c.l.b16 %v6847
    %v7118 = vunpack.c.h.b16 %v6719
    %v7119 = vunpack.c.h.b16 %v6431
    %v7120 = vunpack.c.h.b16 %v6847
    %v7121 = vunpack.c.l.b16 %v6720
    %v7122 = vunpack.c.l.b16 %v6432
    %v7123 = vunpack.c.l.b16 %v6848
    %v7124 = vunpack.c.h.b16 %v6720
    %v7125 = vunpack.c.h.b16 %v6432
    %v7126 = vunpack.c.h.b16 %v6848
    %v7127 = vunpack.c.l.b16 %v6721
    %v7128 = vunpack.c.l.b16 %v6433
    %v7129 = vunpack.c.l.b16 %v6849
    %v7130 = vunpack.c.h.b16 %v6721
    %v7131 = vunpack.c.h.b16 %v6433
    %v7132 = vunpack.c.h.b16 %v6849
    %v7133 = vunpack.c.l.b16 %v6722
    %v7134 = vunpack.c.l.b16 %v6434
    %v7135 = vunpack.c.l.b16 %v6850
    %v7136 = vunpack.c.h.b16 %v6722
    %v7137 = vunpack.c.h.b16 %v6434
    %v7138 = vunpack.c.h.b16 %v6850
    %v7139 = vpack.c.b16 %v6948, %v6947
    %v7140 = vpack.c.b16 %v6949, %v6949
    %v7141 = vpack.c.b16 %v6951, %v6950
    %v7142 = vpack.c.b16 %v6952, %v6952
    %v7143 = vpack.c.b16 %v6954, %v6953
    %v7144 = vpack.c.b16 %v6955, %v6955
    %v7145 = vpack.c.b16 %v6957, %v6956
    %v7146 = vpack.c.b16 %v6958, %v6958
    %v7147 = vpack.c.b16 %v6960, %v6959
    %v7148 = vpack.c.b16 %v6961, %v6961
    %v7149 = vpack.c.b16 %v6963, %v6962
    %v7150 = vpack.c.b16 %v6964, %v6964
    %v7151 = vpack.c.b16 %v6966, %v6965
    %v7152 = vpack.c.b16 %v6967, %v6967
    %v7153 = vpack.c.b16 %v6969, %v6968
    %v7154 = vpack.c.b16 %v6970, %v6970
    %v7155 = vpack.c.b16 %v6972, %v6971
    %v7156 = vpack.c.b16 %v6973, %v6973
    %v7157 = vpack.c.b16 %v6975, %v6974
    %v7158 = vpack.c.b16 %v6976, %v6976
    %v7159 = vpack.c.b16 %v6978, %v6977
    %v7160 = vpack.c.b16 %v6979, %v6979
    %v7161 = vpack.c.b16 %v6981, %v6980
    %v7162 = vpack.c.b16 %v6982, %v6982
    %v7163 = vpack.c.b16 %v6984, %v6983
    %v7164 = vpack.c.b16 %v6985, %v6985
    %v7165 = vpack.c.b16 %v6987, %v6986
    %v7166 = vpack.c.b16 %v6988, %v6988
    %v7167 = vpack.c.b16 %v6990, %v6989
    %v7168 = vpack.c.b16 %v6991, %v6991
    %v7169 = vpack.c.b16 %v6993, %v6992
    %v7170 = vpack.c.b16 %v6994, %v6994
    %v7171 = vpack.c.b16 %v6996, %v6995
    %v7172 = vpack.c.b16 %v6997, %v6997
    %v7173 = vpack.c.b16 %v6999, %v6998
    %v7174 = vpack.c.b16 %v7000, %v7000
    %v7175 = vpack.c.b16 %v7002, %v7001
    %v7176 = vpack.c.b16 %v7003, %v7003
    %v7177 = vpack.c.b16 %v7005, %v7004
    %v7178 = vpack.c.b16 %v7006, %v7006
    %v7179 = vpack.c.b16 %v7008, %v7007
    %v7180 = vpack.c.b16 %v7009, %v7009
    %v7181 = vpack.c.b16 %v7011, %v7010
    %v7182 = vpack.c.b16 %v7012, %v7012
    %v7183 = vpack.c.b16 %v7014, %v7013
    %v7184 = vpack.c.b16 %v7015, %v7015
    %v7185 = vpack.c.b16 %v7017, %v7016
    %v7186 = vpack.c.b16 %v7018, %v7018
    %v7187 = vpack.c.b16 %v7020, %v7019
    %v7188 = vpack.c.b16 %v7021, %v7021
    %v7189 = vpack.c.b16 %v7023, %v7022
    %v7190 = vpack.c.b16 %v7024, %v7024
    %v7191 = vpack.c.b16 %v7026, %v7025
    %v7192 = vpack.c.b16 %v7027, %v7027
    %v7193 = vpack.c.b16 %v7029, %v7028
    %v7194 = vpack.c.b16 %v7030, %v7030
    %v7195 = vpack.c.b16 %v7032, %v7031
    %v7196 = vpack.c.b16 %v7033, %v7033
    %v7197 = vpack.c.b16 %v7035, %v7034
    %v7198 = vpack.c.b16 %v7036, %v7036
    %v7199 = vpack.c.b16 %v7038, %v7037
    %v7200 = vpack.c.b16 %v7039, %v7039
    %v7201 = vpack.c.b16 %v7041, %v7040
    %v7202 = vpack.c.b16 %v7042, %v7042
    %v7203 = vpack.c.b16 %v7044, %v7043
    %v7204 = vpack.c.b16 %v7045, %v7045
    %v7205 = vpack.c.b16 %v7047, %v7046
    %v7206 = vpack.c.b16 %v7048, %v7048
    %v7207 = vpack.c.b16 %v7050, %v7049
    %v7208 = vpack.c.b16 %v7051, %v7051
    %v7209 = vpack.c.b16 %v7053, %v7052
    %v7210 = vpack.c.b16 %v7054, %v7054
    %v7211 = vpack.c.b16 %v7056, %v7055
    %v7212 = vpack.c.b16 %v7057, %v7057
    %v7213 = vpack.c.b16 %v7059, %v7058
    %v7214 = vpack.c.b16 %v7060, %v7060
    %v7215 = vpack.c.b16 %v7062, %v7061
    %v7216 = vpack.c.b16 %v7063, %v7063
    %v7217 = vpack.c.b16 %v7065, %v7064
    %v7218 = vpack.c.b16 %v7066, %v7066
    %v7219 = vpack.c.b16 %v7068, %v7067
    %v7220 = vpack.c.b16 %v7069, %v7069
    %v7221 = vpack.c.b16 %v7071, %v7070
    %v7222 = vpack.c.b16 %v7072, %v7072
    %v7223 = vpack.c.b16 %v7074, %v7073
    %v7224 = vpack.c.b16 %v7075, %v7075
    %v7225 = vpack.c.b16 %v7077, %v7076
    %v7226 = vpack.c.b16 %v7078, %v7078
    %v7227 = vpack.c.b16 %v7080, %v7079
    %v7228 = vpack.c.b16 %v7081, %v7081
    %v7229 = vpack.c.b16 %v7083, %v7082
    %v7230 = vpack.c.b16 %v7084, %v7084
    %v7231 = vpack.c.b16 %v7086, %v7085
    %v7232 = vpack.c.b16 %v7087, %v7087
    %v7233 = vpack.c.b16 %v7089, %v7088
    %v7234 = vpack.c.b16 %v7090, %v7090
    %v7235 = vpack.c.b16 %v7092, %v7091
    %v7236 = vpack.c.b16 %v7093, %v7093
    %v7237 = vpack.c.b16 %v7095, %v7094
    %v7238 = vpack.c.b16 %v7096, %v7096
    %v7239 = vpack.c.b16 %v7098, %v7097
    %v7240 = vpack.c.b16 %v7099, %v7099
    %v7241 = vpack.c.b16 %v7101, %v7100
    %v7242 = vpack.c.b16 %v7102, %v7102
    %v7243 = vpack.c.b16 %v7104, %v7103
    %v7244 = vpack.c.b16 %v7105, %v7105
    %v7245 = vpack.c.b16 %v7107, %v7106
    %v7246 = vpack.c.b16 %v7108, %v7108
    %v7247 = vpack.c.b16 %v7110, %v7109
    %v7248 = vpack.c.b16 %v7111, %v7111
    %v7249 = vpack.c.b16 %v7113, %v7112
    %v7250 = vpack.c.b16 %v7114, %v7114
    %v7251 = vpack.c.b16 %v7116, %v7115
    %v7252 = vpack.c.b16 %v7117, %v7117
    %v7253 = vpack.c.b16 %v7119, %v7118
    %v7254 = vpack.c.b16 %v7120, %v7120
    %v7255 = vpack.c.b16 %v7122, %v7121
    %v7256 = vpack.c.b16 %v7123, %v7123
    %v7257 = vpack.c.b16 %v7125, %v7124
    %v7258 = vpack.c.b16 %v7126, %v7126
    %v7259 = vpack.c.b16 %v7128, %v7127
    %v7260 = vpack.c.b16 %v7129, %v7129
    %v7261 = vpack.c.b16 %v7131, %v7130
    %v7262 = vpack.c.b16 %v7132, %v7132
    %v7263 = vpack.c.b16 %v7134, %v7133
    %v7264 = vpack.c.b16 %v7135, %v7135
    %v7265 = vpack.c.b16 %v7137, %v7136
    %v7266 = vpack.c.b16 %v7138, %v7138
    %7395 = vst [vmem:[%s1194] sm:$0xff] %v7139
    %7396 = vst [vmem:[%s1194 + $0x8] sm:$0xf] %v7140
    %7397 = vst [vmem:[%s1194 + $0xc] sm:$0xff] %v7141
    %7398 = vst [vmem:[%s1194 + $0x14] sm:$0xf] %v7142
    %7399 = vst [vmem:[%s1194 + $0x18] sm:$0xff] %v7143
    %7400 = vst [vmem:[%s1194 + $0x20] sm:$0xf] %v7144
    %7401 = vst [vmem:[%s1194 + $0x24] sm:$0xff] %v7145
    %7402 = vst [vmem:[%s1194 + $0x2c] sm:$0xf] %v7146
    %7403 = vst [vmem:[%s1194 + $0x30] sm:$0xff] %v7147
    %7404 = vst [vmem:[%s1194 + $0x38] sm:$0xf] %v7148
    %7405 = vst [vmem:[%s1194 + $0x3c] sm:$0xff] %v7149
    %7406 = vst [vmem:[%s1194 + $0x44] sm:$0xf] %v7150
    %7407 = vst [vmem:[%s1194 + $0x48] sm:$0xff] %v7151
    %7408 = vst [vmem:[%s1194 + $0x50] sm:$0xf] %v7152
    %7409 = vst [vmem:[%s1194 + $0x54] sm:$0xff] %v7153
    %7410 = vst [vmem:[%s1194 + $0x5c] sm:$0xf] %v7154
    %7411 = vst [vmem:[%s1194 + $0x60] sm:$0xff] %v7155
    %7412 = vst [vmem:[%s1194 + $0x68] sm:$0xf] %v7156
    %7413 = vst [vmem:[%s1194 + $0x6c] sm:$0xff] %v7157
    %7414 = vst [vmem:[%s1194 + $0x74] sm:$0xf] %v7158
    %7415 = vst [vmem:[%s1194 + $0x78] sm:$0xff] %v7159
    %7416 = vst [vmem:[%s1194 + $0x80] sm:$0xf] %v7160
    %7417 = vst [vmem:[%s1194 + $0x84] sm:$0xff] %v7161
    %7418 = vst [vmem:[%s1194 + $0x8c] sm:$0xf] %v7162
    %7419 = vst [vmem:[%s1194 + $0x90] sm:$0xff] %v7163
    %7420 = vst [vmem:[%s1194 + $0x98] sm:$0xf] %v7164
    %7421 = vst [vmem:[%s1194 + $0x9c] sm:$0xff] %v7165
    %7422 = vst [vmem:[%s1194 + $0xa4] sm:$0xf] %v7166
    %7423 = vst [vmem:[%s1194 + $0xa8] sm:$0xff] %v7167
    %7424 = vst [vmem:[%s1194 + $0xb0] sm:$0xf] %v7168
    %7425 = vst [vmem:[%s1194 + $0xb4] sm:$0xff] %v7169
    %7426 = vst [vmem:[%s1194 + $0xbc] sm:$0xf] %v7170
    %7427 = vst [vmem:[%s1194 + $0xc0] sm:$0xff] %v7171
    %7428 = vst [vmem:[%s1194 + $0xc8] sm:$0xf] %v7172
    %7429 = vst [vmem:[%s1194 + $0xcc] sm:$0xff] %v7173
    %7430 = vst [vmem:[%s1194 + $0xd4] sm:$0xf] %v7174
    %7431 = vst [vmem:[%s1194 + $0xd8] sm:$0xff] %v7175
    %7432 = vst [vmem:[%s1194 + $0xe0] sm:$0xf] %v7176
    %7433 = vst [vmem:[%s1194 + $0xe4] sm:$0xff] %v7177
    %7434 = vst [vmem:[%s1194 + $0xec] sm:$0xf] %v7178
    %7435 = vst [vmem:[%s1194 + $0xf0] sm:$0xff] %v7179
    %7436 = vst [vmem:[%s1194 + $0xf8] sm:$0xf] %v7180
    %7437 = vst [vmem:[%s1194 + $0xfc] sm:$0xff] %v7181
    %7438 = vst [vmem:[%s1194 + $0x104] sm:$0xf] %v7182
    %7439 = vst [vmem:[%s1194 + $0x108] sm:$0xff] %v7183
    %7440 = vst [vmem:[%s1194 + $0x110] sm:$0xf] %v7184
    %7441 = vst [vmem:[%s1194 + $0x114] sm:$0xff] %v7185
    %7442 = vst [vmem:[%s1194 + $0x11c] sm:$0xf] %v7186
    %7443 = vst [vmem:[%s1194 + $0x120] sm:$0xff] %v7187
    %7444 = vst [vmem:[%s1194 + $0x128] sm:$0xf] %v7188
    %7445 = vst [vmem:[%s1194 + $0x12c] sm:$0xff] %v7189
    %7446 = vst [vmem:[%s1194 + $0x134] sm:$0xf] %v7190
    %7447 = vst [vmem:[%s1194 + $0x138] sm:$0xff] %v7191
    %7448 = vst [vmem:[%s1194 + $0x140] sm:$0xf] %v7192
    %7449 = vst [vmem:[%s1194 + $0x144] sm:$0xff] %v7193
    %7450 = vst [vmem:[%s1194 + $0x14c] sm:$0xf] %v7194
    %7451 = vst [vmem:[%s1194 + $0x150] sm:$0xff] %v7195
    %7452 = vst [vmem:[%s1194 + $0x158] sm:$0xf] %v7196
    %7453 = vst [vmem:[%s1194 + $0x15c] sm:$0xff] %v7197
    %7454 = vst [vmem:[%s1194 + $0x164] sm:$0xf] %v7198
    %7455 = vst [vmem:[%s1194 + $0x168] sm:$0xff] %v7199
    %7456 = vst [vmem:[%s1194 + $0x170] sm:$0xf] %v7200
    %7457 = vst [vmem:[%s1194 + $0x174] sm:$0xff] %v7201
    %7458 = vst [vmem:[%s1194 + $0x17c] sm:$0xf] %v7202
    %7459 = vst [vmem:[%s1194 + $0x1b0] sm:$0xff] %v7203
    %7460 = vst [vmem:[%s1194 + $0x1b8] sm:$0xf] %v7204
    %7461 = vst [vmem:[%s1194 + $0x1bc] sm:$0xff] %v7205
    %7462 = vst [vmem:[%s1194 + $0x1c4] sm:$0xf] %v7206
    %7463 = vst [vmem:[%s1194 + $0x1c8] sm:$0xff] %v7207
    %7464 = vst [vmem:[%s1194 + $0x1d0] sm:$0xf] %v7208
    %7465 = vst [vmem:[%s1194 + $0x1d4] sm:$0xff] %v7209
    %7466 = vst [vmem:[%s1194 + $0x1dc] sm:$0xf] %v7210
    %7467 = vst [vmem:[%s1194 + $0x1e0] sm:$0xff] %v7211
    %7468 = vst [vmem:[%s1194 + $0x1e8] sm:$0xf] %v7212
    %7469 = vst [vmem:[%s1194 + $0x1ec] sm:$0xff] %v7213
    %7470 = vst [vmem:[%s1194 + $0x1f4] sm:$0xf] %v7214
    %7471 = vst [vmem:[%s1194 + $0x1f8] sm:$0xff] %v7215
    %7472 = vst [vmem:[%s1194 + $0x200] sm:$0xf] %v7216
    %7473 = vst [vmem:[%s1194 + $0x204] sm:$0xff] %v7217
    %7474 = vst [vmem:[%s1194 + $0x20c] sm:$0xf] %v7218
    %7475 = vst [vmem:[%s1194 + $0x210] sm:$0xff] %v7219
    %7476 = vst [vmem:[%s1194 + $0x218] sm:$0xf] %v7220
    %7477 = vst [vmem:[%s1194 + $0x21c] sm:$0xff] %v7221
    %7478 = vst [vmem:[%s1194 + $0x224] sm:$0xf] %v7222
    %7479 = vst [vmem:[%s1194 + $0x228] sm:$0xff] %v7223
    %7480 = vst [vmem:[%s1194 + $0x230] sm:$0xf] %v7224
    %7481 = vst [vmem:[%s1194 + $0x234] sm:$0xff] %v7225
    %7482 = vst [vmem:[%s1194 + $0x23c] sm:$0xf] %v7226
    %7483 = vst [vmem:[%s1194 + $0x240] sm:$0xff] %v7227
    %7484 = vst [vmem:[%s1194 + $0x248] sm:$0xf] %v7228
    %7485 = vst [vmem:[%s1194 + $0x24c] sm:$0xff] %v7229
    %7486 = vst [vmem:[%s1194 + $0x254] sm:$0xf] %v7230
    %7487 = vst [vmem:[%s1194 + $0x258] sm:$0xff] %v7231
    %7488 = vst [vmem:[%s1194 + $0x260] sm:$0xf] %v7232
    %7489 = vst [vmem:[%s1194 + $0x264] sm:$0xff] %v7233
    %7490 = vst [vmem:[%s1194 + $0x26c] sm:$0xf] %v7234
    %7491 = vst [vmem:[%s1194 + $0x270] sm:$0xff] %v7235
    %7492 = vst [vmem:[%s1194 + $0x278] sm:$0xf] %v7236
    %7493 = vst [vmem:[%s1194 + $0x27c] sm:$0xff] %v7237
    %7494 = vst [vmem:[%s1194 + $0x284] sm:$0xf] %v7238
    %7495 = vst [vmem:[%s1194 + $0x288] sm:$0xff] %v7239
    %7496 = vst [vmem:[%s1194 + $0x290] sm:$0xf] %v7240
    %7497 = vst [vmem:[%s1194 + $0x294] sm:$0xff] %v7241
    %7498 = vst [vmem:[%s1194 + $0x29c] sm:$0xf] %v7242
    %7499 = vst [vmem:[%s1194 + $0x2a0] sm:$0xff] %v7243
    %7500 = vst [vmem:[%s1194 + $0x2a8] sm:$0xf] %v7244
    %7501 = vst [vmem:[%s1194 + $0x2ac] sm:$0xff] %v7245
    %7502 = vst [vmem:[%s1194 + $0x2b4] sm:$0xf] %v7246
    %7503 = vst [vmem:[%s1194 + $0x2b8] sm:$0xff] %v7247
    %7504 = vst [vmem:[%s1194 + $0x2c0] sm:$0xf] %v7248
    %7505 = vst [vmem:[%s1194 + $0x2c4] sm:$0xff] %v7249
    %7506 = vst [vmem:[%s1194 + $0x2cc] sm:$0xf] %v7250
    %7507 = vst [vmem:[%s1194 + $0x2d0] sm:$0xff] %v7251
    %7508 = vst [vmem:[%s1194 + $0x2d8] sm:$0xf] %v7252
    %7509 = vst [vmem:[%s1194 + $0x2dc] sm:$0xff] %v7253
    %7510 = vst [vmem:[%s1194 + $0x2e4] sm:$0xf] %v7254
    %7511 = vst [vmem:[%s1194 + $0x2e8] sm:$0xff] %v7255
    %7512 = vst [vmem:[%s1194 + $0x2f0] sm:$0xf] %v7256
    %7513 = vst [vmem:[%s1194 + $0x2f4] sm:$0xff] %v7257
    %7514 = vst [vmem:[%s1194 + $0x2fc] sm:$0xf] %v7258
    %7515 = vst [vmem:[%s1194 + $0x300] sm:$0xff] %v7259
    %7516 = vst [vmem:[%s1194 + $0x308] sm:$0xf] %v7260
    %7517 = vst [vmem:[%s1194 + $0x30c] sm:$0xff] %v7261
    %7518 = vst [vmem:[%s1194 + $0x314] sm:$0xf] %v7262
    %7519 = vst [vmem:[%s1194 + $0x318] sm:$0xff] %v7263
    %7520 = vst [vmem:[%s1194 + $0x320] sm:$0xf] %v7264
    %7521 = vst [vmem:[%s1194 + $0x324] sm:$0xff] %v7265
    %7522 = vst [vmem:[%s1194 + $0x32c] sm:$0xf] %v7266
    %v7523 = vld [vmem:[%s4] sm:$0x1]
    %v7524 = vld [vmem:[#allocation2] sm:$0xff]
    %v7525 = vld [vmem:[#allocation2 + $0x8] sm:$0xf]
    %v7526 = vld [vmem:[#allocation2 + $0xc] sm:$0xff]
    %v7527 = vld [vmem:[#allocation2 + $0x14] sm:$0xf]
    %v7528 = vld [vmem:[#allocation2 + $0x18] sm:$0xff]
    %v7529 = vld [vmem:[#allocation2 + $0x20] sm:$0xf]
    %v7530 = vld [vmem:[#allocation2 + $0x24] sm:$0xff]
    %v7531 = vld [vmem:[#allocation2 + $0x2c] sm:$0xf]
    %v7532 = vld [vmem:[#allocation2 + $0x30] sm:$0xff]
    %v7533 = vld [vmem:[#allocation2 + $0x38] sm:$0xf]
    %v7534 = vld [vmem:[#allocation2 + $0x3c] sm:$0xff]
    %v7535 = vld [vmem:[#allocation2 + $0x44] sm:$0xf]
    %v7536 = vld [vmem:[#allocation2 + $0x48] sm:$0xff]
    %v7537 = vld [vmem:[#allocation2 + $0x50] sm:$0xf]
    %v7538 = vld [vmem:[#allocation2 + $0x54] sm:$0xff]
    %v7539 = vld [vmem:[#allocation2 + $0x5c] sm:$0xf]
    %v7540 = vld [vmem:[#allocation2 + $0x60] sm:$0xff]
    %v7541 = vld [vmem:[#allocation2 + $0x68] sm:$0xf]
    %v7542 = vld [vmem:[#allocation2 + $0x6c] sm:$0xff]
    %v7543 = vld [vmem:[#allocation2 + $0x74] sm:$0xf]
    %v7544 = vld [vmem:[#allocation2 + $0x78] sm:$0xff]
    %v7545 = vld [vmem:[#allocation2 + $0x80] sm:$0xf]
    %v7546 = vld [vmem:[#allocation2 + $0x84] sm:$0xff]
    %v7547 = vld [vmem:[#allocation2 + $0x8c] sm:$0xf]
    %v7548 = vld [vmem:[#allocation2 + $0x90] sm:$0xff]
    %v7549 = vld [vmem:[#allocation2 + $0x98] sm:$0xf]
    %v7550 = vld [vmem:[#allocation2 + $0x9c] sm:$0xff]
    %v7551 = vld [vmem:[#allocation2 + $0xa4] sm:$0xf]
    %v7552 = vld [vmem:[#allocation2 + $0xa8] sm:$0xff]
    %v7553 = vld [vmem:[#allocation2 + $0xb0] sm:$0xf]
    %v7554 = vld [vmem:[#allocation2 + $0xb4] sm:$0xff]
    %v7555 = vld [vmem:[#allocation2 + $0xbc] sm:$0xf]
    %v7556 = vld [vmem:[#allocation2 + $0xc0] sm:$0xff]
    %v7557 = vld [vmem:[#allocation2 + $0xc8] sm:$0xf]
    %v7558 = vld [vmem:[#allocation2 + $0xcc] sm:$0xff]
    %v7559 = vld [vmem:[#allocation2 + $0xd4] sm:$0xf]
    %v7560 = vld [vmem:[#allocation2 + $0xd8] sm:$0xff]
    %v7561 = vld [vmem:[#allocation2 + $0xe0] sm:$0xf]
    %v7562 = vld [vmem:[#allocation2 + $0xe4] sm:$0xff]
    %v7563 = vld [vmem:[#allocation2 + $0xec] sm:$0xf]
    %v7564 = vld [vmem:[#allocation2 + $0xf0] sm:$0xff]
    %v7565 = vld [vmem:[#allocation2 + $0xf8] sm:$0xf]
    %v7566 = vld [vmem:[#allocation2 + $0xfc] sm:$0xff]
    %v7567 = vld [vmem:[#allocation2 + $0x104] sm:$0xf]
    %v7568 = vld [vmem:[#allocation2 + $0x108] sm:$0xff]
    %v7569 = vld [vmem:[#allocation2 + $0x110] sm:$0xf]
    %v7570 = vld [vmem:[#allocation2 + $0x114] sm:$0xff]
    %v7571 = vld [vmem:[#allocation2 + $0x11c] sm:$0xf]
    %v7572 = vld [vmem:[#allocation2 + $0x120] sm:$0xff]
    %v7573 = vld [vmem:[#allocation2 + $0x128] sm:$0xf]
    %v7574 = vld [vmem:[#allocation2 + $0x12c] sm:$0xff]
    %v7575 = vld [vmem:[#allocation2 + $0x134] sm:$0xf]
    %v7576 = vld [vmem:[#allocation2 + $0x138] sm:$0xff]
    %v7577 = vld [vmem:[#allocation2 + $0x140] sm:$0xf]
    %v7578 = vld [vmem:[#allocation2 + $0x144] sm:$0xff]
    %v7579 = vld [vmem:[#allocation2 + $0x14c] sm:$0xf]
    %v7580 = vld [vmem:[#allocation2 + $0x150] sm:$0xff]
    %v7581 = vld [vmem:[#allocation2 + $0x158] sm:$0xf]
    %v7582 = vld [vmem:[#allocation2 + $0x15c] sm:$0xff]
    %v7583 = vld [vmem:[#allocation2 + $0x164] sm:$0xf]
    %v7584 = vld [vmem:[#allocation2 + $0x168] sm:$0xff]
    %v7585 = vld [vmem:[#allocation2 + $0x170] sm:$0xf]
    %v7586 = vld [vmem:[#allocation2 + $0x174] sm:$0xff]
    %v7587 = vld [vmem:[#allocation2 + $0x17c] sm:$0xf]
    %v7588 = vld [vmem:[#allocation2 + $0x1b0] sm:$0xff]
    %v7589 = vld [vmem:[#allocation2 + $0x1b8] sm:$0xf]
    %v7590 = vld [vmem:[#allocation2 + $0x1bc] sm:$0xff]
    %v7591 = vld [vmem:[#allocation2 + $0x1c4] sm:$0xf]
    %v7592 = vld [vmem:[#allocation2 + $0x1c8] sm:$0xff]
    %v7593 = vld [vmem:[#allocation2 + $0x1d0] sm:$0xf]
    %v7594 = vld [vmem:[#allocation2 + $0x1d4] sm:$0xff]
    %v7595 = vld [vmem:[#allocation2 + $0x1dc] sm:$0xf]
    %v7596 = vld [vmem:[#allocation2 + $0x1e0] sm:$0xff]
    %v7597 = vld [vmem:[#allocation2 + $0x1e8] sm:$0xf]
    %v7598 = vld [vmem:[#allocation2 + $0x1ec] sm:$0xff]
    %v7599 = vld [vmem:[#allocation2 + $0x1f4] sm:$0xf]
    %v7600 = vld [vmem:[#allocation2 + $0x1f8] sm:$0xff]
    %v7601 = vld [vmem:[#allocation2 + $0x200] sm:$0xf]
    %v7602 = vld [vmem:[#allocation2 + $0x204] sm:$0xff]
    %v7603 = vld [vmem:[#allocation2 + $0x20c] sm:$0xf]
    %v7604 = vld [vmem:[#allocation2 + $0x210] sm:$0xff]
    %v7605 = vld [vmem:[#allocation2 + $0x218] sm:$0xf]
    %v7606 = vld [vmem:[#allocation2 + $0x21c] sm:$0xff]
    %v7607 = vld [vmem:[#allocation2 + $0x224] sm:$0xf]
    %v7608 = vld [vmem:[#allocation2 + $0x228] sm:$0xff]
    %v7609 = vld [vmem:[#allocation2 + $0x230] sm:$0xf]
    %v7610 = vld [vmem:[#allocation2 + $0x234] sm:$0xff]
    %v7611 = vld [vmem:[#allocation2 + $0x23c] sm:$0xf]
    %v7612 = vld [vmem:[#allocation2 + $0x240] sm:$0xff]
    %v7613 = vld [vmem:[#allocation2 + $0x248] sm:$0xf]
    %v7614 = vld [vmem:[#allocation2 + $0x24c] sm:$0xff]
    %v7615 = vld [vmem:[#allocation2 + $0x254] sm:$0xf]
    %v7616 = vld [vmem:[#allocation2 + $0x258] sm:$0xff]
    %v7617 = vld [vmem:[#allocation2 + $0x260] sm:$0xf]
    %v7618 = vld [vmem:[#allocation2 + $0x264] sm:$0xff]
    %v7619 = vld [vmem:[#allocation2 + $0x26c] sm:$0xf]
    %v7620 = vld [vmem:[#allocation2 + $0x270] sm:$0xff]
    %v7621 = vld [vmem:[#allocation2 + $0x278] sm:$0xf]
    %v7622 = vld [vmem:[#allocation2 + $0x27c] sm:$0xff]
    %v7623 = vld [vmem:[#allocation2 + $0x284] sm:$0xf]
    %v7624 = vld [vmem:[#allocation2 + $0x288] sm:$0xff]
    %v7625 = vld [vmem:[#allocation2 + $0x290] sm:$0xf]
    %v7626 = vld [vmem:[#allocation2 + $0x294] sm:$0xff]
    %v7627 = vld [vmem:[#allocation2 + $0x29c] sm:$0xf]
    %v7628 = vld [vmem:[#allocation2 + $0x2a0] sm:$0xff]
    %v7629 = vld [vmem:[#allocation2 + $0x2a8] sm:$0xf]
    %v7630 = vld [vmem:[#allocation2 + $0x2ac] sm:$0xff]
    %v7631 = vld [vmem:[#allocation2 + $0x2b4] sm:$0xf]
    %v7632 = vld [vmem:[#allocation2 + $0x2b8] sm:$0xff]
    %v7633 = vld [vmem:[#allocation2 + $0x2c0] sm:$0xf]
    %v7634 = vld [vmem:[#allocation2 + $0x2c4] sm:$0xff]
    %v7635 = vld [vmem:[#allocation2 + $0x2cc] sm:$0xf]
    %v7636 = vld [vmem:[#allocation2 + $0x2d0] sm:$0xff]
    %v7637 = vld [vmem:[#allocation2 + $0x2d8] sm:$0xf]
    %v7638 = vld [vmem:[#allocation2 + $0x2dc] sm:$0xff]
    %v7639 = vld [vmem:[#allocation2 + $0x2e4] sm:$0xf]
    %v7640 = vld [vmem:[#allocation2 + $0x2e8] sm:$0xff]
    %v7641 = vld [vmem:[#allocation2 + $0x2f0] sm:$0xf]
    %v7642 = vld [vmem:[#allocation2 + $0x2f4] sm:$0xff]
    %v7643 = vld [vmem:[#allocation2 + $0x2fc] sm:$0xf]
    %v7644 = vld [vmem:[#allocation2 + $0x300] sm:$0xff]
    %v7645 = vld [vmem:[#allocation2 + $0x308] sm:$0xf]
    %v7646 = vld [vmem:[#allocation2 + $0x30c] sm:$0xff]
    %v7647 = vld [vmem:[#allocation2 + $0x314] sm:$0xf]
    %v7648 = vld [vmem:[#allocation2 + $0x318] sm:$0xff]
    %v7649 = vld [vmem:[#allocation2 + $0x320] sm:$0xf]
    %v7650 = vld [vmem:[#allocation2 + $0x324] sm:$0xff]
    %v7651 = vld [vmem:[#allocation2 + $0x32c] sm:$0xf]
    %v7652 = vld [vmem:[#allocation8] sm:$0xf]
    %v7653 = vld [vmem:[#allocation8 + $0x4] sm:$0xf]
    %v7654 = vld [vmem:[#allocation8 + $0x8] sm:$0xf]
    %v7655 = vld [vmem:[#allocation8 + $0xc] sm:$0xf]
    %v7656 = vld [vmem:[#allocation8 + $0x10] sm:$0xf]
    %v7657 = vld [vmem:[#allocation8 + $0x14] sm:$0xf]
    %v7658 = vld [vmem:[#allocation8 + $0x18] sm:$0xf]
    %v7659 = vld [vmem:[#allocation8 + $0x1c] sm:$0xf]
    %v7660 = vld [vmem:[#allocation8 + $0x20] sm:$0xf]
    %v7661 = vld [vmem:[#allocation8 + $0x24] sm:$0xf]
    %v7662 = vld [vmem:[#allocation8 + $0x28] sm:$0xf]
    %v7663 = vld [vmem:[#allocation8 + $0x2c] sm:$0xf]
    %v7664 = vld [vmem:[#allocation8 + $0x30] sm:$0xf]
    %v7665 = vld [vmem:[#allocation8 + $0x34] sm:$0xf]
    %v7666 = vld [vmem:[#allocation8 + $0x38] sm:$0xf]
    %v7667 = vld [vmem:[#allocation8 + $0x3c] sm:$0xf]
    %v7668 = vld [vmem:[#allocation8 + $0x40] sm:$0xf]
    %v7669 = vld [vmem:[#allocation8 + $0x44] sm:$0xf]
    %v7670 = vld [vmem:[#allocation8 + $0x48] sm:$0xf]
    %v7671 = vld [vmem:[#allocation8 + $0x4c] sm:$0xf]
    %v7672 = vld [vmem:[#allocation8 + $0x50] sm:$0xf]
    %v7673 = vld [vmem:[#allocation8 + $0x54] sm:$0xf]
    %v7674 = vld [vmem:[#allocation8 + $0x58] sm:$0xf]
    %v7675 = vld [vmem:[#allocation8 + $0x5c] sm:$0xf]
    %v7676 = vld [vmem:[#allocation8 + $0x60] sm:$0xf]
    %v7677 = vld [vmem:[#allocation8 + $0x64] sm:$0xf]
    %v7678 = vld [vmem:[#allocation8 + $0x68] sm:$0xf]
    %v7679 = vld [vmem:[#allocation8 + $0x6c] sm:$0xf]
    %v7680 = vld [vmem:[#allocation8 + $0x70] sm:$0xf]
    %v7681 = vld [vmem:[#allocation8 + $0x74] sm:$0xf]
    %v7682 = vld [vmem:[#allocation8 + $0x78] sm:$0xf]
    %v7683 = vld [vmem:[#allocation8 + $0x7c] sm:$0xf]
    %v7684 = vld [vmem:[#allocation8 + $0x80] sm:$0xf]
    %v7685 = vld [vmem:[#allocation8 + $0x84] sm:$0xf]
    %v7686 = vld [vmem:[#allocation8 + $0x88] sm:$0xf]
    %v7687 = vld [vmem:[#allocation8 + $0x8c] sm:$0xf]
    %v7688 = vld [vmem:[#allocation8 + $0x90] sm:$0xf]
    %v7689 = vld [vmem:[#allocation8 + $0x94] sm:$0xf]
    %v7690 = vld [vmem:[#allocation8 + $0x98] sm:$0xf]
    %v7691 = vld [vmem:[#allocation8 + $0x9c] sm:$0xf]
    %v7692 = vld [vmem:[#allocation8 + $0xa0] sm:$0xf]
    %v7693 = vld [vmem:[#allocation8 + $0xa4] sm:$0xf]
    %v7694 = vld [vmem:[#allocation8 + $0xa8] sm:$0xf]
    %v7695 = vld [vmem:[#allocation8 + $0xac] sm:$0xf]
    %v7696 = vld [vmem:[#allocation8 + $0xb0] sm:$0xf]
    %v7697 = vld [vmem:[#allocation8 + $0xb4] sm:$0xf]
    %v7698 = vld [vmem:[#allocation8 + $0xb8] sm:$0xf]
    %v7699 = vld [vmem:[#allocation8 + $0xbc] sm:$0xf]
    %v7700 = vld [vmem:[%s1194] sm:$0xff]
    %v7701 = vld [vmem:[%s1194 + $0x8] sm:$0xf]
    %v7702 = vld [vmem:[%s1194 + $0xc] sm:$0xff]
    %v7703 = vld [vmem:[%s1194 + $0x14] sm:$0xf]
    %v7704 = vld [vmem:[%s1194 + $0x18] sm:$0xff]
    %v7705 = vld [vmem:[%s1194 + $0x20] sm:$0xf]
    %v7706 = vld [vmem:[%s1194 + $0x24] sm:$0xff]
    %v7707 = vld [vmem:[%s1194 + $0x2c] sm:$0xf]
    %v7708 = vld [vmem:[%s1194 + $0x30] sm:$0xff]
    %v7709 = vld [vmem:[%s1194 + $0x38] sm:$0xf]
    %v7710 = vld [vmem:[%s1194 + $0x3c] sm:$0xff]
    %v7711 = vld [vmem:[%s1194 + $0x44] sm:$0xf]
    %v7712 = vld [vmem:[%s1194 + $0x48] sm:$0xff]
    %v7713 = vld [vmem:[%s1194 + $0x50] sm:$0xf]
    %v7714 = vld [vmem:[%s1194 + $0x54] sm:$0xff]
    %v7715 = vld [vmem:[%s1194 + $0x5c] sm:$0xf]
    %v7716 = vld [vmem:[%s1194 + $0x60] sm:$0xff]
    %v7717 = vld [vmem:[%s1194 + $0x68] sm:$0xf]
    %v7718 = vld [vmem:[%s1194 + $0x6c] sm:$0xff]
    %v7719 = vld [vmem:[%s1194 + $0x74] sm:$0xf]
    %v7720 = vld [vmem:[%s1194 + $0x78] sm:$0xff]
    %v7721 = vld [vmem:[%s1194 + $0x80] sm:$0xf]
    %v7722 = vld [vmem:[%s1194 + $0x84] sm:$0xff]
    %v7723 = vld [vmem:[%s1194 + $0x8c] sm:$0xf]
    %v7724 = vld [vmem:[%s1194 + $0x90] sm:$0xff]
    %v7725 = vld [vmem:[%s1194 + $0x98] sm:$0xf]
    %v7726 = vld [vmem:[%s1194 + $0x9c] sm:$0xff]
    %v7727 = vld [vmem:[%s1194 + $0xa4] sm:$0xf]
    %v7728 = vld [vmem:[%s1194 + $0xa8] sm:$0xff]
    %v7729 = vld [vmem:[%s1194 + $0xb0] sm:$0xf]
    %v7730 = vld [vmem:[%s1194 + $0xb4] sm:$0xff]
    %v7731 = vld [vmem:[%s1194 + $0xbc] sm:$0xf]
    %v7732 = vld [vmem:[%s1194 + $0xc0] sm:$0xff]
    %v7733 = vld [vmem:[%s1194 + $0xc8] sm:$0xf]
    %v7734 = vld [vmem:[%s1194 + $0xcc] sm:$0xff]
    %v7735 = vld [vmem:[%s1194 + $0xd4] sm:$0xf]
    %v7736 = vld [vmem:[%s1194 + $0xd8] sm:$0xff]
    %v7737 = vld [vmem:[%s1194 + $0xe0] sm:$0xf]
    %v7738 = vld [vmem:[%s1194 + $0xe4] sm:$0xff]
    %v7739 = vld [vmem:[%s1194 + $0xec] sm:$0xf]
    %v7740 = vld [vmem:[%s1194 + $0xf0] sm:$0xff]
    %v7741 = vld [vmem:[%s1194 + $0xf8] sm:$0xf]
    %v7742 = vld [vmem:[%s1194 + $0xfc] sm:$0xff]
    %v7743 = vld [vmem:[%s1194 + $0x104] sm:$0xf]
    %v7744 = vld [vmem:[%s1194 + $0x108] sm:$0xff]
    %v7745 = vld [vmem:[%s1194 + $0x110] sm:$0xf]
    %v7746 = vld [vmem:[%s1194 + $0x114] sm:$0xff]
    %v7747 = vld [vmem:[%s1194 + $0x11c] sm:$0xf]
    %v7748 = vld [vmem:[%s1194 + $0x120] sm:$0xff]
    %v7749 = vld [vmem:[%s1194 + $0x128] sm:$0xf]
    %v7750 = vld [vmem:[%s1194 + $0x12c] sm:$0xff]
    %v7751 = vld [vmem:[%s1194 + $0x134] sm:$0xf]
    %v7752 = vld [vmem:[%s1194 + $0x138] sm:$0xff]
    %v7753 = vld [vmem:[%s1194 + $0x140] sm:$0xf]
    %v7754 = vld [vmem:[%s1194 + $0x144] sm:$0xff]
    %v7755 = vld [vmem:[%s1194 + $0x14c] sm:$0xf]
    %v7756 = vld [vmem:[%s1194 + $0x150] sm:$0xff]
    %v7757 = vld [vmem:[%s1194 + $0x158] sm:$0xf]
    %v7758 = vld [vmem:[%s1194 + $0x15c] sm:$0xff]
    %v7759 = vld [vmem:[%s1194 + $0x164] sm:$0xf]
    %v7760 = vld [vmem:[%s1194 + $0x168] sm:$0xff]
    %v7761 = vld [vmem:[%s1194 + $0x170] sm:$0xf]
    %v7762 = vld [vmem:[%s1194 + $0x174] sm:$0xff]
    %v7763 = vld [vmem:[%s1194 + $0x17c] sm:$0xf]
    %v7764 = vld [vmem:[%s1194 + $0x1b0] sm:$0xff]
    %v7765 = vld [vmem:[%s1194 + $0x1b8] sm:$0xf]
    %v7766 = vld [vmem:[%s1194 + $0x1bc] sm:$0xff]
    %v7767 = vld [vmem:[%s1194 + $0x1c4] sm:$0xf]
    %v7768 = vld [vmem:[%s1194 + $0x1c8] sm:$0xff]
    %v7769 = vld [vmem:[%s1194 + $0x1d0] sm:$0xf]
    %v7770 = vld [vmem:[%s1194 + $0x1d4] sm:$0xff]
    %v7771 = vld [vmem:[%s1194 + $0x1dc] sm:$0xf]
    %v7772 = vld [vmem:[%s1194 + $0x1e0] sm:$0xff]
    %v7773 = vld [vmem:[%s1194 + $0x1e8] sm:$0xf]
    %v7774 = vld [vmem:[%s1194 + $0x1ec] sm:$0xff]
    %v7775 = vld [vmem:[%s1194 + $0x1f4] sm:$0xf]
    %v7776 = vld [vmem:[%s1194 + $0x1f8] sm:$0xff]
    %v7777 = vld [vmem:[%s1194 + $0x200] sm:$0xf]
    %v7778 = vld [vmem:[%s1194 + $0x204] sm:$0xff]
    %v7779 = vld [vmem:[%s1194 + $0x20c] sm:$0xf]
    %v7780 = vld [vmem:[%s1194 + $0x210] sm:$0xff]
    %v7781 = vld [vmem:[%s1194 + $0x218] sm:$0xf]
    %v7782 = vld [vmem:[%s1194 + $0x21c] sm:$0xff]
    %v7783 = vld [vmem:[%s1194 + $0x224] sm:$0xf]
    %v7784 = vld [vmem:[%s1194 + $0x228] sm:$0xff]
    %v7785 = vld [vmem:[%s1194 + $0x230] sm:$0xf]
    %v7786 = vld [vmem:[%s1194 + $0x234] sm:$0xff]
    %v7787 = vld [vmem:[%s1194 + $0x23c] sm:$0xf]
    %v7788 = vld [vmem:[%s1194 + $0x240] sm:$0xff]
    %v7789 = vld [vmem:[%s1194 + $0x248] sm:$0xf]
    %v7790 = vld [vmem:[%s1194 + $0x24c] sm:$0xff]
    %v7791 = vld [vmem:[%s1194 + $0x254] sm:$0xf]
    %v7792 = vld [vmem:[%s1194 + $0x258] sm:$0xff]
    %v7793 = vld [vmem:[%s1194 + $0x260] sm:$0xf]
    %v7794 = vld [vmem:[%s1194 + $0x264] sm:$0xff]
    %v7795 = vld [vmem:[%s1194 + $0x26c] sm:$0xf]
    %v7796 = vld [vmem:[%s1194 + $0x270] sm:$0xff]
    %v7797 = vld [vmem:[%s1194 + $0x278] sm:$0xf]
    %v7798 = vld [vmem:[%s1194 + $0x27c] sm:$0xff]
    %v7799 = vld [vmem:[%s1194 + $0x284] sm:$0xf]
    %v7800 = vld [vmem:[%s1194 + $0x288] sm:$0xff]
    %v7801 = vld [vmem:[%s1194 + $0x290] sm:$0xf]
    %v7802 = vld [vmem:[%s1194 + $0x294] sm:$0xff]
    %v7803 = vld [vmem:[%s1194 + $0x29c] sm:$0xf]
    %v7804 = vld [vmem:[%s1194 + $0x2a0] sm:$0xff]
    %v7805 = vld [vmem:[%s1194 + $0x2a8] sm:$0xf]
    %v7806 = vld [vmem:[%s1194 + $0x2ac] sm:$0xff]
    %v7807 = vld [vmem:[%s1194 + $0x2b4] sm:$0xf]
    %v7808 = vld [vmem:[%s1194 + $0x2b8] sm:$0xff]
    %v7809 = vld [vmem:[%s1194 + $0x2c0] sm:$0xf]
    %v7810 = vld [vmem:[%s1194 + $0x2c4] sm:$0xff]
    %v7811 = vld [vmem:[%s1194 + $0x2cc] sm:$0xf]
    %v7812 = vld [vmem:[%s1194 + $0x2d0] sm:$0xff]
    %v7813 = vld [vmem:[%s1194 + $0x2d8] sm:$0xf]
    %v7814 = vld [vmem:[%s1194 + $0x2dc] sm:$0xff]
    %v7815 = vld [vmem:[%s1194 + $0x2e4] sm:$0xf]
    %v7816 = vld [vmem:[%s1194 + $0x2e8] sm:$0xff]
    %v7817 = vld [vmem:[%s1194 + $0x2f0] sm:$0xf]
    %v7818 = vld [vmem:[%s1194 + $0x2f4] sm:$0xff]
    %v7819 = vld [vmem:[%s1194 + $0x2fc] sm:$0xf]
    %v7820 = vld [vmem:[%s1194 + $0x300] sm:$0xff]
    %v7821 = vld [vmem:[%s1194 + $0x308] sm:$0xf]
    %v7822 = vld [vmem:[%s1194 + $0x30c] sm:$0xff]
    %v7823 = vld [vmem:[%s1194 + $0x314] sm:$0xf]
    %v7824 = vld [vmem:[%s1194 + $0x318] sm:$0xff]
    %v7825 = vld [vmem:[%s1194 + $0x320] sm:$0xf]
    %v7826 = vld [vmem:[%s1194 + $0x324] sm:$0xff]
    %v7827 = vld [vmem:[%s1194 + $0x32c] sm:$0xf]
    %s7828 = scalar_lea.vmem [#allocation8], 192
    %v7829 = vld [vmem:[%s7828] sm:$0xf]
    %v7830 = vld [vmem:[%s7828 + $0x4] sm:$0xf]
    %v7831 = vld [vmem:[%s7828 + $0x8] sm:$0xf]
    %v7832 = vld [vmem:[%s7828 + $0xc] sm:$0xf]
    %v7833 = vld [vmem:[%s7828 + $0x10] sm:$0xf]
    %v7834 = vld [vmem:[%s7828 + $0x14] sm:$0xf]
    %v7835 = vld [vmem:[%s7828 + $0x18] sm:$0xf]
    %v7836 = vld [vmem:[%s7828 + $0x1c] sm:$0xf]
    %v7837 = vld [vmem:[%s7828 + $0x20] sm:$0xf]
    %v7838 = vld [vmem:[%s7828 + $0x24] sm:$0xf]
    %v7839 = vld [vmem:[%s7828 + $0x28] sm:$0xf]
    %v7840 = vld [vmem:[%s7828 + $0x2c] sm:$0xf]
    %v7841 = vld [vmem:[%s7828 + $0x30] sm:$0xf]
    %v7842 = vld [vmem:[%s7828 + $0x34] sm:$0xf]
    %v7843 = vld [vmem:[%s7828 + $0x38] sm:$0xf]
    %v7844 = vld [vmem:[%s7828 + $0x3c] sm:$0xf]
    %v7845 = vld [vmem:[%s7828 + $0x40] sm:$0xf]
    %v7846 = vld [vmem:[%s7828 + $0x44] sm:$0xf]
    %v7847 = vld [vmem:[%s7828 + $0x48] sm:$0xf]
    %v7848 = vld [vmem:[%s7828 + $0x4c] sm:$0xf]
    %v7849 = vld [vmem:[%s7828 + $0x50] sm:$0xf]
    %v7850 = vld [vmem:[%s7828 + $0x54] sm:$0xf]
    %v7851 = vld [vmem:[%s7828 + $0x58] sm:$0xf]
    %v7852 = vld [vmem:[%s7828 + $0x5c] sm:$0xf]
    %v7853 = vld [vmem:[%s7828 + $0x60] sm:$0xf]
    %v7854 = vld [vmem:[%s7828 + $0x64] sm:$0xf]
    %v7855 = vld [vmem:[%s7828 + $0x68] sm:$0xf]
    %v7856 = vld [vmem:[%s7828 + $0x6c] sm:$0xf]
    %v7857 = vld [vmem:[%s7828 + $0x70] sm:$0xf]
    %v7858 = vld [vmem:[%s7828 + $0x74] sm:$0xf]
    %v7859 = vld [vmem:[%s7828 + $0x78] sm:$0xf]
    %v7860 = vld [vmem:[%s7828 + $0x7c] sm:$0xf]
    %v7861 = vld [vmem:[%s7828 + $0x80] sm:$0xf]
    %v7862 = vld [vmem:[%s7828 + $0x84] sm:$0xf]
    %v7863 = vld [vmem:[%s7828 + $0x88] sm:$0xf]
    %v7864 = vld [vmem:[%s7828 + $0x8c] sm:$0xf]
    %v7865 = vld [vmem:[%s7828 + $0x90] sm:$0xf]
    %v7866 = vld [vmem:[%s7828 + $0x94] sm:$0xf]
    %v7867 = vld [vmem:[%s7828 + $0x98] sm:$0xf]
    %v7868 = vld [vmem:[%s7828 + $0x9c] sm:$0xf]
    %v7869 = vld [vmem:[%s7828 + $0xa0] sm:$0xf]
    %v7870 = vld [vmem:[%s7828 + $0xa4] sm:$0xf]
    %v7871 = vld [vmem:[%s7828 + $0xa8] sm:$0xf]
    %v7872 = vld [vmem:[%s7828 + $0xac] sm:$0xf]
    %v7873 = vld [vmem:[%s7828 + $0xb0] sm:$0xf]
    %v7874 = vld [vmem:[%s7828 + $0xb4] sm:$0xf]
    %v7875 = vld [vmem:[%s7828 + $0xb8] sm:$0xf]
    %v7876 = vld [vmem:[%s7828 + $0xbc] sm:$0xf]
    %v8005 = vunpack.c.l.b16 %v7700
    %v8006 = vunpack.c.h.b16 %v7700
    %v8007 = vunpack.c.l.b16 %v7701
    %v8008 = vunpack.c.l.b16 %v7702
    %v8009 = vunpack.c.h.b16 %v7702
    %v8010 = vunpack.c.l.b16 %v7703
    %v8011 = vunpack.c.l.b16 %v7704
    %v8012 = vunpack.c.h.b16 %v7704
    %v8013 = vunpack.c.l.b16 %v7705
    %v8014 = vunpack.c.l.b16 %v7706
    %v8015 = vunpack.c.h.b16 %v7706
    %v8016 = vunpack.c.l.b16 %v7707
    %v8017 = vunpack.c.l.b16 %v7708
    %v8018 = vunpack.c.h.b16 %v7708
    %v8019 = vunpack.c.l.b16 %v7709
    %v8020 = vunpack.c.l.b16 %v7710
    %v8021 = vunpack.c.h.b16 %v7710
    %v8022 = vunpack.c.l.b16 %v7711
    %v8023 = vunpack.c.l.b16 %v7712
    %v8024 = vunpack.c.h.b16 %v7712
    %v8025 = vunpack.c.l.b16 %v7713
    %v8026 = vunpack.c.l.b16 %v7714
    %v8027 = vunpack.c.h.b16 %v7714
    %v8028 = vunpack.c.l.b16 %v7715
    %v8029 = vunpack.c.l.b16 %v7716
    %v8030 = vunpack.c.h.b16 %v7716
    %v8031 = vunpack.c.l.b16 %v7717
    %v8032 = vunpack.c.l.b16 %v7718
    %v8033 = vunpack.c.h.b16 %v7718
    %v8034 = vunpack.c.l.b16 %v7719
    %v8035 = vunpack.c.l.b16 %v7720
    %v8036 = vunpack.c.h.b16 %v7720
    %v8037 = vunpack.c.l.b16 %v7721
    %v8038 = vunpack.c.l.b16 %v7722
    %v8039 = vunpack.c.h.b16 %v7722
    %v8040 = vunpack.c.l.b16 %v7723
    %v8041 = vunpack.c.l.b16 %v7724
    %v8042 = vunpack.c.h.b16 %v7724
    %v8043 = vunpack.c.l.b16 %v7725
    %v8044 = vunpack.c.l.b16 %v7726
    %v8045 = vunpack.c.h.b16 %v7726
    %v8046 = vunpack.c.l.b16 %v7727
    %v8047 = vunpack.c.l.b16 %v7728
    %v8048 = vunpack.c.h.b16 %v7728
    %v8049 = vunpack.c.l.b16 %v7729
    %v8050 = vunpack.c.l.b16 %v7730
    %v8051 = vunpack.c.h.b16 %v7730
    %v8052 = vunpack.c.l.b16 %v7731
    %v8053 = vunpack.c.l.b16 %v7732
    %v8054 = vunpack.c.h.b16 %v7732
    %v8055 = vunpack.c.l.b16 %v7733
    %v8056 = vunpack.c.l.b16 %v7734
    %v8057 = vunpack.c.h.b16 %v7734
    %v8058 = vunpack.c.l.b16 %v7735
    %v8059 = vunpack.c.l.b16 %v7736
    %v8060 = vunpack.c.h.b16 %v7736
    %v8061 = vunpack.c.l.b16 %v7737
    %v8062 = vunpack.c.l.b16 %v7738
    %v8063 = vunpack.c.h.b16 %v7738
    %v8064 = vunpack.c.l.b16 %v7739
    %v8065 = vunpack.c.l.b16 %v7740
    %v8066 = vunpack.c.h.b16 %v7740
    %v8067 = vunpack.c.l.b16 %v7741
    %v8068 = vunpack.c.l.b16 %v7742
    %v8069 = vunpack.c.h.b16 %v7742
    %v8070 = vunpack.c.l.b16 %v7743
    %v8071 = vunpack.c.l.b16 %v7744
    %v8072 = vunpack.c.h.b16 %v7744
    %v8073 = vunpack.c.l.b16 %v7745
    %v8074 = vunpack.c.l.b16 %v7746
    %v8075 = vunpack.c.h.b16 %v7746
    %v8076 = vunpack.c.l.b16 %v7747
    %v8077 = vunpack.c.l.b16 %v7748
    %v8078 = vunpack.c.h.b16 %v7748
    %v8079 = vunpack.c.l.b16 %v7749
    %v8080 = vunpack.c.l.b16 %v7750
    %v8081 = vunpack.c.h.b16 %v7750
    %v8082 = vunpack.c.l.b16 %v7751
    %v8083 = vunpack.c.l.b16 %v7752
    %v8084 = vunpack.c.h.b16 %v7752
    %v8085 = vunpack.c.l.b16 %v7753
    %v8086 = vunpack.c.l.b16 %v7754
    %v8087 = vunpack.c.h.b16 %v7754
    %v8088 = vunpack.c.l.b16 %v7755
    %v8089 = vunpack.c.l.b16 %v7756
    %v8090 = vunpack.c.h.b16 %v7756
    %v8091 = vunpack.c.l.b16 %v7757
    %v8092 = vunpack.c.l.b16 %v7758
    %v8093 = vunpack.c.h.b16 %v7758
    %v8094 = vunpack.c.l.b16 %v7759
    %v8095 = vunpack.c.l.b16 %v7760
    %v8096 = vunpack.c.h.b16 %v7760
    %v8097 = vunpack.c.l.b16 %v7761
    %v8098 = vunpack.c.l.b16 %v7762
    %v8099 = vunpack.c.h.b16 %v7762
    %v8100 = vunpack.c.l.b16 %v7763
    %v8101 = vunpack.c.l.b16 %v7764
    %v8102 = vunpack.c.h.b16 %v7764
    %v8103 = vunpack.c.l.b16 %v7765
    %v8104 = vunpack.c.l.b16 %v7766
    %v8105 = vunpack.c.h.b16 %v7766
    %v8106 = vunpack.c.l.b16 %v7767
    %v8107 = vunpack.c.l.b16 %v7768
    %v8108 = vunpack.c.h.b16 %v7768
    %v8109 = vunpack.c.l.b16 %v7769
    %v8110 = vunpack.c.l.b16 %v7770
    %v8111 = vunpack.c.h.b16 %v7770
    %v8112 = vunpack.c.l.b16 %v7771
    %v8113 = vunpack.c.l.b16 %v7772
    %v8114 = vunpack.c.h.b16 %v7772
    %v8115 = vunpack.c.l.b16 %v7773
    %v8116 = vunpack.c.l.b16 %v7774
    %v8117 = vunpack.c.h.b16 %v7774
    %v8118 = vunpack.c.l.b16 %v7775
    %v8119 = vunpack.c.l.b16 %v7776
    %v8120 = vunpack.c.h.b16 %v7776
    %v8121 = vunpack.c.l.b16 %v7777
    %v8122 = vunpack.c.l.b16 %v7778
    %v8123 = vunpack.c.h.b16 %v7778
    %v8124 = vunpack.c.l.b16 %v7779
    %v8125 = vunpack.c.l.b16 %v7780
    %v8126 = vunpack.c.h.b16 %v7780
    %v8127 = vunpack.c.l.b16 %v7781
    %v8128 = vunpack.c.l.b16 %v7782
    %v8129 = vunpack.c.h.b16 %v7782
    %v8130 = vunpack.c.l.b16 %v7783
    %v8131 = vunpack.c.l.b16 %v7784
    %v8132 = vunpack.c.h.b16 %v7784
    %v8133 = vunpack.c.l.b16 %v7785
    %v8134 = vunpack.c.l.b16 %v7786
    %v8135 = vunpack.c.h.b16 %v7786
    %v8136 = vunpack.c.l.b16 %v7787
    %v8137 = vunpack.c.l.b16 %v7788
    %v8138 = vunpack.c.h.b16 %v7788
    %v8139 = vunpack.c.l.b16 %v7789
    %v8140 = vunpack.c.l.b16 %v7790
    %v8141 = vunpack.c.h.b16 %v7790
    %v8142 = vunpack.c.l.b16 %v7791
    %v8143 = vunpack.c.l.b16 %v7792
    %v8144 = vunpack.c.h.b16 %v7792
    %v8145 = vunpack.c.l.b16 %v7793
    %v8146 = vunpack.c.l.b16 %v7794
    %v8147 = vunpack.c.h.b16 %v7794
    %v8148 = vunpack.c.l.b16 %v7795
    %v8149 = vunpack.c.l.b16 %v7796
    %v8150 = vunpack.c.h.b16 %v7796
    %v8151 = vunpack.c.l.b16 %v7797
    %v8152 = vunpack.c.l.b16 %v7798
    %v8153 = vunpack.c.h.b16 %v7798
    %v8154 = vunpack.c.l.b16 %v7799
    %v8155 = vunpack.c.l.b16 %v7800
    %v8156 = vunpack.c.h.b16 %v7800
    %v8157 = vunpack.c.l.b16 %v7801
    %v8158 = vunpack.c.l.b16 %v7802
    %v8159 = vunpack.c.h.b16 %v7802
    %v8160 = vunpack.c.l.b16 %v7803
    %v8161 = vunpack.c.l.b16 %v7804
    %v8162 = vunpack.c.h.b16 %v7804
    %v8163 = vunpack.c.l.b16 %v7805
    %v8164 = vunpack.c.l.b16 %v7806
    %v8165 = vunpack.c.h.b16 %v7806
    %v8166 = vunpack.c.l.b16 %v7807
    %v8167 = vunpack.c.l.b16 %v7808
    %v8168 = vunpack.c.h.b16 %v7808
    %v8169 = vunpack.c.l.b16 %v7809
    %v8170 = vunpack.c.l.b16 %v7810
    %v8171 = vunpack.c.h.b16 %v7810
    %v8172 = vunpack.c.l.b16 %v7811
    %v8173 = vunpack.c.l.b16 %v7812
    %v8174 = vunpack.c.h.b16 %v7812
    %v8175 = vunpack.c.l.b16 %v7813
    %v8176 = vunpack.c.l.b16 %v7814
    %v8177 = vunpack.c.h.b16 %v7814
    %v8178 = vunpack.c.l.b16 %v7815
    %v8179 = vunpack.c.l.b16 %v7816
    %v8180 = vunpack.c.h.b16 %v7816
    %v8181 = vunpack.c.l.b16 %v7817
    %v8182 = vunpack.c.l.b16 %v7818
    %v8183 = vunpack.c.h.b16 %v7818
    %v8184 = vunpack.c.l.b16 %v7819
    %v8185 = vunpack.c.l.b16 %v7820
    %v8186 = vunpack.c.h.b16 %v7820
    %v8187 = vunpack.c.l.b16 %v7821
    %v8188 = vunpack.c.l.b16 %v7822
    %v8189 = vunpack.c.h.b16 %v7822
    %v8190 = vunpack.c.l.b16 %v7823
    %v8191 = vunpack.c.l.b16 %v7824
    %v8192 = vunpack.c.h.b16 %v7824
    %v8193 = vunpack.c.l.b16 %v7825
    %v8194 = vunpack.c.l.b16 %v7826
    %v8195 = vunpack.c.h.b16 %v7826
    %v8196 = vunpack.c.l.b16 %v7827
    %v8197 = vpack.c.b16 %v8008, %v8005
    %v8198 = vpack.c.b16 %v8009, %v8006
    %v8199 = vpack.c.b16 %v8010, %v8007
    %v8200 = vpack.c.b16 %v8014, %v8011
    %v8201 = vpack.c.b16 %v8015, %v8012
    %v8202 = vpack.c.b16 %v8016, %v8013
    %v8203 = vpack.c.b16 %v8020, %v8017
    %v8204 = vpack.c.b16 %v8021, %v8018
    %v8205 = vpack.c.b16 %v8022, %v8019
    %v8206 = vpack.c.b16 %v8026, %v8023
    %v8207 = vpack.c.b16 %v8027, %v8024
    %v8208 = vpack.c.b16 %v8028, %v8025
    %v8209 = vpack.c.b16 %v8032, %v8029
    %v8210 = vpack.c.b16 %v8033, %v8030
    %v8211 = vpack.c.b16 %v8034, %v8031
    %v8212 = vpack.c.b16 %v8038, %v8035
    %v8213 = vpack.c.b16 %v8039, %v8036
    %v8214 = vpack.c.b16 %v8040, %v8037
    %v8215 = vpack.c.b16 %v8044, %v8041
    %v8216 = vpack.c.b16 %v8045, %v8042
    %v8217 = vpack.c.b16 %v8046, %v8043
    %v8218 = vpack.c.b16 %v8050, %v8047
    %v8219 = vpack.c.b16 %v8051, %v8048
    %v8220 = vpack.c.b16 %v8052, %v8049
    %v8221 = vpack.c.b16 %v8056, %v8053
    %v8222 = vpack.c.b16 %v8057, %v8054
    %v8223 = vpack.c.b16 %v8058, %v8055
    %v8224 = vpack.c.b16 %v8062, %v8059
    %v8225 = vpack.c.b16 %v8063, %v8060
    %v8226 = vpack.c.b16 %v8064, %v8061
    %v8227 = vpack.c.b16 %v8068, %v8065
    %v8228 = vpack.c.b16 %v8069, %v8066
    %v8229 = vpack.c.b16 %v8070, %v8067
    %v8230 = vpack.c.b16 %v8074, %v8071
    %v8231 = vpack.c.b16 %v8075, %v8072
    %v8232 = vpack.c.b16 %v8076, %v8073
    %v8233 = vpack.c.b16 %v8080, %v8077
    %v8234 = vpack.c.b16 %v8081, %v8078
    %v8235 = vpack.c.b16 %v8082, %v8079
    %v8236 = vpack.c.b16 %v8086, %v8083
    %v8237 = vpack.c.b16 %v8087, %v8084
    %v8238 = vpack.c.b16 %v8088, %v8085
    %v8239 = vpack.c.b16 %v8092, %v8089
    %v8240 = vpack.c.b16 %v8093, %v8090
    %v8241 = vpack.c.b16 %v8094, %v8091
    %v8242 = vpack.c.b16 %v8098, %v8095
    %v8243 = vpack.c.b16 %v8099, %v8096
    %v8244 = vpack.c.b16 %v8100, %v8097
    %v8245 = vpack.c.b16 %v8104, %v8101
    %v8246 = vpack.c.b16 %v8105, %v8102
    %v8247 = vpack.c.b16 %v8106, %v8103
    %v8248 = vpack.c.b16 %v8110, %v8107
    %v8249 = vpack.c.b16 %v8111, %v8108
    %v8250 = vpack.c.b16 %v8112, %v8109
    %v8251 = vpack.c.b16 %v8116, %v8113
    %v8252 = vpack.c.b16 %v8117, %v8114
    %v8253 = vpack.c.b16 %v8118, %v8115
    %v8254 = vpack.c.b16 %v8122, %v8119
    %v8255 = vpack.c.b16 %v8123, %v8120
    %v8256 = vpack.c.b16 %v8124, %v8121
    %v8257 = vpack.c.b16 %v8128, %v8125
    %v8258 = vpack.c.b16 %v8129, %v8126
    %v8259 = vpack.c.b16 %v8130, %v8127
    %v8260 = vpack.c.b16 %v8134, %v8131
    %v8261 = vpack.c.b16 %v8135, %v8132
    %v8262 = vpack.c.b16 %v8136, %v8133
    %v8263 = vpack.c.b16 %v8140, %v8137
    %v8264 = vpack.c.b16 %v8141, %v8138
    %v8265 = vpack.c.b16 %v8142, %v8139
    %v8266 = vpack.c.b16 %v8146, %v8143
    %v8267 = vpack.c.b16 %v8147, %v8144
    %v8268 = vpack.c.b16 %v8148, %v8145
    %v8269 = vpack.c.b16 %v8152, %v8149
    %v8270 = vpack.c.b16 %v8153, %v8150
    %v8271 = vpack.c.b16 %v8154, %v8151
    %v8272 = vpack.c.b16 %v8158, %v8155
    %v8273 = vpack.c.b16 %v8159, %v8156
    %v8274 = vpack.c.b16 %v8160, %v8157
    %v8275 = vpack.c.b16 %v8164, %v8161
    %v8276 = vpack.c.b16 %v8165, %v8162
    %v8277 = vpack.c.b16 %v8166, %v8163
    %v8278 = vpack.c.b16 %v8170, %v8167
    %v8279 = vpack.c.b16 %v8171, %v8168
    %v8280 = vpack.c.b16 %v8172, %v8169
    %v8281 = vpack.c.b16 %v8176, %v8173
    %v8282 = vpack.c.b16 %v8177, %v8174
    %v8283 = vpack.c.b16 %v8178, %v8175
    %v8284 = vpack.c.b16 %v8182, %v8179
    %v8285 = vpack.c.b16 %v8183, %v8180
    %v8286 = vpack.c.b16 %v8184, %v8181
    %v8287 = vpack.c.b16 %v8188, %v8185
    %v8288 = vpack.c.b16 %v8189, %v8186
    %v8289 = vpack.c.b16 %v8190, %v8187
    %v8290 = vpack.c.b16 %v8194, %v8191
    %v8291 = vpack.c.b16 %v8195, %v8192
    %v8292 = vpack.c.b16 %v8196, %v8193
    %v8437 = vunpack.c.l.b16 %v7829
    %v8438 = vunpack.c.l.b16 %v7830
    %v8439 = vunpack.c.l.b16 %v7831
    %v8440 = vunpack.c.l.b16 %v7832
    %v8441 = vunpack.c.l.b16 %v7833
    %v8442 = vunpack.c.l.b16 %v7834
    %v8443 = vunpack.c.l.b16 %v7835
    %v8444 = vunpack.c.l.b16 %v7836
    %v8445 = vunpack.c.l.b16 %v7837
    %v8446 = vunpack.c.l.b16 %v7838
    %v8447 = vunpack.c.l.b16 %v7839
    %v8448 = vunpack.c.l.b16 %v7840
    %v8449 = vunpack.c.l.b16 %v7841
    %v8450 = vunpack.c.l.b16 %v7842
    %v8451 = vunpack.c.l.b16 %v7843
    %v8452 = vunpack.c.l.b16 %v7844
    %v8453 = vunpack.c.l.b16 %v7845
    %v8454 = vunpack.c.l.b16 %v7846
    %v8455 = vunpack.c.l.b16 %v7847
    %v8456 = vunpack.c.l.b16 %v7848
    %v8457 = vunpack.c.l.b16 %v7849
    %v8458 = vunpack.c.l.b16 %v7850
    %v8459 = vunpack.c.l.b16 %v7851
    %v8460 = vunpack.c.l.b16 %v7852
    %v8461 = vunpack.c.l.b16 %v7853
    %v8462 = vunpack.c.l.b16 %v7854
    %v8463 = vunpack.c.l.b16 %v7855
    %v8464 = vunpack.c.l.b16 %v7856
    %v8465 = vunpack.c.l.b16 %v7857
    %v8466 = vunpack.c.l.b16 %v7858
    %v8467 = vunpack.c.l.b16 %v7859
    %v8468 = vunpack.c.l.b16 %v7860
    %v8469 = vunpack.c.l.b16 %v7861
    %v8470 = vunpack.c.l.b16 %v7862
    %v8471 = vunpack.c.l.b16 %v7863
    %v8472 = vunpack.c.l.b16 %v7864
    %v8473 = vunpack.c.l.b16 %v7865
    %v8474 = vunpack.c.l.b16 %v7866
    %v8475 = vunpack.c.l.b16 %v7867
    %v8476 = vunpack.c.l.b16 %v7868
    %v8477 = vunpack.c.l.b16 %v7869
    %v8478 = vunpack.c.l.b16 %v7870
    %v8479 = vunpack.c.l.b16 %v7871
    %v8480 = vunpack.c.l.b16 %v7872
    %v8481 = vunpack.c.l.b16 %v7873
    %v8482 = vunpack.c.l.b16 %v7874
    %v8483 = vunpack.c.l.b16 %v7875
    %v8484 = vunpack.c.l.b16 %v7876
    %v8485 = vpack.c.b16 %v8438, %v8437
    %v8486 = vpack.c.b16 %v8440, %v8439
    %v8487 = vpack.c.b16 %v8442, %v8441
    %v8488 = vpack.c.b16 %v8444, %v8443
    %v8489 = vpack.c.b16 %v8446, %v8445
    %v8490 = vpack.c.b16 %v8448, %v8447
    %v8491 = vpack.c.b16 %v8450, %v8449
    %v8492 = vpack.c.b16 %v8452, %v8451
    %v8493 = vpack.c.b16 %v8454, %v8453
    %v8494 = vpack.c.b16 %v8456, %v8455
    %v8495 = vpack.c.b16 %v8458, %v8457
    %v8496 = vpack.c.b16 %v8460, %v8459
    %v8497 = vpack.c.b16 %v8462, %v8461
    %v8498 = vpack.c.b16 %v8464, %v8463
    %v8499 = vpack.c.b16 %v8466, %v8465
    %v8500 = vpack.c.b16 %v8468, %v8467
    %v8501 = vpack.c.b16 %v8470, %v8469
    %v8502 = vpack.c.b16 %v8472, %v8471
    %v8503 = vpack.c.b16 %v8474, %v8473
    %v8504 = vpack.c.b16 %v8476, %v8475
    %v8505 = vpack.c.b16 %v8478, %v8477
    %v8506 = vpack.c.b16 %v8480, %v8479
    %v8507 = vpack.c.b16 %v8482, %v8481
    %v8508 = vpack.c.b16 %v8484, %v8483
    %8533 = vmatprep.subr.bf16.mxu0 0
    %8534 = vmatpush1.bf16.msra.mxu0 %v8492
    %8535 = vmatprep.subr.bf16.mxu0 0
    %8536 = vmatpush1.bf16.msra.mxu0 %v8491
    %8537 = vmatprep.subr.bf16.mxu0 0
    %8538 = vmatpush1.bf16.msra.mxu0 %v8490
    %8539 = vmatprep.subr.bf16.mxu0 0
    %8540 = vmatpush1.bf16.msra.mxu0 %v8489
    %8541 = vmatprep.subr.bf16.mxu0 0
    %8542 = vmatpush1.bf16.msra.mxu0 %v8488
    %8543 = vmatprep.subr.bf16.mxu0 0
    %8544 = vmatpush1.bf16.msra.mxu0 %v8487
    %8545 = vmatprep.subr.bf16.mxu0 0
    %8546 = vmatpush1.bf16.msra.mxu0 %v8486
    %8547 = vmatprep.subr.bf16.mxu0 0
    %8548 = vmatpush1.bf16.msra.mxu0 %v8485
    %8549 = vmatprep.subr.bf16.mxu0 0
    %8550 = vmatpush2.bf16.msra.mxu0 %v8500
    %8551 = vmatprep.subr.bf16.mxu0 0
    %8552 = vmatpush2.bf16.msra.mxu0 %v8499
    %8553 = vmatprep.subr.bf16.mxu0 0
    %8554 = vmatpush2.bf16.msra.mxu0 %v8498
    %8555 = vmatprep.subr.bf16.mxu0 0
    %8556 = vmatpush2.bf16.msra.mxu0 %v8497
    %8557 = vmatprep.subr.bf16.mxu0 0
    %8558 = vmatpush2.bf16.msra.mxu0 %v8496
    %8559 = vmatprep.subr.bf16.mxu0 0
    %8560 = vmatpush2.bf16.msra.mxu0 %v8495
    %8561 = vmatprep.subr.bf16.mxu0 0
    %8562 = vmatpush2.bf16.msra.mxu0 %v8494
    %8563 = vmatprep.subr.bf16.mxu0 0
    %8564 = vmatpush2.bf16.msra.mxu0 %v8493
    %8565 = vmatprep.mubr.bf16.mxu0 %v8198
    %8566 = vmatmul.mubr.bf16.gmra.mxu0 %v8197
    %v8567 = vpop.f32.mrf.mxu0
    %v8568 = vadd.f32 0.0, %v8567
    %v8569 = vpop.f32.mrf.mxu0
    %v8570 = vpop.f32.mrf.mxu0
    %v8571 = vadd.f32 0.0, %v8570
    %v8572 = vpop.f32.mrf.mxu0
    %8573 = vmatprep.mubr.bf16.mxu0 %v8201
    %8574 = vmatmul.mubr.bf16.gmra.mxu0 %v8200
    %v8575 = vpop.f32.mrf.mxu0
    %v8576 = vadd.f32 0.0, %v8575
    %v8577 = vpop.f32.mrf.mxu0
    %v8578 = vpop.f32.mrf.mxu0
    %v8579 = vadd.f32 0.0, %v8578
    %v8580 = vpop.f32.mrf.mxu0
    %8581 = vmatprep.mubr.bf16.mxu0 %v8204
    %8582 = vmatmul.mubr.bf16.gmra.mxu0 %v8203
    %v8583 = vpop.f32.mrf.mxu0
    %v8584 = vadd.f32 0.0, %v8583
    %v8585 = vpop.f32.mrf.mxu0
    %v8586 = vpop.f32.mrf.mxu0
    %v8587 = vadd.f32 0.0, %v8586
    %v8588 = vpop.f32.mrf.mxu0
    %8589 = vmatprep.mubr.bf16.mxu0 %v8207
    %8590 = vmatmul.mubr.bf16.gmra.mxu0 %v8206
    %v8591 = vpop.f32.mrf.mxu0
    %v8592 = vadd.f32 0.0, %v8591
    %v8593 = vpop.f32.mrf.mxu0
    %v8594 = vpop.f32.mrf.mxu0
    %v8595 = vadd.f32 0.0, %v8594
    %v8596 = vpop.f32.mrf.mxu0
    %8597 = vmatprep.mubr.bf16.mxu0 %v8210
    %8598 = vmatmul.mubr.bf16.gmra.mxu0 %v8209
    %v8599 = vpop.f32.mrf.mxu0
    %v8600 = vadd.f32 0.0, %v8599
    %v8601 = vpop.f32.mrf.mxu0
    %v8602 = vpop.f32.mrf.mxu0
    %v8603 = vadd.f32 0.0, %v8602
    %v8604 = vpop.f32.mrf.mxu0
    %8605 = vmatprep.mubr.bf16.mxu0 %v8213
    %8606 = vmatmul.mubr.bf16.gmra.mxu0 %v8212
    %v8607 = vpop.f32.mrf.mxu0
    %v8608 = vadd.f32 0.0, %v8607
    %v8609 = vpop.f32.mrf.mxu0
    %v8610 = vpop.f32.mrf.mxu0
    %v8611 = vadd.f32 0.0, %v8610
    %v8612 = vpop.f32.mrf.mxu0
    %8613 = vmatprep.mubr.bf16.mxu0 %v8216
    %8614 = vmatmul.mubr.bf16.gmra.mxu0 %v8215
    %v8615 = vpop.f32.mrf.mxu0
    %v8616 = vadd.f32 0.0, %v8615
    %v8617 = vpop.f32.mrf.mxu0
    %v8618 = vpop.f32.mrf.mxu0
    %v8619 = vadd.f32 0.0, %v8618
    %v8620 = vpop.f32.mrf.mxu0
    %8621 = vmatprep.mubr.bf16.mxu0 %v8219
    %8622 = vmatmul.mubr.bf16.gmra.mxu0 %v8218
    %v8623 = vpop.f32.mrf.mxu0
    %v8624 = vadd.f32 0.0, %v8623
    %v8625 = vpop.f32.mrf.mxu0
    %v8626 = vpop.f32.mrf.mxu0
    %v8627 = vadd.f32 0.0, %v8626
    %v8628 = vpop.f32.mrf.mxu0
    %8629 = vmatprep.mubr.bf16.mxu0 %v8222
    %8630 = vmatmul.mubr.bf16.gmra.mxu0 %v8221
    %v8631 = vpop.f32.mrf.mxu0
    %v8632 = vadd.f32 0.0, %v8631
    %v8633 = vpop.f32.mrf.mxu0
    %v8634 = vpop.f32.mrf.mxu0
    %v8635 = vadd.f32 0.0, %v8634
    %v8636 = vpop.f32.mrf.mxu0
    %8637 = vmatprep.mubr.bf16.mxu0 %v8225
    %8638 = vmatmul.mubr.bf16.gmra.mxu0 %v8224
    %v8639 = vpop.f32.mrf.mxu0
    %v8640 = vadd.f32 0.0, %v8639
    %v8641 = vpop.f32.mrf.mxu0
    %v8642 = vpop.f32.mrf.mxu0
    %v8643 = vadd.f32 0.0, %v8642
    %v8644 = vpop.f32.mrf.mxu0
    %8645 = vmatprep.mubr.bf16.mxu0 %v8228
    %8646 = vmatmul.mubr.bf16.gmra.mxu0 %v8227
    %v8647 = vpop.f32.mrf.mxu0
    %v8648 = vadd.f32 0.0, %v8647
    %v8649 = vpop.f32.mrf.mxu0
    %v8650 = vpop.f32.mrf.mxu0
    %v8651 = vadd.f32 0.0, %v8650
    %v8652 = vpop.f32.mrf.mxu0
    %8653 = vmatprep.mubr.bf16.mxu0 %v8231
    %8654 = vmatmul.mubr.bf16.gmra.mxu0 %v8230
    %v8655 = vpop.f32.mrf.mxu0
    %v8656 = vadd.f32 0.0, %v8655
    %v8657 = vpop.f32.mrf.mxu0
    %v8658 = vpop.f32.mrf.mxu0
    %v8659 = vadd.f32 0.0, %v8658
    %v8660 = vpop.f32.mrf.mxu0
    %8661 = vmatprep.mubr.bf16.mxu0 %v8234
    %8662 = vmatmul.mubr.bf16.gmra.mxu0 %v8233
    %v8663 = vpop.f32.mrf.mxu0
    %v8664 = vadd.f32 0.0, %v8663
    %v8665 = vpop.f32.mrf.mxu0
    %v8666 = vpop.f32.mrf.mxu0
    %v8667 = vadd.f32 0.0, %v8666
    %v8668 = vpop.f32.mrf.mxu0
    %8669 = vmatprep.mubr.bf16.mxu0 %v8237
    %8670 = vmatmul.mubr.bf16.gmra.mxu0 %v8236
    %v8671 = vpop.f32.mrf.mxu0
    %v8672 = vadd.f32 0.0, %v8671
    %v8673 = vpop.f32.mrf.mxu0
    %v8674 = vpop.f32.mrf.mxu0
    %v8675 = vadd.f32 0.0, %v8674
    %v8676 = vpop.f32.mrf.mxu0
    %8677 = vmatprep.mubr.bf16.mxu0 %v8240
    %8678 = vmatmul.mubr.bf16.gmra.mxu0 %v8239
    %v8679 = vpop.f32.mrf.mxu0
    %v8680 = vadd.f32 0.0, %v8679
    %v8681 = vpop.f32.mrf.mxu0
    %v8682 = vpop.f32.mrf.mxu0
    %v8683 = vadd.f32 0.0, %v8682
    %v8684 = vpop.f32.mrf.mxu0
    %8685 = vmatprep.mubr.bf16.mxu0 %v8243
    %8686 = vmatmul.mubr.bf16.gmra.mxu0 %v8242
    %v8687 = vpop.f32.mrf.mxu0
    %v8688 = vadd.f32 0.0, %v8687
    %v8689 = vpop.f32.mrf.mxu0
    %v8690 = vpop.f32.mrf.mxu0
    %v8691 = vadd.f32 0.0, %v8690
    %v8692 = vpop.f32.mrf.mxu0
    %8693 = vmatprep.mubr.bf16.mxu0 %v8246
    %8694 = vmatmul.mubr.bf16.gmra.mxu0 %v8245
    %v8695 = vpop.f32.mrf.mxu0
    %v8696 = vadd.f32 0.0, %v8695
    %v8697 = vpop.f32.mrf.mxu0
    %v8698 = vpop.f32.mrf.mxu0
    %v8699 = vadd.f32 0.0, %v8698
    %v8700 = vpop.f32.mrf.mxu0
    %8701 = vmatprep.mubr.bf16.mxu0 %v8249
    %8702 = vmatmul.mubr.bf16.gmra.mxu0 %v8248
    %v8703 = vpop.f32.mrf.mxu0
    %v8704 = vadd.f32 0.0, %v8703
    %v8705 = vpop.f32.mrf.mxu0
    %v8706 = vpop.f32.mrf.mxu0
    %v8707 = vadd.f32 0.0, %v8706
    %v8708 = vpop.f32.mrf.mxu0
    %8709 = vmatprep.mubr.bf16.mxu0 %v8252
    %8710 = vmatmul.mubr.bf16.gmra.mxu0 %v8251
    %v8711 = vpop.f32.mrf.mxu0
    %v8712 = vadd.f32 0.0, %v8711
    %v8713 = vpop.f32.mrf.mxu0
    %v8714 = vpop.f32.mrf.mxu0
    %v8715 = vadd.f32 0.0, %v8714
    %v8716 = vpop.f32.mrf.mxu0
    %8717 = vmatprep.mubr.bf16.mxu0 %v8255
    %8718 = vmatmul.mubr.bf16.gmra.mxu0 %v8254
    %v8719 = vpop.f32.mrf.mxu0
    %v8720 = vadd.f32 0.0, %v8719
    %v8721 = vpop.f32.mrf.mxu0
    %v8722 = vpop.f32.mrf.mxu0
    %v8723 = vadd.f32 0.0, %v8722
    %v8724 = vpop.f32.mrf.mxu0
    %8725 = vmatprep.mubr.bf16.mxu0 %v8258
    %8726 = vmatmul.mubr.bf16.gmra.mxu0 %v8257
    %v8727 = vpop.f32.mrf.mxu0
    %v8728 = vadd.f32 0.0, %v8727
    %v8729 = vpop.f32.mrf.mxu0
    %v8730 = vpop.f32.mrf.mxu0
    %v8731 = vadd.f32 0.0, %v8730
    %v8732 = vpop.f32.mrf.mxu0
    %8733 = vmatprep.mubr.bf16.mxu0 %v8261
    %8734 = vmatmul.mubr.bf16.gmra.mxu0 %v8260
    %v8735 = vpop.f32.mrf.mxu0
    %v8736 = vadd.f32 0.0, %v8735
    %v8737 = vpop.f32.mrf.mxu0
    %v8738 = vpop.f32.mrf.mxu0
    %v8739 = vadd.f32 0.0, %v8738
    %v8740 = vpop.f32.mrf.mxu0
    %8741 = vmatprep.mubr.bf16.mxu0 %v8264
    %8742 = vmatmul.mubr.bf16.gmra.mxu0 %v8263
    %v8743 = vpop.f32.mrf.mxu0
    %v8744 = vadd.f32 0.0, %v8743
    %v8745 = vpop.f32.mrf.mxu0
    %v8746 = vpop.f32.mrf.mxu0
    %v8747 = vadd.f32 0.0, %v8746
    %v8748 = vpop.f32.mrf.mxu0
    %8749 = vmatprep.mubr.bf16.mxu0 %v8267
    %8750 = vmatmul.mubr.bf16.gmra.mxu0 %v8266
    %v8751 = vpop.f32.mrf.mxu0
    %v8752 = vadd.f32 0.0, %v8751
    %v8753 = vpop.f32.mrf.mxu0
    %v8754 = vpop.f32.mrf.mxu0
    %v8755 = vadd.f32 0.0, %v8754
    %v8756 = vpop.f32.mrf.mxu0
    %8757 = vmatprep.mubr.bf16.mxu0 %v8270
    %8758 = vmatmul.mubr.bf16.gmra.mxu0 %v8269
    %v8759 = vpop.f32.mrf.mxu0
    %v8760 = vadd.f32 0.0, %v8759
    %v8761 = vpop.f32.mrf.mxu0
    %v8762 = vpop.f32.mrf.mxu0
    %v8763 = vadd.f32 0.0, %v8762
    %v8764 = vpop.f32.mrf.mxu0
    %8765 = vmatprep.mubr.bf16.mxu0 %v8273
    %8766 = vmatmul.mubr.bf16.gmra.mxu0 %v8272
    %v8767 = vpop.f32.mrf.mxu0
    %v8768 = vadd.f32 0.0, %v8767
    %v8769 = vpop.f32.mrf.mxu0
    %v8770 = vpop.f32.mrf.mxu0
    %v8771 = vadd.f32 0.0, %v8770
    %v8772 = vpop.f32.mrf.mxu0
    %8773 = vmatprep.mubr.bf16.mxu0 %v8276
    %8774 = vmatmul.mubr.bf16.gmra.mxu0 %v8275
    %v8775 = vpop.f32.mrf.mxu0
    %v8776 = vadd.f32 0.0, %v8775
    %v8777 = vpop.f32.mrf.mxu0
    %v8778 = vpop.f32.mrf.mxu0
    %v8779 = vadd.f32 0.0, %v8778
    %v8780 = vpop.f32.mrf.mxu0
    %8781 = vmatprep.mubr.bf16.mxu0 %v8279
    %8782 = vmatmul.mubr.bf16.gmra.mxu0 %v8278
    %v8783 = vpop.f32.mrf.mxu0
    %v8784 = vadd.f32 0.0, %v8783
    %v8785 = vpop.f32.mrf.mxu0
    %v8786 = vpop.f32.mrf.mxu0
    %v8787 = vadd.f32 0.0, %v8786
    %v8788 = vpop.f32.mrf.mxu0
    %8789 = vmatprep.mubr.bf16.mxu0 %v8282
    %8790 = vmatmul.mubr.bf16.gmra.mxu0 %v8281
    %v8791 = vpop.f32.mrf.mxu0
    %v8792 = vadd.f32 0.0, %v8791
    %v8793 = vpop.f32.mrf.mxu0
    %v8794 = vpop.f32.mrf.mxu0
    %v8795 = vadd.f32 0.0, %v8794
    %v8796 = vpop.f32.mrf.mxu0
    %8797 = vmatprep.mubr.bf16.mxu0 %v8285
    %8798 = vmatmul.mubr.bf16.gmra.mxu0 %v8284
    %v8799 = vpop.f32.mrf.mxu0
    %v8800 = vadd.f32 0.0, %v8799
    %v8801 = vpop.f32.mrf.mxu0
    %v8802 = vpop.f32.mrf.mxu0
    %v8803 = vadd.f32 0.0, %v8802
    %v8804 = vpop.f32.mrf.mxu0
    %8805 = vmatprep.mubr.bf16.mxu0 %v8288
    %8806 = vmatmul.mubr.bf16.gmra.mxu0 %v8287
    %v8807 = vpop.f32.mrf.mxu0
    %v8808 = vadd.f32 0.0, %v8807
    %v8809 = vpop.f32.mrf.mxu0
    %v8810 = vpop.f32.mrf.mxu0
    %v8811 = vadd.f32 0.0, %v8810
    %v8812 = vpop.f32.mrf.mxu0
    %8813 = vmatprep.mubr.bf16.mxu0 %v8291
    %8814 = vmatmul.mubr.bf16.gmra.mxu0 %v8290
    %v8815 = vpop.f32.mrf.mxu0
    %v8816 = vadd.f32 0.0, %v8815
    %v8817 = vpop.f32.mrf.mxu0
    %v8818 = vpop.f32.mrf.mxu0
    %v8819 = vadd.f32 0.0, %v8818
    %v8820 = vpop.f32.mrf.mxu0
    %8821 = vdwg.mxu0
    %8822 = vmatprep.subr.bf16.mxu0 0
    %8823 = vmatpush1.bf16.msra.mxu0 %v8508
    %8824 = vmatprep.subr.bf16.mxu0 0
    %8825 = vmatpush1.bf16.msra.mxu0 %v8507
    %8826 = vmatprep.subr.bf16.mxu0 0
    %8827 = vmatpush1.bf16.msra.mxu0 %v8506
    %8828 = vmatprep.subr.bf16.mxu0 0
    %8829 = vmatpush1.bf16.msra.mxu0 %v8505
    %8830 = vmatprep.subr.bf16.mxu0 0
    %8831 = vmatpush1.bf16.msra.mxu0 %v8504
    %8832 = vmatprep.subr.bf16.mxu0 0
    %8833 = vmatpush1.bf16.msra.mxu0 %v8503
    %8834 = vmatprep.subr.bf16.mxu0 0
    %8835 = vmatpush1.bf16.msra.mxu0 %v8502
    %8836 = vmatprep.subr.bf16.mxu0 0
    %8837 = vmatpush1.bf16.msra.mxu0 %v8501
    %8838 = vmatprep.subr.bf16.mxu0 0
    %8839 = vmatpush2.bf16.msra.mxu0 0
    %8840 = vmatprep.subr.bf16.mxu0 0
    %8841 = vmatpush2.bf16.msra.mxu0 0
    %8842 = vmatprep.subr.bf16.mxu0 0
    %8843 = vmatpush2.bf16.msra.mxu0 0
    %8844 = vmatprep.subr.bf16.mxu0 0
    %8845 = vmatpush2.bf16.msra.mxu0 0
    %8846 = vmatprep.subr.bf16.mxu0 0
    %8847 = vmatpush2.bf16.msra.mxu0 0
    %8848 = vmatprep.subr.bf16.mxu0 0
    %8849 = vmatpush2.bf16.msra.mxu0 0
    %8850 = vmatprep.subr.bf16.mxu0 0
    %8851 = vmatpush2.bf16.msra.mxu0 0
    %8852 = vmatprep.subr.bf16.mxu0 0
    %8853 = vmatpush2.bf16.msra.mxu0 0
    %8854 = vmatprep.mubr.bf16.mxu0 0
    %8855 = vmatmul.mubr.bf16.gmra.mxu0 %v8199
    %v8856 = vpop.f32.mrf.mxu0
    %v8857 = vadd.f32 %v8568, %v8856
    %v8858 = vpop.f32.mrf.mxu0
    %v8859 = vpop.f32.mrf.mxu0
    %v8860 = vadd.f32 %v8571, %v8859
    %v8861 = vpop.f32.mrf.mxu0
    %8862 = vmatprep.mubr.bf16.mxu0 0
    %8863 = vmatmul.mubr.bf16.gmra.mxu0 %v8202
    %v8864 = vpop.f32.mrf.mxu0
    %v8865 = vadd.f32 %v8576, %v8864
    %v8866 = vpop.f32.mrf.mxu0
    %v8867 = vpop.f32.mrf.mxu0
    %v8868 = vadd.f32 %v8579, %v8867
    %v8869 = vpop.f32.mrf.mxu0
    %8870 = vmatprep.mubr.bf16.mxu0 0
    %8871 = vmatmul.mubr.bf16.gmra.mxu0 %v8205
    %v8872 = vpop.f32.mrf.mxu0
    %v8873 = vadd.f32 %v8584, %v8872
    %v8874 = vpop.f32.mrf.mxu0
    %v8875 = vpop.f32.mrf.mxu0
    %v8876 = vadd.f32 %v8587, %v8875
    %v8877 = vpop.f32.mrf.mxu0
    %8878 = vmatprep.mubr.bf16.mxu0 0
    %8879 = vmatmul.mubr.bf16.gmra.mxu0 %v8208
    %v8880 = vpop.f32.mrf.mxu0
    %v8881 = vadd.f32 %v8592, %v8880
    %v8882 = vpop.f32.mrf.mxu0
    %v8883 = vpop.f32.mrf.mxu0
    %v8884 = vadd.f32 %v8595, %v8883
    %v8885 = vpop.f32.mrf.mxu0
    %8886 = vmatprep.mubr.bf16.mxu0 0
    %8887 = vmatmul.mubr.bf16.gmra.mxu0 %v8211
    %v8888 = vpop.f32.mrf.mxu0
    %v8889 = vadd.f32 %v8600, %v8888
    %v8890 = vpop.f32.mrf.mxu0
    %v8891 = vpop.f32.mrf.mxu0
    %v8892 = vadd.f32 %v8603, %v8891
    %v8893 = vpop.f32.mrf.mxu0
    %8894 = vmatprep.mubr.bf16.mxu0 0
    %8895 = vmatmul.mubr.bf16.gmra.mxu0 %v8214
    %v8896 = vpop.f32.mrf.mxu0
    %v8897 = vadd.f32 %v8608, %v8896
    %v8898 = vpop.f32.mrf.mxu0
    %v8899 = vpop.f32.mrf.mxu0
    %v8900 = vadd.f32 %v8611, %v8899
    %v8901 = vpop.f32.mrf.mxu0
    %8902 = vmatprep.mubr.bf16.mxu0 0
    %8903 = vmatmul.mubr.bf16.gmra.mxu0 %v8217
    %v8904 = vpop.f32.mrf.mxu0
    %v8905 = vadd.f32 %v8616, %v8904
    %v8906 = vpop.f32.mrf.mxu0
    %v8907 = vpop.f32.mrf.mxu0
    %v8908 = vadd.f32 %v8619, %v8907
    %v8909 = vpop.f32.mrf.mxu0
    %8910 = vmatprep.mubr.bf16.mxu0 0
    %8911 = vmatmul.mubr.bf16.gmra.mxu0 %v8220
    %v8912 = vpop.f32.mrf.mxu0
    %v8913 = vadd.f32 %v8624, %v8912
    %v8914 = vpop.f32.mrf.mxu0
    %v8915 = vpop.f32.mrf.mxu0
    %v8916 = vadd.f32 %v8627, %v8915
    %v8917 = vpop.f32.mrf.mxu0
    %8918 = vmatprep.mubr.bf16.mxu0 0
    %8919 = vmatmul.mubr.bf16.gmra.mxu0 %v8223
    %v8920 = vpop.f32.mrf.mxu0
    %v8921 = vadd.f32 %v8632, %v8920
    %v8922 = vpop.f32.mrf.mxu0
    %v8923 = vpop.f32.mrf.mxu0
    %v8924 = vadd.f32 %v8635, %v8923
    %v8925 = vpop.f32.mrf.mxu0
    %8926 = vmatprep.mubr.bf16.mxu0 0
    %8927 = vmatmul.mubr.bf16.gmra.mxu0 %v8226
    %v8928 = vpop.f32.mrf.mxu0
    %v8929 = vadd.f32 %v8640, %v8928
    %v8930 = vpop.f32.mrf.mxu0
    %v8931 = vpop.f32.mrf.mxu0
    %v8932 = vadd.f32 %v8643, %v8931
    %v8933 = vpop.f32.mrf.mxu0
    %8934 = vmatprep.mubr.bf16.mxu0 0
    %8935 = vmatmul.mubr.bf16.gmra.mxu0 %v8229
    %v8936 = vpop.f32.mrf.mxu0
    %v8937 = vadd.f32 %v8648, %v8936
    %v8938 = vpop.f32.mrf.mxu0
    %v8939 = vpop.f32.mrf.mxu0
    %v8940 = vadd.f32 %v8651, %v8939
    %v8941 = vpop.f32.mrf.mxu0
    %8942 = vmatprep.mubr.bf16.mxu0 0
    %8943 = vmatmul.mubr.bf16.gmra.mxu0 %v8232
    %v8944 = vpop.f32.mrf.mxu0
    %v8945 = vadd.f32 %v8656, %v8944
    %v8946 = vpop.f32.mrf.mxu0
    %v8947 = vpop.f32.mrf.mxu0
    %v8948 = vadd.f32 %v8659, %v8947
    %v8949 = vpop.f32.mrf.mxu0
    %8950 = vmatprep.mubr.bf16.mxu0 0
    %8951 = vmatmul.mubr.bf16.gmra.mxu0 %v8235
    %v8952 = vpop.f32.mrf.mxu0
    %v8953 = vadd.f32 %v8664, %v8952
    %v8954 = vpop.f32.mrf.mxu0
    %v8955 = vpop.f32.mrf.mxu0
    %v8956 = vadd.f32 %v8667, %v8955
    %v8957 = vpop.f32.mrf.mxu0
    %8958 = vmatprep.mubr.bf16.mxu0 0
    %8959 = vmatmul.mubr.bf16.gmra.mxu0 %v8238
    %v8960 = vpop.f32.mrf.mxu0
    %v8961 = vadd.f32 %v8672, %v8960
    %v8962 = vpop.f32.mrf.mxu0
    %v8963 = vpop.f32.mrf.mxu0
    %v8964 = vadd.f32 %v8675, %v8963
    %v8965 = vpop.f32.mrf.mxu0
    %8966 = vmatprep.mubr.bf16.mxu0 0
    %8967 = vmatmul.mubr.bf16.gmra.mxu0 %v8241
    %v8968 = vpop.f32.mrf.mxu0
    %v8969 = vadd.f32 %v8680, %v8968
    %v8970 = vpop.f32.mrf.mxu0
    %v8971 = vpop.f32.mrf.mxu0
    %v8972 = vadd.f32 %v8683, %v8971
    %v8973 = vpop.f32.mrf.mxu0
    %8974 = vmatprep.mubr.bf16.mxu0 0
    %8975 = vmatmul.mubr.bf16.gmra.mxu0 %v8244
    %v8976 = vpop.f32.mrf.mxu0
    %v8977 = vadd.f32 %v8688, %v8976
    %v8978 = vpop.f32.mrf.mxu0
    %v8979 = vpop.f32.mrf.mxu0
    %v8980 = vadd.f32 %v8691, %v8979
    %v8981 = vpop.f32.mrf.mxu0
    %8982 = vmatprep.mubr.bf16.mxu0 0
    %8983 = vmatmul.mubr.bf16.gmra.mxu0 %v8247
    %v8984 = vpop.f32.mrf.mxu0
    %v8985 = vadd.f32 %v8696, %v8984
    %v8986 = vpop.f32.mrf.mxu0
    %v8987 = vpop.f32.mrf.mxu0
    %v8988 = vadd.f32 %v8699, %v8987
    %v8989 = vpop.f32.mrf.mxu0
    %8990 = vmatprep.mubr.bf16.mxu0 0
    %8991 = vmatmul.mubr.bf16.gmra.mxu0 %v8250
    %v8992 = vpop.f32.mrf.mxu0
    %v8993 = vadd.f32 %v8704, %v8992
    %v8994 = vpop.f32.mrf.mxu0
    %v8995 = vpop.f32.mrf.mxu0
    %v8996 = vadd.f32 %v8707, %v8995
    %v8997 = vpop.f32.mrf.mxu0
    %8998 = vmatprep.mubr.bf16.mxu0 0
    %8999 = vmatmul.mubr.bf16.gmra.mxu0 %v8253
    %v9000 = vpop.f32.mrf.mxu0
    %v9001 = vadd.f32 %v8712, %v9000
    %v9002 = vpop.f32.mrf.mxu0
    %v9003 = vpop.f32.mrf.mxu0
    %v9004 = vadd.f32 %v8715, %v9003
    %v9005 = vpop.f32.mrf.mxu0
    %9006 = vmatprep.mubr.bf16.mxu0 0
    %9007 = vmatmul.mubr.bf16.gmra.mxu0 %v8256
    %v9008 = vpop.f32.mrf.mxu0
    %v9009 = vadd.f32 %v8720, %v9008
    %v9010 = vpop.f32.mrf.mxu0
    %v9011 = vpop.f32.mrf.mxu0
    %v9012 = vadd.f32 %v8723, %v9011
    %v9013 = vpop.f32.mrf.mxu0
    %9014 = vmatprep.mubr.bf16.mxu0 0
    %9015 = vmatmul.mubr.bf16.gmra.mxu0 %v8259
    %v9016 = vpop.f32.mrf.mxu0
    %v9017 = vadd.f32 %v8728, %v9016
    %v9018 = vpop.f32.mrf.mxu0
    %v9019 = vpop.f32.mrf.mxu0
    %v9020 = vadd.f32 %v8731, %v9019
    %v9021 = vpop.f32.mrf.mxu0
    %9022 = vmatprep.mubr.bf16.mxu0 0
    %9023 = vmatmul.mubr.bf16.gmra.mxu0 %v8262
    %v9024 = vpop.f32.mrf.mxu0
    %v9025 = vadd.f32 %v8736, %v9024
    %v9026 = vpop.f32.mrf.mxu0
    %v9027 = vpop.f32.mrf.mxu0
    %v9028 = vadd.f32 %v8739, %v9027
    %v9029 = vpop.f32.mrf.mxu0
    %9030 = vmatprep.mubr.bf16.mxu0 0
    %9031 = vmatmul.mubr.bf16.gmra.mxu0 %v8265
    %v9032 = vpop.f32.mrf.mxu0
    %v9033 = vadd.f32 %v8744, %v9032
    %v9034 = vpop.f32.mrf.mxu0
    %v9035 = vpop.f32.mrf.mxu0
    %v9036 = vadd.f32 %v8747, %v9035
    %v9037 = vpop.f32.mrf.mxu0
    %9038 = vmatprep.mubr.bf16.mxu0 0
    %9039 = vmatmul.mubr.bf16.gmra.mxu0 %v8268
    %v9040 = vpop.f32.mrf.mxu0
    %v9041 = vadd.f32 %v8752, %v9040
    %v9042 = vpop.f32.mrf.mxu0
    %v9043 = vpop.f32.mrf.mxu0
    %v9044 = vadd.f32 %v8755, %v9043
    %v9045 = vpop.f32.mrf.mxu0
    %9046 = vmatprep.mubr.bf16.mxu0 0
    %9047 = vmatmul.mubr.bf16.gmra.mxu0 %v8271
    %v9048 = vpop.f32.mrf.mxu0
    %v9049 = vadd.f32 %v8760, %v9048
    %v9050 = vpop.f32.mrf.mxu0
    %v9051 = vpop.f32.mrf.mxu0
    %v9052 = vadd.f32 %v8763, %v9051
    %v9053 = vpop.f32.mrf.mxu0
    %9054 = vmatprep.mubr.bf16.mxu0 0
    %9055 = vmatmul.mubr.bf16.gmra.mxu0 %v8274
    %v9056 = vpop.f32.mrf.mxu0
    %v9057 = vadd.f32 %v8768, %v9056
    %v9058 = vpop.f32.mrf.mxu0
    %v9059 = vpop.f32.mrf.mxu0
    %v9060 = vadd.f32 %v8771, %v9059
    %v9061 = vpop.f32.mrf.mxu0
    %9062 = vmatprep.mubr.bf16.mxu0 0
    %9063 = vmatmul.mubr.bf16.gmra.mxu0 %v8277
    %v9064 = vpop.f32.mrf.mxu0
    %v9065 = vadd.f32 %v8776, %v9064
    %v9066 = vpop.f32.mrf.mxu0
    %v9067 = vpop.f32.mrf.mxu0
    %v9068 = vadd.f32 %v8779, %v9067
    %v9069 = vpop.f32.mrf.mxu0
    %9070 = vmatprep.mubr.bf16.mxu0 0
    %9071 = vmatmul.mubr.bf16.gmra.mxu0 %v8280
    %v9072 = vpop.f32.mrf.mxu0
    %v9073 = vadd.f32 %v8784, %v9072
    %v9074 = vpop.f32.mrf.mxu0
    %v9075 = vpop.f32.mrf.mxu0
    %v9076 = vadd.f32 %v8787, %v9075
    %v9077 = vpop.f32.mrf.mxu0
    %9078 = vmatprep.mubr.bf16.mxu0 0
    %9079 = vmatmul.mubr.bf16.gmra.mxu0 %v8283
    %v9080 = vpop.f32.mrf.mxu0
    %v9081 = vadd.f32 %v8792, %v9080
    %v9082 = vpop.f32.mrf.mxu0
    %v9083 = vpop.f32.mrf.mxu0
    %v9084 = vadd.f32 %v8795, %v9083
    %v9085 = vpop.f32.mrf.mxu0
    %9086 = vmatprep.mubr.bf16.mxu0 0
    %9087 = vmatmul.mubr.bf16.gmra.mxu0 %v8286
    %v9088 = vpop.f32.mrf.mxu0
    %v9089 = vadd.f32 %v8800, %v9088
    %v9090 = vpop.f32.mrf.mxu0
    %v9091 = vpop.f32.mrf.mxu0
    %v9092 = vadd.f32 %v8803, %v9091
    %v9093 = vpop.f32.mrf.mxu0
    %9094 = vmatprep.mubr.bf16.mxu0 0
    %9095 = vmatmul.mubr.bf16.gmra.mxu0 %v8289
    %v9096 = vpop.f32.mrf.mxu0
    %v9097 = vadd.f32 %v8808, %v9096
    %v9098 = vpop.f32.mrf.mxu0
    %v9099 = vpop.f32.mrf.mxu0
    %v9100 = vadd.f32 %v8811, %v9099
    %v9101 = vpop.f32.mrf.mxu0
    %9102 = vmatprep.mubr.bf16.mxu0 0
    %9103 = vmatmul.mubr.bf16.gmra.mxu0 %v8292
    %v9104 = vpop.f32.mrf.mxu0
    %v9105 = vadd.f32 %v8816, %v9104
    %v9106 = vpop.f32.mrf.mxu0
    %v9107 = vpop.f32.mrf.mxu0
    %v9108 = vadd.f32 %v8819, %v9107
    %v9109 = vpop.f32.mrf.mxu0
    %9110 = vdwg.mxu0
    %v9239 = vunpack.c.l.b16 %v7524
    %v9240 = vunpack.c.h.b16 %v7524
    %v9241 = vunpack.c.l.b16 %v7525
    %v9242 = vunpack.c.l.b16 %v7526
    %v9243 = vunpack.c.h.b16 %v7526
    %v9244 = vunpack.c.l.b16 %v7527
    %v9245 = vunpack.c.l.b16 %v7528
    %v9246 = vunpack.c.h.b16 %v7528
    %v9247 = vunpack.c.l.b16 %v7529
    %v9248 = vunpack.c.l.b16 %v7530
    %v9249 = vunpack.c.h.b16 %v7530
    %v9250 = vunpack.c.l.b16 %v7531
    %v9251 = vunpack.c.l.b16 %v7532
    %v9252 = vunpack.c.h.b16 %v7532
    %v9253 = vunpack.c.l.b16 %v7533
    %v9254 = vunpack.c.l.b16 %v7534
    %v9255 = vunpack.c.h.b16 %v7534
    %v9256 = vunpack.c.l.b16 %v7535
    %v9257 = vunpack.c.l.b16 %v7536
    %v9258 = vunpack.c.h.b16 %v7536
    %v9259 = vunpack.c.l.b16 %v7537
    %v9260 = vunpack.c.l.b16 %v7538
    %v9261 = vunpack.c.h.b16 %v7538
    %v9262 = vunpack.c.l.b16 %v7539
    %v9263 = vunpack.c.l.b16 %v7540
    %v9264 = vunpack.c.h.b16 %v7540
    %v9265 = vunpack.c.l.b16 %v7541
    %v9266 = vunpack.c.l.b16 %v7542
    %v9267 = vunpack.c.h.b16 %v7542
    %v9268 = vunpack.c.l.b16 %v7543
    %v9269 = vunpack.c.l.b16 %v7544
    %v9270 = vunpack.c.h.b16 %v7544
    %v9271 = vunpack.c.l.b16 %v7545
    %v9272 = vunpack.c.l.b16 %v7546
    %v9273 = vunpack.c.h.b16 %v7546
    %v9274 = vunpack.c.l.b16 %v7547
    %v9275 = vunpack.c.l.b16 %v7548
    %v9276 = vunpack.c.h.b16 %v7548
    %v9277 = vunpack.c.l.b16 %v7549
    %v9278 = vunpack.c.l.b16 %v7550
    %v9279 = vunpack.c.h.b16 %v7550
    %v9280 = vunpack.c.l.b16 %v7551
    %v9281 = vunpack.c.l.b16 %v7552
    %v9282 = vunpack.c.h.b16 %v7552
    %v9283 = vunpack.c.l.b16 %v7553
    %v9284 = vunpack.c.l.b16 %v7554
    %v9285 = vunpack.c.h.b16 %v7554
    %v9286 = vunpack.c.l.b16 %v7555
    %v9287 = vunpack.c.l.b16 %v7556
    %v9288 = vunpack.c.h.b16 %v7556
    %v9289 = vunpack.c.l.b16 %v7557
    %v9290 = vunpack.c.l.b16 %v7558
    %v9291 = vunpack.c.h.b16 %v7558
    %v9292 = vunpack.c.l.b16 %v7559
    %v9293 = vunpack.c.l.b16 %v7560
    %v9294 = vunpack.c.h.b16 %v7560
    %v9295 = vunpack.c.l.b16 %v7561
    %v9296 = vunpack.c.l.b16 %v7562
    %v9297 = vunpack.c.h.b16 %v7562
    %v9298 = vunpack.c.l.b16 %v7563
    %v9299 = vunpack.c.l.b16 %v7564
    %v9300 = vunpack.c.h.b16 %v7564
    %v9301 = vunpack.c.l.b16 %v7565
    %v9302 = vunpack.c.l.b16 %v7566
    %v9303 = vunpack.c.h.b16 %v7566
    %v9304 = vunpack.c.l.b16 %v7567
    %v9305 = vunpack.c.l.b16 %v7568
    %v9306 = vunpack.c.h.b16 %v7568
    %v9307 = vunpack.c.l.b16 %v7569
    %v9308 = vunpack.c.l.b16 %v7570
    %v9309 = vunpack.c.h.b16 %v7570
    %v9310 = vunpack.c.l.b16 %v7571
    %v9311 = vunpack.c.l.b16 %v7572
    %v9312 = vunpack.c.h.b16 %v7572
    %v9313 = vunpack.c.l.b16 %v7573
    %v9314 = vunpack.c.l.b16 %v7574
    %v9315 = vunpack.c.h.b16 %v7574
    %v9316 = vunpack.c.l.b16 %v7575
    %v9317 = vunpack.c.l.b16 %v7576
    %v9318 = vunpack.c.h.b16 %v7576
    %v9319 = vunpack.c.l.b16 %v7577
    %v9320 = vunpack.c.l.b16 %v7578
    %v9321 = vunpack.c.h.b16 %v7578
    %v9322 = vunpack.c.l.b16 %v7579
    %v9323 = vunpack.c.l.b16 %v7580
    %v9324 = vunpack.c.h.b16 %v7580
    %v9325 = vunpack.c.l.b16 %v7581
    %v9326 = vunpack.c.l.b16 %v7582
    %v9327 = vunpack.c.h.b16 %v7582
    %v9328 = vunpack.c.l.b16 %v7583
    %v9329 = vunpack.c.l.b16 %v7584
    %v9330 = vunpack.c.h.b16 %v7584
    %v9331 = vunpack.c.l.b16 %v7585
    %v9332 = vunpack.c.l.b16 %v7586
    %v9333 = vunpack.c.h.b16 %v7586
    %v9334 = vunpack.c.l.b16 %v7587
    %v9335 = vunpack.c.l.b16 %v7588
    %v9336 = vunpack.c.h.b16 %v7588
    %v9337 = vunpack.c.l.b16 %v7589
    %v9338 = vunpack.c.l.b16 %v7590
    %v9339 = vunpack.c.h.b16 %v7590
    %v9340 = vunpack.c.l.b16 %v7591
    %v9341 = vunpack.c.l.b16 %v7592
    %v9342 = vunpack.c.h.b16 %v7592
    %v9343 = vunpack.c.l.b16 %v7593
    %v9344 = vunpack.c.l.b16 %v7594
    %v9345 = vunpack.c.h.b16 %v7594
    %v9346 = vunpack.c.l.b16 %v7595
    %v9347 = vunpack.c.l.b16 %v7596
    %v9348 = vunpack.c.h.b16 %v7596
    %v9349 = vunpack.c.l.b16 %v7597
    %v9350 = vunpack.c.l.b16 %v7598
    %v9351 = vunpack.c.h.b16 %v7598
    %v9352 = vunpack.c.l.b16 %v7599
    %v9353 = vunpack.c.l.b16 %v7600
    %v9354 = vunpack.c.h.b16 %v7600
    %v9355 = vunpack.c.l.b16 %v7601
    %v9356 = vunpack.c.l.b16 %v7602
    %v9357 = vunpack.c.h.b16 %v7602
    %v9358 = vunpack.c.l.b16 %v7603
    %v9359 = vunpack.c.l.b16 %v7604
    %v9360 = vunpack.c.h.b16 %v7604
    %v9361 = vunpack.c.l.b16 %v7605
    %v9362 = vunpack.c.l.b16 %v7606
    %v9363 = vunpack.c.h.b16 %v7606
    %v9364 = vunpack.c.l.b16 %v7607
    %v9365 = vunpack.c.l.b16 %v7608
    %v9366 = vunpack.c.h.b16 %v7608
    %v9367 = vunpack.c.l.b16 %v7609
    %v9368 = vunpack.c.l.b16 %v7610
    %v9369 = vunpack.c.h.b16 %v7610
    %v9370 = vunpack.c.l.b16 %v7611
    %v9371 = vunpack.c.l.b16 %v7612
    %v9372 = vunpack.c.h.b16 %v7612
    %v9373 = vunpack.c.l.b16 %v7613
    %v9374 = vunpack.c.l.b16 %v7614
    %v9375 = vunpack.c.h.b16 %v7614
    %v9376 = vunpack.c.l.b16 %v7615
    %v9377 = vunpack.c.l.b16 %v7616
    %v9378 = vunpack.c.h.b16 %v7616
    %v9379 = vunpack.c.l.b16 %v7617
    %v9380 = vunpack.c.l.b16 %v7618
    %v9381 = vunpack.c.h.b16 %v7618
    %v9382 = vunpack.c.l.b16 %v7619
    %v9383 = vunpack.c.l.b16 %v7620
    %v9384 = vunpack.c.h.b16 %v7620
    %v9385 = vunpack.c.l.b16 %v7621
    %v9386 = vunpack.c.l.b16 %v7622
    %v9387 = vunpack.c.h.b16 %v7622
    %v9388 = vunpack.c.l.b16 %v7623
    %v9389 = vunpack.c.l.b16 %v7624
    %v9390 = vunpack.c.h.b16 %v7624
    %v9391 = vunpack.c.l.b16 %v7625
    %v9392 = vunpack.c.l.b16 %v7626
    %v9393 = vunpack.c.h.b16 %v7626
    %v9394 = vunpack.c.l.b16 %v7627
    %v9395 = vunpack.c.l.b16 %v7628
    %v9396 = vunpack.c.h.b16 %v7628
    %v9397 = vunpack.c.l.b16 %v7629
    %v9398 = vunpack.c.l.b16 %v7630
    %v9399 = vunpack.c.h.b16 %v7630
    %v9400 = vunpack.c.l.b16 %v7631
    %v9401 = vunpack.c.l.b16 %v7632
    %v9402 = vunpack.c.h.b16 %v7632
    %v9403 = vunpack.c.l.b16 %v7633
    %v9404 = vunpack.c.l.b16 %v7634
    %v9405 = vunpack.c.h.b16 %v7634
    %v9406 = vunpack.c.l.b16 %v7635
    %v9407 = vunpack.c.l.b16 %v7636
    %v9408 = vunpack.c.h.b16 %v7636
    %v9409 = vunpack.c.l.b16 %v7637
    %v9410 = vunpack.c.l.b16 %v7638
    %v9411 = vunpack.c.h.b16 %v7638
    %v9412 = vunpack.c.l.b16 %v7639
    %v9413 = vunpack.c.l.b16 %v7640
    %v9414 = vunpack.c.h.b16 %v7640
    %v9415 = vunpack.c.l.b16 %v7641
    %v9416 = vunpack.c.l.b16 %v7642
    %v9417 = vunpack.c.h.b16 %v7642
    %v9418 = vunpack.c.l.b16 %v7643
    %v9419 = vunpack.c.l.b16 %v7644
    %v9420 = vunpack.c.h.b16 %v7644
    %v9421 = vunpack.c.l.b16 %v7645
    %v9422 = vunpack.c.l.b16 %v7646
    %v9423 = vunpack.c.h.b16 %v7646
    %v9424 = vunpack.c.l.b16 %v7647
    %v9425 = vunpack.c.l.b16 %v7648
    %v9426 = vunpack.c.h.b16 %v7648
    %v9427 = vunpack.c.l.b16 %v7649
    %v9428 = vunpack.c.l.b16 %v7650
    %v9429 = vunpack.c.h.b16 %v7650
    %v9430 = vunpack.c.l.b16 %v7651
    %v9431 = vpack.c.b16 %v9242, %v9239
    %v9432 = vpack.c.b16 %v9243, %v9240
    %v9433 = vpack.c.b16 %v9244, %v9241
    %v9434 = vpack.c.b16 %v9248, %v9245
    %v9435 = vpack.c.b16 %v9249, %v9246
    %v9436 = vpack.c.b16 %v9250, %v9247
    %v9437 = vpack.c.b16 %v9254, %v9251
    %v9438 = vpack.c.b16 %v9255, %v9252
    %v9439 = vpack.c.b16 %v9256, %v9253
    %v9440 = vpack.c.b16 %v9260, %v9257
    %v9441 = vpack.c.b16 %v9261, %v9258
    %v9442 = vpack.c.b16 %v9262, %v9259
    %v9443 = vpack.c.b16 %v9266, %v9263
    %v9444 = vpack.c.b16 %v9267, %v9264
    %v9445 = vpack.c.b16 %v9268, %v9265
    %v9446 = vpack.c.b16 %v9272, %v9269
    %v9447 = vpack.c.b16 %v9273, %v9270
    %v9448 = vpack.c.b16 %v9274, %v9271
    %v9449 = vpack.c.b16 %v9278, %v9275
    %v9450 = vpack.c.b16 %v9279, %v9276
    %v9451 = vpack.c.b16 %v9280, %v9277
    %v9452 = vpack.c.b16 %v9284, %v9281
    %v9453 = vpack.c.b16 %v9285, %v9282
    %v9454 = vpack.c.b16 %v9286, %v9283
    %v9455 = vpack.c.b16 %v9290, %v9287
    %v9456 = vpack.c.b16 %v9291, %v9288
    %v9457 = vpack.c.b16 %v9292, %v9289
    %v9458 = vpack.c.b16 %v9296, %v9293
    %v9459 = vpack.c.b16 %v9297, %v9294
    %v9460 = vpack.c.b16 %v9298, %v9295
    %v9461 = vpack.c.b16 %v9302, %v9299
    %v9462 = vpack.c.b16 %v9303, %v9300
    %v9463 = vpack.c.b16 %v9304, %v9301
    %v9464 = vpack.c.b16 %v9308, %v9305
    %v9465 = vpack.c.b16 %v9309, %v9306
    %v9466 = vpack.c.b16 %v9310, %v9307
    %v9467 = vpack.c.b16 %v9314, %v9311
    %v9468 = vpack.c.b16 %v9315, %v9312
    %v9469 = vpack.c.b16 %v9316, %v9313
    %v9470 = vpack.c.b16 %v9320, %v9317
    %v9471 = vpack.c.b16 %v9321, %v9318
    %v9472 = vpack.c.b16 %v9322, %v9319
    %v9473 = vpack.c.b16 %v9326, %v9323
    %v9474 = vpack.c.b16 %v9327, %v9324
    %v9475 = vpack.c.b16 %v9328, %v9325
    %v9476 = vpack.c.b16 %v9332, %v9329
    %v9477 = vpack.c.b16 %v9333, %v9330
    %v9478 = vpack.c.b16 %v9334, %v9331
    %v9479 = vpack.c.b16 %v9338, %v9335
    %v9480 = vpack.c.b16 %v9339, %v9336
    %v9481 = vpack.c.b16 %v9340, %v9337
    %v9482 = vpack.c.b16 %v9344, %v9341
    %v9483 = vpack.c.b16 %v9345, %v9342
    %v9484 = vpack.c.b16 %v9346, %v9343
    %v9485 = vpack.c.b16 %v9350, %v9347
    %v9486 = vpack.c.b16 %v9351, %v9348
    %v9487 = vpack.c.b16 %v9352, %v9349
    %v9488 = vpack.c.b16 %v9356, %v9353
    %v9489 = vpack.c.b16 %v9357, %v9354
    %v9490 = vpack.c.b16 %v9358, %v9355
    %v9491 = vpack.c.b16 %v9362, %v9359
    %v9492 = vpack.c.b16 %v9363, %v9360
    %v9493 = vpack.c.b16 %v9364, %v9361
    %v9494 = vpack.c.b16 %v9368, %v9365
    %v9495 = vpack.c.b16 %v9369, %v9366
    %v9496 = vpack.c.b16 %v9370, %v9367
    %v9497 = vpack.c.b16 %v9374, %v9371
    %v9498 = vpack.c.b16 %v9375, %v9372
    %v9499 = vpack.c.b16 %v9376, %v9373
    %v9500 = vpack.c.b16 %v9380, %v9377
    %v9501 = vpack.c.b16 %v9381, %v9378
    %v9502 = vpack.c.b16 %v9382, %v9379
    %v9503 = vpack.c.b16 %v9386, %v9383
    %v9504 = vpack.c.b16 %v9387, %v9384
    %v9505 = vpack.c.b16 %v9388, %v9385
    %v9506 = vpack.c.b16 %v9392, %v9389
    %v9507 = vpack.c.b16 %v9393, %v9390
    %v9508 = vpack.c.b16 %v9394, %v9391
    %v9509 = vpack.c.b16 %v9398, %v9395
    %v9510 = vpack.c.b16 %v9399, %v9396
    %v9511 = vpack.c.b16 %v9400, %v9397
    %v9512 = vpack.c.b16 %v9404, %v9401
    %v9513 = vpack.c.b16 %v9405, %v9402
    %v9514 = vpack.c.b16 %v9406, %v9403
    %v9515 = vpack.c.b16 %v9410, %v9407
    %v9516 = vpack.c.b16 %v9411, %v9408
    %v9517 = vpack.c.b16 %v9412, %v9409
    %v9518 = vpack.c.b16 %v9416, %v9413
    %v9519 = vpack.c.b16 %v9417, %v9414
    %v9520 = vpack.c.b16 %v9418, %v9415
    %v9521 = vpack.c.b16 %v9422, %v9419
    %v9522 = vpack.c.b16 %v9423, %v9420
    %v9523 = vpack.c.b16 %v9424, %v9421
    %v9524 = vpack.c.b16 %v9428, %v9425
    %v9525 = vpack.c.b16 %v9429, %v9426
    %v9526 = vpack.c.b16 %v9430, %v9427
    %v9671 = vunpack.c.l.b16 %v7652
    %v9672 = vunpack.c.l.b16 %v7653
    %v9673 = vunpack.c.l.b16 %v7654
    %v9674 = vunpack.c.l.b16 %v7655
    %v9675 = vunpack.c.l.b16 %v7656
    %v9676 = vunpack.c.l.b16 %v7657
    %v9677 = vunpack.c.l.b16 %v7658
    %v9678 = vunpack.c.l.b16 %v7659
    %v9679 = vunpack.c.l.b16 %v7660
    %v9680 = vunpack.c.l.b16 %v7661
    %v9681 = vunpack.c.l.b16 %v7662
    %v9682 = vunpack.c.l.b16 %v7663
    %v9683 = vunpack.c.l.b16 %v7664
    %v9684 = vunpack.c.l.b16 %v7665
    %v9685 = vunpack.c.l.b16 %v7666
    %v9686 = vunpack.c.l.b16 %v7667
    %v9687 = vunpack.c.l.b16 %v7668
    %v9688 = vunpack.c.l.b16 %v7669
    %v9689 = vunpack.c.l.b16 %v7670
    %v9690 = vunpack.c.l.b16 %v7671
    %v9691 = vunpack.c.l.b16 %v7672
    %v9692 = vunpack.c.l.b16 %v7673
    %v9693 = vunpack.c.l.b16 %v7674
    %v9694 = vunpack.c.l.b16 %v7675
    %v9695 = vunpack.c.l.b16 %v7676
    %v9696 = vunpack.c.l.b16 %v7677
    %v9697 = vunpack.c.l.b16 %v7678
    %v9698 = vunpack.c.l.b16 %v7679
    %v9699 = vunpack.c.l.b16 %v7680
    %v9700 = vunpack.c.l.b16 %v7681
    %v9701 = vunpack.c.l.b16 %v7682
    %v9702 = vunpack.c.l.b16 %v7683
    %v9703 = vunpack.c.l.b16 %v7684
    %v9704 = vunpack.c.l.b16 %v7685
    %v9705 = vunpack.c.l.b16 %v7686
    %v9706 = vunpack.c.l.b16 %v7687
    %v9707 = vunpack.c.l.b16 %v7688
    %v9708 = vunpack.c.l.b16 %v7689
    %v9709 = vunpack.c.l.b16 %v7690
    %v9710 = vunpack.c.l.b16 %v7691
    %v9711 = vunpack.c.l.b16 %v7692
    %v9712 = vunpack.c.l.b16 %v7693
    %v9713 = vunpack.c.l.b16 %v7694
    %v9714 = vunpack.c.l.b16 %v7695
    %v9715 = vunpack.c.l.b16 %v7696
    %v9716 = vunpack.c.l.b16 %v7697
    %v9717 = vunpack.c.l.b16 %v7698
    %v9718 = vunpack.c.l.b16 %v7699
    %v9719 = vpack.c.b16 %v9672, %v9671
    %v9720 = vpack.c.b16 %v9674, %v9673
    %v9721 = vpack.c.b16 %v9676, %v9675
    %v9722 = vpack.c.b16 %v9678, %v9677
    %v9723 = vpack.c.b16 %v9680, %v9679
    %v9724 = vpack.c.b16 %v9682, %v9681
    %v9725 = vpack.c.b16 %v9684, %v9683
    %v9726 = vpack.c.b16 %v9686, %v9685
    %v9727 = vpack.c.b16 %v9688, %v9687
    %v9728 = vpack.c.b16 %v9690, %v9689
    %v9729 = vpack.c.b16 %v9692, %v9691
    %v9730 = vpack.c.b16 %v9694, %v9693
    %v9731 = vpack.c.b16 %v9696, %v9695
    %v9732 = vpack.c.b16 %v9698, %v9697
    %v9733 = vpack.c.b16 %v9700, %v9699
    %v9734 = vpack.c.b16 %v9702, %v9701
    %v9735 = vpack.c.b16 %v9704, %v9703
    %v9736 = vpack.c.b16 %v9706, %v9705
    %v9737 = vpack.c.b16 %v9708, %v9707
    %v9738 = vpack.c.b16 %v9710, %v9709
    %v9739 = vpack.c.b16 %v9712, %v9711
    %v9740 = vpack.c.b16 %v9714, %v9713
    %v9741 = vpack.c.b16 %v9716, %v9715
    %v9742 = vpack.c.b16 %v9718, %v9717
    %9767 = vmatprep.subr.bf16.mxu0 0
    %9768 = vmatpush1.bf16.msra.mxu0 %v9726
    %9769 = vmatprep.subr.bf16.mxu0 0
    %9770 = vmatpush1.bf16.msra.mxu0 %v9725
    %9771 = vmatprep.subr.bf16.mxu0 0
    %9772 = vmatpush1.bf16.msra.mxu0 %v9724
    %9773 = vmatprep.subr.bf16.mxu0 0
    %9774 = vmatpush1.bf16.msra.mxu0 %v9723
    %9775 = vmatprep.subr.bf16.mxu0 0
    %9776 = vmatpush1.bf16.msra.mxu0 %v9722
    %9777 = vmatprep.subr.bf16.mxu0 0
    %9778 = vmatpush1.bf16.msra.mxu0 %v9721
    %9779 = vmatprep.subr.bf16.mxu0 0
    %9780 = vmatpush1.bf16.msra.mxu0 %v9720
    %9781 = vmatprep.subr.bf16.mxu0 0
    %9782 = vmatpush1.bf16.msra.mxu0 %v9719
    %9783 = vmatprep.subr.bf16.mxu0 0
    %9784 = vmatpush2.bf16.msra.mxu0 %v9734
    %9785 = vmatprep.subr.bf16.mxu0 0
    %9786 = vmatpush2.bf16.msra.mxu0 %v9733
    %9787 = vmatprep.subr.bf16.mxu0 0
    %9788 = vmatpush2.bf16.msra.mxu0 %v9732
    %9789 = vmatprep.subr.bf16.mxu0 0
    %9790 = vmatpush2.bf16.msra.mxu0 %v9731
    %9791 = vmatprep.subr.bf16.mxu0 0
    %9792 = vmatpush2.bf16.msra.mxu0 %v9730
    %9793 = vmatprep.subr.bf16.mxu0 0
    %9794 = vmatpush2.bf16.msra.mxu0 %v9729
    %9795 = vmatprep.subr.bf16.mxu0 0
    %9796 = vmatpush2.bf16.msra.mxu0 %v9728
    %9797 = vmatprep.subr.bf16.mxu0 0
    %9798 = vmatpush2.bf16.msra.mxu0 %v9727
    %9799 = vmatprep.mubr.bf16.mxu0 %v9432
    %9800 = vmatmul.mubr.bf16.gmra.mxu0 %v9431
    %v9801 = vpop.f32.mrf.mxu0
    %v9802 = vadd.f32 %v8857, %v9801
    %v9803 = vpop.f32.mrf.mxu0
    %v9804 = vpop.f32.mrf.mxu0
    %v9805 = vadd.f32 %v8860, %v9804
    %v9806 = vpop.f32.mrf.mxu0
    %9807 = vmatprep.mubr.bf16.mxu0 %v9435
    %9808 = vmatmul.mubr.bf16.gmra.mxu0 %v9434
    %v9809 = vpop.f32.mrf.mxu0
    %v9810 = vadd.f32 %v8865, %v9809
    %v9811 = vpop.f32.mrf.mxu0
    %v9812 = vpop.f32.mrf.mxu0
    %v9813 = vadd.f32 %v8868, %v9812
    %v9814 = vpop.f32.mrf.mxu0
    %9815 = vmatprep.mubr.bf16.mxu0 %v9438
    %9816 = vmatmul.mubr.bf16.gmra.mxu0 %v9437
    %v9817 = vpop.f32.mrf.mxu0
    %v9818 = vadd.f32 %v8873, %v9817
    %v9819 = vpop.f32.mrf.mxu0
    %v9820 = vpop.f32.mrf.mxu0
    %v9821 = vadd.f32 %v8876, %v9820
    %v9822 = vpop.f32.mrf.mxu0
    %9823 = vmatprep.mubr.bf16.mxu0 %v9441
    %9824 = vmatmul.mubr.bf16.gmra.mxu0 %v9440
    %v9825 = vpop.f32.mrf.mxu0
    %v9826 = vadd.f32 %v8881, %v9825
    %v9827 = vpop.f32.mrf.mxu0
    %v9828 = vpop.f32.mrf.mxu0
    %v9829 = vadd.f32 %v8884, %v9828
    %v9830 = vpop.f32.mrf.mxu0
    %9831 = vmatprep.mubr.bf16.mxu0 %v9444
    %9832 = vmatmul.mubr.bf16.gmra.mxu0 %v9443
    %v9833 = vpop.f32.mrf.mxu0
    %v9834 = vadd.f32 %v8889, %v9833
    %v9835 = vpop.f32.mrf.mxu0
    %v9836 = vpop.f32.mrf.mxu0
    %v9837 = vadd.f32 %v8892, %v9836
    %v9838 = vpop.f32.mrf.mxu0
    %9839 = vmatprep.mubr.bf16.mxu0 %v9447
    %9840 = vmatmul.mubr.bf16.gmra.mxu0 %v9446
    %v9841 = vpop.f32.mrf.mxu0
    %v9842 = vadd.f32 %v8897, %v9841
    %v9843 = vpop.f32.mrf.mxu0
    %v9844 = vpop.f32.mrf.mxu0
    %v9845 = vadd.f32 %v8900, %v9844
    %v9846 = vpop.f32.mrf.mxu0
    %9847 = vmatprep.mubr.bf16.mxu0 %v9450
    %9848 = vmatmul.mubr.bf16.gmra.mxu0 %v9449
    %v9849 = vpop.f32.mrf.mxu0
    %v9850 = vadd.f32 %v8905, %v9849
    %v9851 = vpop.f32.mrf.mxu0
    %v9852 = vpop.f32.mrf.mxu0
    %v9853 = vadd.f32 %v8908, %v9852
    %v9854 = vpop.f32.mrf.mxu0
    %9855 = vmatprep.mubr.bf16.mxu0 %v9453
    %9856 = vmatmul.mubr.bf16.gmra.mxu0 %v9452
    %v9857 = vpop.f32.mrf.mxu0
    %v9858 = vadd.f32 %v8913, %v9857
    %v9859 = vpop.f32.mrf.mxu0
    %v9860 = vpop.f32.mrf.mxu0
    %v9861 = vadd.f32 %v8916, %v9860
    %v9862 = vpop.f32.mrf.mxu0
    %9863 = vmatprep.mubr.bf16.mxu0 %v9456
    %9864 = vmatmul.mubr.bf16.gmra.mxu0 %v9455
    %v9865 = vpop.f32.mrf.mxu0
    %v9866 = vadd.f32 %v8921, %v9865
    %v9867 = vpop.f32.mrf.mxu0
    %v9868 = vpop.f32.mrf.mxu0
    %v9869 = vadd.f32 %v8924, %v9868
    %v9870 = vpop.f32.mrf.mxu0
    %9871 = vmatprep.mubr.bf16.mxu0 %v9459
    %9872 = vmatmul.mubr.bf16.gmra.mxu0 %v9458
    %v9873 = vpop.f32.mrf.mxu0
    %v9874 = vadd.f32 %v8929, %v9873
    %v9875 = vpop.f32.mrf.mxu0
    %v9876 = vpop.f32.mrf.mxu0
    %v9877 = vadd.f32 %v8932, %v9876
    %v9878 = vpop.f32.mrf.mxu0
    %9879 = vmatprep.mubr.bf16.mxu0 %v9462
    %9880 = vmatmul.mubr.bf16.gmra.mxu0 %v9461
    %v9881 = vpop.f32.mrf.mxu0
    %v9882 = vadd.f32 %v8937, %v9881
    %v9883 = vpop.f32.mrf.mxu0
    %v9884 = vpop.f32.mrf.mxu0
    %v9885 = vadd.f32 %v8940, %v9884
    %v9886 = vpop.f32.mrf.mxu0
    %9887 = vmatprep.mubr.bf16.mxu0 %v9465
    %9888 = vmatmul.mubr.bf16.gmra.mxu0 %v9464
    %v9889 = vpop.f32.mrf.mxu0
    %v9890 = vadd.f32 %v8945, %v9889
    %v9891 = vpop.f32.mrf.mxu0
    %v9892 = vpop.f32.mrf.mxu0
    %v9893 = vadd.f32 %v8948, %v9892
    %v9894 = vpop.f32.mrf.mxu0
    %9895 = vmatprep.mubr.bf16.mxu0 %v9468
    %9896 = vmatmul.mubr.bf16.gmra.mxu0 %v9467
    %v9897 = vpop.f32.mrf.mxu0
    %v9898 = vadd.f32 %v8953, %v9897
    %v9899 = vpop.f32.mrf.mxu0
    %v9900 = vpop.f32.mrf.mxu0
    %v9901 = vadd.f32 %v8956, %v9900
    %v9902 = vpop.f32.mrf.mxu0
    %9903 = vmatprep.mubr.bf16.mxu0 %v9471
    %9904 = vmatmul.mubr.bf16.gmra.mxu0 %v9470
    %v9905 = vpop.f32.mrf.mxu0
    %v9906 = vadd.f32 %v8961, %v9905
    %v9907 = vpop.f32.mrf.mxu0
    %v9908 = vpop.f32.mrf.mxu0
    %v9909 = vadd.f32 %v8964, %v9908
    %v9910 = vpop.f32.mrf.mxu0
    %9911 = vmatprep.mubr.bf16.mxu0 %v9474
    %9912 = vmatmul.mubr.bf16.gmra.mxu0 %v9473
    %v9913 = vpop.f32.mrf.mxu0
    %v9914 = vadd.f32 %v8969, %v9913
    %v9915 = vpop.f32.mrf.mxu0
    %v9916 = vpop.f32.mrf.mxu0
    %v9917 = vadd.f32 %v8972, %v9916
    %v9918 = vpop.f32.mrf.mxu0
    %9919 = vmatprep.mubr.bf16.mxu0 %v9477
    %9920 = vmatmul.mubr.bf16.gmra.mxu0 %v9476
    %v9921 = vpop.f32.mrf.mxu0
    %v9922 = vadd.f32 %v8977, %v9921
    %v9923 = vpop.f32.mrf.mxu0
    %v9924 = vpop.f32.mrf.mxu0
    %v9925 = vadd.f32 %v8980, %v9924
    %v9926 = vpop.f32.mrf.mxu0
    %9927 = vmatprep.mubr.bf16.mxu0 %v9480
    %9928 = vmatmul.mubr.bf16.gmra.mxu0 %v9479
    %v9929 = vpop.f32.mrf.mxu0
    %v9930 = vadd.f32 %v8985, %v9929
    %v9931 = vpop.f32.mrf.mxu0
    %v9932 = vpop.f32.mrf.mxu0
    %v9933 = vadd.f32 %v8988, %v9932
    %v9934 = vpop.f32.mrf.mxu0
    %9935 = vmatprep.mubr.bf16.mxu0 %v9483
    %9936 = vmatmul.mubr.bf16.gmra.mxu0 %v9482
    %v9937 = vpop.f32.mrf.mxu0
    %v9938 = vadd.f32 %v8993, %v9937
    %v9939 = vpop.f32.mrf.mxu0
    %v9940 = vpop.f32.mrf.mxu0
    %v9941 = vadd.f32 %v8996, %v9940
    %v9942 = vpop.f32.mrf.mxu0
    %9943 = vmatprep.mubr.bf16.mxu0 %v9486
    %9944 = vmatmul.mubr.bf16.gmra.mxu0 %v9485
    %v9945 = vpop.f32.mrf.mxu0
    %v9946 = vadd.f32 %v9001, %v9945
    %v9947 = vpop.f32.mrf.mxu0
    %v9948 = vpop.f32.mrf.mxu0
    %v9949 = vadd.f32 %v9004, %v9948
    %v9950 = vpop.f32.mrf.mxu0
    %9951 = vmatprep.mubr.bf16.mxu0 %v9489
    %9952 = vmatmul.mubr.bf16.gmra.mxu0 %v9488
    %v9953 = vpop.f32.mrf.mxu0
    %v9954 = vadd.f32 %v9009, %v9953
    %v9955 = vpop.f32.mrf.mxu0
    %v9956 = vpop.f32.mrf.mxu0
    %v9957 = vadd.f32 %v9012, %v9956
    %v9958 = vpop.f32.mrf.mxu0
    %9959 = vmatprep.mubr.bf16.mxu0 %v9492
    %9960 = vmatmul.mubr.bf16.gmra.mxu0 %v9491
    %v9961 = vpop.f32.mrf.mxu0
    %v9962 = vadd.f32 %v9017, %v9961
    %v9963 = vpop.f32.mrf.mxu0
    %v9964 = vpop.f32.mrf.mxu0
    %v9965 = vadd.f32 %v9020, %v9964
    %v9966 = vpop.f32.mrf.mxu0
    %9967 = vmatprep.mubr.bf16.mxu0 %v9495
    %9968 = vmatmul.mubr.bf16.gmra.mxu0 %v9494
    %v9969 = vpop.f32.mrf.mxu0
    %v9970 = vadd.f32 %v9025, %v9969
    %v9971 = vpop.f32.mrf.mxu0
    %v9972 = vpop.f32.mrf.mxu0
    %v9973 = vadd.f32 %v9028, %v9972
    %v9974 = vpop.f32.mrf.mxu0
    %9975 = vmatprep.mubr.bf16.mxu0 %v9498
    %9976 = vmatmul.mubr.bf16.gmra.mxu0 %v9497
    %v9977 = vpop.f32.mrf.mxu0
    %v9978 = vadd.f32 %v9033, %v9977
    %v9979 = vpop.f32.mrf.mxu0
    %v9980 = vpop.f32.mrf.mxu0
    %v9981 = vadd.f32 %v9036, %v9980
    %v9982 = vpop.f32.mrf.mxu0
    %9983 = vmatprep.mubr.bf16.mxu0 %v9501
    %9984 = vmatmul.mubr.bf16.gmra.mxu0 %v9500
    %v9985 = vpop.f32.mrf.mxu0
    %v9986 = vadd.f32 %v9041, %v9985
    %v9987 = vpop.f32.mrf.mxu0
    %v9988 = vpop.f32.mrf.mxu0
    %v9989 = vadd.f32 %v9044, %v9988
    %v9990 = vpop.f32.mrf.mxu0
    %9991 = vmatprep.mubr.bf16.mxu0 %v9504
    %9992 = vmatmul.mubr.bf16.gmra.mxu0 %v9503
    %v9993 = vpop.f32.mrf.mxu0
    %v9994 = vadd.f32 %v9049, %v9993
    %v9995 = vpop.f32.mrf.mxu0
    %v9996 = vpop.f32.mrf.mxu0
    %v9997 = vadd.f32 %v9052, %v9996
    %v9998 = vpop.f32.mrf.mxu0
    %9999 = vmatprep.mubr.bf16.mxu0 %v9507
    %10000 = vmatmul.mubr.bf16.gmra.mxu0 %v9506
    %v10001 = vpop.f32.mrf.mxu0
    %v10002 = vadd.f32 %v9057, %v10001
    %v10003 = vpop.f32.mrf.mxu0
    %v10004 = vpop.f32.mrf.mxu0
    %v10005 = vadd.f32 %v9060, %v10004
    %v10006 = vpop.f32.mrf.mxu0
    %10007 = vmatprep.mubr.bf16.mxu0 %v9510
    %10008 = vmatmul.mubr.bf16.gmra.mxu0 %v9509
    %v10009 = vpop.f32.mrf.mxu0
    %v10010 = vadd.f32 %v9065, %v10009
    %v10011 = vpop.f32.mrf.mxu0
    %v10012 = vpop.f32.mrf.mxu0
    %v10013 = vadd.f32 %v9068, %v10012
    %v10014 = vpop.f32.mrf.mxu0
    %10015 = vmatprep.mubr.bf16.mxu0 %v9513
    %10016 = vmatmul.mubr.bf16.gmra.mxu0 %v9512
    %v10017 = vpop.f32.mrf.mxu0
    %v10018 = vadd.f32 %v9073, %v10017
    %v10019 = vpop.f32.mrf.mxu0
    %v10020 = vpop.f32.mrf.mxu0
    %v10021 = vadd.f32 %v9076, %v10020
    %v10022 = vpop.f32.mrf.mxu0
    %10023 = vmatprep.mubr.bf16.mxu0 %v9516
    %10024 = vmatmul.mubr.bf16.gmra.mxu0 %v9515
    %v10025 = vpop.f32.mrf.mxu0
    %v10026 = vadd.f32 %v9081, %v10025
    %v10027 = vpop.f32.mrf.mxu0
    %v10028 = vpop.f32.mrf.mxu0
    %v10029 = vadd.f32 %v9084, %v10028
    %v10030 = vpop.f32.mrf.mxu0
    %10031 = vmatprep.mubr.bf16.mxu0 %v9519
    %10032 = vmatmul.mubr.bf16.gmra.mxu0 %v9518
    %v10033 = vpop.f32.mrf.mxu0
    %v10034 = vadd.f32 %v9089, %v10033
    %v10035 = vpop.f32.mrf.mxu0
    %v10036 = vpop.f32.mrf.mxu0
    %v10037 = vadd.f32 %v9092, %v10036
    %v10038 = vpop.f32.mrf.mxu0
    %10039 = vmatprep.mubr.bf16.mxu0 %v9522
    %10040 = vmatmul.mubr.bf16.gmra.mxu0 %v9521
    %v10041 = vpop.f32.mrf.mxu0
    %v10042 = vadd.f32 %v9097, %v10041
    %v10043 = vpop.f32.mrf.mxu0
    %v10044 = vpop.f32.mrf.mxu0
    %v10045 = vadd.f32 %v9100, %v10044
    %v10046 = vpop.f32.mrf.mxu0
    %10047 = vmatprep.mubr.bf16.mxu0 %v9525
    %10048 = vmatmul.mubr.bf16.gmra.mxu0 %v9524
    %v10049 = vpop.f32.mrf.mxu0
    %v10050 = vadd.f32 %v9105, %v10049
    %v10051 = vpop.f32.mrf.mxu0
    %v10052 = vpop.f32.mrf.mxu0
    %v10053 = vadd.f32 %v9108, %v10052
    %v10054 = vpop.f32.mrf.mxu0
    %10055 = vdwg.mxu0
    %10056 = vmatprep.subr.bf16.mxu0 0
    %10057 = vmatpush1.bf16.msra.mxu0 %v9742
    %10058 = vmatprep.subr.bf16.mxu0 0
    %10059 = vmatpush1.bf16.msra.mxu0 %v9741
    %10060 = vmatprep.subr.bf16.mxu0 0
    %10061 = vmatpush1.bf16.msra.mxu0 %v9740
    %10062 = vmatprep.subr.bf16.mxu0 0
    %10063 = vmatpush1.bf16.msra.mxu0 %v9739
    %10064 = vmatprep.subr.bf16.mxu0 0
    %10065 = vmatpush1.bf16.msra.mxu0 %v9738
    %10066 = vmatprep.subr.bf16.mxu0 0
    %10067 = vmatpush1.bf16.msra.mxu0 %v9737
    %10068 = vmatprep.subr.bf16.mxu0 0
    %10069 = vmatpush1.bf16.msra.mxu0 %v9736
    %10070 = vmatprep.subr.bf16.mxu0 0
    %10071 = vmatpush1.bf16.msra.mxu0 %v9735
    %10072 = vmatprep.subr.bf16.mxu0 0
    %10073 = vmatpush2.bf16.msra.mxu0 0
    %10074 = vmatprep.subr.bf16.mxu0 0
    %10075 = vmatpush2.bf16.msra.mxu0 0
    %10076 = vmatprep.subr.bf16.mxu0 0
    %10077 = vmatpush2.bf16.msra.mxu0 0
    %10078 = vmatprep.subr.bf16.mxu0 0
    %10079 = vmatpush2.bf16.msra.mxu0 0
    %10080 = vmatprep.subr.bf16.mxu0 0
    %10081 = vmatpush2.bf16.msra.mxu0 0
    %10082 = vmatprep.subr.bf16.mxu0 0
    %10083 = vmatpush2.bf16.msra.mxu0 0
    %10084 = vmatprep.subr.bf16.mxu0 0
    %10085 = vmatpush2.bf16.msra.mxu0 0
    %10086 = vmatprep.subr.bf16.mxu0 0
    %10087 = vmatpush2.bf16.msra.mxu0 0
    %10088 = vmatprep.mubr.bf16.mxu0 0
    %10089 = vmatmul.mubr.bf16.gmra.mxu0 %v9433
    %v10090 = vpop.f32.mrf.mxu0
    %v10091 = vadd.f32 %v9802, %v10090
    %v10092 = vpop.f32.mrf.mxu0
    %v10093 = vpop.f32.mrf.mxu0
    %v10094 = vadd.f32 %v9805, %v10093
    %v10095 = vpop.f32.mrf.mxu0
    %10096 = vmatprep.mubr.bf16.mxu0 0
    %10097 = vmatmul.mubr.bf16.gmra.mxu0 %v9436
    %v10098 = vpop.f32.mrf.mxu0
    %v10099 = vadd.f32 %v9810, %v10098
    %v10100 = vpop.f32.mrf.mxu0
    %v10101 = vpop.f32.mrf.mxu0
    %v10102 = vadd.f32 %v9813, %v10101
    %v10103 = vpop.f32.mrf.mxu0
    %10104 = vmatprep.mubr.bf16.mxu0 0
    %10105 = vmatmul.mubr.bf16.gmra.mxu0 %v9439
    %v10106 = vpop.f32.mrf.mxu0
    %v10107 = vadd.f32 %v9818, %v10106
    %v10108 = vpop.f32.mrf.mxu0
    %v10109 = vpop.f32.mrf.mxu0
    %v10110 = vadd.f32 %v9821, %v10109
    %v10111 = vpop.f32.mrf.mxu0
    %10112 = vmatprep.mubr.bf16.mxu0 0
    %10113 = vmatmul.mubr.bf16.gmra.mxu0 %v9442
    %v10114 = vpop.f32.mrf.mxu0
    %v10115 = vadd.f32 %v9826, %v10114
    %v10116 = vpop.f32.mrf.mxu0
    %v10117 = vpop.f32.mrf.mxu0
    %v10118 = vadd.f32 %v9829, %v10117
    %v10119 = vpop.f32.mrf.mxu0
    %10120 = vmatprep.mubr.bf16.mxu0 0
    %10121 = vmatmul.mubr.bf16.gmra.mxu0 %v9445
    %v10122 = vpop.f32.mrf.mxu0
    %v10123 = vadd.f32 %v9834, %v10122
    %v10124 = vpop.f32.mrf.mxu0
    %v10125 = vpop.f32.mrf.mxu0
    %v10126 = vadd.f32 %v9837, %v10125
    %v10127 = vpop.f32.mrf.mxu0
    %10128 = vmatprep.mubr.bf16.mxu0 0
    %10129 = vmatmul.mubr.bf16.gmra.mxu0 %v9448
    %v10130 = vpop.f32.mrf.mxu0
    %v10131 = vadd.f32 %v9842, %v10130
    %v10132 = vpop.f32.mrf.mxu0
    %v10133 = vpop.f32.mrf.mxu0
    %v10134 = vadd.f32 %v9845, %v10133
    %v10135 = vpop.f32.mrf.mxu0
    %10136 = vmatprep.mubr.bf16.mxu0 0
    %10137 = vmatmul.mubr.bf16.gmra.mxu0 %v9451
    %v10138 = vpop.f32.mrf.mxu0
    %v10139 = vadd.f32 %v9850, %v10138
    %v10140 = vpop.f32.mrf.mxu0
    %v10141 = vpop.f32.mrf.mxu0
    %v10142 = vadd.f32 %v9853, %v10141
    %v10143 = vpop.f32.mrf.mxu0
    %10144 = vmatprep.mubr.bf16.mxu0 0
    %10145 = vmatmul.mubr.bf16.gmra.mxu0 %v9454
    %v10146 = vpop.f32.mrf.mxu0
    %v10147 = vadd.f32 %v9858, %v10146
    %v10148 = vpop.f32.mrf.mxu0
    %v10149 = vpop.f32.mrf.mxu0
    %v10150 = vadd.f32 %v9861, %v10149
    %v10151 = vpop.f32.mrf.mxu0
    %10152 = vmatprep.mubr.bf16.mxu0 0
    %10153 = vmatmul.mubr.bf16.gmra.mxu0 %v9457
    %v10154 = vpop.f32.mrf.mxu0
    %v10155 = vadd.f32 %v9866, %v10154
    %v10156 = vpop.f32.mrf.mxu0
    %v10157 = vpop.f32.mrf.mxu0
    %v10158 = vadd.f32 %v9869, %v10157
    %v10159 = vpop.f32.mrf.mxu0
    %10160 = vmatprep.mubr.bf16.mxu0 0
    %10161 = vmatmul.mubr.bf16.gmra.mxu0 %v9460
    %v10162 = vpop.f32.mrf.mxu0
    %v10163 = vadd.f32 %v9874, %v10162
    %v10164 = vpop.f32.mrf.mxu0
    %v10165 = vpop.f32.mrf.mxu0
    %v10166 = vadd.f32 %v9877, %v10165
    %v10167 = vpop.f32.mrf.mxu0
    %10168 = vmatprep.mubr.bf16.mxu0 0
    %10169 = vmatmul.mubr.bf16.gmra.mxu0 %v9463
    %v10170 = vpop.f32.mrf.mxu0
    %v10171 = vadd.f32 %v9882, %v10170
    %v10172 = vpop.f32.mrf.mxu0
    %v10173 = vpop.f32.mrf.mxu0
    %v10174 = vadd.f32 %v9885, %v10173
    %v10175 = vpop.f32.mrf.mxu0
    %10176 = vmatprep.mubr.bf16.mxu0 0
    %10177 = vmatmul.mubr.bf16.gmra.mxu0 %v9466
    %v10178 = vpop.f32.mrf.mxu0
    %v10179 = vadd.f32 %v9890, %v10178
    %v10180 = vpop.f32.mrf.mxu0
    %v10181 = vpop.f32.mrf.mxu0
    %v10182 = vadd.f32 %v9893, %v10181
    %v10183 = vpop.f32.mrf.mxu0
    %10184 = vmatprep.mubr.bf16.mxu0 0
    %10185 = vmatmul.mubr.bf16.gmra.mxu0 %v9469
    %v10186 = vpop.f32.mrf.mxu0
    %v10187 = vadd.f32 %v9898, %v10186
    %v10188 = vpop.f32.mrf.mxu0
    %v10189 = vpop.f32.mrf.mxu0
    %v10190 = vadd.f32 %v9901, %v10189
    %v10191 = vpop.f32.mrf.mxu0
    %10192 = vmatprep.mubr.bf16.mxu0 0
    %10193 = vmatmul.mubr.bf16.gmra.mxu0 %v9472
    %v10194 = vpop.f32.mrf.mxu0
    %v10195 = vadd.f32 %v9906, %v10194
    %v10196 = vpop.f32.mrf.mxu0
    %v10197 = vpop.f32.mrf.mxu0
    %v10198 = vadd.f32 %v9909, %v10197
    %v10199 = vpop.f32.mrf.mxu0
    %10200 = vmatprep.mubr.bf16.mxu0 0
    %10201 = vmatmul.mubr.bf16.gmra.mxu0 %v9475
    %v10202 = vpop.f32.mrf.mxu0
    %v10203 = vadd.f32 %v9914, %v10202
    %v10204 = vpop.f32.mrf.mxu0
    %v10205 = vpop.f32.mrf.mxu0
    %v10206 = vadd.f32 %v9917, %v10205
    %v10207 = vpop.f32.mrf.mxu0
    %10208 = vmatprep.mubr.bf16.mxu0 0
    %10209 = vmatmul.mubr.bf16.gmra.mxu0 %v9478
    %v10210 = vpop.f32.mrf.mxu0
    %v10211 = vadd.f32 %v9922, %v10210
    %v10212 = vpop.f32.mrf.mxu0
    %v10213 = vpop.f32.mrf.mxu0
    %v10214 = vadd.f32 %v9925, %v10213
    %v10215 = vpop.f32.mrf.mxu0
    %10216 = vmatprep.mubr.bf16.mxu0 0
    %10217 = vmatmul.mubr.bf16.gmra.mxu0 %v9481
    %v10218 = vpop.f32.mrf.mxu0
    %v10219 = vadd.f32 %v9930, %v10218
    %v10220 = vpop.f32.mrf.mxu0
    %v10221 = vpop.f32.mrf.mxu0
    %v10222 = vadd.f32 %v9933, %v10221
    %v10223 = vpop.f32.mrf.mxu0
    %10224 = vmatprep.mubr.bf16.mxu0 0
    %10225 = vmatmul.mubr.bf16.gmra.mxu0 %v9484
    %v10226 = vpop.f32.mrf.mxu0
    %v10227 = vadd.f32 %v9938, %v10226
    %v10228 = vpop.f32.mrf.mxu0
    %v10229 = vpop.f32.mrf.mxu0
    %v10230 = vadd.f32 %v9941, %v10229
    %v10231 = vpop.f32.mrf.mxu0
    %10232 = vmatprep.mubr.bf16.mxu0 0
    %10233 = vmatmul.mubr.bf16.gmra.mxu0 %v9487
    %v10234 = vpop.f32.mrf.mxu0
    %v10235 = vadd.f32 %v9946, %v10234
    %v10236 = vpop.f32.mrf.mxu0
    %v10237 = vpop.f32.mrf.mxu0
    %v10238 = vadd.f32 %v9949, %v10237
    %v10239 = vpop.f32.mrf.mxu0
    %10240 = vmatprep.mubr.bf16.mxu0 0
    %10241 = vmatmul.mubr.bf16.gmra.mxu0 %v9490
    %v10242 = vpop.f32.mrf.mxu0
    %v10243 = vadd.f32 %v9954, %v10242
    %v10244 = vpop.f32.mrf.mxu0
    %v10245 = vpop.f32.mrf.mxu0
    %v10246 = vadd.f32 %v9957, %v10245
    %v10247 = vpop.f32.mrf.mxu0
    %10248 = vmatprep.mubr.bf16.mxu0 0
    %10249 = vmatmul.mubr.bf16.gmra.mxu0 %v9493
    %v10250 = vpop.f32.mrf.mxu0
    %v10251 = vadd.f32 %v9962, %v10250
    %v10252 = vpop.f32.mrf.mxu0
    %v10253 = vpop.f32.mrf.mxu0
    %v10254 = vadd.f32 %v9965, %v10253
    %v10255 = vpop.f32.mrf.mxu0
    %10256 = vmatprep.mubr.bf16.mxu0 0
    %10257 = vmatmul.mubr.bf16.gmra.mxu0 %v9496
    %v10258 = vpop.f32.mrf.mxu0
    %v10259 = vadd.f32 %v9970, %v10258
    %v10260 = vpop.f32.mrf.mxu0
    %v10261 = vpop.f32.mrf.mxu0
    %v10262 = vadd.f32 %v9973, %v10261
    %v10263 = vpop.f32.mrf.mxu0
    %10264 = vmatprep.mubr.bf16.mxu0 0
    %10265 = vmatmul.mubr.bf16.gmra.mxu0 %v9499
    %v10266 = vpop.f32.mrf.mxu0
    %v10267 = vadd.f32 %v9978, %v10266
    %v10268 = vpop.f32.mrf.mxu0
    %v10269 = vpop.f32.mrf.mxu0
    %v10270 = vadd.f32 %v9981, %v10269
    %v10271 = vpop.f32.mrf.mxu0
    %10272 = vmatprep.mubr.bf16.mxu0 0
    %10273 = vmatmul.mubr.bf16.gmra.mxu0 %v9502
    %v10274 = vpop.f32.mrf.mxu0
    %v10275 = vadd.f32 %v9986, %v10274
    %v10276 = vpop.f32.mrf.mxu0
    %v10277 = vpop.f32.mrf.mxu0
    %v10278 = vadd.f32 %v9989, %v10277
    %v10279 = vpop.f32.mrf.mxu0
    %10280 = vmatprep.mubr.bf16.mxu0 0
    %10281 = vmatmul.mubr.bf16.gmra.mxu0 %v9505
    %v10282 = vpop.f32.mrf.mxu0
    %v10283 = vadd.f32 %v9994, %v10282
    %v10284 = vpop.f32.mrf.mxu0
    %v10285 = vpop.f32.mrf.mxu0
    %v10286 = vadd.f32 %v9997, %v10285
    %v10287 = vpop.f32.mrf.mxu0
    %10288 = vmatprep.mubr.bf16.mxu0 0
    %10289 = vmatmul.mubr.bf16.gmra.mxu0 %v9508
    %v10290 = vpop.f32.mrf.mxu0
    %v10291 = vadd.f32 %v10002, %v10290
    %v10292 = vpop.f32.mrf.mxu0
    %v10293 = vpop.f32.mrf.mxu0
    %v10294 = vadd.f32 %v10005, %v10293
    %v10295 = vpop.f32.mrf.mxu0
    %10296 = vmatprep.mubr.bf16.mxu0 0
    %10297 = vmatmul.mubr.bf16.gmra.mxu0 %v9511
    %v10298 = vpop.f32.mrf.mxu0
    %v10299 = vadd.f32 %v10010, %v10298
    %v10300 = vpop.f32.mrf.mxu0
    %v10301 = vpop.f32.mrf.mxu0
    %v10302 = vadd.f32 %v10013, %v10301
    %v10303 = vpop.f32.mrf.mxu0
    %10304 = vmatprep.mubr.bf16.mxu0 0
    %10305 = vmatmul.mubr.bf16.gmra.mxu0 %v9514
    %v10306 = vpop.f32.mrf.mxu0
    %v10307 = vadd.f32 %v10018, %v10306
    %v10308 = vpop.f32.mrf.mxu0
    %v10309 = vpop.f32.mrf.mxu0
    %v10310 = vadd.f32 %v10021, %v10309
    %v10311 = vpop.f32.mrf.mxu0
    %10312 = vmatprep.mubr.bf16.mxu0 0
    %10313 = vmatmul.mubr.bf16.gmra.mxu0 %v9517
    %v10314 = vpop.f32.mrf.mxu0
    %v10315 = vadd.f32 %v10026, %v10314
    %v10316 = vpop.f32.mrf.mxu0
    %v10317 = vpop.f32.mrf.mxu0
    %v10318 = vadd.f32 %v10029, %v10317
    %v10319 = vpop.f32.mrf.mxu0
    %10320 = vmatprep.mubr.bf16.mxu0 0
    %10321 = vmatmul.mubr.bf16.gmra.mxu0 %v9520
    %v10322 = vpop.f32.mrf.mxu0
    %v10323 = vadd.f32 %v10034, %v10322
    %v10324 = vpop.f32.mrf.mxu0
    %v10325 = vpop.f32.mrf.mxu0
    %v10326 = vadd.f32 %v10037, %v10325
    %v10327 = vpop.f32.mrf.mxu0
    %10328 = vmatprep.mubr.bf16.mxu0 0
    %10329 = vmatmul.mubr.bf16.gmra.mxu0 %v9523
    %v10330 = vpop.f32.mrf.mxu0
    %v10331 = vadd.f32 %v10042, %v10330
    %v10332 = vpop.f32.mrf.mxu0
    %v10333 = vpop.f32.mrf.mxu0
    %v10334 = vadd.f32 %v10045, %v10333
    %v10335 = vpop.f32.mrf.mxu0
    %10336 = vmatprep.mubr.bf16.mxu0 0
    %10337 = vmatmul.mubr.bf16.gmra.mxu0 %v9526
    %v10338 = vpop.f32.mrf.mxu0
    %v10339 = vadd.f32 %v10050, %v10338
    %v10340 = vpop.f32.mrf.mxu0
    %v10341 = vpop.f32.mrf.mxu0
    %v10342 = vadd.f32 %v10053, %v10341
    %v10343 = vpop.f32.mrf.mxu0
    %10344 = vdwg.mxu0
    %v10345 = vld [vmem:[%s4145] sm:$0xff]
    %v10346 = vld [vmem:[%s4145 + $0x8] sm:$0xf]
    %v10347 = vld [vmem:[%s4145 + $0xc] sm:$0xff]
    %v10348 = vld [vmem:[%s4145 + $0x14] sm:$0xf]
    %v10349 = vld [vmem:[%s4145 + $0x18] sm:$0xff]
    %v10350 = vld [vmem:[%s4145 + $0x20] sm:$0xf]
    %v10351 = vld [vmem:[%s4145 + $0x24] sm:$0xff]
    %v10352 = vld [vmem:[%s4145 + $0x2c] sm:$0xf]
    %v10353 = vld [vmem:[%s4145 + $0x30] sm:$0xff]
    %v10354 = vld [vmem:[%s4145 + $0x38] sm:$0xf]
    %v10355 = vld [vmem:[%s4145 + $0x3c] sm:$0xff]
    %v10356 = vld [vmem:[%s4145 + $0x44] sm:$0xf]
    %v10357 = vld [vmem:[%s4145 + $0x48] sm:$0xff]
    %v10358 = vld [vmem:[%s4145 + $0x50] sm:$0xf]
    %v10359 = vld [vmem:[%s4145 + $0x54] sm:$0xff]
    %v10360 = vld [vmem:[%s4145 + $0x5c] sm:$0xf]
    %v10361 = vld [vmem:[%s4145 + $0x60] sm:$0xff]
    %v10362 = vld [vmem:[%s4145 + $0x68] sm:$0xf]
    %v10363 = vld [vmem:[%s4145 + $0x6c] sm:$0xff]
    %v10364 = vld [vmem:[%s4145 + $0x74] sm:$0xf]
    %v10365 = vld [vmem:[%s4145 + $0x78] sm:$0xff]
    %v10366 = vld [vmem:[%s4145 + $0x80] sm:$0xf]
    %v10367 = vld [vmem:[%s4145 + $0x84] sm:$0xff]
    %v10368 = vld [vmem:[%s4145 + $0x8c] sm:$0xf]
    %v10369 = vld [vmem:[%s4145 + $0x90] sm:$0xff]
    %v10370 = vld [vmem:[%s4145 + $0x98] sm:$0xf]
    %v10371 = vld [vmem:[%s4145 + $0x9c] sm:$0xff]
    %v10372 = vld [vmem:[%s4145 + $0xa4] sm:$0xf]
    %v10373 = vld [vmem:[%s4145 + $0xa8] sm:$0xff]
    %v10374 = vld [vmem:[%s4145 + $0xb0] sm:$0xf]
    %v10375 = vld [vmem:[%s4145 + $0xb4] sm:$0xff]
    %v10376 = vld [vmem:[%s4145 + $0xbc] sm:$0xf]
    %v10377 = vld [vmem:[%s4145 + $0xc0] sm:$0xff]
    %v10378 = vld [vmem:[%s4145 + $0xc8] sm:$0xf]
    %v10379 = vld [vmem:[%s4145 + $0xcc] sm:$0xff]
    %v10380 = vld [vmem:[%s4145 + $0xd4] sm:$0xf]
    %v10381 = vld [vmem:[%s4145 + $0xd8] sm:$0xff]
    %v10382 = vld [vmem:[%s4145 + $0xe0] sm:$0xf]
    %v10383 = vld [vmem:[%s4145 + $0xe4] sm:$0xff]
    %v10384 = vld [vmem:[%s4145 + $0xec] sm:$0xf]
    %v10385 = vld [vmem:[%s4145 + $0xf0] sm:$0xff]
    %v10386 = vld [vmem:[%s4145 + $0xf8] sm:$0xf]
    %v10387 = vld [vmem:[%s4145 + $0xfc] sm:$0xff]
    %v10388 = vld [vmem:[%s4145 + $0x104] sm:$0xf]
    %v10389 = vld [vmem:[%s4145 + $0x108] sm:$0xff]
    %v10390 = vld [vmem:[%s4145 + $0x110] sm:$0xf]
    %v10391 = vld [vmem:[%s4145 + $0x114] sm:$0xff]
    %v10392 = vld [vmem:[%s4145 + $0x11c] sm:$0xf]
    %v10393 = vld [vmem:[%s4145 + $0x120] sm:$0xff]
    %v10394 = vld [vmem:[%s4145 + $0x128] sm:$0xf]
    %v10395 = vld [vmem:[%s4145 + $0x12c] sm:$0xff]
    %v10396 = vld [vmem:[%s4145 + $0x134] sm:$0xf]
    %v10397 = vld [vmem:[%s4145 + $0x138] sm:$0xff]
    %v10398 = vld [vmem:[%s4145 + $0x140] sm:$0xf]
    %v10399 = vld [vmem:[%s4145 + $0x144] sm:$0xff]
    %v10400 = vld [vmem:[%s4145 + $0x14c] sm:$0xf]
    %v10401 = vld [vmem:[%s4145 + $0x150] sm:$0xff]
    %v10402 = vld [vmem:[%s4145 + $0x158] sm:$0xf]
    %v10403 = vld [vmem:[%s4145 + $0x15c] sm:$0xff]
    %v10404 = vld [vmem:[%s4145 + $0x164] sm:$0xf]
    %v10405 = vld [vmem:[%s4145 + $0x168] sm:$0xff]
    %v10406 = vld [vmem:[%s4145 + $0x170] sm:$0xf]
    %v10407 = vld [vmem:[%s4145 + $0x174] sm:$0xff]
    %v10408 = vld [vmem:[%s4145 + $0x17c] sm:$0xf]
    %v10409 = vld [vmem:[%s4145 + $0x1b0] sm:$0xff]
    %v10410 = vld [vmem:[%s4145 + $0x1b8] sm:$0xf]
    %v10411 = vld [vmem:[%s4145 + $0x1bc] sm:$0xff]
    %v10412 = vld [vmem:[%s4145 + $0x1c4] sm:$0xf]
    %v10413 = vld [vmem:[%s4145 + $0x1c8] sm:$0xff]
    %v10414 = vld [vmem:[%s4145 + $0x1d0] sm:$0xf]
    %v10415 = vld [vmem:[%s4145 + $0x1d4] sm:$0xff]
    %v10416 = vld [vmem:[%s4145 + $0x1dc] sm:$0xf]
    %v10417 = vld [vmem:[%s4145 + $0x1e0] sm:$0xff]
    %v10418 = vld [vmem:[%s4145 + $0x1e8] sm:$0xf]
    %v10419 = vld [vmem:[%s4145 + $0x1ec] sm:$0xff]
    %v10420 = vld [vmem:[%s4145 + $0x1f4] sm:$0xf]
    %v10421 = vld [vmem:[%s4145 + $0x1f8] sm:$0xff]
    %v10422 = vld [vmem:[%s4145 + $0x200] sm:$0xf]
    %v10423 = vld [vmem:[%s4145 + $0x204] sm:$0xff]
    %v10424 = vld [vmem:[%s4145 + $0x20c] sm:$0xf]
    %v10425 = vld [vmem:[%s4145 + $0x210] sm:$0xff]
    %v10426 = vld [vmem:[%s4145 + $0x218] sm:$0xf]
    %v10427 = vld [vmem:[%s4145 + $0x21c] sm:$0xff]
    %v10428 = vld [vmem:[%s4145 + $0x224] sm:$0xf]
    %v10429 = vld [vmem:[%s4145 + $0x228] sm:$0xff]
    %v10430 = vld [vmem:[%s4145 + $0x230] sm:$0xf]
    %v10431 = vld [vmem:[%s4145 + $0x234] sm:$0xff]
    %v10432 = vld [vmem:[%s4145 + $0x23c] sm:$0xf]
    %v10433 = vld [vmem:[%s4145 + $0x240] sm:$0xff]
    %v10434 = vld [vmem:[%s4145 + $0x248] sm:$0xf]
    %v10435 = vld [vmem:[%s4145 + $0x24c] sm:$0xff]
    %v10436 = vld [vmem:[%s4145 + $0x254] sm:$0xf]
    %v10437 = vld [vmem:[%s4145 + $0x258] sm:$0xff]
    %v10438 = vld [vmem:[%s4145 + $0x260] sm:$0xf]
    %v10439 = vld [vmem:[%s4145 + $0x264] sm:$0xff]
    %v10440 = vld [vmem:[%s4145 + $0x26c] sm:$0xf]
    %v10441 = vld [vmem:[%s4145 + $0x270] sm:$0xff]
    %v10442 = vld [vmem:[%s4145 + $0x278] sm:$0xf]
    %v10443 = vld [vmem:[%s4145 + $0x27c] sm:$0xff]
    %v10444 = vld [vmem:[%s4145 + $0x284] sm:$0xf]
    %v10445 = vld [vmem:[%s4145 + $0x288] sm:$0xff]
    %v10446 = vld [vmem:[%s4145 + $0x290] sm:$0xf]
    %v10447 = vld [vmem:[%s4145 + $0x294] sm:$0xff]
    %v10448 = vld [vmem:[%s4145 + $0x29c] sm:$0xf]
    %v10449 = vld [vmem:[%s4145 + $0x2a0] sm:$0xff]
    %v10450 = vld [vmem:[%s4145 + $0x2a8] sm:$0xf]
    %v10451 = vld [vmem:[%s4145 + $0x2ac] sm:$0xff]
    %v10452 = vld [vmem:[%s4145 + $0x2b4] sm:$0xf]
    %v10453 = vld [vmem:[%s4145 + $0x2b8] sm:$0xff]
    %v10454 = vld [vmem:[%s4145 + $0x2c0] sm:$0xf]
    %v10455 = vld [vmem:[%s4145 + $0x2c4] sm:$0xff]
    %v10456 = vld [vmem:[%s4145 + $0x2cc] sm:$0xf]
    %v10457 = vld [vmem:[%s4145 + $0x2d0] sm:$0xff]
    %v10458 = vld [vmem:[%s4145 + $0x2d8] sm:$0xf]
    %v10459 = vld [vmem:[%s4145 + $0x2dc] sm:$0xff]
    %v10460 = vld [vmem:[%s4145 + $0x2e4] sm:$0xf]
    %v10461 = vld [vmem:[%s4145 + $0x2e8] sm:$0xff]
    %v10462 = vld [vmem:[%s4145 + $0x2f0] sm:$0xf]
    %v10463 = vld [vmem:[%s4145 + $0x2f4] sm:$0xff]
    %v10464 = vld [vmem:[%s4145 + $0x2fc] sm:$0xf]
    %v10465 = vld [vmem:[%s4145 + $0x300] sm:$0xff]
    %v10466 = vld [vmem:[%s4145 + $0x308] sm:$0xf]
    %v10467 = vld [vmem:[%s4145 + $0x30c] sm:$0xff]
    %v10468 = vld [vmem:[%s4145 + $0x314] sm:$0xf]
    %v10469 = vld [vmem:[%s4145 + $0x318] sm:$0xff]
    %v10470 = vld [vmem:[%s4145 + $0x320] sm:$0xf]
    %v10471 = vld [vmem:[%s4145 + $0x324] sm:$0xff]
    %v10472 = vld [vmem:[%s4145 + $0x32c] sm:$0xf]
    %s10473 = scalar_lea.vmem [#allocation8], 384
    %v10474 = vld [vmem:[%s10473] sm:$0xf]
    %v10475 = vld [vmem:[%s10473 + $0x4] sm:$0xf]
    %v10476 = vld [vmem:[%s10473 + $0x8] sm:$0xf]
    %v10477 = vld [vmem:[%s10473 + $0xc] sm:$0xf]
    %v10478 = vld [vmem:[%s10473 + $0x10] sm:$0xf]
    %v10479 = vld [vmem:[%s10473 + $0x14] sm:$0xf]
    %v10480 = vld [vmem:[%s10473 + $0x18] sm:$0xf]
    %v10481 = vld [vmem:[%s10473 + $0x1c] sm:$0xf]
    %v10482 = vld [vmem:[%s10473 + $0x20] sm:$0xf]
    %v10483 = vld [vmem:[%s10473 + $0x24] sm:$0xf]
    %v10484 = vld [vmem:[%s10473 + $0x28] sm:$0xf]
    %v10485 = vld [vmem:[%s10473 + $0x2c] sm:$0xf]
    %v10486 = vld [vmem:[%s10473 + $0x30] sm:$0xf]
    %v10487 = vld [vmem:[%s10473 + $0x34] sm:$0xf]
    %v10488 = vld [vmem:[%s10473 + $0x38] sm:$0xf]
    %v10489 = vld [vmem:[%s10473 + $0x3c] sm:$0xf]
    %v10490 = vld [vmem:[%s10473 + $0x40] sm:$0xf]
    %v10491 = vld [vmem:[%s10473 + $0x44] sm:$0xf]
    %v10492 = vld [vmem:[%s10473 + $0x48] sm:$0xf]
    %v10493 = vld [vmem:[%s10473 + $0x4c] sm:$0xf]
    %v10494 = vld [vmem:[%s10473 + $0x50] sm:$0xf]
    %v10495 = vld [vmem:[%s10473 + $0x54] sm:$0xf]
    %v10496 = vld [vmem:[%s10473 + $0x58] sm:$0xf]
    %v10497 = vld [vmem:[%s10473 + $0x5c] sm:$0xf]
    %v10498 = vld [vmem:[%s10473 + $0x60] sm:$0xf]
    %v10499 = vld [vmem:[%s10473 + $0x64] sm:$0xf]
    %v10500 = vld [vmem:[%s10473 + $0x68] sm:$0xf]
    %v10501 = vld [vmem:[%s10473 + $0x6c] sm:$0xf]
    %v10502 = vld [vmem:[%s10473 + $0x70] sm:$0xf]
    %v10503 = vld [vmem:[%s10473 + $0x74] sm:$0xf]
    %v10504 = vld [vmem:[%s10473 + $0x78] sm:$0xf]
    %v10505 = vld [vmem:[%s10473 + $0x7c] sm:$0xf]
    %v10506 = vld [vmem:[%s10473 + $0x80] sm:$0xf]
    %v10507 = vld [vmem:[%s10473 + $0x84] sm:$0xf]
    %v10508 = vld [vmem:[%s10473 + $0x88] sm:$0xf]
    %v10509 = vld [vmem:[%s10473 + $0x8c] sm:$0xf]
    %v10510 = vld [vmem:[%s10473 + $0x90] sm:$0xf]
    %v10511 = vld [vmem:[%s10473 + $0x94] sm:$0xf]
    %v10512 = vld [vmem:[%s10473 + $0x98] sm:$0xf]
    %v10513 = vld [vmem:[%s10473 + $0x9c] sm:$0xf]
    %v10514 = vld [vmem:[%s10473 + $0xa0] sm:$0xf]
    %v10515 = vld [vmem:[%s10473 + $0xa4] sm:$0xf]
    %v10516 = vld [vmem:[%s10473 + $0xa8] sm:$0xf]
    %v10517 = vld [vmem:[%s10473 + $0xac] sm:$0xf]
    %v10518 = vld [vmem:[%s10473 + $0xb0] sm:$0xf]
    %v10519 = vld [vmem:[%s10473 + $0xb4] sm:$0xf]
    %v10520 = vld [vmem:[%s10473 + $0xb8] sm:$0xf]
    %v10521 = vld [vmem:[%s10473 + $0xbc] sm:$0xf]
    %v10650 = vunpack.c.l.b16 %v10345
    %v10651 = vunpack.c.h.b16 %v10345
    %v10652 = vunpack.c.l.b16 %v10346
    %v10653 = vunpack.c.l.b16 %v10347
    %v10654 = vunpack.c.h.b16 %v10347
    %v10655 = vunpack.c.l.b16 %v10348
    %v10656 = vunpack.c.l.b16 %v10349
    %v10657 = vunpack.c.h.b16 %v10349
    %v10658 = vunpack.c.l.b16 %v10350
    %v10659 = vunpack.c.l.b16 %v10351
    %v10660 = vunpack.c.h.b16 %v10351
    %v10661 = vunpack.c.l.b16 %v10352
    %v10662 = vunpack.c.l.b16 %v10353
    %v10663 = vunpack.c.h.b16 %v10353
    %v10664 = vunpack.c.l.b16 %v10354
    %v10665 = vunpack.c.l.b16 %v10355
    %v10666 = vunpack.c.h.b16 %v10355
    %v10667 = vunpack.c.l.b16 %v10356
    %v10668 = vunpack.c.l.b16 %v10357
    %v10669 = vunpack.c.h.b16 %v10357
    %v10670 = vunpack.c.l.b16 %v10358
    %v10671 = vunpack.c.l.b16 %v10359
    %v10672 = vunpack.c.h.b16 %v10359
    %v10673 = vunpack.c.l.b16 %v10360
    %v10674 = vunpack.c.l.b16 %v10361
    %v10675 = vunpack.c.h.b16 %v10361
    %v10676 = vunpack.c.l.b16 %v10362
    %v10677 = vunpack.c.l.b16 %v10363
    %v10678 = vunpack.c.h.b16 %v10363
    %v10679 = vunpack.c.l.b16 %v10364
    %v10680 = vunpack.c.l.b16 %v10365
    %v10681 = vunpack.c.h.b16 %v10365
    %v10682 = vunpack.c.l.b16 %v10366
    %v10683 = vunpack.c.l.b16 %v10367
    %v10684 = vunpack.c.h.b16 %v10367
    %v10685 = vunpack.c.l.b16 %v10368
    %v10686 = vunpack.c.l.b16 %v10369
    %v10687 = vunpack.c.h.b16 %v10369
    %v10688 = vunpack.c.l.b16 %v10370
    %v10689 = vunpack.c.l.b16 %v10371
    %v10690 = vunpack.c.h.b16 %v10371
    %v10691 = vunpack.c.l.b16 %v10372
    %v10692 = vunpack.c.l.b16 %v10373
    %v10693 = vunpack.c.h.b16 %v10373
    %v10694 = vunpack.c.l.b16 %v10374
    %v10695 = vunpack.c.l.b16 %v10375
    %v10696 = vunpack.c.h.b16 %v10375
    %v10697 = vunpack.c.l.b16 %v10376
    %v10698 = vunpack.c.l.b16 %v10377
    %v10699 = vunpack.c.h.b16 %v10377
    %v10700 = vunpack.c.l.b16 %v10378
    %v10701 = vunpack.c.l.b16 %v10379
    %v10702 = vunpack.c.h.b16 %v10379
    %v10703 = vunpack.c.l.b16 %v10380
    %v10704 = vunpack.c.l.b16 %v10381
    %v10705 = vunpack.c.h.b16 %v10381
    %v10706 = vunpack.c.l.b16 %v10382
    %v10707 = vunpack.c.l.b16 %v10383
    %v10708 = vunpack.c.h.b16 %v10383
    %v10709 = vunpack.c.l.b16 %v10384
    %v10710 = vunpack.c.l.b16 %v10385
    %v10711 = vunpack.c.h.b16 %v10385
    %v10712 = vunpack.c.l.b16 %v10386
    %v10713 = vunpack.c.l.b16 %v10387
    %v10714 = vunpack.c.h.b16 %v10387
    %v10715 = vunpack.c.l.b16 %v10388
    %v10716 = vunpack.c.l.b16 %v10389
    %v10717 = vunpack.c.h.b16 %v10389
    %v10718 = vunpack.c.l.b16 %v10390
    %v10719 = vunpack.c.l.b16 %v10391
    %v10720 = vunpack.c.h.b16 %v10391
    %v10721 = vunpack.c.l.b16 %v10392
    %v10722 = vunpack.c.l.b16 %v10393
    %v10723 = vunpack.c.h.b16 %v10393
    %v10724 = vunpack.c.l.b16 %v10394
    %v10725 = vunpack.c.l.b16 %v10395
    %v10726 = vunpack.c.h.b16 %v10395
    %v10727 = vunpack.c.l.b16 %v10396
    %v10728 = vunpack.c.l.b16 %v10397
    %v10729 = vunpack.c.h.b16 %v10397
    %v10730 = vunpack.c.l.b16 %v10398
    %v10731 = vunpack.c.l.b16 %v10399
    %v10732 = vunpack.c.h.b16 %v10399
    %v10733 = vunpack.c.l.b16 %v10400
    %v10734 = vunpack.c.l.b16 %v10401
    %v10735 = vunpack.c.h.b16 %v10401
    %v10736 = vunpack.c.l.b16 %v10402
    %v10737 = vunpack.c.l.b16 %v10403
    %v10738 = vunpack.c.h.b16 %v10403
    %v10739 = vunpack.c.l.b16 %v10404
    %v10740 = vunpack.c.l.b16 %v10405
    %v10741 = vunpack.c.h.b16 %v10405
    %v10742 = vunpack.c.l.b16 %v10406
    %v10743 = vunpack.c.l.b16 %v10407
    %v10744 = vunpack.c.h.b16 %v10407
    %v10745 = vunpack.c.l.b16 %v10408
    %v10746 = vunpack.c.l.b16 %v10409
    %v10747 = vunpack.c.h.b16 %v10409
    %v10748 = vunpack.c.l.b16 %v10410
    %v10749 = vunpack.c.l.b16 %v10411
    %v10750 = vunpack.c.h.b16 %v10411
    %v10751 = vunpack.c.l.b16 %v10412
    %v10752 = vunpack.c.l.b16 %v10413
    %v10753 = vunpack.c.h.b16 %v10413
    %v10754 = vunpack.c.l.b16 %v10414
    %v10755 = vunpack.c.l.b16 %v10415
    %v10756 = vunpack.c.h.b16 %v10415
    %v10757 = vunpack.c.l.b16 %v10416
    %v10758 = vunpack.c.l.b16 %v10417
    %v10759 = vunpack.c.h.b16 %v10417
    %v10760 = vunpack.c.l.b16 %v10418
    %v10761 = vunpack.c.l.b16 %v10419
    %v10762 = vunpack.c.h.b16 %v10419
    %v10763 = vunpack.c.l.b16 %v10420
    %v10764 = vunpack.c.l.b16 %v10421
    %v10765 = vunpack.c.h.b16 %v10421
    %v10766 = vunpack.c.l.b16 %v10422
    %v10767 = vunpack.c.l.b16 %v10423
    %v10768 = vunpack.c.h.b16 %v10423
    %v10769 = vunpack.c.l.b16 %v10424
    %v10770 = vunpack.c.l.b16 %v10425
    %v10771 = vunpack.c.h.b16 %v10425
    %v10772 = vunpack.c.l.b16 %v10426
    %v10773 = vunpack.c.l.b16 %v10427
    %v10774 = vunpack.c.h.b16 %v10427
    %v10775 = vunpack.c.l.b16 %v10428
    %v10776 = vunpack.c.l.b16 %v10429
    %v10777 = vunpack.c.h.b16 %v10429
    %v10778 = vunpack.c.l.b16 %v10430
    %v10779 = vunpack.c.l.b16 %v10431
    %v10780 = vunpack.c.h.b16 %v10431
    %v10781 = vunpack.c.l.b16 %v10432
    %v10782 = vunpack.c.l.b16 %v10433
    %v10783 = vunpack.c.h.b16 %v10433
    %v10784 = vunpack.c.l.b16 %v10434
    %v10785 = vunpack.c.l.b16 %v10435
    %v10786 = vunpack.c.h.b16 %v10435
    %v10787 = vunpack.c.l.b16 %v10436
    %v10788 = vunpack.c.l.b16 %v10437
    %v10789 = vunpack.c.h.b16 %v10437
    %v10790 = vunpack.c.l.b16 %v10438
    %v10791 = vunpack.c.l.b16 %v10439
    %v10792 = vunpack.c.h.b16 %v10439
    %v10793 = vunpack.c.l.b16 %v10440
    %v10794 = vunpack.c.l.b16 %v10441
    %v10795 = vunpack.c.h.b16 %v10441
    %v10796 = vunpack.c.l.b16 %v10442
    %v10797 = vunpack.c.l.b16 %v10443
    %v10798 = vunpack.c.h.b16 %v10443
    %v10799 = vunpack.c.l.b16 %v10444
    %v10800 = vunpack.c.l.b16 %v10445
    %v10801 = vunpack.c.h.b16 %v10445
    %v10802 = vunpack.c.l.b16 %v10446
    %v10803 = vunpack.c.l.b16 %v10447
    %v10804 = vunpack.c.h.b16 %v10447
    %v10805 = vunpack.c.l.b16 %v10448
    %v10806 = vunpack.c.l.b16 %v10449
    %v10807 = vunpack.c.h.b16 %v10449
    %v10808 = vunpack.c.l.b16 %v10450
    %v10809 = vunpack.c.l.b16 %v10451
    %v10810 = vunpack.c.h.b16 %v10451
    %v10811 = vunpack.c.l.b16 %v10452
    %v10812 = vunpack.c.l.b16 %v10453
    %v10813 = vunpack.c.h.b16 %v10453
    %v10814 = vunpack.c.l.b16 %v10454
    %v10815 = vunpack.c.l.b16 %v10455
    %v10816 = vunpack.c.h.b16 %v10455
    %v10817 = vunpack.c.l.b16 %v10456
    %v10818 = vunpack.c.l.b16 %v10457
    %v10819 = vunpack.c.h.b16 %v10457
    %v10820 = vunpack.c.l.b16 %v10458
    %v10821 = vunpack.c.l.b16 %v10459
    %v10822 = vunpack.c.h.b16 %v10459
    %v10823 = vunpack.c.l.b16 %v10460
    %v10824 = vunpack.c.l.b16 %v10461
    %v10825 = vunpack.c.h.b16 %v10461
    %v10826 = vunpack.c.l.b16 %v10462
    %v10827 = vunpack.c.l.b16 %v10463
    %v10828 = vunpack.c.h.b16 %v10463
    %v10829 = vunpack.c.l.b16 %v10464
    %v10830 = vunpack.c.l.b16 %v10465
    %v10831 = vunpack.c.h.b16 %v10465
    %v10832 = vunpack.c.l.b16 %v10466
    %v10833 = vunpack.c.l.b16 %v10467
    %v10834 = vunpack.c.h.b16 %v10467
    %v10835 = vunpack.c.l.b16 %v10468
    %v10836 = vunpack.c.l.b16 %v10469
    %v10837 = vunpack.c.h.b16 %v10469
    %v10838 = vunpack.c.l.b16 %v10470
    %v10839 = vunpack.c.l.b16 %v10471
    %v10840 = vunpack.c.h.b16 %v10471
    %v10841 = vunpack.c.l.b16 %v10472
    %v10842 = vpack.c.b16 %v10653, %v10650
    %v10843 = vpack.c.b16 %v10654, %v10651
    %v10844 = vpack.c.b16 %v10655, %v10652
    %v10845 = vpack.c.b16 %v10659, %v10656
    %v10846 = vpack.c.b16 %v10660, %v10657
    %v10847 = vpack.c.b16 %v10661, %v10658
    %v10848 = vpack.c.b16 %v10665, %v10662
    %v10849 = vpack.c.b16 %v10666, %v10663
    %v10850 = vpack.c.b16 %v10667, %v10664
    %v10851 = vpack.c.b16 %v10671, %v10668
    %v10852 = vpack.c.b16 %v10672, %v10669
    %v10853 = vpack.c.b16 %v10673, %v10670
    %v10854 = vpack.c.b16 %v10677, %v10674
    %v10855 = vpack.c.b16 %v10678, %v10675
    %v10856 = vpack.c.b16 %v10679, %v10676
    %v10857 = vpack.c.b16 %v10683, %v10680
    %v10858 = vpack.c.b16 %v10684, %v10681
    %v10859 = vpack.c.b16 %v10685, %v10682
    %v10860 = vpack.c.b16 %v10689, %v10686
    %v10861 = vpack.c.b16 %v10690, %v10687
    %v10862 = vpack.c.b16 %v10691, %v10688
    %v10863 = vpack.c.b16 %v10695, %v10692
    %v10864 = vpack.c.b16 %v10696, %v10693
    %v10865 = vpack.c.b16 %v10697, %v10694
    %v10866 = vpack.c.b16 %v10701, %v10698
    %v10867 = vpack.c.b16 %v10702, %v10699
    %v10868 = vpack.c.b16 %v10703, %v10700
    %v10869 = vpack.c.b16 %v10707, %v10704
    %v10870 = vpack.c.b16 %v10708, %v10705
    %v10871 = vpack.c.b16 %v10709, %v10706
    %v10872 = vpack.c.b16 %v10713, %v10710
    %v10873 = vpack.c.b16 %v10714, %v10711
    %v10874 = vpack.c.b16 %v10715, %v10712
    %v10875 = vpack.c.b16 %v10719, %v10716
    %v10876 = vpack.c.b16 %v10720, %v10717
    %v10877 = vpack.c.b16 %v10721, %v10718
    %v10878 = vpack.c.b16 %v10725, %v10722
    %v10879 = vpack.c.b16 %v10726, %v10723
    %v10880 = vpack.c.b16 %v10727, %v10724
    %v10881 = vpack.c.b16 %v10731, %v10728
    %v10882 = vpack.c.b16 %v10732, %v10729
    %v10883 = vpack.c.b16 %v10733, %v10730
    %v10884 = vpack.c.b16 %v10737, %v10734
    %v10885 = vpack.c.b16 %v10738, %v10735
    %v10886 = vpack.c.b16 %v10739, %v10736
    %v10887 = vpack.c.b16 %v10743, %v10740
    %v10888 = vpack.c.b16 %v10744, %v10741
    %v10889 = vpack.c.b16 %v10745, %v10742
    %v10890 = vpack.c.b16 %v10749, %v10746
    %v10891 = vpack.c.b16 %v10750, %v10747
    %v10892 = vpack.c.b16 %v10751, %v10748
    %v10893 = vpack.c.b16 %v10755, %v10752
    %v10894 = vpack.c.b16 %v10756, %v10753
    %v10895 = vpack.c.b16 %v10757, %v10754
    %v10896 = vpack.c.b16 %v10761, %v10758
    %v10897 = vpack.c.b16 %v10762, %v10759
    %v10898 = vpack.c.b16 %v10763, %v10760
    %v10899 = vpack.c.b16 %v10767, %v10764
    %v10900 = vpack.c.b16 %v10768, %v10765
    %v10901 = vpack.c.b16 %v10769, %v10766
    %v10902 = vpack.c.b16 %v10773, %v10770
    %v10903 = vpack.c.b16 %v10774, %v10771
    %v10904 = vpack.c.b16 %v10775, %v10772
    %v10905 = vpack.c.b16 %v10779, %v10776
    %v10906 = vpack.c.b16 %v10780, %v10777
    %v10907 = vpack.c.b16 %v10781, %v10778
    %v10908 = vpack.c.b16 %v10785, %v10782
    %v10909 = vpack.c.b16 %v10786, %v10783
    %v10910 = vpack.c.b16 %v10787, %v10784
    %v10911 = vpack.c.b16 %v10791, %v10788
    %v10912 = vpack.c.b16 %v10792, %v10789
    %v10913 = vpack.c.b16 %v10793, %v10790
    %v10914 = vpack.c.b16 %v10797, %v10794
    %v10915 = vpack.c.b16 %v10798, %v10795
    %v10916 = vpack.c.b16 %v10799, %v10796
    %v10917 = vpack.c.b16 %v10803, %v10800
    %v10918 = vpack.c.b16 %v10804, %v10801
    %v10919 = vpack.c.b16 %v10805, %v10802
    %v10920 = vpack.c.b16 %v10809, %v10806
    %v10921 = vpack.c.b16 %v10810, %v10807
    %v10922 = vpack.c.b16 %v10811, %v10808
    %v10923 = vpack.c.b16 %v10815, %v10812
    %v10924 = vpack.c.b16 %v10816, %v10813
    %v10925 = vpack.c.b16 %v10817, %v10814
    %v10926 = vpack.c.b16 %v10821, %v10818
    %v10927 = vpack.c.b16 %v10822, %v10819
    %v10928 = vpack.c.b16 %v10823, %v10820
    %v10929 = vpack.c.b16 %v10827, %v10824
    %v10930 = vpack.c.b16 %v10828, %v10825
    %v10931 = vpack.c.b16 %v10829, %v10826
    %v10932 = vpack.c.b16 %v10833, %v10830
    %v10933 = vpack.c.b16 %v10834, %v10831
    %v10934 = vpack.c.b16 %v10835, %v10832
    %v10935 = vpack.c.b16 %v10839, %v10836
    %v10936 = vpack.c.b16 %v10840, %v10837
    %v10937 = vpack.c.b16 %v10841, %v10838
    %v11082 = vunpack.c.l.b16 %v10474
    %v11083 = vunpack.c.l.b16 %v10475
    %v11084 = vunpack.c.l.b16 %v10476
    %v11085 = vunpack.c.l.b16 %v10477
    %v11086 = vunpack.c.l.b16 %v10478
    %v11087 = vunpack.c.l.b16 %v10479
    %v11088 = vunpack.c.l.b16 %v10480
    %v11089 = vunpack.c.l.b16 %v10481
    %v11090 = vunpack.c.l.b16 %v10482
    %v11091 = vunpack.c.l.b16 %v10483
    %v11092 = vunpack.c.l.b16 %v10484
    %v11093 = vunpack.c.l.b16 %v10485
    %v11094 = vunpack.c.l.b16 %v10486
    %v11095 = vunpack.c.l.b16 %v10487
    %v11096 = vunpack.c.l.b16 %v10488
    %v11097 = vunpack.c.l.b16 %v10489
    %v11098 = vunpack.c.l.b16 %v10490
    %v11099 = vunpack.c.l.b16 %v10491
    %v11100 = vunpack.c.l.b16 %v10492
    %v11101 = vunpack.c.l.b16 %v10493
    %v11102 = vunpack.c.l.b16 %v10494
    %v11103 = vunpack.c.l.b16 %v10495
    %v11104 = vunpack.c.l.b16 %v10496
    %v11105 = vunpack.c.l.b16 %v10497
    %v11106 = vunpack.c.l.b16 %v10498
    %v11107 = vunpack.c.l.b16 %v10499
    %v11108 = vunpack.c.l.b16 %v10500
    %v11109 = vunpack.c.l.b16 %v10501
    %v11110 = vunpack.c.l.b16 %v10502
    %v11111 = vunpack.c.l.b16 %v10503
    %v11112 = vunpack.c.l.b16 %v10504
    %v11113 = vunpack.c.l.b16 %v10505
    %v11114 = vunpack.c.l.b16 %v10506
    %v11115 = vunpack.c.l.b16 %v10507
    %v11116 = vunpack.c.l.b16 %v10508
    %v11117 = vunpack.c.l.b16 %v10509
    %v11118 = vunpack.c.l.b16 %v10510
    %v11119 = vunpack.c.l.b16 %v10511
    %v11120 = vunpack.c.l.b16 %v10512
    %v11121 = vunpack.c.l.b16 %v10513
    %v11122 = vunpack.c.l.b16 %v10514
    %v11123 = vunpack.c.l.b16 %v10515
    %v11124 = vunpack.c.l.b16 %v10516
    %v11125 = vunpack.c.l.b16 %v10517
    %v11126 = vunpack.c.l.b16 %v10518
    %v11127 = vunpack.c.l.b16 %v10519
    %v11128 = vunpack.c.l.b16 %v10520
    %v11129 = vunpack.c.l.b16 %v10521
    %v11130 = vpack.c.b16 %v11083, %v11082
    %v11131 = vpack.c.b16 %v11085, %v11084
    %v11132 = vpack.c.b16 %v11087, %v11086
    %v11133 = vpack.c.b16 %v11089, %v11088
    %v11134 = vpack.c.b16 %v11091, %v11090
    %v11135 = vpack.c.b16 %v11093, %v11092
    %v11136 = vpack.c.b16 %v11095, %v11094
    %v11137 = vpack.c.b16 %v11097, %v11096
    %v11138 = vpack.c.b16 %v11099, %v11098
    %v11139 = vpack.c.b16 %v11101, %v11100
    %v11140 = vpack.c.b16 %v11103, %v11102
    %v11141 = vpack.c.b16 %v11105, %v11104
    %v11142 = vpack.c.b16 %v11107, %v11106
    %v11143 = vpack.c.b16 %v11109, %v11108
    %v11144 = vpack.c.b16 %v11111, %v11110
    %v11145 = vpack.c.b16 %v11113, %v11112
    %v11146 = vpack.c.b16 %v11115, %v11114
    %v11147 = vpack.c.b16 %v11117, %v11116
    %v11148 = vpack.c.b16 %v11119, %v11118
    %v11149 = vpack.c.b16 %v11121, %v11120
    %v11150 = vpack.c.b16 %v11123, %v11122
    %v11151 = vpack.c.b16 %v11125, %v11124
    %v11152 = vpack.c.b16 %v11127, %v11126
    %v11153 = vpack.c.b16 %v11129, %v11128
    %11178 = vmatprep.subr.bf16.mxu0 0
    %11179 = vmatpush1.bf16.msra.mxu0 %v11137
    %11180 = vmatprep.subr.bf16.mxu0 0
    %11181 = vmatpush1.bf16.msra.mxu0 %v11136
    %11182 = vmatprep.subr.bf16.mxu0 0
    %11183 = vmatpush1.bf16.msra.mxu0 %v11135
    %11184 = vmatprep.subr.bf16.mxu0 0
    %11185 = vmatpush1.bf16.msra.mxu0 %v11134
    %11186 = vmatprep.subr.bf16.mxu0 0
    %11187 = vmatpush1.bf16.msra.mxu0 %v11133
    %11188 = vmatprep.subr.bf16.mxu0 0
    %11189 = vmatpush1.bf16.msra.mxu0 %v11132
    %11190 = vmatprep.subr.bf16.mxu0 0
    %11191 = vmatpush1.bf16.msra.mxu0 %v11131
    %11192 = vmatprep.subr.bf16.mxu0 0
    %11193 = vmatpush1.bf16.msra.mxu0 %v11130
    %11194 = vmatprep.subr.bf16.mxu0 0
    %11195 = vmatpush2.bf16.msra.mxu0 %v11145
    %11196 = vmatprep.subr.bf16.mxu0 0
    %11197 = vmatpush2.bf16.msra.mxu0 %v11144
    %11198 = vmatprep.subr.bf16.mxu0 0
    %11199 = vmatpush2.bf16.msra.mxu0 %v11143
    %11200 = vmatprep.subr.bf16.mxu0 0
    %11201 = vmatpush2.bf16.msra.mxu0 %v11142
    %11202 = vmatprep.subr.bf16.mxu0 0
    %11203 = vmatpush2.bf16.msra.mxu0 %v11141
    %11204 = vmatprep.subr.bf16.mxu0 0
    %11205 = vmatpush2.bf16.msra.mxu0 %v11140
    %11206 = vmatprep.subr.bf16.mxu0 0
    %11207 = vmatpush2.bf16.msra.mxu0 %v11139
    %11208 = vmatprep.subr.bf16.mxu0 0
    %11209 = vmatpush2.bf16.msra.mxu0 %v11138
    %11210 = vmatprep.mubr.bf16.mxu0 %v10843
    %11211 = vmatmul.mubr.bf16.gmra.mxu0 %v10842
    %v11212 = vpop.f32.mrf.mxu0
    %v11213 = vadd.f32 0.0, %v11212
    %v11214 = vpop.f32.mrf.mxu0
    %v11215 = vpop.f32.mrf.mxu0
    %v11216 = vadd.f32 0.0, %v11215
    %v11217 = vpop.f32.mrf.mxu0
    %11218 = vmatprep.mubr.bf16.mxu0 %v10846
    %11219 = vmatmul.mubr.bf16.gmra.mxu0 %v10845
    %v11220 = vpop.f32.mrf.mxu0
    %v11221 = vadd.f32 0.0, %v11220
    %v11222 = vpop.f32.mrf.mxu0
    %v11223 = vpop.f32.mrf.mxu0
    %v11224 = vadd.f32 0.0, %v11223
    %v11225 = vpop.f32.mrf.mxu0
    %11226 = vmatprep.mubr.bf16.mxu0 %v10849
    %11227 = vmatmul.mubr.bf16.gmra.mxu0 %v10848
    %v11228 = vpop.f32.mrf.mxu0
    %v11229 = vadd.f32 0.0, %v11228
    %v11230 = vpop.f32.mrf.mxu0
    %v11231 = vpop.f32.mrf.mxu0
    %v11232 = vadd.f32 0.0, %v11231
    %v11233 = vpop.f32.mrf.mxu0
    %11234 = vmatprep.mubr.bf16.mxu0 %v10852
    %11235 = vmatmul.mubr.bf16.gmra.mxu0 %v10851
    %v11236 = vpop.f32.mrf.mxu0
    %v11237 = vadd.f32 0.0, %v11236
    %v11238 = vpop.f32.mrf.mxu0
    %v11239 = vpop.f32.mrf.mxu0
    %v11240 = vadd.f32 0.0, %v11239
    %v11241 = vpop.f32.mrf.mxu0
    %11242 = vmatprep.mubr.bf16.mxu0 %v10855
    %11243 = vmatmul.mubr.bf16.gmra.mxu0 %v10854
    %v11244 = vpop.f32.mrf.mxu0
    %v11245 = vadd.f32 0.0, %v11244
    %v11246 = vpop.f32.mrf.mxu0
    %v11247 = vpop.f32.mrf.mxu0
    %v11248 = vadd.f32 0.0, %v11247
    %v11249 = vpop.f32.mrf.mxu0
    %11250 = vmatprep.mubr.bf16.mxu0 %v10858
    %11251 = vmatmul.mubr.bf16.gmra.mxu0 %v10857
    %v11252 = vpop.f32.mrf.mxu0
    %v11253 = vadd.f32 0.0, %v11252
    %v11254 = vpop.f32.mrf.mxu0
    %v11255 = vpop.f32.mrf.mxu0
    %v11256 = vadd.f32 0.0, %v11255
    %v11257 = vpop.f32.mrf.mxu0
    %11258 = vmatprep.mubr.bf16.mxu0 %v10861
    %11259 = vmatmul.mubr.bf16.gmra.mxu0 %v10860
    %v11260 = vpop.f32.mrf.mxu0
    %v11261 = vadd.f32 0.0, %v11260
    %v11262 = vpop.f32.mrf.mxu0
    %v11263 = vpop.f32.mrf.mxu0
    %v11264 = vadd.f32 0.0, %v11263
    %v11265 = vpop.f32.mrf.mxu0
    %11266 = vmatprep.mubr.bf16.mxu0 %v10864
    %11267 = vmatmul.mubr.bf16.gmra.mxu0 %v10863
    %v11268 = vpop.f32.mrf.mxu0
    %v11269 = vadd.f32 0.0, %v11268
    %v11270 = vpop.f32.mrf.mxu0
    %v11271 = vpop.f32.mrf.mxu0
    %v11272 = vadd.f32 0.0, %v11271
    %v11273 = vpop.f32.mrf.mxu0
    %11274 = vmatprep.mubr.bf16.mxu0 %v10867
    %11275 = vmatmul.mubr.bf16.gmra.mxu0 %v10866
    %v11276 = vpop.f32.mrf.mxu0
    %v11277 = vadd.f32 0.0, %v11276
    %v11278 = vpop.f32.mrf.mxu0
    %v11279 = vpop.f32.mrf.mxu0
    %v11280 = vadd.f32 0.0, %v11279
    %v11281 = vpop.f32.mrf.mxu0
    %11282 = vmatprep.mubr.bf16.mxu0 %v10870
    %11283 = vmatmul.mubr.bf16.gmra.mxu0 %v10869
    %v11284 = vpop.f32.mrf.mxu0
    %v11285 = vadd.f32 0.0, %v11284
    %v11286 = vpop.f32.mrf.mxu0
    %v11287 = vpop.f32.mrf.mxu0
    %v11288 = vadd.f32 0.0, %v11287
    %v11289 = vpop.f32.mrf.mxu0
    %11290 = vmatprep.mubr.bf16.mxu0 %v10873
    %11291 = vmatmul.mubr.bf16.gmra.mxu0 %v10872
    %v11292 = vpop.f32.mrf.mxu0
    %v11293 = vadd.f32 0.0, %v11292
    %v11294 = vpop.f32.mrf.mxu0
    %v11295 = vpop.f32.mrf.mxu0
    %v11296 = vadd.f32 0.0, %v11295
    %v11297 = vpop.f32.mrf.mxu0
    %11298 = vmatprep.mubr.bf16.mxu0 %v10876
    %11299 = vmatmul.mubr.bf16.gmra.mxu0 %v10875
    %v11300 = vpop.f32.mrf.mxu0
    %v11301 = vadd.f32 0.0, %v11300
    %v11302 = vpop.f32.mrf.mxu0
    %v11303 = vpop.f32.mrf.mxu0
    %v11304 = vadd.f32 0.0, %v11303
    %v11305 = vpop.f32.mrf.mxu0
    %11306 = vmatprep.mubr.bf16.mxu0 %v10879
    %11307 = vmatmul.mubr.bf16.gmra.mxu0 %v10878
    %v11308 = vpop.f32.mrf.mxu0
    %v11309 = vadd.f32 0.0, %v11308
    %v11310 = vpop.f32.mrf.mxu0
    %v11311 = vpop.f32.mrf.mxu0
    %v11312 = vadd.f32 0.0, %v11311
    %v11313 = vpop.f32.mrf.mxu0
    %11314 = vmatprep.mubr.bf16.mxu0 %v10882
    %11315 = vmatmul.mubr.bf16.gmra.mxu0 %v10881
    %v11316 = vpop.f32.mrf.mxu0
    %v11317 = vadd.f32 0.0, %v11316
    %v11318 = vpop.f32.mrf.mxu0
    %v11319 = vpop.f32.mrf.mxu0
    %v11320 = vadd.f32 0.0, %v11319
    %v11321 = vpop.f32.mrf.mxu0
    %11322 = vmatprep.mubr.bf16.mxu0 %v10885
    %11323 = vmatmul.mubr.bf16.gmra.mxu0 %v10884
    %v11324 = vpop.f32.mrf.mxu0
    %v11325 = vadd.f32 0.0, %v11324
    %v11326 = vpop.f32.mrf.mxu0
    %v11327 = vpop.f32.mrf.mxu0
    %v11328 = vadd.f32 0.0, %v11327
    %v11329 = vpop.f32.mrf.mxu0
    %11330 = vmatprep.mubr.bf16.mxu0 %v10888
    %11331 = vmatmul.mubr.bf16.gmra.mxu0 %v10887
    %v11332 = vpop.f32.mrf.mxu0
    %v11333 = vadd.f32 0.0, %v11332
    %v11334 = vpop.f32.mrf.mxu0
    %v11335 = vpop.f32.mrf.mxu0
    %v11336 = vadd.f32 0.0, %v11335
    %v11337 = vpop.f32.mrf.mxu0
    %11338 = vmatprep.mubr.bf16.mxu0 %v10891
    %11339 = vmatmul.mubr.bf16.gmra.mxu0 %v10890
    %v11340 = vpop.f32.mrf.mxu0
    %v11341 = vadd.f32 0.0, %v11340
    %v11342 = vpop.f32.mrf.mxu0
    %v11343 = vpop.f32.mrf.mxu0
    %v11344 = vadd.f32 0.0, %v11343
    %v11345 = vpop.f32.mrf.mxu0
    %11346 = vmatprep.mubr.bf16.mxu0 %v10894
    %11347 = vmatmul.mubr.bf16.gmra.mxu0 %v10893
    %v11348 = vpop.f32.mrf.mxu0
    %v11349 = vadd.f32 0.0, %v11348
    %v11350 = vpop.f32.mrf.mxu0
    %v11351 = vpop.f32.mrf.mxu0
    %v11352 = vadd.f32 0.0, %v11351
    %v11353 = vpop.f32.mrf.mxu0
    %11354 = vmatprep.mubr.bf16.mxu0 %v10897
    %11355 = vmatmul.mubr.bf16.gmra.mxu0 %v10896
    %v11356 = vpop.f32.mrf.mxu0
    %v11357 = vadd.f32 0.0, %v11356
    %v11358 = vpop.f32.mrf.mxu0
    %v11359 = vpop.f32.mrf.mxu0
    %v11360 = vadd.f32 0.0, %v11359
    %v11361 = vpop.f32.mrf.mxu0
    %11362 = vmatprep.mubr.bf16.mxu0 %v10900
    %11363 = vmatmul.mubr.bf16.gmra.mxu0 %v10899
    %v11364 = vpop.f32.mrf.mxu0
    %v11365 = vadd.f32 0.0, %v11364
    %v11366 = vpop.f32.mrf.mxu0
    %v11367 = vpop.f32.mrf.mxu0
    %v11368 = vadd.f32 0.0, %v11367
    %v11369 = vpop.f32.mrf.mxu0
    %11370 = vmatprep.mubr.bf16.mxu0 %v10903
    %11371 = vmatmul.mubr.bf16.gmra.mxu0 %v10902
    %v11372 = vpop.f32.mrf.mxu0
    %v11373 = vadd.f32 0.0, %v11372
    %v11374 = vpop.f32.mrf.mxu0
    %v11375 = vpop.f32.mrf.mxu0
    %v11376 = vadd.f32 0.0, %v11375
    %v11377 = vpop.f32.mrf.mxu0
    %11378 = vmatprep.mubr.bf16.mxu0 %v10906
    %11379 = vmatmul.mubr.bf16.gmra.mxu0 %v10905
    %v11380 = vpop.f32.mrf.mxu0
    %v11381 = vadd.f32 0.0, %v11380
    %v11382 = vpop.f32.mrf.mxu0
    %v11383 = vpop.f32.mrf.mxu0
    %v11384 = vadd.f32 0.0, %v11383
    %v11385 = vpop.f32.mrf.mxu0
    %11386 = vmatprep.mubr.bf16.mxu0 %v10909
    %11387 = vmatmul.mubr.bf16.gmra.mxu0 %v10908
    %v11388 = vpop.f32.mrf.mxu0
    %v11389 = vadd.f32 0.0, %v11388
    %v11390 = vpop.f32.mrf.mxu0
    %v11391 = vpop.f32.mrf.mxu0
    %v11392 = vadd.f32 0.0, %v11391
    %v11393 = vpop.f32.mrf.mxu0
    %11394 = vmatprep.mubr.bf16.mxu0 %v10912
    %11395 = vmatmul.mubr.bf16.gmra.mxu0 %v10911
    %v11396 = vpop.f32.mrf.mxu0
    %v11397 = vadd.f32 0.0, %v11396
    %v11398 = vpop.f32.mrf.mxu0
    %v11399 = vpop.f32.mrf.mxu0
    %v11400 = vadd.f32 0.0, %v11399
    %v11401 = vpop.f32.mrf.mxu0
    %11402 = vmatprep.mubr.bf16.mxu0 %v10915
    %11403 = vmatmul.mubr.bf16.gmra.mxu0 %v10914
    %v11404 = vpop.f32.mrf.mxu0
    %v11405 = vadd.f32 0.0, %v11404
    %v11406 = vpop.f32.mrf.mxu0
    %v11407 = vpop.f32.mrf.mxu0
    %v11408 = vadd.f32 0.0, %v11407
    %v11409 = vpop.f32.mrf.mxu0
    %11410 = vmatprep.mubr.bf16.mxu0 %v10918
    %11411 = vmatmul.mubr.bf16.gmra.mxu0 %v10917
    %v11412 = vpop.f32.mrf.mxu0
    %v11413 = vadd.f32 0.0, %v11412
    %v11414 = vpop.f32.mrf.mxu0
    %v11415 = vpop.f32.mrf.mxu0
    %v11416 = vadd.f32 0.0, %v11415
    %v11417 = vpop.f32.mrf.mxu0
    %11418 = vmatprep.mubr.bf16.mxu0 %v10921
    %11419 = vmatmul.mubr.bf16.gmra.mxu0 %v10920
    %v11420 = vpop.f32.mrf.mxu0
    %v11421 = vadd.f32 0.0, %v11420
    %v11422 = vpop.f32.mrf.mxu0
    %v11423 = vpop.f32.mrf.mxu0
    %v11424 = vadd.f32 0.0, %v11423
    %v11425 = vpop.f32.mrf.mxu0
    %11426 = vmatprep.mubr.bf16.mxu0 %v10924
    %11427 = vmatmul.mubr.bf16.gmra.mxu0 %v10923
    %v11428 = vpop.f32.mrf.mxu0
    %v11429 = vadd.f32 0.0, %v11428
    %v11430 = vpop.f32.mrf.mxu0
    %v11431 = vpop.f32.mrf.mxu0
    %v11432 = vadd.f32 0.0, %v11431
    %v11433 = vpop.f32.mrf.mxu0
    %11434 = vmatprep.mubr.bf16.mxu0 %v10927
    %11435 = vmatmul.mubr.bf16.gmra.mxu0 %v10926
    %v11436 = vpop.f32.mrf.mxu0
    %v11437 = vadd.f32 0.0, %v11436
    %v11438 = vpop.f32.mrf.mxu0
    %v11439 = vpop.f32.mrf.mxu0
    %v11440 = vadd.f32 0.0, %v11439
    %v11441 = vpop.f32.mrf.mxu0
    %11442 = vmatprep.mubr.bf16.mxu0 %v10930
    %11443 = vmatmul.mubr.bf16.gmra.mxu0 %v10929
    %v11444 = vpop.f32.mrf.mxu0
    %v11445 = vadd.f32 0.0, %v11444
    %v11446 = vpop.f32.mrf.mxu0
    %v11447 = vpop.f32.mrf.mxu0
    %v11448 = vadd.f32 0.0, %v11447
    %v11449 = vpop.f32.mrf.mxu0
    %11450 = vmatprep.mubr.bf16.mxu0 %v10933
    %11451 = vmatmul.mubr.bf16.gmra.mxu0 %v10932
    %v11452 = vpop.f32.mrf.mxu0
    %v11453 = vadd.f32 0.0, %v11452
    %v11454 = vpop.f32.mrf.mxu0
    %v11455 = vpop.f32.mrf.mxu0
    %v11456 = vadd.f32 0.0, %v11455
    %v11457 = vpop.f32.mrf.mxu0
    %11458 = vmatprep.mubr.bf16.mxu0 %v10936
    %11459 = vmatmul.mubr.bf16.gmra.mxu0 %v10935
    %v11460 = vpop.f32.mrf.mxu0
    %v11461 = vadd.f32 0.0, %v11460
    %v11462 = vpop.f32.mrf.mxu0
    %v11463 = vpop.f32.mrf.mxu0
    %v11464 = vadd.f32 0.0, %v11463
    %v11465 = vpop.f32.mrf.mxu0
    %11466 = vdwg.mxu0
    %11467 = vmatprep.subr.bf16.mxu0 0
    %11468 = vmatpush1.bf16.msra.mxu0 %v11153
    %11469 = vmatprep.subr.bf16.mxu0 0
    %11470 = vmatpush1.bf16.msra.mxu0 %v11152
    %11471 = vmatprep.subr.bf16.mxu0 0
    %11472 = vmatpush1.bf16.msra.mxu0 %v11151
    %11473 = vmatprep.subr.bf16.mxu0 0
    %11474 = vmatpush1.bf16.msra.mxu0 %v11150
    %11475 = vmatprep.subr.bf16.mxu0 0
    %11476 = vmatpush1.bf16.msra.mxu0 %v11149
    %11477 = vmatprep.subr.bf16.mxu0 0
    %11478 = vmatpush1.bf16.msra.mxu0 %v11148
    %11479 = vmatprep.subr.bf16.mxu0 0
    %11480 = vmatpush1.bf16.msra.mxu0 %v11147
    %11481 = vmatprep.subr.bf16.mxu0 0
    %11482 = vmatpush1.bf16.msra.mxu0 %v11146
    %11483 = vmatprep.subr.bf16.mxu0 0
    %11484 = vmatpush2.bf16.msra.mxu0 0
    %11485 = vmatprep.subr.bf16.mxu0 0
    %11486 = vmatpush2.bf16.msra.mxu0 0
    %11487 = vmatprep.subr.bf16.mxu0 0
    %11488 = vmatpush2.bf16.msra.mxu0 0
    %11489 = vmatprep.subr.bf16.mxu0 0
    %11490 = vmatpush2.bf16.msra.mxu0 0
    %11491 = vmatprep.subr.bf16.mxu0 0
    %11492 = vmatpush2.bf16.msra.mxu0 0
    %11493 = vmatprep.subr.bf16.mxu0 0
    %11494 = vmatpush2.bf16.msra.mxu0 0
    %11495 = vmatprep.subr.bf16.mxu0 0
    %11496 = vmatpush2.bf16.msra.mxu0 0
    %11497 = vmatprep.subr.bf16.mxu0 0
    %11498 = vmatpush2.bf16.msra.mxu0 0
    %11499 = vmatprep.mubr.bf16.mxu0 0
    %11500 = vmatmul.mubr.bf16.gmra.mxu0 %v10844
    %v11501 = vpop.f32.mrf.mxu0
    %v11502 = vadd.f32 %v11213, %v11501
    %v11503 = vpop.f32.mrf.mxu0
    %v11504 = vpop.f32.mrf.mxu0
    %v11505 = vadd.f32 %v11216, %v11504
    %v11506 = vpop.f32.mrf.mxu0
    %11507 = vmatprep.mubr.bf16.mxu0 0
    %11508 = vmatmul.mubr.bf16.gmra.mxu0 %v10847
    %v11509 = vpop.f32.mrf.mxu0
    %v11510 = vadd.f32 %v11221, %v11509
    %v11511 = vpop.f32.mrf.mxu0
    %v11512 = vpop.f32.mrf.mxu0
    %v11513 = vadd.f32 %v11224, %v11512
    %v11514 = vpop.f32.mrf.mxu0
    %11515 = vmatprep.mubr.bf16.mxu0 0
    %11516 = vmatmul.mubr.bf16.gmra.mxu0 %v10850
    %v11517 = vpop.f32.mrf.mxu0
    %v11518 = vadd.f32 %v11229, %v11517
    %v11519 = vpop.f32.mrf.mxu0
    %v11520 = vpop.f32.mrf.mxu0
    %v11521 = vadd.f32 %v11232, %v11520
    %v11522 = vpop.f32.mrf.mxu0
    %11523 = vmatprep.mubr.bf16.mxu0 0
    %11524 = vmatmul.mubr.bf16.gmra.mxu0 %v10853
    %v11525 = vpop.f32.mrf.mxu0
    %v11526 = vadd.f32 %v11237, %v11525
    %v11527 = vpop.f32.mrf.mxu0
    %v11528 = vpop.f32.mrf.mxu0
    %v11529 = vadd.f32 %v11240, %v11528
    %v11530 = vpop.f32.mrf.mxu0
    %11531 = vmatprep.mubr.bf16.mxu0 0
    %11532 = vmatmul.mubr.bf16.gmra.mxu0 %v10856
    %v11533 = vpop.f32.mrf.mxu0
    %v11534 = vadd.f32 %v11245, %v11533
    %v11535 = vpop.f32.mrf.mxu0
    %v11536 = vpop.f32.mrf.mxu0
    %v11537 = vadd.f32 %v11248, %v11536
    %v11538 = vpop.f32.mrf.mxu0
    %11539 = vmatprep.mubr.bf16.mxu0 0
    %11540 = vmatmul.mubr.bf16.gmra.mxu0 %v10859
    %v11541 = vpop.f32.mrf.mxu0
    %v11542 = vadd.f32 %v11253, %v11541
    %v11543 = vpop.f32.mrf.mxu0
    %v11544 = vpop.f32.mrf.mxu0
    %v11545 = vadd.f32 %v11256, %v11544
    %v11546 = vpop.f32.mrf.mxu0
    %11547 = vmatprep.mubr.bf16.mxu0 0
    %11548 = vmatmul.mubr.bf16.gmra.mxu0 %v10862
    %v11549 = vpop.f32.mrf.mxu0
    %v11550 = vadd.f32 %v11261, %v11549
    %v11551 = vpop.f32.mrf.mxu0
    %v11552 = vpop.f32.mrf.mxu0
    %v11553 = vadd.f32 %v11264, %v11552
    %v11554 = vpop.f32.mrf.mxu0
    %11555 = vmatprep.mubr.bf16.mxu0 0
    %11556 = vmatmul.mubr.bf16.gmra.mxu0 %v10865
    %v11557 = vpop.f32.mrf.mxu0
    %v11558 = vadd.f32 %v11269, %v11557
    %v11559 = vpop.f32.mrf.mxu0
    %v11560 = vpop.f32.mrf.mxu0
    %v11561 = vadd.f32 %v11272, %v11560
    %v11562 = vpop.f32.mrf.mxu0
    %11563 = vmatprep.mubr.bf16.mxu0 0
    %11564 = vmatmul.mubr.bf16.gmra.mxu0 %v10868
    %v11565 = vpop.f32.mrf.mxu0
    %v11566 = vadd.f32 %v11277, %v11565
    %v11567 = vpop.f32.mrf.mxu0
    %v11568 = vpop.f32.mrf.mxu0
    %v11569 = vadd.f32 %v11280, %v11568
    %v11570 = vpop.f32.mrf.mxu0
    %11571 = vmatprep.mubr.bf16.mxu0 0
    %11572 = vmatmul.mubr.bf16.gmra.mxu0 %v10871
    %v11573 = vpop.f32.mrf.mxu0
    %v11574 = vadd.f32 %v11285, %v11573
    %v11575 = vpop.f32.mrf.mxu0
    %v11576 = vpop.f32.mrf.mxu0
    %v11577 = vadd.f32 %v11288, %v11576
    %v11578 = vpop.f32.mrf.mxu0
    %11579 = vmatprep.mubr.bf16.mxu0 0
    %11580 = vmatmul.mubr.bf16.gmra.mxu0 %v10874
    %v11581 = vpop.f32.mrf.mxu0
    %v11582 = vadd.f32 %v11293, %v11581
    %v11583 = vpop.f32.mrf.mxu0
    %v11584 = vpop.f32.mrf.mxu0
    %v11585 = vadd.f32 %v11296, %v11584
    %v11586 = vpop.f32.mrf.mxu0
    %11587 = vmatprep.mubr.bf16.mxu0 0
    %11588 = vmatmul.mubr.bf16.gmra.mxu0 %v10877
    %v11589 = vpop.f32.mrf.mxu0
    %v11590 = vadd.f32 %v11301, %v11589
    %v11591 = vpop.f32.mrf.mxu0
    %v11592 = vpop.f32.mrf.mxu0
    %v11593 = vadd.f32 %v11304, %v11592
    %v11594 = vpop.f32.mrf.mxu0
    %11595 = vmatprep.mubr.bf16.mxu0 0
    %11596 = vmatmul.mubr.bf16.gmra.mxu0 %v10880
    %v11597 = vpop.f32.mrf.mxu0
    %v11598 = vadd.f32 %v11309, %v11597
    %v11599 = vpop.f32.mrf.mxu0
    %v11600 = vpop.f32.mrf.mxu0
    %v11601 = vadd.f32 %v11312, %v11600
    %v11602 = vpop.f32.mrf.mxu0
    %11603 = vmatprep.mubr.bf16.mxu0 0
    %11604 = vmatmul.mubr.bf16.gmra.mxu0 %v10883
    %v11605 = vpop.f32.mrf.mxu0
    %v11606 = vadd.f32 %v11317, %v11605
    %v11607 = vpop.f32.mrf.mxu0
    %v11608 = vpop.f32.mrf.mxu0
    %v11609 = vadd.f32 %v11320, %v11608
    %v11610 = vpop.f32.mrf.mxu0
    %11611 = vmatprep.mubr.bf16.mxu0 0
    %11612 = vmatmul.mubr.bf16.gmra.mxu0 %v10886
    %v11613 = vpop.f32.mrf.mxu0
    %v11614 = vadd.f32 %v11325, %v11613
    %v11615 = vpop.f32.mrf.mxu0
    %v11616 = vpop.f32.mrf.mxu0
    %v11617 = vadd.f32 %v11328, %v11616
    %v11618 = vpop.f32.mrf.mxu0
    %11619 = vmatprep.mubr.bf16.mxu0 0
    %11620 = vmatmul.mubr.bf16.gmra.mxu0 %v10889
    %v11621 = vpop.f32.mrf.mxu0
    %v11622 = vadd.f32 %v11333, %v11621
    %v11623 = vpop.f32.mrf.mxu0
    %v11624 = vpop.f32.mrf.mxu0
    %v11625 = vadd.f32 %v11336, %v11624
    %v11626 = vpop.f32.mrf.mxu0
    %11627 = vmatprep.mubr.bf16.mxu0 0
    %11628 = vmatmul.mubr.bf16.gmra.mxu0 %v10892
    %v11629 = vpop.f32.mrf.mxu0
    %v11630 = vadd.f32 %v11341, %v11629
    %v11631 = vpop.f32.mrf.mxu0
    %v11632 = vpop.f32.mrf.mxu0
    %v11633 = vadd.f32 %v11344, %v11632
    %v11634 = vpop.f32.mrf.mxu0
    %11635 = vmatprep.mubr.bf16.mxu0 0
    %11636 = vmatmul.mubr.bf16.gmra.mxu0 %v10895
    %v11637 = vpop.f32.mrf.mxu0
    %v11638 = vadd.f32 %v11349, %v11637
    %v11639 = vpop.f32.mrf.mxu0
    %v11640 = vpop.f32.mrf.mxu0
    %v11641 = vadd.f32 %v11352, %v11640
    %v11642 = vpop.f32.mrf.mxu0
    %11643 = vmatprep.mubr.bf16.mxu0 0
    %11644 = vmatmul.mubr.bf16.gmra.mxu0 %v10898
    %v11645 = vpop.f32.mrf.mxu0
    %v11646 = vadd.f32 %v11357, %v11645
    %v11647 = vpop.f32.mrf.mxu0
    %v11648 = vpop.f32.mrf.mxu0
    %v11649 = vadd.f32 %v11360, %v11648
    %v11650 = vpop.f32.mrf.mxu0
    %11651 = vmatprep.mubr.bf16.mxu0 0
    %11652 = vmatmul.mubr.bf16.gmra.mxu0 %v10901
    %v11653 = vpop.f32.mrf.mxu0
    %v11654 = vadd.f32 %v11365, %v11653
    %v11655 = vpop.f32.mrf.mxu0
    %v11656 = vpop.f32.mrf.mxu0
    %v11657 = vadd.f32 %v11368, %v11656
    %v11658 = vpop.f32.mrf.mxu0
    %11659 = vmatprep.mubr.bf16.mxu0 0
    %11660 = vmatmul.mubr.bf16.gmra.mxu0 %v10904
    %v11661 = vpop.f32.mrf.mxu0
    %v11662 = vadd.f32 %v11373, %v11661
    %v11663 = vpop.f32.mrf.mxu0
    %v11664 = vpop.f32.mrf.mxu0
    %v11665 = vadd.f32 %v11376, %v11664
    %v11666 = vpop.f32.mrf.mxu0
    %11667 = vmatprep.mubr.bf16.mxu0 0
    %11668 = vmatmul.mubr.bf16.gmra.mxu0 %v10907
    %v11669 = vpop.f32.mrf.mxu0
    %v11670 = vadd.f32 %v11381, %v11669
    %v11671 = vpop.f32.mrf.mxu0
    %v11672 = vpop.f32.mrf.mxu0
    %v11673 = vadd.f32 %v11384, %v11672
    %v11674 = vpop.f32.mrf.mxu0
    %11675 = vmatprep.mubr.bf16.mxu0 0
    %11676 = vmatmul.mubr.bf16.gmra.mxu0 %v10910
    %v11677 = vpop.f32.mrf.mxu0
    %v11678 = vadd.f32 %v11389, %v11677
    %v11679 = vpop.f32.mrf.mxu0
    %v11680 = vpop.f32.mrf.mxu0
    %v11681 = vadd.f32 %v11392, %v11680
    %v11682 = vpop.f32.mrf.mxu0
    %11683 = vmatprep.mubr.bf16.mxu0 0
    %11684 = vmatmul.mubr.bf16.gmra.mxu0 %v10913
    %v11685 = vpop.f32.mrf.mxu0
    %v11686 = vadd.f32 %v11397, %v11685
    %v11687 = vpop.f32.mrf.mxu0
    %v11688 = vpop.f32.mrf.mxu0
    %v11689 = vadd.f32 %v11400, %v11688
    %v11690 = vpop.f32.mrf.mxu0
    %11691 = vmatprep.mubr.bf16.mxu0 0
    %11692 = vmatmul.mubr.bf16.gmra.mxu0 %v10916
    %v11693 = vpop.f32.mrf.mxu0
    %v11694 = vadd.f32 %v11405, %v11693
    %v11695 = vpop.f32.mrf.mxu0
    %v11696 = vpop.f32.mrf.mxu0
    %v11697 = vadd.f32 %v11408, %v11696
    %v11698 = vpop.f32.mrf.mxu0
    %11699 = vmatprep.mubr.bf16.mxu0 0
    %11700 = vmatmul.mubr.bf16.gmra.mxu0 %v10919
    %v11701 = vpop.f32.mrf.mxu0
    %v11702 = vadd.f32 %v11413, %v11701
    %v11703 = vpop.f32.mrf.mxu0
    %v11704 = vpop.f32.mrf.mxu0
    %v11705 = vadd.f32 %v11416, %v11704
    %v11706 = vpop.f32.mrf.mxu0
    %11707 = vmatprep.mubr.bf16.mxu0 0
    %11708 = vmatmul.mubr.bf16.gmra.mxu0 %v10922
    %v11709 = vpop.f32.mrf.mxu0
    %v11710 = vadd.f32 %v11421, %v11709
    %v11711 = vpop.f32.mrf.mxu0
    %v11712 = vpop.f32.mrf.mxu0
    %v11713 = vadd.f32 %v11424, %v11712
    %v11714 = vpop.f32.mrf.mxu0
    %11715 = vmatprep.mubr.bf16.mxu0 0
    %11716 = vmatmul.mubr.bf16.gmra.mxu0 %v10925
    %v11717 = vpop.f32.mrf.mxu0
    %v11718 = vadd.f32 %v11429, %v11717
    %v11719 = vpop.f32.mrf.mxu0
    %v11720 = vpop.f32.mrf.mxu0
    %v11721 = vadd.f32 %v11432, %v11720
    %v11722 = vpop.f32.mrf.mxu0
    %11723 = vmatprep.mubr.bf16.mxu0 0
    %11724 = vmatmul.mubr.bf16.gmra.mxu0 %v10928
    %v11725 = vpop.f32.mrf.mxu0
    %v11726 = vadd.f32 %v11437, %v11725
    %v11727 = vpop.f32.mrf.mxu0
    %v11728 = vpop.f32.mrf.mxu0
    %v11729 = vadd.f32 %v11440, %v11728
    %v11730 = vpop.f32.mrf.mxu0
    %11731 = vmatprep.mubr.bf16.mxu0 0
    %11732 = vmatmul.mubr.bf16.gmra.mxu0 %v10931
    %v11733 = vpop.f32.mrf.mxu0
    %v11734 = vadd.f32 %v11445, %v11733
    %v11735 = vpop.f32.mrf.mxu0
    %v11736 = vpop.f32.mrf.mxu0
    %v11737 = vadd.f32 %v11448, %v11736
    %v11738 = vpop.f32.mrf.mxu0
    %11739 = vmatprep.mubr.bf16.mxu0 0
    %11740 = vmatmul.mubr.bf16.gmra.mxu0 %v10934
    %v11741 = vpop.f32.mrf.mxu0
    %v11742 = vadd.f32 %v11453, %v11741
    %v11743 = vpop.f32.mrf.mxu0
    %v11744 = vpop.f32.mrf.mxu0
    %v11745 = vadd.f32 %v11456, %v11744
    %v11746 = vpop.f32.mrf.mxu0
    %11747 = vmatprep.mubr.bf16.mxu0 0
    %11748 = vmatmul.mubr.bf16.gmra.mxu0 %v10937
    %v11749 = vpop.f32.mrf.mxu0
    %v11750 = vadd.f32 %v11461, %v11749
    %v11751 = vpop.f32.mrf.mxu0
    %v11752 = vpop.f32.mrf.mxu0
    %v11753 = vadd.f32 %v11464, %v11752
    %v11754 = vpop.f32.mrf.mxu0
    %11755 = vdwg.mxu0
    %v11756 = vadd.f32 %v10091, %v11502
    %v11757 = vadd.f32 %v10094, %v11505
    %v11758 = vadd.f32 %v10099, %v11510
    %v11759 = vadd.f32 %v10102, %v11513
    %v11760 = vadd.f32 %v10107, %v11518
    %v11761 = vadd.f32 %v10110, %v11521
    %v11762 = vadd.f32 %v10115, %v11526
    %v11763 = vadd.f32 %v10118, %v11529
    %v11764 = vadd.f32 %v10123, %v11534
    %v11765 = vadd.f32 %v10126, %v11537
    %v11766 = vadd.f32 %v10131, %v11542
    %v11767 = vadd.f32 %v10134, %v11545
    %v11768 = vadd.f32 %v10139, %v11550
    %v11769 = vadd.f32 %v10142, %v11553
    %v11770 = vadd.f32 %v10147, %v11558
    %v11771 = vadd.f32 %v10150, %v11561
    %v11772 = vadd.f32 %v10155, %v11566
    %v11773 = vadd.f32 %v10158, %v11569
    %v11774 = vadd.f32 %v10163, %v11574
    %v11775 = vadd.f32 %v10166, %v11577
    %v11776 = vadd.f32 %v10171, %v11582
    %v11777 = vadd.f32 %v10174, %v11585
    %v11778 = vadd.f32 %v10179, %v11590
    %v11779 = vadd.f32 %v10182, %v11593
    %v11780 = vadd.f32 %v10187, %v11598
    %v11781 = vadd.f32 %v10190, %v11601
    %v11782 = vadd.f32 %v10195, %v11606
    %v11783 = vadd.f32 %v10198, %v11609
    %v11784 = vadd.f32 %v10203, %v11614
    %v11785 = vadd.f32 %v10206, %v11617
    %v11786 = vadd.f32 %v10211, %v11622
    %v11787 = vadd.f32 %v10214, %v11625
    %v11788 = vadd.f32 %v10219, %v11630
    %v11789 = vadd.f32 %v10222, %v11633
    %v11790 = vadd.f32 %v10227, %v11638
    %v11791 = vadd.f32 %v10230, %v11641
    %v11792 = vadd.f32 %v10235, %v11646
    %v11793 = vadd.f32 %v10238, %v11649
    %v11794 = vadd.f32 %v10243, %v11654
    %v11795 = vadd.f32 %v10246, %v11657
    %v11796 = vadd.f32 %v10251, %v11662
    %v11797 = vadd.f32 %v10254, %v11665
    %v11798 = vadd.f32 %v10259, %v11670
    %v11799 = vadd.f32 %v10262, %v11673
    %v11800 = vadd.f32 %v10267, %v11678
    %v11801 = vadd.f32 %v10270, %v11681
    %v11802 = vadd.f32 %v10275, %v11686
    %v11803 = vadd.f32 %v10278, %v11689
    %v11804 = vadd.f32 %v10283, %v11694
    %v11805 = vadd.f32 %v10286, %v11697
    %v11806 = vadd.f32 %v10291, %v11702
    %v11807 = vadd.f32 %v10294, %v11705
    %v11808 = vadd.f32 %v10299, %v11710
    %v11809 = vadd.f32 %v10302, %v11713
    %v11810 = vadd.f32 %v10307, %v11718
    %v11811 = vadd.f32 %v10310, %v11721
    %v11812 = vadd.f32 %v10315, %v11726
    %v11813 = vadd.f32 %v10318, %v11729
    %v11814 = vadd.f32 %v10323, %v11734
    %v11815 = vadd.f32 %v10326, %v11737
    %v11816 = vadd.f32 %v10331, %v11742
    %v11817 = vadd.f32 %v10334, %v11745
    %v11818 = vadd.f32 %v10339, %v11750
    %v11819 = vadd.f32 %v10342, %v11753
    %v11821 = vlaneseq
    %v11822 = vshrl.u32 %v11821, 7
    %v11823 = vsub.s32 0, %v11822
    %v11824 = vrot.slane %v7523, %v11823
    %v11826 = vadd.f32 %v11756, %v11824
    %v11827 = vadd.f32 %v11757, %v11824
    %v11828 = vadd.f32 %v11758, %v11824
    %v11829 = vadd.f32 %v11759, %v11824
    %v11830 = vadd.f32 %v11760, %v11824
    %v11831 = vadd.f32 %v11761, %v11824
    %v11832 = vadd.f32 %v11762, %v11824
    %v11833 = vadd.f32 %v11763, %v11824
    %v11834 = vadd.f32 %v11764, %v11824
    %v11835 = vadd.f32 %v11765, %v11824
    %v11836 = vadd.f32 %v11766, %v11824
    %v11837 = vadd.f32 %v11767, %v11824
    %v11838 = vadd.f32 %v11768, %v11824
    %v11839 = vadd.f32 %v11769, %v11824
    %v11840 = vadd.f32 %v11770, %v11824
    %v11841 = vadd.f32 %v11771, %v11824
    %v11842 = vadd.f32 %v11772, %v11824
    %v11843 = vadd.f32 %v11773, %v11824
    %v11844 = vadd.f32 %v11774, %v11824
    %v11845 = vadd.f32 %v11775, %v11824
    %v11846 = vadd.f32 %v11776, %v11824
    %v11847 = vadd.f32 %v11777, %v11824
    %v11848 = vadd.f32 %v11778, %v11824
    %v11849 = vadd.f32 %v11779, %v11824
    %v11850 = vadd.f32 %v11780, %v11824
    %v11851 = vadd.f32 %v11781, %v11824
    %v11852 = vadd.f32 %v11782, %v11824
    %v11853 = vadd.f32 %v11783, %v11824
    %v11854 = vadd.f32 %v11784, %v11824
    %v11855 = vadd.f32 %v11785, %v11824
    %v11856 = vadd.f32 %v11786, %v11824
    %v11857 = vadd.f32 %v11787, %v11824
    %v11858 = vadd.f32 %v11788, %v11824
    %v11859 = vadd.f32 %v11789, %v11824
    %v11860 = vadd.f32 %v11790, %v11824
    %v11861 = vadd.f32 %v11791, %v11824
    %v11862 = vadd.f32 %v11792, %v11824
    %v11863 = vadd.f32 %v11793, %v11824
    %v11864 = vadd.f32 %v11794, %v11824
    %v11865 = vadd.f32 %v11795, %v11824
    %v11866 = vadd.f32 %v11796, %v11824
    %v11867 = vadd.f32 %v11797, %v11824
    %v11868 = vadd.f32 %v11798, %v11824
    %v11869 = vadd.f32 %v11799, %v11824
    %v11870 = vadd.f32 %v11800, %v11824
    %v11871 = vadd.f32 %v11801, %v11824
    %v11872 = vadd.f32 %v11802, %v11824
    %v11873 = vadd.f32 %v11803, %v11824
    %v11874 = vadd.f32 %v11804, %v11824
    %v11875 = vadd.f32 %v11805, %v11824
    %v11876 = vadd.f32 %v11806, %v11824
    %v11877 = vadd.f32 %v11807, %v11824
    %v11878 = vadd.f32 %v11808, %v11824
    %v11879 = vadd.f32 %v11809, %v11824
    %v11880 = vadd.f32 %v11810, %v11824
    %v11881 = vadd.f32 %v11811, %v11824
    %v11882 = vadd.f32 %v11812, %v11824
    %v11883 = vadd.f32 %v11813, %v11824
    %v11884 = vadd.f32 %v11814, %v11824
    %v11885 = vadd.f32 %v11815, %v11824
    %v11886 = vadd.f32 %v11816, %v11824
    %v11887 = vadd.f32 %v11817, %v11824
    %v11888 = vadd.f32 %v11818, %v11824
    %v11889 = vadd.f32 %v11819, %v11824
    %v11890 = vmul.f32 %v11826, 0.5
    %v11891 = vmul.f32 %v11827, 0.5
    %v11892 = vmul.f32 %v11828, 0.5
    %v11893 = vmul.f32 %v11829, 0.5
    %v11894 = vmul.f32 %v11830, 0.5
    %v11895 = vmul.f32 %v11831, 0.5
    %v11896 = vmul.f32 %v11832, 0.5
    %v11897 = vmul.f32 %v11833, 0.5
    %v11898 = vmul.f32 %v11834, 0.5
    %v11899 = vmul.f32 %v11835, 0.5
    %v11900 = vmul.f32 %v11836, 0.5
    %v11901 = vmul.f32 %v11837, 0.5
    %v11902 = vmul.f32 %v11838, 0.5
    %v11903 = vmul.f32 %v11839, 0.5
    %v11904 = vmul.f32 %v11840, 0.5
    %v11905 = vmul.f32 %v11841, 0.5
    %v11906 = vmul.f32 %v11842, 0.5
    %v11907 = vmul.f32 %v11843, 0.5
    %v11908 = vmul.f32 %v11844, 0.5
    %v11909 = vmul.f32 %v11845, 0.5
    %v11910 = vmul.f32 %v11846, 0.5
    %v11911 = vmul.f32 %v11847, 0.5
    %v11912 = vmul.f32 %v11848, 0.5
    %v11913 = vmul.f32 %v11849, 0.5
    %v11914 = vmul.f32 %v11850, 0.5
    %v11915 = vmul.f32 %v11851, 0.5
    %v11916 = vmul.f32 %v11852, 0.5
    %v11917 = vmul.f32 %v11853, 0.5
    %v11918 = vmul.f32 %v11854, 0.5
    %v11919 = vmul.f32 %v11855, 0.5
    %v11920 = vmul.f32 %v11856, 0.5
    %v11921 = vmul.f32 %v11857, 0.5
    %v11922 = vmul.f32 %v11858, 0.5
    %v11923 = vmul.f32 %v11859, 0.5
    %v11924 = vmul.f32 %v11860, 0.5
    %v11925 = vmul.f32 %v11861, 0.5
    %v11926 = vmul.f32 %v11862, 0.5
    %v11927 = vmul.f32 %v11863, 0.5
    %v11928 = vmul.f32 %v11864, 0.5
    %v11929 = vmul.f32 %v11865, 0.5
    %v11930 = vmul.f32 %v11866, 0.5
    %v11931 = vmul.f32 %v11867, 0.5
    %v11932 = vmul.f32 %v11868, 0.5
    %v11933 = vmul.f32 %v11869, 0.5
    %v11934 = vmul.f32 %v11870, 0.5
    %v11935 = vmul.f32 %v11871, 0.5
    %v11936 = vmul.f32 %v11872, 0.5
    %v11937 = vmul.f32 %v11873, 0.5
    %v11938 = vmul.f32 %v11874, 0.5
    %v11939 = vmul.f32 %v11875, 0.5
    %v11940 = vmul.f32 %v11876, 0.5
    %v11941 = vmul.f32 %v11877, 0.5
    %v11942 = vmul.f32 %v11878, 0.5
    %v11943 = vmul.f32 %v11879, 0.5
    %v11944 = vmul.f32 %v11880, 0.5
    %v11945 = vmul.f32 %v11881, 0.5
    %v11946 = vmul.f32 %v11882, 0.5
    %v11947 = vmul.f32 %v11883, 0.5
    %v11948 = vmul.f32 %v11884, 0.5
    %v11949 = vmul.f32 %v11885, 0.5
    %v11950 = vmul.f32 %v11886, 0.5
    %v11951 = vmul.f32 %v11887, 0.5
    %v11952 = vmul.f32 %v11888, 0.5
    %v11953 = vmul.f32 %v11889, 0.5
    %v11954 = vtanh.pop %v11890
    %v11955 = vtanh.pop %v11891
    %v11956 = vtanh.pop %v11892
    %v11957 = vtanh.pop %v11893
    %v11958 = vtanh.pop %v11894
    %v11959 = vtanh.pop %v11895
    %v11960 = vtanh.pop %v11896
    %v11961 = vtanh.pop %v11897
    %v11962 = vtanh.pop %v11898
    %v11963 = vtanh.pop %v11899
    %v11964 = vtanh.pop %v11900
    %v11965 = vtanh.pop %v11901
    %v11966 = vtanh.pop %v11902
    %v11967 = vtanh.pop %v11903
    %v11968 = vtanh.pop %v11904
    %v11969 = vtanh.pop %v11905
    %v11970 = vtanh.pop %v11906
    %v11971 = vtanh.pop %v11907
    %v11972 = vtanh.pop %v11908
    %v11973 = vtanh.pop %v11909
    %v11974 = vtanh.pop %v11910
    %v11975 = vtanh.pop %v11911
    %v11976 = vtanh.pop %v11912
    %v11977 = vtanh.pop %v11913
    %v11978 = vtanh.pop %v11914
    %v11979 = vtanh.pop %v11915
    %v11980 = vtanh.pop %v11916
    %v11981 = vtanh.pop %v11917
    %v11982 = vtanh.pop %v11918
    %v11983 = vtanh.pop %v11919
    %v11984 = vtanh.pop %v11920
    %v11985 = vtanh.pop %v11921
    %v11986 = vtanh.pop %v11922
    %v11987 = vtanh.pop %v11923
    %v11988 = vtanh.pop %v11924
    %v11989 = vtanh.pop %v11925
    %v11990 = vtanh.pop %v11926
    %v11991 = vtanh.pop %v11927
    %v11992 = vtanh.pop %v11928
    %v11993 = vtanh.pop %v11929
    %v11994 = vtanh.pop %v11930
    %v11995 = vtanh.pop %v11931
    %v11996 = vtanh.pop %v11932
    %v11997 = vtanh.pop %v11933
    %v11998 = vtanh.pop %v11934
    %v11999 = vtanh.pop %v11935
    %v12000 = vtanh.pop %v11936
    %v12001 = vtanh.pop %v11937
    %v12002 = vtanh.pop %v11938
    %v12003 = vtanh.pop %v11939
    %v12004 = vtanh.pop %v11940
    %v12005 = vtanh.pop %v11941
    %v12006 = vtanh.pop %v11942
    %v12007 = vtanh.pop %v11943
    %v12008 = vtanh.pop %v11944
    %v12009 = vtanh.pop %v11945
    %v12010 = vtanh.pop %v11946
    %v12011 = vtanh.pop %v11947
    %v12012 = vtanh.pop %v11948
    %v12013 = vtanh.pop %v11949
    %v12014 = vtanh.pop %v11950
    %v12015 = vtanh.pop %v11951
    %v12016 = vtanh.pop %v11952
    %v12017 = vtanh.pop %v11953
    %v12018 = vmul.f32 %v11954, 0.5
    %v12019 = vmul.f32 %v11955, 0.5
    %v12020 = vmul.f32 %v11956, 0.5
    %v12021 = vmul.f32 %v11957, 0.5
    %v12022 = vmul.f32 %v11958, 0.5
    %v12023 = vmul.f32 %v11959, 0.5
    %v12024 = vmul.f32 %v11960, 0.5
    %v12025 = vmul.f32 %v11961, 0.5
    %v12026 = vmul.f32 %v11962, 0.5
    %v12027 = vmul.f32 %v11963, 0.5
    %v12028 = vmul.f32 %v11964, 0.5
    %v12029 = vmul.f32 %v11965, 0.5
    %v12030 = vmul.f32 %v11966, 0.5
    %v12031 = vmul.f32 %v11967, 0.5
    %v12032 = vmul.f32 %v11968, 0.5
    %v12033 = vmul.f32 %v11969, 0.5
    %v12034 = vmul.f32 %v11970, 0.5
    %v12035 = vmul.f32 %v11971, 0.5
    %v12036 = vmul.f32 %v11972, 0.5
    %v12037 = vmul.f32 %v11973, 0.5
    %v12038 = vmul.f32 %v11974, 0.5
    %v12039 = vmul.f32 %v11975, 0.5
    %v12040 = vmul.f32 %v11976, 0.5
    %v12041 = vmul.f32 %v11977, 0.5
    %v12042 = vmul.f32 %v11978, 0.5
    %v12043 = vmul.f32 %v11979, 0.5
    %v12044 = vmul.f32 %v11980, 0.5
    %v12045 = vmul.f32 %v11981, 0.5
    %v12046 = vmul.f32 %v11982, 0.5
    %v12047 = vmul.f32 %v11983, 0.5
    %v12048 = vmul.f32 %v11984, 0.5
    %v12049 = vmul.f32 %v11985, 0.5
    %v12050 = vmul.f32 %v11986, 0.5
    %v12051 = vmul.f32 %v11987, 0.5
    %v12052 = vmul.f32 %v11988, 0.5
    %v12053 = vmul.f32 %v11989, 0.5
    %v12054 = vmul.f32 %v11990, 0.5
    %v12055 = vmul.f32 %v11991, 0.5
    %v12056 = vmul.f32 %v11992, 0.5
    %v12057 = vmul.f32 %v11993, 0.5
    %v12058 = vmul.f32 %v11994, 0.5
    %v12059 = vmul.f32 %v11995, 0.5
    %v12060 = vmul.f32 %v11996, 0.5
    %v12061 = vmul.f32 %v11997, 0.5
    %v12062 = vmul.f32 %v11998, 0.5
    %v12063 = vmul.f32 %v11999, 0.5
    %v12064 = vmul.f32 %v12000, 0.5
    %v12065 = vmul.f32 %v12001, 0.5
    %v12066 = vmul.f32 %v12002, 0.5
    %v12067 = vmul.f32 %v12003, 0.5
    %v12068 = vmul.f32 %v12004, 0.5
    %v12069 = vmul.f32 %v12005, 0.5
    %v12070 = vmul.f32 %v12006, 0.5
    %v12071 = vmul.f32 %v12007, 0.5
    %v12072 = vmul.f32 %v12008, 0.5
    %v12073 = vmul.f32 %v12009, 0.5
    %v12074 = vmul.f32 %v12010, 0.5
    %v12075 = vmul.f32 %v12011, 0.5
    %v12076 = vmul.f32 %v12012, 0.5
    %v12077 = vmul.f32 %v12013, 0.5
    %v12078 = vmul.f32 %v12014, 0.5
    %v12079 = vmul.f32 %v12015, 0.5
    %v12080 = vmul.f32 %v12016, 0.5
    %v12081 = vmul.f32 %v12017, 0.5
    %v12082 = vadd.f32 %v12018, 0.5
    %v12083 = vadd.f32 %v12019, 0.5
    %v12084 = vadd.f32 %v12020, 0.5
    %v12085 = vadd.f32 %v12021, 0.5
    %v12086 = vadd.f32 %v12022, 0.5
    %v12087 = vadd.f32 %v12023, 0.5
    %v12088 = vadd.f32 %v12024, 0.5
    %v12089 = vadd.f32 %v12025, 0.5
    %v12090 = vadd.f32 %v12026, 0.5
    %v12091 = vadd.f32 %v12027, 0.5
    %v12092 = vadd.f32 %v12028, 0.5
    %v12093 = vadd.f32 %v12029, 0.5
    %v12094 = vadd.f32 %v12030, 0.5
    %v12095 = vadd.f32 %v12031, 0.5
    %v12096 = vadd.f32 %v12032, 0.5
    %v12097 = vadd.f32 %v12033, 0.5
    %v12098 = vadd.f32 %v12034, 0.5
    %v12099 = vadd.f32 %v12035, 0.5
    %v12100 = vadd.f32 %v12036, 0.5
    %v12101 = vadd.f32 %v12037, 0.5
    %v12102 = vadd.f32 %v12038, 0.5
    %v12103 = vadd.f32 %v12039, 0.5
    %v12104 = vadd.f32 %v12040, 0.5
    %v12105 = vadd.f32 %v12041, 0.5
    %v12106 = vadd.f32 %v12042, 0.5
    %v12107 = vadd.f32 %v12043, 0.5
    %v12108 = vadd.f32 %v12044, 0.5
    %v12109 = vadd.f32 %v12045, 0.5
    %v12110 = vadd.f32 %v12046, 0.5
    %v12111 = vadd.f32 %v12047, 0.5
    %v12112 = vadd.f32 %v12048, 0.5
    %v12113 = vadd.f32 %v12049, 0.5
    %v12114 = vadd.f32 %v12050, 0.5
    %v12115 = vadd.f32 %v12051, 0.5
    %v12116 = vadd.f32 %v12052, 0.5
    %v12117 = vadd.f32 %v12053, 0.5
    %v12118 = vadd.f32 %v12054, 0.5
    %v12119 = vadd.f32 %v12055, 0.5
    %v12120 = vadd.f32 %v12056, 0.5
    %v12121 = vadd.f32 %v12057, 0.5
    %v12122 = vadd.f32 %v12058, 0.5
    %v12123 = vadd.f32 %v12059, 0.5
    %v12124 = vadd.f32 %v12060, 0.5
    %v12125 = vadd.f32 %v12061, 0.5
    %v12126 = vadd.f32 %v12062, 0.5
    %v12127 = vadd.f32 %v12063, 0.5
    %v12128 = vadd.f32 %v12064, 0.5
    %v12129 = vadd.f32 %v12065, 0.5
    %v12130 = vadd.f32 %v12066, 0.5
    %v12131 = vadd.f32 %v12067, 0.5
    %v12132 = vadd.f32 %v12068, 0.5
    %v12133 = vadd.f32 %v12069, 0.5
    %v12134 = vadd.f32 %v12070, 0.5
    %v12135 = vadd.f32 %v12071, 0.5
    %v12136 = vadd.f32 %v12072, 0.5
    %v12137 = vadd.f32 %v12073, 0.5
    %v12138 = vadd.f32 %v12074, 0.5
    %v12139 = vadd.f32 %v12075, 0.5
    %v12140 = vadd.f32 %v12076, 0.5
    %v12141 = vadd.f32 %v12077, 0.5
    %v12142 = vadd.f32 %v12078, 0.5
    %v12143 = vadd.f32 %v12079, 0.5
    %v12144 = vadd.f32 %v12080, 0.5
    %v12145 = vadd.f32 %v12081, 0.5
    %v12146 = vmul.f32 %v11826, %v12082
    %v12147 = vmul.f32 %v11827, %v12083
    %v12148 = vmul.f32 %v11828, %v12084
    %v12149 = vmul.f32 %v11829, %v12085
    %v12150 = vmul.f32 %v11830, %v12086
    %v12151 = vmul.f32 %v11831, %v12087
    %v12152 = vmul.f32 %v11832, %v12088
    %v12153 = vmul.f32 %v11833, %v12089
    %v12154 = vmul.f32 %v11834, %v12090
    %v12155 = vmul.f32 %v11835, %v12091
    %v12156 = vmul.f32 %v11836, %v12092
    %v12157 = vmul.f32 %v11837, %v12093
    %v12158 = vmul.f32 %v11838, %v12094
    %v12159 = vmul.f32 %v11839, %v12095
    %v12160 = vmul.f32 %v11840, %v12096
    %v12161 = vmul.f32 %v11841, %v12097
    %v12162 = vmul.f32 %v11842, %v12098
    %v12163 = vmul.f32 %v11843, %v12099
    %v12164 = vmul.f32 %v11844, %v12100
    %v12165 = vmul.f32 %v11845, %v12101
    %v12166 = vmul.f32 %v11846, %v12102
    %v12167 = vmul.f32 %v11847, %v12103
    %v12168 = vmul.f32 %v11848, %v12104
    %v12169 = vmul.f32 %v11849, %v12105
    %v12170 = vmul.f32 %v11850, %v12106
    %v12171 = vmul.f32 %v11851, %v12107
    %v12172 = vmul.f32 %v11852, %v12108
    %v12173 = vmul.f32 %v11853, %v12109
    %v12174 = vmul.f32 %v11854, %v12110
    %v12175 = vmul.f32 %v11855, %v12111
    %v12176 = vmul.f32 %v11856, %v12112
    %v12177 = vmul.f32 %v11857, %v12113
    %v12178 = vmul.f32 %v11858, %v12114
    %v12179 = vmul.f32 %v11859, %v12115
    %v12180 = vmul.f32 %v11860, %v12116
    %v12181 = vmul.f32 %v11861, %v12117
    %v12182 = vmul.f32 %v11862, %v12118
    %v12183 = vmul.f32 %v11863, %v12119
    %v12184 = vmul.f32 %v11864, %v12120
    %v12185 = vmul.f32 %v11865, %v12121
    %v12186 = vmul.f32 %v11866, %v12122
    %v12187 = vmul.f32 %v11867, %v12123
    %v12188 = vmul.f32 %v11868, %v12124
    %v12189 = vmul.f32 %v11869, %v12125
    %v12190 = vmul.f32 %v11870, %v12126
    %v12191 = vmul.f32 %v11871, %v12127
    %v12192 = vmul.f32 %v11872, %v12128
    %v12193 = vmul.f32 %v11873, %v12129
    %v12194 = vmul.f32 %v11874, %v12130
    %v12195 = vmul.f32 %v11875, %v12131
    %v12196 = vmul.f32 %v11876, %v12132
    %v12197 = vmul.f32 %v11877, %v12133
    %v12198 = vmul.f32 %v11878, %v12134
    %v12199 = vmul.f32 %v11879, %v12135
    %v12200 = vmul.f32 %v11880, %v12136
    %v12201 = vmul.f32 %v11881, %v12137
    %v12202 = vmul.f32 %v11882, %v12138
    %v12203 = vmul.f32 %v11883, %v12139
    %v12204 = vmul.f32 %v11884, %v12140
    %v12205 = vmul.f32 %v11885, %v12141
    %v12206 = vmul.f32 %v11886, %v12142
    %v12207 = vmul.f32 %v11887, %v12143
    %v12208 = vmul.f32 %v11888, %v12144
    %v12209 = vmul.f32 %v11889, %v12145
    %v12210 = vadd.f32 %v12146, %v6149
    %v12211 = vadd.f32 %v12147, %v6152
    %v12212 = vadd.f32 %v12148, %v6157
    %v12213 = vadd.f32 %v12149, %v6160
    %v12214 = vadd.f32 %v12150, %v6165
    %v12215 = vadd.f32 %v12151, %v6168
    %v12216 = vadd.f32 %v12152, %v6173
    %v12217 = vadd.f32 %v12153, %v6176
    %v12218 = vadd.f32 %v12154, %v6181
    %v12219 = vadd.f32 %v12155, %v6184
    %v12220 = vadd.f32 %v12156, %v6189
    %v12221 = vadd.f32 %v12157, %v6192
    %v12222 = vadd.f32 %v12158, %v6197
    %v12223 = vadd.f32 %v12159, %v6200
    %v12224 = vadd.f32 %v12160, %v6205
    %v12225 = vadd.f32 %v12161, %v6208
    %v12226 = vadd.f32 %v12162, %v6213
    %v12227 = vadd.f32 %v12163, %v6216
    %v12228 = vadd.f32 %v12164, %v6221
    %v12229 = vadd.f32 %v12165, %v6224
    %v12230 = vadd.f32 %v12166, %v6229
    %v12231 = vadd.f32 %v12167, %v6232
    %v12232 = vadd.f32 %v12168, %v6237
    %v12233 = vadd.f32 %v12169, %v6240
    %v12234 = vadd.f32 %v12170, %v6245
    %v12235 = vadd.f32 %v12171, %v6248
    %v12236 = vadd.f32 %v12172, %v6253
    %v12237 = vadd.f32 %v12173, %v6256
    %v12238 = vadd.f32 %v12174, %v6261
    %v12239 = vadd.f32 %v12175, %v6264
    %v12240 = vadd.f32 %v12176, %v6269
    %v12241 = vadd.f32 %v12177, %v6272
    %v12242 = vadd.f32 %v12178, %v6277
    %v12243 = vadd.f32 %v12179, %v6280
    %v12244 = vadd.f32 %v12180, %v6285
    %v12245 = vadd.f32 %v12181, %v6288
    %v12246 = vadd.f32 %v12182, %v6293
    %v12247 = vadd.f32 %v12183, %v6296
    %v12248 = vadd.f32 %v12184, %v6301
    %v12249 = vadd.f32 %v12185, %v6304
    %v12250 = vadd.f32 %v12186, %v6309
    %v12251 = vadd.f32 %v12187, %v6312
    %v12252 = vadd.f32 %v12188, %v6317
    %v12253 = vadd.f32 %v12189, %v6320
    %v12254 = vadd.f32 %v12190, %v6325
    %v12255 = vadd.f32 %v12191, %v6328
    %v12256 = vadd.f32 %v12192, %v6333
    %v12257 = vadd.f32 %v12193, %v6336
    %v12258 = vadd.f32 %v12194, %v6341
    %v12259 = vadd.f32 %v12195, %v6344
    %v12260 = vadd.f32 %v12196, %v6349
    %v12261 = vadd.f32 %v12197, %v6352
    %v12262 = vadd.f32 %v12198, %v6357
    %v12263 = vadd.f32 %v12199, %v6360
    %v12264 = vadd.f32 %v12200, %v6365
    %v12265 = vadd.f32 %v12201, %v6368
    %v12266 = vadd.f32 %v12202, %v6373
    %v12267 = vadd.f32 %v12203, %v6376
    %v12268 = vadd.f32 %v12204, %v6381
    %v12269 = vadd.f32 %v12205, %v6384
    %v12270 = vadd.f32 %v12206, %v6389
    %v12271 = vadd.f32 %v12207, %v6392
    %v12272 = vadd.f32 %v12208, %v6397
    %v12273 = vadd.f32 %v12209, %v6400
    %v12274 = vpack.c.bf16 %v12211, %v12210
    %v12275 = vpack.c.bf16 %v12213, %v12212
    %v12276 = vpack.c.bf16 %v12215, %v12214
    %v12277 = vpack.c.bf16 %v12217, %v12216
    %v12278 = vpack.c.bf16 %v12219, %v12218
    %v12279 = vpack.c.bf16 %v12221, %v12220
    %v12280 = vpack.c.bf16 %v12223, %v12222
    %v12281 = vpack.c.bf16 %v12225, %v12224
    %v12282 = vpack.c.bf16 %v12227, %v12226
    %v12283 = vpack.c.bf16 %v12229, %v12228
    %v12284 = vpack.c.bf16 %v12231, %v12230
    %v12285 = vpack.c.bf16 %v12233, %v12232
    %v12286 = vpack.c.bf16 %v12235, %v12234
    %v12287 = vpack.c.bf16 %v12237, %v12236
    %v12288 = vpack.c.bf16 %v12239, %v12238
    %v12289 = vpack.c.bf16 %v12241, %v12240
    %v12290 = vpack.c.bf16 %v12243, %v12242
    %v12291 = vpack.c.bf16 %v12245, %v12244
    %v12292 = vpack.c.bf16 %v12247, %v12246
    %v12293 = vpack.c.bf16 %v12249, %v12248
    %v12294 = vpack.c.bf16 %v12251, %v12250
    %v12295 = vpack.c.bf16 %v12253, %v12252
    %v12296 = vpack.c.bf16 %v12255, %v12254
    %v12297 = vpack.c.bf16 %v12257, %v12256
    %v12298 = vpack.c.bf16 %v12259, %v12258
    %v12299 = vpack.c.bf16 %v12261, %v12260
    %v12300 = vpack.c.bf16 %v12263, %v12262
    %v12301 = vpack.c.bf16 %v12265, %v12264
    %v12302 = vpack.c.bf16 %v12267, %v12266
    %v12303 = vpack.c.bf16 %v12269, %v12268
    %v12304 = vpack.c.bf16 %v12271, %v12270
    %v12305 = vpack.c.bf16 %v12273, %v12272
    %v12338 = vunpack.c.l.b16 %v12274
    %v12339 = vunpack.c.h.b16 %v12274
    %v12340 = vunpack.c.l.b16 %v12275
    %v12341 = vunpack.c.h.b16 %v12275
    %v12342 = vunpack.c.l.b16 %v12276
    %v12343 = vunpack.c.h.b16 %v12276
    %v12344 = vunpack.c.l.b16 %v12277
    %v12345 = vunpack.c.h.b16 %v12277
    %v12346 = vunpack.c.l.b16 %v12278
    %v12347 = vunpack.c.h.b16 %v12278
    %v12348 = vunpack.c.l.b16 %v12279
    %v12349 = vunpack.c.h.b16 %v12279
    %v12350 = vunpack.c.l.b16 %v12280
    %v12351 = vunpack.c.h.b16 %v12280
    %v12352 = vunpack.c.l.b16 %v12281
    %v12353 = vunpack.c.h.b16 %v12281
    %v12354 = vunpack.c.l.b16 %v12282
    %v12355 = vunpack.c.h.b16 %v12282
    %v12356 = vunpack.c.l.b16 %v12283
    %v12357 = vunpack.c.h.b16 %v12283
    %v12358 = vunpack.c.l.b16 %v12284
    %v12359 = vunpack.c.h.b16 %v12284
    %v12360 = vunpack.c.l.b16 %v12285
    %v12361 = vunpack.c.h.b16 %v12285
    %v12362 = vunpack.c.l.b16 %v12286
    %v12363 = vunpack.c.h.b16 %v12286
    %v12364 = vunpack.c.l.b16 %v12287
    %v12365 = vunpack.c.h.b16 %v12287
    %v12366 = vunpack.c.l.b16 %v12288
    %v12367 = vunpack.c.h.b16 %v12288
    %v12368 = vunpack.c.l.b16 %v12289
    %v12369 = vunpack.c.h.b16 %v12289
    %v12370 = vunpack.c.l.b16 %v12290
    %v12371 = vunpack.c.h.b16 %v12290
    %v12372 = vunpack.c.l.b16 %v12291
    %v12373 = vunpack.c.h.b16 %v12291
    %v12374 = vunpack.c.l.b16 %v12292
    %v12375 = vunpack.c.h.b16 %v12292
    %v12376 = vunpack.c.l.b16 %v12293
    %v12377 = vunpack.c.h.b16 %v12293
    %v12378 = vunpack.c.l.b16 %v12294
    %v12379 = vunpack.c.h.b16 %v12294
    %v12380 = vunpack.c.l.b16 %v12295
    %v12381 = vunpack.c.h.b16 %v12295
    %v12382 = vunpack.c.l.b16 %v12296
    %v12383 = vunpack.c.h.b16 %v12296
    %v12384 = vunpack.c.l.b16 %v12297
    %v12385 = vunpack.c.h.b16 %v12297
    %v12386 = vunpack.c.l.b16 %v12298
    %v12387 = vunpack.c.h.b16 %v12298
    %v12388 = vunpack.c.l.b16 %v12299
    %v12389 = vunpack.c.h.b16 %v12299
    %v12390 = vunpack.c.l.b16 %v12300
    %v12391 = vunpack.c.h.b16 %v12300
    %v12392 = vunpack.c.l.b16 %v12301
    %v12393 = vunpack.c.h.b16 %v12301
    %v12394 = vunpack.c.l.b16 %v12302
    %v12395 = vunpack.c.h.b16 %v12302
    %v12396 = vunpack.c.l.b16 %v12303
    %v12397 = vunpack.c.h.b16 %v12303
    %v12398 = vunpack.c.l.b16 %v12304
    %v12399 = vunpack.c.h.b16 %v12304
    %v12400 = vunpack.c.l.b16 %v12305
    %v12401 = vunpack.c.h.b16 %v12305
    %v12402 = vpack.c.b16 %v12338, %v12338
    %v12403 = vpack.c.b16 %v12339, %v12339
    %v12404 = vpack.c.b16 %v12340, %v12340
    %v12405 = vpack.c.b16 %v12341, %v12341
    %v12406 = vpack.c.b16 %v12342, %v12342
    %v12407 = vpack.c.b16 %v12343, %v12343
    %v12408 = vpack.c.b16 %v12344, %v12344
    %v12409 = vpack.c.b16 %v12345, %v12345
    %v12410 = vpack.c.b16 %v12346, %v12346
    %v12411 = vpack.c.b16 %v12347, %v12347
    %v12412 = vpack.c.b16 %v12348, %v12348
    %v12413 = vpack.c.b16 %v12349, %v12349
    %v12414 = vpack.c.b16 %v12350, %v12350
    %v12415 = vpack.c.b16 %v12351, %v12351
    %v12416 = vpack.c.b16 %v12352, %v12352
    %v12417 = vpack.c.b16 %v12353, %v12353
    %v12418 = vpack.c.b16 %v12354, %v12354
    %v12419 = vpack.c.b16 %v12355, %v12355
    %v12420 = vpack.c.b16 %v12356, %v12356
    %v12421 = vpack.c.b16 %v12357, %v12357
    %v12422 = vpack.c.b16 %v12358, %v12358
    %v12423 = vpack.c.b16 %v12359, %v12359
    %v12424 = vpack.c.b16 %v12360, %v12360
    %v12425 = vpack.c.b16 %v12361, %v12361
    %v12426 = vpack.c.b16 %v12362, %v12362
    %v12427 = vpack.c.b16 %v12363, %v12363
    %v12428 = vpack.c.b16 %v12364, %v12364
    %v12429 = vpack.c.b16 %v12365, %v12365
    %v12430 = vpack.c.b16 %v12366, %v12366
    %v12431 = vpack.c.b16 %v12367, %v12367
    %v12432 = vpack.c.b16 %v12368, %v12368
    %v12433 = vpack.c.b16 %v12369, %v12369
    %v12434 = vpack.c.b16 %v12370, %v12370
    %v12435 = vpack.c.b16 %v12371, %v12371
    %v12436 = vpack.c.b16 %v12372, %v12372
    %v12437 = vpack.c.b16 %v12373, %v12373
    %v12438 = vpack.c.b16 %v12374, %v12374
    %v12439 = vpack.c.b16 %v12375, %v12375
    %v12440 = vpack.c.b16 %v12376, %v12376
    %v12441 = vpack.c.b16 %v12377, %v12377
    %v12442 = vpack.c.b16 %v12378, %v12378
    %v12443 = vpack.c.b16 %v12379, %v12379
    %v12444 = vpack.c.b16 %v12380, %v12380
    %v12445 = vpack.c.b16 %v12381, %v12381
    %v12446 = vpack.c.b16 %v12382, %v12382
    %v12447 = vpack.c.b16 %v12383, %v12383
    %v12448 = vpack.c.b16 %v12384, %v12384
    %v12449 = vpack.c.b16 %v12385, %v12385
    %v12450 = vpack.c.b16 %v12386, %v12386
    %v12451 = vpack.c.b16 %v12387, %v12387
    %v12452 = vpack.c.b16 %v12388, %v12388
    %v12453 = vpack.c.b16 %v12389, %v12389
    %v12454 = vpack.c.b16 %v12390, %v12390
    %v12455 = vpack.c.b16 %v12391, %v12391
    %v12456 = vpack.c.b16 %v12392, %v12392
    %v12457 = vpack.c.b16 %v12393, %v12393
    %v12458 = vpack.c.b16 %v12394, %v12394
    %v12459 = vpack.c.b16 %v12395, %v12395
    %v12460 = vpack.c.b16 %v12396, %v12396
    %v12461 = vpack.c.b16 %v12397, %v12397
    %v12462 = vpack.c.b16 %v12398, %v12398
    %v12463 = vpack.c.b16 %v12399, %v12399
    %v12464 = vpack.c.b16 %v12400, %v12400
    %v12465 = vpack.c.b16 %v12401, %v12401
    %12530 = vst [vmem:[#allocation11] sm:$0xf] %v12402
    %12531 = vst [vmem:[#allocation11 + $0x4] sm:$0xf] %v12403
    %12532 = vst [vmem:[#allocation11 + $0x8] sm:$0xf] %v12404
    %12533 = vst [vmem:[#allocation11 + $0xc] sm:$0xf] %v12405
    %12534 = vst [vmem:[#allocation11 + $0x10] sm:$0xf] %v12406
    %12535 = vst [vmem:[#allocation11 + $0x14] sm:$0xf] %v12407
    %12536 = vst [vmem:[#allocation11 + $0x18] sm:$0xf] %v12408
    %12537 = vst [vmem:[#allocation11 + $0x1c] sm:$0xf] %v12409
    %12538 = vst [vmem:[#allocation11 + $0x20] sm:$0xf] %v12410
    %12539 = vst [vmem:[#allocation11 + $0x24] sm:$0xf] %v12411
    %12540 = vst [vmem:[#allocation11 + $0x28] sm:$0xf] %v12412
    %12541 = vst [vmem:[#allocation11 + $0x2c] sm:$0xf] %v12413
    %12542 = vst [vmem:[#allocation11 + $0x30] sm:$0xf] %v12414
    %12543 = vst [vmem:[#allocation11 + $0x34] sm:$0xf] %v12415
    %12544 = vst [vmem:[#allocation11 + $0x38] sm:$0xf] %v12416
    %12545 = vst [vmem:[#allocation11 + $0x3c] sm:$0xf] %v12417
    %12546 = vst [vmem:[#allocation11 + $0x40] sm:$0xf] %v12418
    %12547 = vst [vmem:[#allocation11 + $0x44] sm:$0xf] %v12419
    %12548 = vst [vmem:[#allocation11 + $0x48] sm:$0xf] %v12420
    %12549 = vst [vmem:[#allocation11 + $0x4c] sm:$0xf] %v12421
    %12550 = vst [vmem:[#allocation11 + $0x50] sm:$0xf] %v12422
    %12551 = vst [vmem:[#allocation11 + $0x54] sm:$0xf] %v12423
    %12552 = vst [vmem:[#allocation11 + $0x58] sm:$0xf] %v12424
    %12553 = vst [vmem:[#allocation11 + $0x5c] sm:$0xf] %v12425
    %12554 = vst [vmem:[#allocation11 + $0x60] sm:$0xf] %v12426
    %12555 = vst [vmem:[#allocation11 + $0x64] sm:$0xf] %v12427
    %12556 = vst [vmem:[#allocation11 + $0x68] sm:$0xf] %v12428
    %12557 = vst [vmem:[#allocation11 + $0x6c] sm:$0xf] %v12429
    %12558 = vst [vmem:[#allocation11 + $0x70] sm:$0xf] %v12430
    %12559 = vst [vmem:[#allocation11 + $0x74] sm:$0xf] %v12431
    %12560 = vst [vmem:[#allocation11 + $0x78] sm:$0xf] %v12432
    %12561 = vst [vmem:[#allocation11 + $0x7c] sm:$0xf] %v12433
    %12562 = vst [vmem:[#allocation11 + $0x80] sm:$0xf] %v12434
    %12563 = vst [vmem:[#allocation11 + $0x84] sm:$0xf] %v12435
    %12564 = vst [vmem:[#allocation11 + $0x88] sm:$0xf] %v12436
    %12565 = vst [vmem:[#allocation11 + $0x8c] sm:$0xf] %v12437
    %12566 = vst [vmem:[#allocation11 + $0x90] sm:$0xf] %v12438
    %12567 = vst [vmem:[#allocation11 + $0x94] sm:$0xf] %v12439
    %12568 = vst [vmem:[#allocation11 + $0x98] sm:$0xf] %v12440
    %12569 = vst [vmem:[#allocation11 + $0x9c] sm:$0xf] %v12441
    %12570 = vst [vmem:[#allocation11 + $0xa0] sm:$0xf] %v12442
    %12571 = vst [vmem:[#allocation11 + $0xa4] sm:$0xf] %v12443
    %12572 = vst [vmem:[#allocation11 + $0xa8] sm:$0xf] %v12444
    %12573 = vst [vmem:[#allocation11 + $0xac] sm:$0xf] %v12445
    %12574 = vst [vmem:[#allocation11 + $0xb0] sm:$0xf] %v12446
    %12575 = vst [vmem:[#allocation11 + $0xb4] sm:$0xf] %v12447
    %12576 = vst [vmem:[#allocation11 + $0xb8] sm:$0xf] %v12448
    %12577 = vst [vmem:[#allocation11 + $0xbc] sm:$0xf] %v12449
    %12578 = vst [vmem:[#allocation11 + $0xc0] sm:$0xf] %v12450
    %12579 = vst [vmem:[#allocation11 + $0xc4] sm:$0xf] %v12451
    %12580 = vst [vmem:[#allocation11 + $0xc8] sm:$0xf] %v12452
    %12581 = vst [vmem:[#allocation11 + $0xcc] sm:$0xf] %v12453
    %12582 = vst [vmem:[#allocation11 + $0xd0] sm:$0xf] %v12454
    %12583 = vst [vmem:[#allocation11 + $0xd4] sm:$0xf] %v12455
    %12584 = vst [vmem:[#allocation11 + $0xd8] sm:$0xf] %v12456
    %12585 = vst [vmem:[#allocation11 + $0xdc] sm:$0xf] %v12457
    %12586 = vst [vmem:[#allocation11 + $0xe0] sm:$0xf] %v12458
    %12587 = vst [vmem:[#allocation11 + $0xe4] sm:$0xf] %v12459
    %12588 = vst [vmem:[#allocation11 + $0xe8] sm:$0xf] %v12460
    %12589 = vst [vmem:[#allocation11 + $0xec] sm:$0xf] %v12461
    %12590 = vst [vmem:[#allocation11 + $0xf0] sm:$0xf] %v12462
    %12591 = vst [vmem:[#allocation11 + $0xf4] sm:$0xf] %v12463
    %12592 = vst [vmem:[#allocation11 + $0xf8] sm:$0xf] %v12464
    %12593 = vst [vmem:[#allocation11 + $0xfc] sm:$0xf] %v12465
    // Predicated region
    $region46: #{tpu_custom_call.1} parent=1 // pred_check
      _
    $region47: #{tpu_custom_call.1} parent=1 // pred_check_branch
      %12595 = sbr.rel (0) target = $region49
    $region48: #{tpu_custom_call.1} parent=1 // pred_region
      %s12597 = ssub.s32 4096, 4096
      %12598 = vsyncadd [#allocation5], %s12597
      %s12599 = sshll.u32 [#allocation11], 4
      %s12600 = int_to_ptr.vmem [resolvable:$true] %s12599
      %12605 = dma.vmem_to_hbm [thread:$0]  %s12600, 4096, %s7, [#allocation5], 64, 64, 4
    $region49: #{tpu_custom_call.1} parent=1 // pred_fallthru
      _
    // Predicated region
    $region50: #{tpu_custom_call.1} parent=1 // pred_check
      _
    $region51: #{tpu_custom_call.1} parent=1 // pred_check_branch
      %12607 = sbr.rel (0) target = $region53
    $region52: #{tpu_custom_call.1} parent=1 // pred_region
      %12608 = dma.done [#allocation5], 4096
    $region53: #{tpu_custom_call.1} parent=1 // pred_fallthru
      _
    %12609 = vsyncpa [#allocation4], 1
    %12610 = vsyncpa [#allocation7], 1
    %12611 = vsyncpa [#allocation10], 1
    %12612 = vsyncpa [#allocation5], 1

</llo_original>
